<compile_context>
chip_gen: v6e
topology: v6e:2x2x1
jax: 0.10.0
libtpu: 0.0.40
codegen_flags: <defaults>
</compile_context>

<pallas_src>
import functools
import math

import numpy as np
import jax
import jax.numpy as jnp
from jax import lax
from jax.experimental import pallas as pl
from jax.experimental.pallas import tpu as pltpu


# ----------------------------------------------------------------------------
# In-kernel helpers
# ----------------------------------------------------------------------------
def _bf16(x):
    return x.astype(jnp.bfloat16)


def _ln(x, g, b, eps):
    """LayerNorm over last dim (biased variance), f32."""
    mean = jnp.mean(x, axis=-1, keepdims=True)
    xc = x - mean
    var = jnp.mean(xc * xc, axis=-1, keepdims=True)
    return xc * lax.rsqrt(var + eps) * g + b


def _im2col3(a, row):
    """K=3 'same' conv im2col: [a[t-1] | a[t] | a[t+1]] with zero sequence boundaries.

    a:   (T, C) f32 value
    row: (T, 1) int32 row iota
    returns (T, 3C)
    """
    T = a.shape[0]
    prev = pltpu.roll(a, shift=1, axis=0)          # prev[t] = a[t-1]  (row 0 wraps)
    prev = jnp.where(row >= 1, prev, 0.0)
    nxt = pltpu.roll(a, shift=T - 1, axis=0)       # nxt[t]  = a[t+1]  (last row wraps)
    nxt = jnp.where(row < T - 1, nxt, 0.0)
    return jnp.concatenate([prev, a, nxt], axis=-1)


# ----------------------------------------------------------------------------
# Fused FFT block kernel (MultiHeadAttention + Conv1DLayer), one call per layer
# ----------------------------------------------------------------------------
def _fft_block_kernel(lens_ref, x_ref,
                      wqkv_ref, bqkv_ref, wo_ref, bo_ref, g1_ref, b1ln_ref,
                      w1_ref, b1_ref, w2_ref, b2_ref, g2_ref, b2ln_ref,
                      o_ref, *, n_head, eps):
    length = lens_ref[pl.program_id(0)]            # valid length of this batch element
    x = x_ref[0]                                   # (T, D) f32
    T, D = x.shape
    dk = D // n_head
    inv_temp = 1.0 / math.sqrt(dk)

    # --- fused QKV projection (bf16 MXU inputs, f32 accumulation) ---
    qkv = jnp.dot(_bf16(x), wqkv_ref[...],
                  preferred_element_type=jnp.float32) + bqkv_ref[...]
    q = qkv[:, :D] * inv_temp                      # 1/temperature folded into q
    k = qkv[:, D:2 * D]
    v = qkv[:, 2 * D:]

    # --- per-head attention; key-padding mask built from length, no HBM mask ---
    col = lax.broadcasted_iota(jnp.int32, (T, T), 1)
    neg = jnp.where(col >= length, -1e30, 0.0)     # masked_fill(-inf) surrogate
    heads = []
    for h in range(n_head):                        # n_head static -> unrolled
        sl = slice(h * dk, (h + 1) * dk)
        s = lax.dot_general(_bf16(q[:, sl]), _bf16(k[:, sl]),
                            (((1,), (1,)), ((), ())),
                            preferred_element_type=jnp.float32) + neg
        s = s - jnp.max(s, axis=-1, keepdims=True)
        p = jnp.exp(s)
        p = p * pl.reciprocal(jnp.sum(p, axis=-1, keepdims=True), approx=True)
        heads.append(jnp.dot(_bf16(p), _bf16(v[:, sl]),
                             preferred_element_type=jnp.float32))
    attn_out = jnp.concatenate(heads, axis=-1)     # (T, D)

    # --- output projection + residual + LayerNorm + length mask ---
    proj = jnp.dot(_bf16(attn_out), wo_ref[...],
                   preferred_element_type=jnp.float32) + bo_ref[...]
    a = _ln(proj + x, g1_ref[...], b1ln_ref[...], eps)
    row = lax.broadcasted_iota(jnp.int32, (T, 1), 0)
    keep = (row < length).astype(jnp.float32)
    a = a * keep                                   # masked_fill(mask, 0)

    # --- Conv1DLayer: two 3-tap "same" convs as single im2col matmuls ---
    h1 = jnp.dot(_bf16(_im2col3(a, row)), w1_ref[...],
                 preferred_element_type=jnp.float32) + b1_ref[...]
    h1 = jnp.maximum(h1, 0.0)
    h2 = jnp.dot(_bf16(_im2col3(h1, row)), w2_ref[...],
                 preferred_element_type=jnp.float32) + b2_ref[...]
    o_ref[0] = _ln(h2 + a, g2_ref[...], b2ln_ref[...], eps) * keep


def fft_block(x, x_lens, p, n_head):
    B, T, D = x.shape
    F = p['b1'].shape[0]

    def w_spec(shape):
        return pl.BlockSpec(shape, lambda b, lens: (0, 0))

    grid_spec = pltpu.PrefetchScalarGridSpec(
        num_scalar_prefetch=1, grid=(B,),
        in_specs=[pl.BlockSpec((1, T, D), lambda b, lens: (b, 0, 0)),
                  w_spec((D, 3 * D)), w_spec((1, 3 * D)),
                  w_spec((D, D)), w_spec((1, D)),
                  w_spec((1, D)), w_spec((1, D)),
                  w_spec((3 * D, F)), w_spec((1, F)),
                  w_spec((3 * F, D)), w_spec((1, D)),
                  w_spec((1, D)), w_spec((1, D))],
        out_specs=pl.BlockSpec((1, T, D), lambda b, lens: (b, 0, 0)))
    return pl.pallas_call(
        functools.partial(_fft_block_kernel, n_head=n_head, eps=1e-5),
        out_shape=jax.ShapeDtypeStruct((B, T, D), jnp.float32),
        grid_spec=grid_spec,
        compiler_params=pltpu.CompilerParams(dimension_semantics=("parallel",)),
    )(x_lens, x,
      p['wqkv'], p['bqkv'][None, :], p['wo'], p['bo'][None, :],
      p['ln1_g'][None, :], p['ln1_b'][None, :],
      p['w1'], p['b1'][None, :], p['w2'], p['b2'][None, :],
      p['ln2_g'][None, :], p['ln2_b'][None, :])


# ----------------------------------------------------------------------------
# Fused tanh*sigmoid gate (ContextEncoder) with in-kernel length mask
# ----------------------------------------------------------------------------
def _gate_kernel(lens_ref, a_ref, b_ref, o_ref):
    length = lens_ref[pl.program_id(0)]
    s = a_ref[0] + b_ref[0]
    row = lax.broadcasted_iota(jnp.int32, (s.shape[0], 1), 0)
    keep = (row < length).astype(jnp.float32)
    o_ref[0] = jnp.tanh(s) * jax.nn.sigmoid(s) * keep


def fused_gate(pho, sty, x_lens):
    B, T, D = pho.shape
    grid_spec = pltpu.PrefetchScalarGridSpec(
        num_scalar_prefetch=1, grid=(B,),
        in_specs=[pl.BlockSpec((1, T, D), lambda b, lens: (b, 0, 0)),
                  pl.BlockSpec((1, T, D), lambda b, lens: (b, 0, 0))],
        out_specs=pl.BlockSpec((1, T, D), lambda b, lens: (b, 0, 0)))
    return pl.pallas_call(
        _gate_kernel,
        out_shape=jax.ShapeDtypeStruct((B, T, D), jnp.float32),
        grid_spec=grid_spec,
        compiler_params=pltpu.CompilerParams(dimension_semantics=("parallel",)),
    )(x_lens, pho, sty)


# ----------------------------------------------------------------------------
# Fused mean_proj / std_proj (two 1x1 convs -> one (D, 32) matmul) + mask
# ----------------------------------------------------------------------------
def _proj_ms_kernel(lens_ref, x_ref, w_ref, b_ref, o_ref):
    length = lens_ref[pl.program_id(0)]
    x = x_ref[0]
    y = jnp.dot(_bf16(x), w_ref[...], preferred_element_type=jnp.float32) + b_ref[...]
    row = lax.broadcasted_iota(jnp.int32, (x.shape[0], 1), 0)
    o_ref[0] = y * (row < length).astype(jnp.float32)


def proj_mean_std(x, x_lens, w, b):
    B, T, D = x.shape
    C = w.shape[1]
    grid_spec = pltpu.PrefetchScalarGridSpec(
        num_scalar_prefetch=1, grid=(B,),
        in_specs=[pl.BlockSpec((1, T, D), lambda i, lens: (i, 0, 0)),
                  pl.BlockSpec((D, C), lambda i, lens: (0, 0)),
                  pl.BlockSpec((1, C), lambda i, lens: (0, 0))],
        out_specs=pl.BlockSpec((1, T, C), lambda i, lens: (i, 0, 0)))
    return pl.pallas_call(
        _proj_ms_kernel,
        out_shape=jax.ShapeDtypeStruct((B, T, C), jnp.float32),
        grid_spec=grid_spec,
        compiler_params=pltpu.CompilerParams(dimension_semantics=("parallel",)),
    )(x_lens, x, w, b[None, :])


# ----------------------------------------------------------------------------
# Fused LengthPredictor (conv->relu->LN->conv->relu->LN->linear) + mask
# ----------------------------------------------------------------------------
def _dp_kernel(lens_ref, x_ref, w1_ref, b1_ref, g1_ref, be1_ref,
               w2_ref, b2_ref, g2_ref, be2_ref, wp_ref, bp_ref, o_ref, *, eps):
    length = lens_ref[pl.program_id(0)]
    x = x_ref[0]                                   # (T, 256)
    row = lax.broadcasted_iota(jnp.int32, (x.shape[0], 1), 0)
    h = jnp.dot(_bf16(_im2col3(x, row)), w1_ref[...],
                preferred_element_type=jnp.float32) + b1_ref[...]
    h = _ln(jnp.maximum(h, 0.0), g1_ref[...], be1_ref[...], eps)
    h = jnp.dot(_bf16(_im2col3(h, row)), w2_ref[...],
                preferred_element_type=jnp.float32) + b2_ref[...]
    h = _ln(jnp.maximum(h, 0.0), g2_ref[...], be2_ref[...], eps)
    # final head padded to 128 lanes (lane-dense store); column 0 is the real output
    y = jnp.dot(_bf16(h), wp_ref[...], preferred_element_type=jnp.float32) + bp_ref[...]
    o_ref[0] = y * (row < length).astype(jnp.float32)


def duration_predictor(x, x_lens, p):
    B, T, D = x.shape
    F = p['b1'].shape[0]
    P = p['wp'].shape[1]                           # 128 (padded head width)

    def w_spec(shape):
        return pl.BlockSpec(shape, lambda b, lens: (0, 0))

    grid_spec = pltpu.PrefetchScalarGridSpec(
        num_scalar_prefetch=1, grid=(B,),
        in_specs=[pl.BlockSpec((1, T, D), lambda b, lens: (b, 0, 0)),
                  w_spec((3 * D, F)), w_spec((1, F)), w_spec((1, F)), w_spec((1, F)),
                  w_spec((3 * F, F)), w_spec((1, F)), w_spec((1, F)), w_spec((1, F)),
                  w_spec((F, P)), w_spec((1, P))],
        out_specs=pl.BlockSpec((1, T, P), lambda b, lens: (b, 0, 0)))
    out = pl.pallas_call(
        functools.partial(_dp_kernel, eps=1e-5),
        out_shape=jax.ShapeDtypeStruct((B, T, P), jnp.float32),
        grid_spec=grid_spec,
        compiler_params=pltpu.CompilerParams(dimension_semantics=("parallel",)),
    )(x_lens, x,
      p['w1'], p['b1'][None, :], p['ln1_g'][None, :], p['ln1_b'][None, :],
      p['w2'], p['b2'][None, :], p['ln2_g'][None, :], p['ln2_b'][None, :],
      p['wp'], p['bp'][None, :])
    return out[:, :, 0:1]                          # (B, T, 1) log-duration


# ----------------------------------------------------------------------------
# Batched matmul (attn^T @ [c_mean | c_std]) — single fused call
# ----------------------------------------------------------------------------
def _bmm_kernel(a_ref, b_ref, o_ref):
    o_ref[0] = jnp.dot(_bf16(a_ref[0]), _bf16(b_ref[0]),
                       preferred_element_type=jnp.float32)


def bmm(a, b):
    B, M, K = a.shape
    N = b.shape[2]
    return pl.pallas_call(
        _bmm_kernel,
        out_shape=jax.ShapeDtypeStruct((B, M, N), jnp.float32),
        grid=(B,),
        in_specs=[pl.BlockSpec((1, M, K), lambda i: (i, 0, 0)),
                  pl.BlockSpec((1, K, N), lambda i: (i, 0, 0))],
        out_specs=pl.BlockSpec((1, M, N), lambda i: (i, 0, 0)),
        compiler_params=pltpu.CompilerParams(dimension_semantics=("parallel",)),
    )(a, b)


# ----------------------------------------------------------------------------
# Model glue (plain JAX; everything hot runs in the kernels above)
# ----------------------------------------------------------------------------
def encoder_fwd(tokens, x_lens, p, n_head):
    T = tokens.shape[1]
    x = p['embed'][tokens] + p['pos'][:T][None, :, :]
    for lp in p['layers']:
        x = fft_block(x, x_lens, lp, n_head)
    return x


def context_encoder_fwd(x_tok, s_tok, x_lens, p, n_head):
    pho = encoder_fwd(x_tok, x_lens, p['pho'], n_head)
    sty = encoder_fwd(s_tok, x_lens, p['style'], n_head)
    return fused_gate(pho, sty, x_lens)


def generate_path(duration, mask):
    """duration: (B, Tx); mask: (B, Tx, Ty) float."""
    Ty = mask.shape[2]
    cum = jnp.cumsum(duration, axis=1)
    path = (jnp.arange(Ty, dtype=cum.dtype)[None, None, :] < cum[:, :, None]).astype(mask.dtype)
    path = path - jnp.pad(path, ((0, 0), (1, 0), (0, 0)))[:, :-1, :]
    return path * mask


@functools.partial(jax.jit,
                   static_argnames=("Ty", "noise_scale", "length_scale", "n_head"))
def stylespeech2_forward(params, x_tok, s_tok, x_lens, y_lens, noise_key,
                         Ty, noise_scale=1.0, length_scale=1.0, n_head=2):
    B, Tx = x_tok.shape

    c = context_encoder_fwd(x_tok, s_tok, x_lens, params['encoder'], n_head)   # (B,Tx,256)

    x_mask = (jnp.arange(Tx)[None, :] < x_lens[:, None]).astype(jnp.float32)[:, :, None]

    ms = proj_mean_std(c, x_lens, params['proj_ms_w'], params['proj_ms_b'])    # (B,Tx,32), masked
    x_m, x_logs = ms[..., :16], ms[..., 16:]                                   # c_mean / c_std

    logw = duration_predictor(c, x_lens, params['dp'])                         # (B,Tx,1), masked

    w = jnp.exp(logw) * x_mask * length_scale
    w_ceil = jnp.ceil(w)

    # TODO(synk): the reference forward() builds attn via Glow(z) + maximum_path (MAS);
    # Glow is not defined in the provided source, so the duration-driven generate_path
    # (the module's gen/inverse path) is used with the caller-provided y_lens.
    z_mask = (jnp.arange(Ty)[None, :] < y_lens[:, None]).astype(jnp.float32)[:, :, None]
    attn_mask = x_mask * jnp.transpose(z_mask, (0, 2, 1))                      # (B,Tx,Ty)
    attn = generate_path(w_ceil[..., 0], attn_mask)

    attn_t = jnp.transpose(attn, (0, 2, 1))                                    # (B,Ty,Tx)
    z_ms = bmm(attn_t, ms)                                                     # (B,Ty,32)
    z_m, z_logs = z_ms[..., :16], z_ms[..., 16:]
    logw_ = jnp.log(1e-8 + jnp.sum(attn, axis=-1, keepdims=True)) * x_mask

    noise = jax.random.normal(noise_key, z_m.shape, dtype=z_m.dtype)
    z = (z_m + jnp.exp(z_logs) * noise * noise_scale) * z_mask

    # TODO(synk): Glow decoder (reverse) unavailable in source -> return z, logdet=None.
    y_out = z
    logdet = None

    to_ct = lambda t: jnp.transpose(t, (0, 2, 1))                              # -> torch (B,C,T)
    return ((to_ct(y_out), to_ct(z_m), to_ct(z_logs), logdet, to_ct(z_mask)),
            (to_ct(x_m), to_ct(x_logs), to_ct(x_mask)),
            (attn[:, None, :, :], to_ct(logw), to_ct(logw_)))


# ----------------------------------------------------------------------------
# Deterministic parameter initialization (matmul weights stored in bf16)
# ----------------------------------------------------------------------------
def sinusoid_encoding_table(seq_len, d_hid):
    pos = np.arange(seq_len, dtype=np.float64)[:, None]
    hid = np.arange(d_hid)[None, :]
    table = pos / np.power(10000, 2 * (hid // 2) / d_hid)
    table[:, 0::2] = np.sin(table[:, 0::2])
    table[:, 1::2] = np.cos(table[:, 1::2])
    return jnp.asarray(table, dtype=jnp.float32)


def _rand(key, shape, scale=0.05):
    return scale * jax.random.normal(key, shape, jnp.float32)


def _fft_params(key, D, F, K):
    ks = jax.random.split(key, 9)
    wq, wk, wv = _rand(ks[0], (D, D)), _rand(ks[1], (D, D)), _rand(ks[2], (D, D))
    return dict(
        wqkv=jnp.concatenate([wq, wk, wv], axis=1).astype(jnp.bfloat16),   # fused QKV
        bqkv=jnp.concatenate([_rand(ks[3], (D,)), _rand(ks[4], (D,)), _rand(ks[5], (D,))]),
        wo=_rand(ks[6], (D, D)).astype(jnp.bfloat16),
        bo=jnp.zeros((D,), jnp.float32),
        ln1_g=jnp.ones((D,), jnp.float32), ln1_b=jnp.zeros((D,), jnp.float32),
        # conv weights in im2col layout: rows = [tap t-1 | tap t | tap t+1] x Cin
        w1=_rand(ks[7], (K * D, F)).astype(jnp.bfloat16),
        b1=jnp.zeros((F,), jnp.float32),
        w2=_rand(ks[8], (K * F, D)).astype(jnp.bfloat16),
        b2=jnp.zeros((D,), jnp.float32),
        ln2_g=jnp.ones((D,), jnp.float32), ln2_b=jnp.zeros((D,), jnp.float32))


def _encoder_params(key, word_num, D, F, K, n_layers, max_word):
    ks = jax.random.split(key, n_layers + 1)
    emb = _rand(ks[0], (word_num, D))
    emb = emb.at[0].set(0.0)                                               # padding_idx = 0
    return dict(embed=emb, pos=sinusoid_encoding_table(max_word, D),
                layers=[_fft_params(ks[i + 1], D, F, K) for i in range(n_layers)])


def _dp_params(key, cin, cf, K):
    ks = jax.random.split(key, 4)
    wp = _rand(ks[2], (cf, 1))
    bp = _rand(ks[3], (1,))
    return dict(
        w1=_rand(ks[0], (K * cin, cf)).astype(jnp.bfloat16),
        b1=jnp.zeros((cf,), jnp.float32),
        ln1_g=jnp.ones((cf,), jnp.float32), ln1_b=jnp.zeros((cf,), jnp.float32),
        w2=_rand(ks[1], (K * cf, cf)).astype(jnp.bfloat16),
        b2=jnp.zeros((cf,), jnp.float32),
        ln2_g=jnp.ones((cf,), jnp.float32), ln2_b=jnp.zeros((cf,), jnp.float32),
        # 1-wide head padded to 128 lanes for dense stores; column 0 holds the real weights
        wp=jnp.pad(wp, ((0, 0), (0, 127))).astype(jnp.bfloat16),
        bp=jnp.pad(bp, (0, 127)))


def init_params(key, *, word_num_pho=12, word_num_style=6, D=256, filter_num=256,
                kernel_size=3, n_layers=1, max_word=33, dp_filter=256):
    ks = jax.random.split(key, 5)
    wm, wsd = _rand(ks[2], (D, 16)), _rand(ks[3], (D, 16))
    return dict(
        encoder=dict(
            pho=_encoder_params(ks[0], word_num_pho, D, filter_num, kernel_size,
                                n_layers, max_word),
            style=_encoder_params(ks[1], word_num_style, D, filter_num, kernel_size,
                                  n_layers, max_word)),
        # mean_proj / std_proj (1x1 convs 256->16) fused into a single (D, 32) projection
        proj_ms_w=jnp.concatenate([wm, wsd], axis=1).astype(jnp.bfloat16),
        proj_ms_b=jnp.zeros((32,), jnp.float32),
        dp=_dp_params(ks[4], D, dp_filter, kernel_size))


# ----------------------------------------------------------------------------
if __name__ == "__main__":
    key = jax.random.PRNGKey(0)
    kp, kx, ks_, kn = jax.random.split(key, 4)

    B, Tx, Ty = 2, 8, 12
    params = init_params(kp)

    x_tok = jax.random.randint(kx, (B, Tx), 1, 12, dtype=jnp.int32)     # phoneme ids
    s_tok = jax.random.randint(ks_, (B, Tx), 1, 6, dtype=jnp.int32)     # style ids
    x_lens = jnp.array([8, 6], dtype=jnp.int32)
    y_lens = jnp.array([12, 10], dtype=jnp.int32)

    out = stylespeech2_forward(params, x_tok, s_tok, x_lens, y_lens, kn,
                               Ty=Ty, noise_scale=1.0, length_scale=1.0, n_head=2)
    jax.block_until_ready(out)
    print("KERNEL_OK")
</pallas_src>

<mosaic_0001>
module attributes {stable_mosaic.version = 11 : i64} {
  func.func @_fft_block_kernel(%arg0: i32, %arg1: memref<2xi32, #tpu.memory_space<smem>>, %arg2: memref<1x8x256xf32, #tpu.memory_space<vmem>>, %arg3: memref<256x768xbf16, #tpu.memory_space<vmem>>, %arg4: memref<1x768xf32, #tpu.memory_space<vmem>>, %arg5: memref<256x256xbf16, #tpu.memory_space<vmem>>, %arg6: memref<1x256xf32, #tpu.memory_space<vmem>>, %arg7: memref<1x256xf32, #tpu.memory_space<vmem>>, %arg8: memref<1x256xf32, #tpu.memory_space<vmem>>, %arg9: memref<768x256xbf16, #tpu.memory_space<vmem>>, %arg10: memref<1x256xf32, #tpu.memory_space<vmem>>, %arg11: memref<768x256xbf16, #tpu.memory_space<vmem>>, %arg12: memref<1x256xf32, #tpu.memory_space<vmem>>, %arg13: memref<1x256xf32, #tpu.memory_space<vmem>>, %arg14: memref<1x256xf32, #tpu.memory_space<vmem>>, %arg15: memref<1x8x256xf32, #tpu.memory_space<vmem>>) attributes {dimension_semantics = [#tpu.dimension_semantics<parallel>], iteration_bounds = array<i64: 2>, scalar_prefetch = 1 : i64, scratch_operands = 0 : i64, tpu.core_type = #tpu.core_type<tc>, window_params = [{transform_indices = @transform_0, window_bounds = array<i64: 1, 8, 256>}, {pipeline_mode = #tpu.pipeline_mode<synchronous>, transform_indices = @transform_1, window_bounds = array<i64: 256, 768>}, {pipeline_mode = #tpu.pipeline_mode<synchronous>, transform_indices = @transform_2, window_bounds = array<i64: 1, 768>}, {pipeline_mode = #tpu.pipeline_mode<synchronous>, transform_indices = @transform_3, window_bounds = array<i64: 256, 256>}, {pipeline_mode = #tpu.pipeline_mode<synchronous>, transform_indices = @transform_4, window_bounds = array<i64: 1, 256>}, {pipeline_mode = #tpu.pipeline_mode<synchronous>, transform_indices = @transform_5, window_bounds = array<i64: 1, 256>}, {pipeline_mode = #tpu.pipeline_mode<synchronous>, transform_indices = @transform_6, window_bounds = array<i64: 1, 256>}, {pipeline_mode = #tpu.pipeline_mode<synchronous>, transform_indices = @transform_7, window_bounds = array<i64: 768, 256>}, {pipeline_mode = #tpu.pipeline_mode<synchronous>, transform_indices = @transform_8, window_bounds = array<i64: 1, 256>}, {pipeline_mode = #tpu.pipeline_mode<synchronous>, transform_indices = @transform_9, window_bounds = array<i64: 768, 256>}, {pipeline_mode = #tpu.pipeline_mode<synchronous>, transform_indices = @transform_10, window_bounds = array<i64: 1, 256>}, {pipeline_mode = #tpu.pipeline_mode<synchronous>, transform_indices = @transform_11, window_bounds = array<i64: 1, 256>}, {pipeline_mode = #tpu.pipeline_mode<synchronous>, transform_indices = @transform_12, window_bounds = array<i64: 1, 256>}, {transform_indices = @transform_13, window_bounds = array<i64: 1, 8, 256>}]} {
    %0 = arith.index_cast %arg0 : i32 to index
    %1 = memref.load %arg1[%0] : memref<2xi32, #tpu.memory_space<smem>>
    %c0 = arith.constant 0 : index
    %c0_0 = arith.constant 0 : index
    %c0_1 = arith.constant 0 : index
    %2 = vector.load %arg2[%c0, %c0_0, %c0_1] : memref<1x8x256xf32, #tpu.memory_space<vmem>>, vector<1x8x256xf32>
    %3 = vector.shape_cast %2 : vector<1x8x256xf32> to vector<8x256xf32>
    %4 = arith.truncf %3 : vector<8x256xf32> to vector<8x256xbf16>
    %c0_2 = arith.constant 0 : index
    %c0_3 = arith.constant 0 : index
    %5 = vector.load %arg3[%c0_2, %c0_3] : memref<256x768xbf16, #tpu.memory_space<vmem>>, vector<256x768xbf16>
    %cst = arith.constant dense<0.000000e+00> : vector<8x768xf32>
    %6 = tpu.matmul %4, %5, %cst {dimension_numbers = #tpu.dot_dimension_numbers<[1], [0], [0], [1], [0, 0, 1, 1], [], []>} : vector<8x256xbf16>, vector<256x768xbf16>, vector<8x768xf32> -> vector<8x768xf32>
    %c0_4 = arith.constant 0 : index
    %c0_5 = arith.constant 0 : index
    %7 = vector.load %arg4[%c0_4, %c0_5] : memref<1x768xf32, #tpu.memory_space<vmem>>, vector<1x768xf32>
    %8 = vector.broadcast %7 : vector<1x768xf32> to vector<8x768xf32>
    %9 = arith.addf %6, %8 : vector<8x768xf32>
    %10 = vector.extract_strided_slice %9 {offsets = [0, 0], sizes = [8, 256], strides = [1, 1]} : vector<8x768xf32> to vector<8x256xf32>
    %cst_6 = arith.constant 0.0883883461 : f32
    %11 = vector.broadcast %cst_6 : f32 to vector<8x256xf32>
    %12 = arith.mulf %10, %11 : vector<8x256xf32>
    %13 = vector.extract_strided_slice %9 {offsets = [0, 256], sizes = [8, 256], strides = [1, 1]} : vector<8x768xf32> to vector<8x256xf32>
    %14 = vector.extract_strided_slice %9 {offsets = [0, 512], sizes = [8, 256], strides = [1, 1]} : vector<8x768xf32> to vector<8x256xf32>
    %15 = tpu.iota {dimensions = array<i32: 1>} : vector<8x8xi32>
    %16 = vector.broadcast %1 : i32 to vector<8x8xi32>
    %17 = arith.cmpi sge, %15, %16 : vector<8x8xi32>
    %cst_7 = arith.constant -1.000000e+30 : f32
    %cst_8 = arith.constant 0.000000e+00 : f32
    %18 = vector.broadcast %cst_7 : f32 to vector<8x8xf32>
    %19 = vector.broadcast %cst_8 : f32 to vector<8x8xf32>
    %20 = arith.select %17, %18, %19 : vector<8x8xi1>, vector<8x8xf32>
    %21 = vector.extract_strided_slice %12 {offsets = [0, 0], sizes = [8, 128], strides = [1, 1]} : vector<8x256xf32> to vector<8x128xf32>
    %22 = arith.truncf %21 : vector<8x128xf32> to vector<8x128xbf16>
    %23 = vector.extract_strided_slice %13 {offsets = [0, 0], sizes = [8, 128], strides = [1, 1]} : vector<8x256xf32> to vector<8x128xf32>
    %24 = arith.truncf %23 : vector<8x128xf32> to vector<8x128xbf16>
    %cst_9 = arith.constant dense<0.000000e+00> : vector<8x8xf32>
    %25 = tpu.matmul %22, %24, %cst_9 {dimension_numbers = #tpu.dot_dimension_numbers<[1], [1], [0], [0], [0, 0, 1, 0], [], []>} : vector<8x128xbf16>, vector<8x128xbf16>, vector<8x8xf32> -> vector<8x8xf32>
    %26 = arith.addf %25, %20 : vector<8x8xf32>
    %cst_10 = arith.constant dense<0xFF800000> : vector<8xf32>
    %27 = vector.multi_reduction <maximumf>, %26, %cst_10 [1] : vector<8x8xf32> to vector<8xf32>
    %28 = vector.shape_cast %27 : vector<8xf32> to vector<8x1xf32>
    %29 = vector.broadcast %28 : vector<8x1xf32> to vector<8x8xf32>
    %30 = arith.subf %26, %29 : vector<8x8xf32>
    %31 = math.exp %30 : vector<8x8xf32>
    %cst_11 = arith.constant dense<0.000000e+00> : vector<8xf32>
    %32 = vector.multi_reduction <add>, %31, %cst_11 [1] : vector<8x8xf32> to vector<8xf32>
    %33 = vector.shape_cast %32 : vector<8xf32> to vector<8x1xf32>
    %34 = tpu.reciprocal %33 {approx = true} : vector<8x1xf32> -> vector<8x1xf32>
    %35 = vector.broadcast %34 : vector<8x1xf32> to vector<8x8xf32>
    %36 = arith.mulf %31, %35 : vector<8x8xf32>
    %37 = arith.truncf %36 : vector<8x8xf32> to vector<8x8xbf16>
    %38 = vector.extract_strided_slice %14 {offsets = [0, 0], sizes = [8, 128], strides = [1, 1]} : vector<8x256xf32> to vector<8x128xf32>
    %39 = arith.truncf %38 : vector<8x128xf32> to vector<8x128xbf16>
    %cst_12 = arith.constant dense<0.000000e+00> : vector<8x128xf32>
    %40 = tpu.matmul %37, %39, %cst_12 {dimension_numbers = #tpu.dot_dimension_numbers<[1], [0], [0], [1], [0, 0, 1, 1], [], []>} : vector<8x8xbf16>, vector<8x128xbf16>, vector<8x128xf32> -> vector<8x128xf32>
    %41 = vector.extract_strided_slice %12 {offsets = [0, 128], sizes = [8, 128], strides = [1, 1]} : vector<8x256xf32> to vector<8x128xf32>
    %42 = arith.truncf %41 : vector<8x128xf32> to vector<8x128xbf16>
    %43 = vector.extract_strided_slice %13 {offsets = [0, 128], sizes = [8, 128], strides = [1, 1]} : vector<8x256xf32> to vector<8x128xf32>
    %44 = arith.truncf %43 : vector<8x128xf32> to vector<8x128xbf16>
    %cst_13 = arith.constant dense<0.000000e+00> : vector<8x8xf32>
    %45 = tpu.matmul %42, %44, %cst_13 {dimension_numbers = #tpu.dot_dimension_numbers<[1], [1], [0], [0], [0, 0, 1, 0], [], []>} : vector<8x128xbf16>, vector<8x128xbf16>, vector<8x8xf32> -> vector<8x8xf32>
    %46 = arith.addf %45, %20 : vector<8x8xf32>
    %cst_14 = arith.constant dense<0xFF800000> : vector<8xf32>
    %47 = vector.multi_reduction <maximumf>, %46, %cst_14 [1] : vector<8x8xf32> to vector<8xf32>
    %48 = vector.shape_cast %47 : vector<8xf32> to vector<8x1xf32>
    %49 = vector.broadcast %48 : vector<8x1xf32> to vector<8x8xf32>
    %50 = arith.subf %46, %49 : vector<8x8xf32>
    %51 = math.exp %50 : vector<8x8xf32>
    %cst_15 = arith.constant dense<0.000000e+00> : vector<8xf32>
    %52 = vector.multi_reduction <add>, %51, %cst_15 [1] : vector<8x8xf32> to vector<8xf32>
    %53 = vector.shape_cast %52 : vector<8xf32> to vector<8x1xf32>
    %54 = tpu.reciprocal %53 {approx = true} : vector<8x1xf32> -> vector<8x1xf32>
    %55 = vector.broadcast %54 : vector<8x1xf32> to vector<8x8xf32>
    %56 = arith.mulf %51, %55 : vector<8x8xf32>
    %57 = arith.truncf %56 : vector<8x8xf32> to vector<8x8xbf16>
    %58 = vector.extract_strided_slice %14 {offsets = [0, 128], sizes = [8, 128], strides = [1, 1]} : vector<8x256xf32> to vector<8x128xf32>
    %59 = arith.truncf %58 : vector<8x128xf32> to vector<8x128xbf16>
    %cst_16 = arith.constant dense<0.000000e+00> : vector<8x128xf32>
    %60 = tpu.matmul %57, %59, %cst_16 {dimension_numbers = #tpu.dot_dimension_numbers<[1], [0], [0], [1], [0, 0, 1, 1], [], []>} : vector<8x8xbf16>, vector<8x128xbf16>, vector<8x128xf32> -> vector<8x128xf32>
    %61 = tpu.concatenate %40, %60 in 1 : vector<8x128xf32>, vector<8x128xf32> -> vector<8x256xf32>
    %62 = arith.truncf %61 : vector<8x256xf32> to vector<8x256xbf16>
    %c0_17 = arith.constant 0 : index
    %c0_18 = arith.constant 0 : index
    %63 = vector.load %arg5[%c0_17, %c0_18] : memref<256x256xbf16, #tpu.memory_space<vmem>>, vector<256x256xbf16>
    %cst_19 = arith.constant dense<0.000000e+00> : vector<8x256xf32>
    %64 = tpu.matmul %62, %63, %cst_19 {dimension_numbers = #tpu.dot_dimension_numbers<[1], [0], [0], [1], [0, 0, 1, 1], [], []>} : vector<8x256xbf16>, vector<256x256xbf16>, vector<8x256xf32> -> vector<8x256xf32>
    %c0_20 = arith.constant 0 : index
    %c0_21 = arith.constant 0 : index
    %65 = vector.load %arg6[%c0_20, %c0_21] : memref<1x256xf32, #tpu.memory_space<vmem>>, vector<1x256xf32>
    %66 = vector.broadcast %65 : vector<1x256xf32> to vector<8x256xf32>
    %67 = arith.addf %64, %66 : vector<8x256xf32>
    %68 = arith.addf %67, %3 : vector<8x256xf32>
    %c0_22 = arith.constant 0 : index
    %c0_23 = arith.constant 0 : index
    %69 = vector.load %arg7[%c0_22, %c0_23] : memref<1x256xf32, #tpu.memory_space<vmem>>, vector<1x256xf32>
    %c0_24 = arith.constant 0 : index
    %c0_25 = arith.constant 0 : index
    %70 = vector.load %arg8[%c0_24, %c0_25] : memref<1x256xf32, #tpu.memory_space<vmem>>, vector<1x256xf32>
    %cst_26 = arith.constant dense<0.000000e+00> : vector<8xf32>
    %71 = vector.multi_reduction <add>, %68, %cst_26 [1] : vector<8x256xf32> to vector<8xf32>
    %72 = vector.shape_cast %71 : vector<8xf32> to vector<8x1xf32>
    %cst_27 = arith.constant 2.560000e+02 : f32
    %73 = vector.broadcast %cst_27 : f32 to vector<8x1xf32>
    %74 = arith.divf %72, %73 : vector<8x1xf32>
    %75 = vector.broadcast %74 : vector<8x1xf32> to vector<8x256xf32>
    %76 = arith.subf %68, %75 : vector<8x256xf32>
    %77 = arith.mulf %76, %76 : vector<8x256xf32>
    %cst_28 = arith.constant dense<0.000000e+00> : vector<8xf32>
    %78 = vector.multi_reduction <add>, %77, %cst_28 [1] : vector<8x256xf32> to vector<8xf32>
    %79 = vector.shape_cast %78 : vector<8xf32> to vector<8x1xf32>
    %cst_29 = arith.constant 2.560000e+02 : f32
    %80 = vector.broadcast %cst_29 : f32 to vector<8x1xf32>
    %81 = arith.divf %79, %80 : vector<8x1xf32>
    %cst_30 = arith.constant 9.99999974E-6 : f32
    %82 = vector.broadcast %cst_30 : f32 to vector<8x1xf32>
    %83 = arith.addf %81, %82 : vector<8x1xf32>
    %84 = math.rsqrt %83 : vector<8x1xf32>
    %85 = vector.broadcast %84 : vector<8x1xf32> to vector<8x256xf32>
    %86 = arith.mulf %76, %85 : vector<8x256xf32>
    %87 = vector.broadcast %69 : vector<1x256xf32> to vector<8x256xf32>
    %88 = arith.mulf %86, %87 : vector<8x256xf32>
    %89 = vector.broadcast %70 : vector<1x256xf32> to vector<8x256xf32>
    %90 = arith.addf %88, %89 : vector<8x256xf32>
    %91 = tpu.iota {dimensions = array<i32: 0>} : vector<8x1xi32>
    %92 = vector.broadcast %1 : i32 to vector<8x1xi32>
    %93 = arith.cmpi slt, %91, %92 : vector<8x1xi32>
    %94 = arith.extui %93 : vector<8x1xi1> to vector<8x1xi32>
    %95 = arith.sitofp %94 : vector<8x1xi32> to vector<8x1xf32>
    %96 = vector.broadcast %95 : vector<8x1xf32> to vector<8x256xf32>
    %97 = arith.mulf %90, %96 : vector<8x256xf32>
    %c1_i32 = arith.constant 1 : i32
    %98 = tpu.dynamic_rotate %97 by %c1_i32 dim 0 : vector<8x256xf32>, i32 -> vector<8x256xf32>
    %c1_i32_31 = arith.constant 1 : i32
    %99 = vector.broadcast %c1_i32_31 : i32 to vector<8x1xi32>
    %100 = arith.cmpi sge, %91, %99 : vector<8x1xi32>
    %cst_32 = arith.constant 0.000000e+00 : f32
    %101 = vector.shape_cast %100 : vector<8x1xi1> to vector<8x1xi1>
    %102 = vector.broadcast %101 : vector<8x1xi1> to vector<8x256xi1>
    %103 = vector.broadcast %cst_32 : f32 to vector<8x256xf32>
    %104 = arith.select %102, %98, %103 : vector<8x256xi1>, vector<8x256xf32>
    %c7_i32 = arith.constant 7 : i32
    %105 = tpu.dynamic_rotate %97 by %c7_i32 dim 0 : vector<8x256xf32>, i32 -> vector<8x256xf32>
    %c7_i32_33 = arith.constant 7 : i32
    %106 = vector.broadcast %c7_i32_33 : i32 to vector<8x1xi32>
    %107 = arith.cmpi slt, %91, %106 : vector<8x1xi32>
    %cst_34 = arith.constant 0.000000e+00 : f32
    %108 = vector.shape_cast %107 : vector<8x1xi1> to vector<8x1xi1>
    %109 = vector.broadcast %108 : vector<8x1xi1> to vector<8x256xi1>
    %110 = vector.broadcast %cst_34 : f32 to vector<8x256xf32>
    %111 = arith.select %109, %105, %110 : vector<8x256xi1>, vector<8x256xf32>
    %112 = tpu.concatenate %104, %97, %111 in 1 : vector<8x256xf32>, vector<8x256xf32>, vector<8x256xf32> -> vector<8x768xf32>
    %113 = arith.truncf %112 : vector<8x768xf32> to vector<8x768xbf16>
    %c0_35 = arith.constant 0 : index
    %c0_36 = arith.constant 0 : index
    %114 = vector.load %arg9[%c0_35, %c0_36] : memref<768x256xbf16, #tpu.memory_space<vmem>>, vector<768x256xbf16>
    %cst_37 = arith.constant dense<0.000000e+00> : vector<8x256xf32>
    %115 = tpu.matmul %113, %114, %cst_37 {dimension_numbers = #tpu.dot_dimension_numbers<[1], [0], [0], [1], [0, 0, 1, 1], [], []>} : vector<8x768xbf16>, vector<768x256xbf16>, vector<8x256xf32> -> vector<8x256xf32>
    %c0_38 = arith.constant 0 : index
    %c0_39 = arith.constant 0 : index
    %116 = vector.load %arg10[%c0_38, %c0_39] : memref<1x256xf32, #tpu.memory_space<vmem>>, vector<1x256xf32>
    %117 = vector.broadcast %116 : vector<1x256xf32> to vector<8x256xf32>
    %118 = arith.addf %115, %117 : vector<8x256xf32>
    %cst_40 = arith.constant 0.000000e+00 : f32
    %119 = vector.broadcast %cst_40 : f32 to vector<8x256xf32>
    %120 = arith.maximumf %118, %119 : vector<8x256xf32>
    %c1_i32_41 = arith.constant 1 : i32
    %121 = tpu.dynamic_rotate %120 by %c1_i32_41 dim 0 : vector<8x256xf32>, i32 -> vector<8x256xf32>
    %c1_i32_42 = arith.constant 1 : i32
    %122 = vector.broadcast %c1_i32_42 : i32 to vector<8x1xi32>
    %123 = arith.cmpi sge, %91, %122 : vector<8x1xi32>
    %cst_43 = arith.constant 0.000000e+00 : f32
    %124 = vector.shape_cast %123 : vector<8x1xi1> to vector<8x1xi1>
    %125 = vector.broadcast %124 : vector<8x1xi1> to vector<8x256xi1>
    %126 = vector.broadcast %cst_43 : f32 to vector<8x256xf32>
    %127 = arith.select %125, %121, %126 : vector<8x256xi1>, vector<8x256xf32>
    %c7_i32_44 = arith.constant 7 : i32
    %128 = tpu.dynamic_rotate %120 by %c7_i32_44 dim 0 : vector<8x256xf32>, i32 -> vector<8x256xf32>
    %c7_i32_45 = arith.constant 7 : i32
    %129 = vector.broadcast %c7_i32_45 : i32 to vector<8x1xi32>
    %130 = arith.cmpi slt, %91, %129 : vector<8x1xi32>
    %cst_46 = arith.constant 0.000000e+00 : f32
    %131 = vector.shape_cast %130 : vector<8x1xi1> to vector<8x1xi1>
    %132 = vector.broadcast %131 : vector<8x1xi1> to vector<8x256xi1>
    %133 = vector.broadcast %cst_46 : f32 to vector<8x256xf32>
    %134 = arith.select %132, %128, %133 : vector<8x256xi1>, vector<8x256xf32>
    %135 = tpu.concatenate %127, %120, %134 in 1 : vector<8x256xf32>, vector<8x256xf32>, vector<8x256xf32> -> vector<8x768xf32>
    %136 = arith.truncf %135 : vector<8x768xf32> to vector<8x768xbf16>
    %c0_47 = arith.constant 0 : index
    %c0_48 = arith.constant 0 : index
    %137 = vector.load %arg11[%c0_47, %c0_48] : memref<768x256xbf16, #tpu.memory_space<vmem>>, vector<768x256xbf16>
    %cst_49 = arith.constant dense<0.000000e+00> : vector<8x256xf32>
    %138 = tpu.matmul %136, %137, %cst_49 {dimension_numbers = #tpu.dot_dimension_numbers<[1], [0], [0], [1], [0, 0, 1, 1], [], []>} : vector<8x768xbf16>, vector<768x256xbf16>, vector<8x256xf32> -> vector<8x256xf32>
    %c0_50 = arith.constant 0 : index
    %c0_51 = arith.constant 0 : index
    %139 = vector.load %arg12[%c0_50, %c0_51] : memref<1x256xf32, #tpu.memory_space<vmem>>, vector<1x256xf32>
    %140 = vector.broadcast %139 : vector<1x256xf32> to vector<8x256xf32>
    %141 = arith.addf %138, %140 : vector<8x256xf32>
    %142 = arith.addf %141, %97 : vector<8x256xf32>
    %c0_52 = arith.constant 0 : index
    %c0_53 = arith.constant 0 : index
    %143 = vector.load %arg13[%c0_52, %c0_53] : memref<1x256xf32, #tpu.memory_space<vmem>>, vector<1x256xf32>
    %c0_54 = arith.constant 0 : index
    %c0_55 = arith.constant 0 : index
    %144 = vector.load %arg14[%c0_54, %c0_55] : memref<1x256xf32, #tpu.memory_space<vmem>>, vector<1x256xf32>
    %cst_56 = arith.constant dense<0.000000e+00> : vector<8xf32>
    %145 = vector.multi_reduction <add>, %142, %cst_56 [1] : vector<8x256xf32> to vector<8xf32>
    %146 = vector.shape_cast %145 : vector<8xf32> to vector<8x1xf32>
    %cst_57 = arith.constant 2.560000e+02 : f32
    %147 = vector.broadcast %cst_57 : f32 to vector<8x1xf32>
    %148 = arith.divf %146, %147 : vector<8x1xf32>
    %149 = vector.broadcast %148 : vector<8x1xf32> to vector<8x256xf32>
    %150 = arith.subf %142, %149 : vector<8x256xf32>
    %151 = arith.mulf %150, %150 : vector<8x256xf32>
    %cst_58 = arith.constant dense<0.000000e+00> : vector<8xf32>
    %152 = vector.multi_reduction <add>, %151, %cst_58 [1] : vector<8x256xf32> to vector<8xf32>
    %153 = vector.shape_cast %152 : vector<8xf32> to vector<8x1xf32>
    %cst_59 = arith.constant 2.560000e+02 : f32
    %154 = vector.broadcast %cst_59 : f32 to vector<8x1xf32>
    %155 = arith.divf %153, %154 : vector<8x1xf32>
    %cst_60 = arith.constant 9.99999974E-6 : f32
    %156 = vector.broadcast %cst_60 : f32 to vector<8x1xf32>
    %157 = arith.addf %155, %156 : vector<8x1xf32>
    %158 = math.rsqrt %157 : vector<8x1xf32>
    %159 = vector.broadcast %158 : vector<8x1xf32> to vector<8x256xf32>
    %160 = arith.mulf %150, %159 : vector<8x256xf32>
    %161 = vector.broadcast %143 : vector<1x256xf32> to vector<8x256xf32>
    %162 = arith.mulf %160, %161 : vector<8x256xf32>
    %163 = vector.broadcast %144 : vector<1x256xf32> to vector<8x256xf32>
    %164 = arith.addf %162, %163 : vector<8x256xf32>
    %165 = vector.broadcast %95 : vector<8x1xf32> to vector<8x256xf32>
    %166 = arith.mulf %164, %165 : vector<8x256xf32>
    %c0_61 = arith.constant 0 : index
    %c0_62 = arith.constant 0 : index
    %c0_63 = arith.constant 0 : index
    %167 = vector.load %arg15[%c0_61, %c0_62, %c0_63] : memref<1x8x256xf32, #tpu.memory_space<vmem>>, vector<1x8x256xf32>
    %168 = vector.shape_cast %167 : vector<1x8x256xf32> to vector<8x256xf32>
    %169 = vector.shape_cast %166 : vector<8x256xf32> to vector<1x8x256xf32>
    tpu.vector_store %arg15[%c0_61, %c0_62, %c0_63], %169 {strides = array<i32>} : memref<1x8x256xf32, #tpu.memory_space<vmem>>, vector<1x8x256xf32>,
    return
  }
  func.func @transform_0(%arg0: i32, %arg1: memref<2xi32, #tpu.memory_space<smem>>) -> (i32, i32, i32) {
    %c0_i32 = arith.constant 0 : i32
    %c0_i32_0 = arith.constant 0 : i32
    %c0_i32_1 = arith.constant 0 : i32
    return %arg0, %c0_i32, %c0_i32_0 : i32, i32, i32
  }
  func.func @transform_1(%arg0: i32, %arg1: memref<2xi32, #tpu.memory_space<smem>>) -> (i32, i32) {
    %c0_i32 = arith.constant 0 : i32
    %c0_i32_0 = arith.constant 0 : i32
    %c0_i32_1 = arith.constant 0 : i32
    return %c0_i32, %c0_i32_0 : i32, i32
  }
  func.func @transform_2(%arg0: i32, %arg1: memref<2xi32, #tpu.memory_space<smem>>) -> (i32, i32) {
    %c0_i32 = arith.constant 0 : i32
    %c0_i32_0 = arith.constant 0 : i32
    %c0_i32_1 = arith.constant 0 : i32
    return %c0_i32, %c0_i32_0 : i32, i32
  }
  func.func @transform_3(%arg0: i32, %arg1: memref<2xi32, #tpu.memory_space<smem>>) -> (i32, i32) {
    %c0_i32 = arith.constant 0 : i32
    %c0_i32_0 = arith.constant 0 : i32
    %c0_i32_1 = arith.constant 0 : i32
    return %c0_i32, %c0_i32_0 : i32, i32
  }
  func.func @transform_4(%arg0: i32, %arg1: memref<2xi32, #tpu.memory_space<smem>>) -> (i32, i32) {
    %c0_i32 = arith.constant 0 : i32
    %c0_i32_0 = arith.constant 0 : i32
    %c0_i32_1 = arith.constant 0 : i32
    return %c0_i32, %c0_i32_0 : i32, i32
  }
  func.func @transform_5(%arg0: i32, %arg1: memref<2xi32, #tpu.memory_space<smem>>) -> (i32, i32) {
    %c0_i32 = arith.constant 0 : i32
    %c0_i32_0 = arith.constant 0 : i32
    %c0_i32_1 = arith.constant 0 : i32
    return %c0_i32, %c0_i32_0 : i32, i32
  }
  func.func @transform_6(%arg0: i32, %arg1: memref<2xi32, #tpu.memory_space<smem>>) -> (i32, i32) {
    %c0_i32 = arith.constant 0 : i32
    %c0_i32_0 = arith.constant 0 : i32
    %c0_i32_1 = arith.constant 0 : i32
    return %c0_i32, %c0_i32_0 : i32, i32
  }
  func.func @transform_7(%arg0: i32, %arg1: memref<2xi32, #tpu.memory_space<smem>>) -> (i32, i32) {
    %c0_i32 = arith.constant 0 : i32
    %c0_i32_0 = arith.constant 0 : i32
    %c0_i32_1 = arith.constant 0 : i32
    return %c0_i32, %c0_i32_0 : i32, i32
  }
  func.func @transform_8(%arg0: i32, %arg1: memref<2xi32, #tpu.memory_space<smem>>) -> (i32, i32) {
    %c0_i32 = arith.constant 0 : i32
    %c0_i32_0 = arith.constant 0 : i32
    %c0_i32_1 = arith.constant 0 : i32
    return %c0_i32, %c0_i32_0 : i32, i32
  }
  func.func @transform_9(%arg0: i32, %arg1: memref<2xi32, #tpu.memory_space<smem>>) -> (i32, i32) {
    %c0_i32 = arith.constant 0 : i32
    %c0_i32_0 = arith.constant 0 : i32
    %c0_i32_1 = arith.constant 0 : i32
    return %c0_i32, %c0_i32_0 : i32, i32
  }
  func.func @transform_10(%arg0: i32, %arg1: memref<2xi32, #tpu.memory_space<smem>>) -> (i32, i32) {
    %c0_i32 = arith.constant 0 : i32
    %c0_i32_0 = arith.constant 0 : i32
    %c0_i32_1 = arith.constant 0 : i32
    return %c0_i32, %c0_i32_0 : i32, i32
  }
  func.func @transform_11(%arg0: i32, %arg1: memref<2xi32, #tpu.memory_space<smem>>) -> (i32, i32) {
    %c0_i32 = arith.constant 0 : i32
    %c0_i32_0 = arith.constant 0 : i32
    %c0_i32_1 = arith.constant 0 : i32
    return %c0_i32, %c0_i32_0 : i32, i32
  }
  func.func @transform_12(%arg0: i32, %arg1: memref<2xi32, #tpu.memory_space<smem>>) -> (i32, i32) {
    %c0_i32 = arith.constant 0 : i32
    %c0_i32_0 = arith.constant 0 : i32
    %c0_i32_1 = arith.constant 0 : i32
    return %c0_i32, %c0_i32_0 : i32, i32
  }
  func.func @transform_13(%arg0: i32, %arg1: memref<2xi32, #tpu.memory_space<smem>>) -> (i32, i32, i32) {
    %c0_i32 = arith.constant 0 : i32
    %c0_i32_0 = arith.constant 0 : i32
    %c0_i32_1 = arith.constant 0 : i32
    return %arg0, %c0_i32, %c0_i32_0 : i32, i32, i32
  }
}

module attributes {stable_mosaic.version = 11 : i64} {
  func.func @_gate_kernel(%arg0: i32, %arg1: memref<2xi32, #tpu.memory_space<smem>>, %arg2: memref<1x8x256xf32, #tpu.memory_space<vmem>>, %arg3: memref<1x8x256xf32, #tpu.memory_space<vmem>>, %arg4: memref<1x8x256xf32, #tpu.memory_space<vmem>>) attributes {dimension_semantics = [#tpu.dimension_semantics<parallel>], iteration_bounds = array<i64: 2>, scalar_prefetch = 1 : i64, scratch_operands = 0 : i64, tpu.core_type = #tpu.core_type<tc>, window_params = [{transform_indices = @transform_0, window_bounds = array<i64: 1, 8, 256>}, {transform_indices = @transform_1, window_bounds = array<i64: 1, 8, 256>}, {transform_indices = @transform_2, window_bounds = array<i64: 1, 8, 256>}]} {
    %0 = arith.index_cast %arg0 : i32 to index
    %1 = memref.load %arg1[%0] : memref<2xi32, #tpu.memory_space<smem>>
    %c0 = arith.constant 0 : index
    %c0_0 = arith.constant 0 : index
    %c0_1 = arith.constant 0 : index
    %2 = vector.load %arg2[%c0, %c0_0, %c0_1] : memref<1x8x256xf32, #tpu.memory_space<vmem>>, vector<1x8x256xf32>
    %3 = vector.shape_cast %2 : vector<1x8x256xf32> to vector<8x256xf32>
    %c0_2 = arith.constant 0 : index
    %c0_3 = arith.constant 0 : index
    %c0_4 = arith.constant 0 : index
    %4 = vector.load %arg3[%c0_2, %c0_3, %c0_4] : memref<1x8x256xf32, #tpu.memory_space<vmem>>, vector<1x8x256xf32>
    %5 = vector.shape_cast %4 : vector<1x8x256xf32> to vector<8x256xf32>
    %6 = arith.addf %3, %5 : vector<8x256xf32>
    %7 = tpu.iota {dimensions = array<i32: 0>} : vector<8x1xi32>
    %8 = vector.broadcast %1 : i32 to vector<8x1xi32>
    %9 = arith.cmpi slt, %7, %8 : vector<8x1xi32>
    %10 = arith.extui %9 : vector<8x1xi1> to vector<8x1xi32>
    %11 = arith.sitofp %10 : vector<8x1xi32> to vector<8x1xf32>
    %12 = math.tanh %6 : vector<8x256xf32>
    %13 = arith.negf %6 : vector<8x256xf32>
    %14 = math.exp %13 : vector<8x256xf32>
    %cst = arith.constant 1.000000e+00 : f32
    %15 = vector.broadcast %cst : f32 to vector<8x256xf32>
    %16 = arith.addf %15, %14 : vector<8x256xf32>
    %17 = arith.divf %15, %16 : vector<8x256xf32>
    %18 = arith.mulf %12, %17 : vector<8x256xf32>
    %19 = vector.broadcast %11 : vector<8x1xf32> to vector<8x256xf32>
    %20 = arith.mulf %18, %19 : vector<8x256xf32>
    %c0_5 = arith.constant 0 : index
    %c0_6 = arith.constant 0 : index
    %c0_7 = arith.constant 0 : index
    %21 = vector.load %arg4[%c0_5, %c0_6, %c0_7] : memref<1x8x256xf32, #tpu.memory_space<vmem>>, vector<1x8x256xf32>
    %22 = vector.shape_cast %21 : vector<1x8x256xf32> to vector<8x256xf32>
    %23 = vector.shape_cast %20 : vector<8x256xf32> to vector<1x8x256xf32>
    tpu.vector_store %arg4[%c0_5, %c0_6, %c0_7], %23 {strides = array<i32>} : memref<1x8x256xf32, #tpu.memory_space<vmem>>, vector<1x8x256xf32>,
    return
  }
  func.func @transform_0(%arg0: i32, %arg1: memref<2xi32, #tpu.memory_space<smem>>) -> (i32, i32, i32) {
    %c0_i32 = arith.constant 0 : i32
    %c0_i32_0 = arith.constant 0 : i32
    %c0_i32_1 = arith.constant 0 : i32
    return %arg0, %c0_i32, %c0_i32_0 : i32, i32, i32
  }
  func.func @transform_1(%arg0: i32, %arg1: memref<2xi32, #tpu.memory_space<smem>>) -> (i32, i32, i32) {
    %c0_i32 = arith.constant 0 : i32
    %c0_i32_0 = arith.constant 0 : i32
    %c0_i32_1 = arith.constant 0 : i32
    return %arg0, %c0_i32, %c0_i32_0 : i32, i32, i32
  }
  func.func @transform_2(%arg0: i32, %arg1: memref<2xi32, #tpu.memory_space<smem>>) -> (i32, i32, i32) {
    %c0_i32 = arith.constant 0 : i32
    %c0_i32_0 = arith.constant 0 : i32
    %c0_i32_1 = arith.constant 0 : i32
    return %arg0, %c0_i32, %c0_i32_0 : i32, i32, i32
  }
}

module attributes {stable_mosaic.version = 11 : i64} {
  func.func @_dp_kernel(%arg0: i32, %arg1: memref<2xi32, #tpu.memory_space<smem>>, %arg2: memref<1x8x256xf32, #tpu.memory_space<vmem>>, %arg3: memref<768x256xbf16, #tpu.memory_space<vmem>>, %arg4: memref<1x256xf32, #tpu.memory_space<vmem>>, %arg5: memref<1x256xf32, #tpu.memory_space<vmem>>, %arg6: memref<1x256xf32, #tpu.memory_space<vmem>>, %arg7: memref<768x256xbf16, #tpu.memory_space<vmem>>, %arg8: memref<1x256xf32, #tpu.memory_space<vmem>>, %arg9: memref<1x256xf32, #tpu.memory_space<vmem>>, %arg10: memref<1x256xf32, #tpu.memory_space<vmem>>, %arg11: memref<256x128xbf16, #tpu.memory_space<vmem>>, %arg12: memref<1x128xf32, #tpu.memory_space<vmem>>, %arg13: memref<1x8x128xf32, #tpu.memory_space<vmem>>) attributes {dimension_semantics = [#tpu.dimension_semantics<parallel>], iteration_bounds = array<i64: 2>, scalar_prefetch = 1 : i64, scratch_operands = 0 : i64, tpu.core_type = #tpu.core_type<tc>, window_params = [{transform_indices = @transform_0, window_bounds = array<i64: 1, 8, 256>}, {pipeline_mode = #tpu.pipeline_mode<synchronous>, transform_indices = @transform_1, window_bounds = array<i64: 768, 256>}, {pipeline_mode = #tpu.pipeline_mode<synchronous>, transform_indices = @transform_2, window_bounds = array<i64: 1, 256>}, {pipeline_mode = #tpu.pipeline_mode<synchronous>, transform_indices = @transform_3, window_bounds = array<i64: 1, 256>}, {pipeline_mode = #tpu.pipeline_mode<synchronous>, transform_indices = @transform_4, window_bounds = array<i64: 1, 256>}, {pipeline_mode = #tpu.pipeline_mode<synchronous>, transform_indices = @transform_5, window_bounds = array<i64: 768, 256>}, {pipeline_mode = #tpu.pipeline_mode<synchronous>, transform_indices = @transform_6, window_bounds = array<i64: 1, 256>}, {pipeline_mode = #tpu.pipeline_mode<synchronous>, transform_indices = @transform_7, window_bounds = array<i64: 1, 256>}, {pipeline_mode = #tpu.pipeline_mode<synchronous>, transform_indices = @transform_8, window_bounds = array<i64: 1, 256>}, {pipeline_mode = #tpu.pipeline_mode<synchronous>, transform_indices = @transform_9, window_bounds = array<i64: 256, 128>}, {pipeline_mode = #tpu.pipeline_mode<synchronous>, transform_indices = @transform_10, window_bounds = array<i64: 1, 128>}, {transform_indices = @transform_11, window_bounds = array<i64: 1, 8, 128>}]} {
    %0 = arith.index_cast %arg0 : i32 to index
    %1 = memref.load %arg1[%0] : memref<2xi32, #tpu.memory_space<smem>>
    %c0 = arith.constant 0 : index
    %c0_0 = arith.constant 0 : index
    %c0_1 = arith.constant 0 : index
    %2 = vector.load %arg2[%c0, %c0_0, %c0_1] : memref<1x8x256xf32, #tpu.memory_space<vmem>>, vector<1x8x256xf32>
    %3 = vector.shape_cast %2 : vector<1x8x256xf32> to vector<8x256xf32>
    %4 = tpu.iota {dimensions = array<i32: 0>} : vector<8x1xi32>
    %c1_i32 = arith.constant 1 : i32
    %5 = tpu.dynamic_rotate %3 by %c1_i32 dim 0 : vector<8x256xf32>, i32 -> vector<8x256xf32>
    %c1_i32_2 = arith.constant 1 : i32
    %6 = vector.broadcast %c1_i32_2 : i32 to vector<8x1xi32>
    %7 = arith.cmpi sge, %4, %6 : vector<8x1xi32>
    %cst = arith.constant 0.000000e+00 : f32
    %8 = vector.shape_cast %7 : vector<8x1xi1> to vector<8x1xi1>
    %9 = vector.broadcast %8 : vector<8x1xi1> to vector<8x256xi1>
    %10 = vector.broadcast %cst : f32 to vector<8x256xf32>
    %11 = arith.select %9, %5, %10 : vector<8x256xi1>, vector<8x256xf32>
    %c7_i32 = arith.constant 7 : i32
    %12 = tpu.dynamic_rotate %3 by %c7_i32 dim 0 : vector<8x256xf32>, i32 -> vector<8x256xf32>
    %c7_i32_3 = arith.constant 7 : i32
    %13 = vector.broadcast %c7_i32_3 : i32 to vector<8x1xi32>
    %14 = arith.cmpi slt, %4, %13 : vector<8x1xi32>
    %cst_4 = arith.constant 0.000000e+00 : f32
    %15 = vector.shape_cast %14 : vector<8x1xi1> to vector<8x1xi1>
    %16 = vector.broadcast %15 : vector<8x1xi1> to vector<8x256xi1>
    %17 = vector.broadcast %cst_4 : f32 to vector<8x256xf32>
    %18 = arith.select %16, %12, %17 : vector<8x256xi1>, vector<8x256xf32>
    %19 = tpu.concatenate %11, %3, %18 in 1 : vector<8x256xf32>, vector<8x256xf32>, vector<8x256xf32> -> vector<8x768xf32>
    %20 = arith.truncf %19 : vector<8x768xf32> to vector<8x768xbf16>
    %c0_5 = arith.constant 0 : index
    %c0_6 = arith.constant 0 : index
    %21 = vector.load %arg3[%c0_5, %c0_6] : memref<768x256xbf16, #tpu.memory_space<vmem>>, vector<768x256xbf16>
    %cst_7 = arith.constant dense<0.000000e+00> : vector<8x256xf32>
    %22 = tpu.matmul %20, %21, %cst_7 {dimension_numbers = #tpu.dot_dimension_numbers<[1], [0], [0], [1], [0, 0, 1, 1], [], []>} : vector<8x768xbf16>, vector<768x256xbf16>, vector<8x256xf32> -> vector<8x256xf32>
    %c0_8 = arith.constant 0 : index
    %c0_9 = arith.constant 0 : index
    %23 = vector.load %arg4[%c0_8, %c0_9] : memref<1x256xf32, #tpu.memory_space<vmem>>, vector<1x256xf32>
    %24 = vector.broadcast %23 : vector<1x256xf32> to vector<8x256xf32>
    %25 = arith.addf %22, %24 : vector<8x256xf32>
    %cst_10 = arith.constant 0.000000e+00 : f32
    %26 = vector.broadcast %cst_10 : f32 to vector<8x256xf32>
    %27 = arith.maximumf %25, %26 : vector<8x256xf32>
    %c0_11 = arith.constant 0 : index
    %c0_12 = arith.constant 0 : index
    %28 = vector.load %arg5[%c0_11, %c0_12] : memref<1x256xf32, #tpu.memory_space<vmem>>, vector<1x256xf32>
    %c0_13 = arith.constant 0 : index
    %c0_14 = arith.constant 0 : index
    %29 = vector.load %arg6[%c0_13, %c0_14] : memref<1x256xf32, #tpu.memory_space<vmem>>, vector<1x256xf32>
    %cst_15 = arith.constant dense<0.000000e+00> : vector<8xf32>
    %30 = vector.multi_reduction <add>, %27, %cst_15 [1] : vector<8x256xf32> to vector<8xf32>
    %31 = vector.shape_cast %30 : vector<8xf32> to vector<8x1xf32>
    %cst_16 = arith.constant 2.560000e+02 : f32
    %32 = vector.broadcast %cst_16 : f32 to vector<8x1xf32>
    %33 = arith.divf %31, %32 : vector<8x1xf32>
    %34 = vector.broadcast %33 : vector<8x1xf32> to vector<8x256xf32>
    %35 = arith.subf %27, %34 : vector<8x256xf32>
    %36 = arith.mulf %35, %35 : vector<8x256xf32>
    %cst_17 = arith.constant dense<0.000000e+00> : vector<8xf32>
    %37 = vector.multi_reduction <add>, %36, %cst_17 [1] : vector<8x256xf32> to vector<8xf32>
    %38 = vector.shape_cast %37 : vector<8xf32> to vector<8x1xf32>
    %cst_18 = arith.constant 2.560000e+02 : f32
    %39 = vector.broadcast %cst_18 : f32 to vector<8x1xf32>
    %40 = arith.divf %38, %39 : vector<8x1xf32>
    %cst_19 = arith.constant 9.99999974E-6 : f32
    %41 = vector.broadcast %cst_19 : f32 to vector<8x1xf32>
    %42 = arith.addf %40, %41 : vector<8x1xf32>
    %43 = math.rsqrt %42 : vector<8x1xf32>
    %44 = vector.broadcast %43 : vector<8x1xf32> to vector<8x256xf32>
    %45 = arith.mulf %35, %44 : vector<8x256xf32>
    %46 = vector.broadcast %28 : vector<1x256xf32> to vector<8x256xf32>
    %47 = arith.mulf %45, %46 : vector<8x256xf32>
    %48 = vector.broadcast %29 : vector<1x256xf32> to vector<8x256xf32>
    %49 = arith.addf %47, %48 : vector<8x256xf32>
    %c1_i32_20 = arith.constant 1 : i32
    %50 = tpu.dynamic_rotate %49 by %c1_i32_20 dim 0 : vector<8x256xf32>, i32 -> vector<8x256xf32>
    %c1_i32_21 = arith.constant 1 : i32
    %51 = vector.broadcast %c1_i32_21 : i32 to vector<8x1xi32>
    %52 = arith.cmpi sge, %4, %51 : vector<8x1xi32>
    %cst_22 = arith.constant 0.000000e+00 : f32
    %53 = vector.shape_cast %52 : vector<8x1xi1> to vector<8x1xi1>
    %54 = vector.broadcast %53 : vector<8x1xi1> to vector<8x256xi1>
    %55 = vector.broadcast %cst_22 : f32 to vector<8x256xf32>
    %56 = arith.select %54, %50, %55 : vector<8x256xi1>, vector<8x256xf32>
    %c7_i32_23 = arith.constant 7 : i32
    %57 = tpu.dynamic_rotate %49 by %c7_i32_23 dim 0 : vector<8x256xf32>, i32 -> vector<8x256xf32>
    %c7_i32_24 = arith.constant 7 : i32
    %58 = vector.broadcast %c7_i32_24 : i32 to vector<8x1xi32>
    %59 = arith.cmpi slt, %4, %58 : vector<8x1xi32>
    %cst_25 = arith.constant 0.000000e+00 : f32
    %60 = vector.shape_cast %59 : vector<8x1xi1> to vector<8x1xi1>
    %61 = vector.broadcast %60 : vector<8x1xi1> to vector<8x256xi1>
    %62 = vector.broadcast %cst_25 : f32 to vector<8x256xf32>
    %63 = arith.select %61, %57, %62 : vector<8x256xi1>, vector<8x256xf32>
    %64 = tpu.concatenate %56, %49, %63 in 1 : vector<8x256xf32>, vector<8x256xf32>, vector<8x256xf32> -> vector<8x768xf32>
    %65 = arith.truncf %64 : vector<8x768xf32> to vector<8x768xbf16>
    %c0_26 = arith.constant 0 : index
    %c0_27 = arith.constant 0 : index
    %66 = vector.load %arg7[%c0_26, %c0_27] : memref<768x256xbf16, #tpu.memory_space<vmem>>, vector<768x256xbf16>
    %cst_28 = arith.constant dense<0.000000e+00> : vector<8x256xf32>
    %67 = tpu.matmul %65, %66, %cst_28 {dimension_numbers = #tpu.dot_dimension_numbers<[1], [0], [0], [1], [0, 0, 1, 1], [], []>} : vector<8x768xbf16>, vector<768x256xbf16>, vector<8x256xf32> -> vector<8x256xf32>
    %c0_29 = arith.constant 0 : index
    %c0_30 = arith.constant 0 : index
    %68 = vector.load %arg8[%c0_29, %c0_30] : memref<1x256xf32, #tpu.memory_space<vmem>>, vector<1x256xf32>
    %69 = vector.broadcast %68 : vector<1x256xf32> to vector<8x256xf32>
    %70 = arith.addf %67, %69 : vector<8x256xf32>
    %cst_31 = arith.constant 0.000000e+00 : f32
    %71 = vector.broadcast %cst_31 : f32 to vector<8x256xf32>
    %72 = arith.maximumf %70, %71 : vector<8x256xf32>
    %c0_32 = arith.constant 0 : index
    %c0_33 = arith.constant 0 : index
    %73 = vector.load %arg9[%c0_32, %c0_33] : memref<1x256xf32, #tpu.memory_space<vmem>>, vector<1x256xf32>
    %c0_34 = arith.constant 0 : index
    %c0_35 = arith.constant 0 : index
    %74 = vector.load %arg10[%c0_34, %c0_35] : memref<1x256xf32, #tpu.memory_space<vmem>>, vector<1x256xf32>
    %cst_36 = arith.constant dense<0.000000e+00> : vector<8xf32>
    %75 = vector.multi_reduction <add>, %72, %cst_36 [1] : vector<8x256xf32> to vector<8xf32>
    %76 = vector.shape_cast %75 : vector<8xf32> to vector<8x1xf32>
    %cst_37 = arith.constant 2.560000e+02 : f32
    %77 = vector.broadcast %cst_37 : f32 to vector<8x1xf32>
    %78 = arith.divf %76, %77 : vector<8x1xf32>
    %79 = vector.broadcast %78 : vector<8x1xf32> to vector<8x256xf32>
    %80 = arith.subf %72, %79 : vector<8x256xf32>
    %81 = arith.mulf %80, %80 : vector<8x256xf32>
    %cst_38 = arith.constant dense<0.000000e+00> : vector<8xf32>
    %82 = vector.multi_reduction <add>, %81, %cst_38 [1] : vector<8x256xf32> to vector<8xf32>
    %83 = vector.shape_cast %82 : vector<8xf32> to vector<8x1xf32>
    %cst_39 = arith.constant 2.560000e+02 : f32
    %84 = vector.broadcast %cst_39 : f32 to vector<8x1xf32>
    %85 = arith.divf %83, %84 : vector<8x1xf32>
    %cst_40 = arith.constant 9.99999974E-6 : f32
    %86 = vector.broadcast %cst_40 : f32 to vector<8x1xf32>
    %87 = arith.addf %85, %86 : vector<8x1xf32>
    %88 = math.rsqrt %87 : vector<8x1xf32>
    %89 = vector.broadcast %88 : vector<8x1xf32> to vector<8x256xf32>
    %90 = arith.mulf %80, %89 : vector<8x256xf32>
    %91 = vector.broadcast %73 : vector<1x256xf32> to vector<8x256xf32>
    %92 = arith.mulf %90, %91 : vector<8x256xf32>
    %93 = vector.broadcast %74 : vector<1x256xf32> to vector<8x256xf32>
    %94 = arith.addf %92, %93 : vector<8x256xf32>
    %95 = arith.truncf %94 : vector<8x256xf32> to vector<8x256xbf16>
    %c0_41 = arith.constant 0 : index
    %c0_42 = arith.constant 0 : index
    %96 = vector.load %arg11[%c0_41, %c0_42] : memref<256x128xbf16, #tpu.memory_space<vmem>>, vector<256x128xbf16>
    %cst_43 = arith.constant dense<0.000000e+00> : vector<8x128xf32>
    %97 = tpu.matmul %95, %96, %cst_43 {dimension_numbers = #tpu.dot_dimension_numbers<[1], [0], [0], [1], [0, 0, 1, 1], [], []>} : vector<8x256xbf16>, vector<256x128xbf16>, vector<8x128xf32> -> vector<8x128xf32>
    %c0_44 = arith.constant 0 : index
    %c0_45 = arith.constant 0 : index
    %98 = vector.load %arg12[%c0_44, %c0_45] : memref<1x128xf32, #tpu.memory_space<vmem>>, vector<1x128xf32>
    %99 = vector.broadcast %98 : vector<1x128xf32> to vector<8x128xf32>
    %100 = arith.addf %97, %99 : vector<8x128xf32>
    %101 = vector.broadcast %1 : i32 to vector<8x1xi32>
    %102 = arith.cmpi slt, %4, %101 : vector<8x1xi32>
    %103 = arith.extui %102 : vector<8x1xi1> to vector<8x1xi32>
    %104 = arith.sitofp %103 : vector<8x1xi32> to vector<8x1xf32>
    %105 = vector.broadcast %104 : vector<8x1xf32> to vector<8x128xf32>
    %106 = arith.mulf %100, %105 : vector<8x128xf32>
    %c0_46 = arith.constant 0 : index
    %c0_47 = arith.constant 0 : index
    %c0_48 = arith.constant 0 : index
    %107 = vector.load %arg13[%c0_46, %c0_47, %c0_48] : memref<1x8x128xf32, #tpu.memory_space<vmem>>, vector<1x8x128xf32>
    %108 = vector.shape_cast %107 : vector<1x8x128xf32> to vector<8x128xf32>
    %109 = vector.shape_cast %106 : vector<8x128xf32> to vector<1x8x128xf32>
    tpu.vector_store %arg13[%c0_46, %c0_47, %c0_48], %109 {strides = array<i32>} : memref<1x8x128xf32, #tpu.memory_space<vmem>>, vector<1x8x128xf32>,
    return
  }
  func.func @transform_0(%arg0: i32, %arg1: memref<2xi32, #tpu.memory_space<smem>>) -> (i32, i32, i32) {
    %c0_i32 = arith.constant 0 : i32
    %c0_i32_0 = arith.constant 0 : i32
    %c0_i32_1 = arith.constant 0 : i32
    return %arg0, %c0_i32, %c0_i32_0 : i32, i32, i32
  }
  func.func @transform_1(%arg0: i32, %arg1: memref<2xi32, #tpu.memory_space<smem>>) -> (i32, i32) {
    %c0_i32 = arith.constant 0 : i32
    %c0_i32_0 = arith.constant 0 : i32
    %c0_i32_1 = arith.constant 0 : i32
    return %c0_i32, %c0_i32_0 : i32, i32
  }
  func.func @transform_2(%arg0: i32, %arg1: memref<2xi32, #tpu.memory_space<smem>>) -> (i32, i32) {
    %c0_i32 = arith.constant 0 : i32
    %c0_i32_0 = arith.constant 0 : i32
    %c0_i32_1 = arith.constant 0 : i32
    return %c0_i32, %c0_i32_0 : i32, i32
  }
  func.func @transform_3(%arg0: i32, %arg1: memref<2xi32, #tpu.memory_space<smem>>) -> (i32, i32) {
    %c0_i32 = arith.constant 0 : i32
    %c0_i32_0 = arith.constant 0 : i32
    %c0_i32_1 = arith.constant 0 : i32
    return %c0_i32, %c0_i32_0 : i32, i32
  }
  func.func @transform_4(%arg0: i32, %arg1: memref<2xi32, #tpu.memory_space<smem>>) -> (i32, i32) {
    %c0_i32 = arith.constant 0 : i32
    %c0_i32_0 = arith.constant 0 : i32
    %c0_i32_1 = arith.constant 0 : i32
    return %c0_i32, %c0_i32_0 : i32, i32
  }
  func.func @transform_5(%arg0: i32, %arg1: memref<2xi32, #tpu.memory_space<smem>>) -> (i32, i32) {
    %c0_i32 = arith.constant 0 : i32
    %c0_i32_0 = arith.constant 0 : i32
    %c0_i32_1 = arith.constant 0 : i32
    return %c0_i32, %c0_i32_0 : i32, i32
  }
  func.func @transform_6(%arg0: i32, %arg1: memref<2xi32, #tpu.memory_space<smem>>) -> (i32, i32) {
    %c0_i32 = arith.constant 0 : i32
    %c0_i32_0 = arith.constant 0 : i32
    %c0_i32_1 = arith.constant 0 : i32
    return %c0_i32, %c0_i32_0 : i32, i32
  }
  func.func @transform_7(%arg0: i32, %arg1: memref<2xi32, #tpu.memory_space<smem>>) -> (i32, i32) {
    %c0_i32 = arith.constant 0 : i32
    %c0_i32_0 = arith.constant 0 : i32
    %c0_i32_1 = arith.constant 0 : i32
    return %c0_i32, %c0_i32_0 : i32, i32
  }
  func.func @transform_8(%arg0: i32, %arg1: memref<2xi32, #tpu.memory_space<smem>>) -> (i32, i32) {
    %c0_i32 = arith.constant 0 : i32
    %c0_i32_0 = arith.constant 0 : i32
    %c0_i32_1 = arith.constant 0 : i32
    return %c0_i32, %c0_i32_0 : i32, i32
  }
  func.func @transform_9(%arg0: i32, %arg1: memref<2xi32, #tpu.memory_space<smem>>) -> (i32, i32) {
    %c0_i32 = arith.constant 0 : i32
    %c0_i32_0 = arith.constant 0 : i32
    %c0_i32_1 = arith.constant 0 : i32
    return %c0_i32, %c0_i32_0 : i32, i32
  }
  func.func @transform_10(%arg0: i32, %arg1: memref<2xi32, #tpu.memory_space<smem>>) -> (i32, i32) {
    %c0_i32 = arith.constant 0 : i32
    %c0_i32_0 = arith.constant 0 : i32
    %c0_i32_1 = arith.constant 0 : i32
    return %c0_i32, %c0_i32_0 : i32, i32
  }
  func.func @transform_11(%arg0: i32, %arg1: memref<2xi32, #tpu.memory_space<smem>>) -> (i32, i32, i32) {
    %c0_i32 = arith.constant 0 : i32
    %c0_i32_0 = arith.constant 0 : i32
    %c0_i32_1 = arith.constant 0 : i32
    return %arg0, %c0_i32, %c0_i32_0 : i32, i32, i32
  }
}

module attributes {stable_mosaic.version = 11 : i64} {
  func.func @_fft_block_kernel(%arg0: i32, %arg1: memref<2xi32, #tpu.memory_space<smem>>, %arg2: memref<1x8x256xf32, #tpu.memory_space<vmem>>, %arg3: memref<256x768xbf16, #tpu.memory_space<vmem>>, %arg4: memref<1x768xf32, #tpu.memory_space<vmem>>, %arg5: memref<256x256xbf16, #tpu.memory_space<vmem>>, %arg6: memref<1x256xf32, #tpu.memory_space<vmem>>, %arg7: memref<1x256xf32, #tpu.memory_space<vmem>>, %arg8: memref<1x256xf32, #tpu.memory_space<vmem>>, %arg9: memref<768x256xbf16, #tpu.memory_space<vmem>>, %arg10: memref<1x256xf32, #tpu.memory_space<vmem>>, %arg11: memref<768x256xbf16, #tpu.memory_space<vmem>>, %arg12: memref<1x256xf32, #tpu.memory_space<vmem>>, %arg13: memref<1x256xf32, #tpu.memory_space<vmem>>, %arg14: memref<1x256xf32, #tpu.memory_space<vmem>>, %arg15: memref<1x8x256xf32, #tpu.memory_space<vmem>>) attributes {dimension_semantics = [#tpu.dimension_semantics<parallel>], iteration_bounds = array<i64: 2>, scalar_prefetch = 1 : i64, scratch_operands = 0 : i64, tpu.core_type = #tpu.core_type<tc>, window_params = [{transform_indices = @transform_0, window_bounds = array<i64: 1, 8, 256>}, {pipeline_mode = #tpu.pipeline_mode<synchronous>, transform_indices = @transform_1, window_bounds = array<i64: 256, 768>}, {pipeline_mode = #tpu.pipeline_mode<synchronous>, transform_indices = @transform_2, window_bounds = array<i64: 1, 768>}, {pipeline_mode = #tpu.pipeline_mode<synchronous>, transform_indices = @transform_3, window_bounds = array<i64: 256, 256>}, {pipeline_mode = #tpu.pipeline_mode<synchronous>, transform_indices = @transform_4, window_bounds = array<i64: 1, 256>}, {pipeline_mode = #tpu.pipeline_mode<synchronous>, transform_indices = @transform_5, window_bounds = array<i64: 1, 256>}, {pipeline_mode = #tpu.pipeline_mode<synchronous>, transform_indices = @transform_6, window_bounds = array<i64: 1, 256>}, {pipeline_mode = #tpu.pipeline_mode<synchronous>, transform_indices = @transform_7, window_bounds = array<i64: 768, 256>}, {pipeline_mode = #tpu.pipeline_mode<synchronous>, transform_indices = @transform_8, window_bounds = array<i64: 1, 256>}, {pipeline_mode = #tpu.pipeline_mode<synchronous>, transform_indices = @transform_9, window_bounds = array<i64: 768, 256>}, {pipeline_mode = #tpu.pipeline_mode<synchronous>, transform_indices = @transform_10, window_bounds = array<i64: 1, 256>}, {pipeline_mode = #tpu.pipeline_mode<synchronous>, transform_indices = @transform_11, window_bounds = array<i64: 1, 256>}, {pipeline_mode = #tpu.pipeline_mode<synchronous>, transform_indices = @transform_12, window_bounds = array<i64: 1, 256>}, {transform_indices = @transform_13, window_bounds = array<i64: 1, 8, 256>}]} {
    %0 = arith.index_cast %arg0 : i32 to index
    %1 = memref.load %arg1[%0] : memref<2xi32, #tpu.memory_space<smem>>
    %c0 = arith.constant 0 : index
    %c0_0 = arith.constant 0 : index
    %c0_1 = arith.constant 0 : index
    %2 = vector.load %arg2[%c0, %c0_0, %c0_1] : memref<1x8x256xf32, #tpu.memory_space<vmem>>, vector<1x8x256xf32>
    %3 = vector.shape_cast %2 : vector<1x8x256xf32> to vector<8x256xf32>
    %4 = arith.truncf %3 : vector<8x256xf32> to vector<8x256xbf16>
    %c0_2 = arith.constant 0 : index
    %c0_3 = arith.constant 0 : index
    %5 = vector.load %arg3[%c0_2, %c0_3] : memref<256x768xbf16, #tpu.memory_space<vmem>>, vector<256x768xbf16>
    %cst = arith.constant dense<0.000000e+00> : vector<8x768xf32>
    %6 = tpu.matmul %4, %5, %cst {dimension_numbers = #tpu.dot_dimension_numbers<[1], [0], [0], [1], [0, 0, 1, 1], [], []>} : vector<8x256xbf16>, vector<256x768xbf16>, vector<8x768xf32> -> vector<8x768xf32>
    %c0_4 = arith.constant 0 : index
    %c0_5 = arith.constant 0 : index
    %7 = vector.load %arg4[%c0_4, %c0_5] : memref<1x768xf32, #tpu.memory_space<vmem>>, vector<1x768xf32>
    %8 = vector.broadcast %7 : vector<1x768xf32> to vector<8x768xf32>
    %9 = arith.addf %6, %8 : vector<8x768xf32>
    %10 = vector.extract_strided_slice %9 {offsets = [0, 0], sizes = [8, 256], strides = [1, 1]} : vector<8x768xf32> to vector<8x256xf32>
    %cst_6 = arith.constant 0.0883883461 : f32
    %11 = vector.broadcast %cst_6 : f32 to vector<8x256xf32>
    %12 = arith.mulf %10, %11 : vector<8x256xf32>
    %13 = vector.extract_strided_slice %9 {offsets = [0, 256], sizes = [8, 256], strides = [1, 1]} : vector<8x768xf32> to vector<8x256xf32>
    %14 = vector.extract_strided_slice %9 {offsets = [0, 512], sizes = [8, 256], strides = [1, 1]} : vector<8x768xf32> to vector<8x256xf32>
    %15 = tpu.iota {dimensions = array<i32: 1>} : vector<8x8xi32>
    %16 = vector.broadcast %1 : i32 to vector<8x8xi32>
    %17 = arith.cmpi sge, %15, %16 : vector<8x8xi32>
    %cst_7 = arith.constant -1.000000e+30 : f32
    %cst_8 = arith.constant 0.000000e+00 : f32
    %18 = vector.broadcast %cst_7 : f32 to vector<8x8xf32>
    %19 = vector.broadcast %cst_8 : f32 to vector<8x8xf32>
    %20 = arith.select %17, %18, %19 : vector<8x8xi1>, vector<8x8xf32>
    %21 = vector.extract_strided_slice %12 {offsets = [0, 0], sizes = [8, 128], strides = [1, 1]} : vector<8x256xf32> to vector<8x128xf32>
    %22 = arith.truncf %21 : vector<8x128xf32> to vector<8x128xbf16>
    %23 = vector.extract_strided_slice %13 {offsets = [0, 0], sizes = [8, 128], strides = [1, 1]} : vector<8x256xf32> to vector<8x128xf32>
    %24 = arith.truncf %23 : vector<8x128xf32> to vector<8x128xbf16>
    %cst_9 = arith.constant dense<0.000000e+00> : vector<8x8xf32>
    %25 = tpu.matmul %22, %24, %cst_9 {dimension_numbers = #tpu.dot_dimension_numbers<[1], [1], [0], [0], [0, 0, 1, 0], [], []>} : vector<8x128xbf16>, vector<8x128xbf16>, vector<8x8xf32> -> vector<8x8xf32>
    %26 = arith.addf %25, %20 : vector<8x8xf32>
    %cst_10 = arith.constant dense<0xFF800000> : vector<8xf32>
    %27 = vector.multi_reduction <maximumf>, %26, %cst_10 [1] : vector<8x8xf32> to vector<8xf32>
    %28 = vector.shape_cast %27 : vector<8xf32> to vector<8x1xf32>
    %29 = vector.broadcast %28 : vector<8x1xf32> to vector<8x8xf32>
    %30 = arith.subf %26, %29 : vector<8x8xf32>
    %31 = math.exp %30 : vector<8x8xf32>
    %cst_11 = arith.constant dense<0.000000e+00> : vector<8xf32>
    %32 = vector.multi_reduction <add>, %31, %cst_11 [1] : vector<8x8xf32> to vector<8xf32>
    %33 = vector.shape_cast %32 : vector<8xf32> to vector<8x1xf32>
    %34 = tpu.reciprocal %33 {approx = true} : vector<8x1xf32> -> vector<8x1xf32>
    %35 = vector.broadcast %34 : vector<8x1xf32> to vector<8x8xf32>
    %36 = arith.mulf %31, %35 : vector<8x8xf32>
    %37 = arith.truncf %36 : vector<8x8xf32> to vector<8x8xbf16>
    %38 = vector.extract_strided_slice %14 {offsets = [0, 0], sizes = [8, 128], strides = [1, 1]} : vector<8x256xf32> to vector<8x128xf32>
    %39 = arith.truncf %38 : vector<8x128xf32> to vector<8x128xbf16>
    %cst_12 = arith.constant dense<0.000000e+00> : vector<8x128xf32>
    %40 = tpu.matmul %37, %39, %cst_12 {dimension_numbers = #tpu.dot_dimension_numbers<[1], [0], [0], [1], [0, 0, 1, 1], [], []>} : vector<8x8xbf16>, vector<8x128xbf16>, vector<8x128xf32> -> vector<8x128xf32>
    %41 = vector.extract_strided_slice %12 {offsets = [0, 128], sizes = [8, 128], strides = [1, 1]} : vector<8x256xf32> to vector<8x128xf32>
    %42 = arith.truncf %41 : vector<8x128xf32> to vector<8x128xbf16>
    %43 = vector.extract_strided_slice %13 {offsets = [0, 128], sizes = [8, 128], strides = [1, 1]} : vector<8x256xf32> to vector<8x128xf32>
    %44 = arith.truncf %43 : vector<8x128xf32> to vector<8x128xbf16>
    %cst_13 = arith.constant dense<0.000000e+00> : vector<8x8xf32>
    %45 = tpu.matmul %42, %44, %cst_13 {dimension_numbers = #tpu.dot_dimension_numbers<[1], [1], [0], [0], [0, 0, 1, 0], [], []>} : vector<8x128xbf16>, vector<8x128xbf16>, vector<8x8xf32> -> vector<8x8xf32>
    %46 = arith.addf %45, %20 : vector<8x8xf32>
    %cst_14 = arith.constant dense<0xFF800000> : vector<8xf32>
    %47 = vector.multi_reduction <maximumf>, %46, %cst_14 [1] : vector<8x8xf32> to vector<8xf32>
    %48 = vector.shape_cast %47 : vector<8xf32> to vector<8x1xf32>
    %49 = vector.broadcast %48 : vector<8x1xf32> to vector<8x8xf32>
    %50 = arith.subf %46, %49 : vector<8x8xf32>
    %51 = math.exp %50 : vector<8x8xf32>
    %cst_15 = arith.constant dense<0.000000e+00> : vector<8xf32>
    %52 = vector.multi_reduction <add>, %51, %cst_15 [1] : vector<8x8xf32> to vector<8xf32>
    %53 = vector.shape_cast %52 : vector<8xf32> to vector<8x1xf32>
    %54 = tpu.reciprocal %53 {approx = true} : vector<8x1xf32> -> vector<8x1xf32>
    %55 = vector.broadcast %54 : vector<8x1xf32> to vector<8x8xf32>
    %56 = arith.mulf %51, %55 : vector<8x8xf32>
    %57 = arith.truncf %56 : vector<8x8xf32> to vector<8x8xbf16>
    %58 = vector.extract_strided_slice %14 {offsets = [0, 128], sizes = [8, 128], strides = [1, 1]} : vector<8x256xf32> to vector<8x128xf32>
    %59 = arith.truncf %58 : vector<8x128xf32> to vector<8x128xbf16>
    %cst_16 = arith.constant dense<0.000000e+00> : vector<8x128xf32>
    %60 = tpu.matmul %57, %59, %cst_16 {dimension_numbers = #tpu.dot_dimension_numbers<[1], [0], [0], [1], [0, 0, 1, 1], [], []>} : vector<8x8xbf16>, vector<8x128xbf16>, vector<8x128xf32> -> vector<8x128xf32>
    %61 = tpu.concatenate %40, %60 in 1 : vector<8x128xf32>, vector<8x128xf32> -> vector<8x256xf32>
    %62 = arith.truncf %61 : vector<8x256xf32> to vector<8x256xbf16>
    %c0_17 = arith.constant 0 : index
    %c0_18 = arith.constant 0 : index
    %63 = vector.load %arg5[%c0_17, %c0_18] : memref<256x256xbf16, #tpu.memory_space<vmem>>, vector<256x256xbf16>
    %cst_19 = arith.constant dense<0.000000e+00> : vector<8x256xf32>
    %64 = tpu.matmul %62, %63, %cst_19 {dimension_numbers = #tpu.dot_dimension_numbers<[1], [0], [0], [1], [0, 0, 1, 1], [], []>} : vector<8x256xbf16>, vector<256x256xbf16>, vector<8x256xf32> -> vector<8x256xf32>
    %c0_20 = arith.constant 0 : index
    %c0_21 = arith.constant 0 : index
    %65 = vector.load %arg6[%c0_20, %c0_21] : memref<1x256xf32, #tpu.memory_space<vmem>>, vector<1x256xf32>
    %66 = vector.broadcast %65 : vector<1x256xf32> to vector<8x256xf32>
    %67 = arith.addf %64, %66 : vector<8x256xf32>
    %68 = arith.addf %67, %3 : vector<8x256xf32>
    %c0_22 = arith.constant 0 : index
    %c0_23 = arith.constant 0 : index
    %69 = vector.load %arg7[%c0_22, %c0_23] : memref<1x256xf32, #tpu.memory_space<vmem>>, vector<1x256xf32>
    %c0_24 = arith.constant 0 : index
    %c0_25 = arith.constant 0 : index
    %70 = vector.load %arg8[%c0_24, %c0_25] : memref<1x256xf32, #tpu.memory_space<vmem>>, vector<1x256xf32>
    %cst_26 = arith.constant dense<0.000000e+00> : vector<8xf32>
    %71 = vector.multi_reduction <add>, %68, %cst_26 [1] : vector<8x256xf32> to vector<8xf32>
    %72 = vector.shape_cast %71 : vector<8xf32> to vector<8x1xf32>
    %cst_27 = arith.constant 2.560000e+02 : f32
    %73 = vector.broadcast %cst_27 : f32 to vector<8x1xf32>
    %74 = arith.divf %72, %73 : vector<8x1xf32>
    %75 = vector.broadcast %74 : vector<8x1xf32> to vector<8x256xf32>
    %76 = arith.subf %68, %75 : vector<8x256xf32>
    %77 = arith.mulf %76, %76 : vector<8x256xf32>
    %cst_28 = arith.constant dense<0.000000e+00> : vector<8xf32>
    %78 = vector.multi_reduction <add>, %77, %cst_28 [1] : vector<8x256xf32> to vector<8xf32>
    %79 = vector.shape_cast %78 : vector<8xf32> to vector<8x1xf32>
    %cst_29 = arith.constant 2.560000e+02 : f32
    %80 = vector.broadcast %cst_29 : f32 to vector<8x1xf32>
    %81 = arith.divf %79, %80 : vector<8x1xf32>
    %cst_30 = arith.constant 9.99999974E-6 : f32
    %82 = vector.broadcast %cst_30 : f32 to vector<8x1xf32>
    %83 = arith.addf %81, %82 : vector<8x1xf32>
    %84 = math.rsqrt %83 : vector<8x1xf32>
    %85 = vector.broadcast %84 : vector<8x1xf32> to vector<8x256xf32>
    %86 = arith.mulf %76, %85 : vector<8x256xf32>
    %87 = vector.broadcast %69 : vector<1x256xf32> to vector<8x256xf32>
    %88 = arith.mulf %86, %87 : vector<8x256xf32>
    %89 = vector.broadcast %70 : vector<1x256xf32> to vector<8x256xf32>
    %90 = arith.addf %88, %89 : vector<8x256xf32>
    %91 = tpu.iota {dimensions = array<i32: 0>} : vector<8x1xi32>
    %92 = vector.broadcast %1 : i32 to vector<8x1xi32>
    %93 = arith.cmpi slt, %91, %92 : vector<8x1xi32>
    %94 = arith.extui %93 : vector<8x1xi1> to vector<8x1xi32>
    %95 = arith.sitofp %94 : vector<8x1xi32> to vector<8x1xf32>
    %96 = vector.broadcast %95 : vector<8x1xf32> to vector<8x256xf32>
    %97 = arith.mulf %90, %96 : vector<8x256xf32>
    %c1_i32 = arith.constant 1 : i32
    %98 = tpu.dynamic_rotate %97 by %c1_i32 dim 0 : vector<8x256xf32>, i32 -> vector<8x256xf32>
    %c1_i32_31 = arith.constant 1 : i32
    %99 = vector.broadcast %c1_i32_31 : i32 to vector<8x1xi32>
    %100 = arith.cmpi sge, %91, %99 : vector<8x1xi32>
    %cst_32 = arith.constant 0.000000e+00 : f32
    %101 = vector.shape_cast %100 : vector<8x1xi1> to vector<8x1xi1>
    %102 = vector.broadcast %101 : vector<8x1xi1> to vector<8x256xi1>
    %103 = vector.broadcast %cst_32 : f32 to vector<8x256xf32>
    %104 = arith.select %102, %98, %103 : vector<8x256xi1>, vector<8x256xf32>
    %c7_i32 = arith.constant 7 : i32
    %105 = tpu.dynamic_rotate %97 by %c7_i32 dim 0 : vector<8x256xf32>, i32 -> vector<8x256xf32>
    %c7_i32_33 = arith.constant 7 : i32
    %106 = vector.broadcast %c7_i32_33 : i32 to vector<8x1xi32>
    %107 = arith.cmpi slt, %91, %106 : vector<8x1xi32>
    %cst_34 = arith.constant 0.000000e+00 : f32
    %108 = vector.shape_cast %107 : vector<8x1xi1> to vector<8x1xi1>
    %109 = vector.broadcast %108 : vector<8x1xi1> to vector<8x256xi1>
    %110 = vector.broadcast %cst_34 : f32 to vector<8x256xf32>
    %111 = arith.select %109, %105, %110 : vector<8x256xi1>, vector<8x256xf32>
    %112 = tpu.concatenate %104, %97, %111 in 1 : vector<8x256xf32>, vector<8x256xf32>, vector<8x256xf32> -> vector<8x768xf32>
    %113 = arith.truncf %112 : vector<8x768xf32> to vector<8x768xbf16>
    %c0_35 = arith.constant 0 : index
    %c0_36 = arith.constant 0 : index
    %114 = vector.load %arg9[%c0_35, %c0_36] : memref<768x256xbf16, #tpu.memory_space<vmem>>, vector<768x256xbf16>
    %cst_37 = arith.constant dense<0.000000e+00> : vector<8x256xf32>
    %115 = tpu.matmul %113, %114, %cst_37 {dimension_numbers = #tpu.dot_dimension_numbers<[1], [0], [0], [1], [0, 0, 1, 1], [], []>} : vector<8x768xbf16>, vector<768x256xbf16>, vector<8x256xf32> -> vector<8x256xf32>
    %c0_38 = arith.constant 0 : index
    %c0_39 = arith.constant 0 : index
    %116 = vector.load %arg10[%c0_38, %c0_39] : memref<1x256xf32, #tpu.memory_space<vmem>>, vector<1x256xf32>
    %117 = vector.broadcast %116 : vector<1x256xf32> to vector<8x256xf32>
    %118 = arith.addf %115, %117 : vector<8x256xf32>
    %cst_40 = arith.constant 0.000000e+00 : f32
    %119 = vector.broadcast %cst_40 : f32 to vector<8x256xf32>
    %120 = arith.maximumf %118, %119 : vector<8x256xf32>
    %c1_i32_41 = arith.constant 1 : i32
    %121 = tpu.dynamic_rotate %120 by %c1_i32_41 dim 0 : vector<8x256xf32>, i32 -> vector<8x256xf32>
    %c1_i32_42 = arith.constant 1 : i32
    %122 = vector.broadcast %c1_i32_42 : i32 to vector<8x1xi32>
    %123 = arith.cmpi sge, %91, %122 : vector<8x1xi32>
    %cst_43 = arith.constant 0.000000e+00 : f32
    %124 = vector.shape_cast %123 : vector<8x1xi1> to vector<8x1xi1>
    %125 = vector.broadcast %124 : vector<8x1xi1> to vector<8x256xi1>
    %126 = vector.broadcast %cst_43 : f32 to vector<8x256xf32>
    %127 = arith.select %125, %121, %126 : vector<8x256xi1>, vector<8x256xf32>
    %c7_i32_44 = arith.constant 7 : i32
    %128 = tpu.dynamic_rotate %120 by %c7_i32_44 dim 0 : vector<8x256xf32>, i32 -> vector<8x256xf32>
    %c7_i32_45 = arith.constant 7 : i32
    %129 = vector.broadcast %c7_i32_45 : i32 to vector<8x1xi32>
    %130 = arith.cmpi slt, %91, %129 : vector<8x1xi32>
    %cst_46 = arith.constant 0.000000e+00 : f32
    %131 = vector.shape_cast %130 : vector<8x1xi1> to vector<8x1xi1>
    %132 = vector.broadcast %131 : vector<8x1xi1> to vector<8x256xi1>
    %133 = vector.broadcast %cst_46 : f32 to vector<8x256xf32>
    %134 = arith.select %132, %128, %133 : vector<8x256xi1>, vector<8x256xf32>
    %135 = tpu.concatenate %127, %120, %134 in 1 : vector<8x256xf32>, vector<8x256xf32>, vector<8x256xf32> -> vector<8x768xf32>
    %136 = arith.truncf %135 : vector<8x768xf32> to vector<8x768xbf16>
    %c0_47 = arith.constant 0 : index
    %c0_48 = arith.constant 0 : index
    %137 = vector.load %arg11[%c0_47, %c0_48] : memref<768x256xbf16, #tpu.memory_space<vmem>>, vector<768x256xbf16>
    %cst_49 = arith.constant dense<0.000000e+00> : vector<8x256xf32>
    %138 = tpu.matmul %136, %137, %cst_49 {dimension_numbers = #tpu.dot_dimension_numbers<[1], [0], [0], [1], [0, 0, 1, 1], [], []>} : vector<8x768xbf16>, vector<768x256xbf16>, vector<8x256xf32> -> vector<8x256xf32>
    %c0_50 = arith.constant 0 : index
    %c0_51 = arith.constant 0 : index
    %139 = vector.load %arg12[%c0_50, %c0_51] : memref<1x256xf32, #tpu.memory_space<vmem>>, vector<1x256xf32>
    %140 = vector.broadcast %139 : vector<1x256xf32> to vector<8x256xf32>
    %141 = arith.addf %138, %140 : vector<8x256xf32>
    %142 = arith.addf %141, %97 : vector<8x256xf32>
    %c0_52 = arith.constant 0 : index
    %c0_53 = arith.constant 0 : index
    %143 = vector.load %arg13[%c0_52, %c0_53] : memref<1x256xf32, #tpu.memory_space<vmem>>, vector<1x256xf32>
    %c0_54 = arith.constant 0 : index
    %c0_55 = arith.constant 0 : index
    %144 = vector.load %arg14[%c0_54, %c0_55] : memref<1x256xf32, #tpu.memory_space<vmem>>, vector<1x256xf32>
    %cst_56 = arith.constant dense<0.000000e+00> : vector<8xf32>
    %145 = vector.multi_reduction <add>, %142, %cst_56 [1] : vector<8x256xf32> to vector<8xf32>
    %146 = vector.shape_cast %145 : vector<8xf32> to vector<8x1xf32>
    %cst_57 = arith.constant 2.560000e+02 : f32
    %147 = vector.broadcast %cst_57 : f32 to vector<8x1xf32>
    %148 = arith.divf %146, %147 : vector<8x1xf32>
    %149 = vector.broadcast %148 : vector<8x1xf32> to vector<8x256xf32>
    %150 = arith.subf %142, %149 : vector<8x256xf32>
    %151 = arith.mulf %150, %150 : vector<8x256xf32>
    %cst_58 = arith.constant dense<0.000000e+00> : vector<8xf32>
    %152 = vector.multi_reduction <add>, %151, %cst_58 [1] : vector<8x256xf32> to vector<8xf32>
    %153 = vector.shape_cast %152 : vector<8xf32> to vector<8x1xf32>
    %cst_59 = arith.constant 2.560000e+02 : f32
    %154 = vector.broadcast %cst_59 : f32 to vector<8x1xf32>
    %155 = arith.divf %153, %154 : vector<8x1xf32>
    %cst_60 = arith.constant 9.99999974E-6 : f32
    %156 = vector.broadcast %cst_60 : f32 to vector<8x1xf32>
    %157 = arith.addf %155, %156 : vector<8x1xf32>
    %158 = math.rsqrt %157 : vector<8x1xf32>
    %159 = vector.broadcast %158 : vector<8x1xf32> to vector<8x256xf32>
    %160 = arith.mulf %150, %159 : vector<8x256xf32>
    %161 = vector.broadcast %143 : vector<1x256xf32> to vector<8x256xf32>
    %162 = arith.mulf %160, %161 : vector<8x256xf32>
    %163 = vector.broadcast %144 : vector<1x256xf32> to vector<8x256xf32>
    %164 = arith.addf %162, %163 : vector<8x256xf32>
    %165 = vector.broadcast %95 : vector<8x1xf32> to vector<8x256xf32>
    %166 = arith.mulf %164, %165 : vector<8x256xf32>
    %c0_61 = arith.constant 0 : index
    %c0_62 = arith.constant 0 : index
    %c0_63 = arith.constant 0 : index
    %167 = vector.load %arg15[%c0_61, %c0_62, %c0_63] : memref<1x8x256xf32, #tpu.memory_space<vmem>>, vector<1x8x256xf32>
    %168 = vector.shape_cast %167 : vector<1x8x256xf32> to vector<8x256xf32>
    %169 = vector.shape_cast %166 : vector<8x256xf32> to vector<1x8x256xf32>
    tpu.vector_store %arg15[%c0_61, %c0_62, %c0_63], %169 {strides = array<i32>} : memref<1x8x256xf32, #tpu.memory_space<vmem>>, vector<1x8x256xf32>,
    return
  }
  func.func @transform_0(%arg0: i32, %arg1: memref<2xi32, #tpu.memory_space<smem>>) -> (i32, i32, i32) {
    %c0_i32 = arith.constant 0 : i32
    %c0_i32_0 = arith.constant 0 : i32
    %c0_i32_1 = arith.constant 0 : i32
    return %arg0, %c0_i32, %c0_i32_0 : i32, i32, i32
  }
  func.func @transform_1(%arg0: i32, %arg1: memref<2xi32, #tpu.memory_space<smem>>) -> (i32, i32) {
    %c0_i32 = arith.constant 0 : i32
    %c0_i32_0 = arith.constant 0 : i32
    %c0_i32_1 = arith.constant 0 : i32
    return %c0_i32, %c0_i32_0 : i32, i32
  }
  func.func @transform_2(%arg0: i32, %arg1: memref<2xi32, #tpu.memory_space<smem>>) -> (i32, i32) {
    %c0_i32 = arith.constant 0 : i32
    %c0_i32_0 = arith.constant 0 : i32
    %c0_i32_1 = arith.constant 0 : i32
    return %c0_i32, %c0_i32_0 : i32, i32
  }
  func.func @transform_3(%arg0: i32, %arg1: memref<2xi32, #tpu.memory_space<smem>>) -> (i32, i32) {
    %c0_i32 = arith.constant 0 : i32
    %c0_i32_0 = arith.constant 0 : i32
    %c0_i32_1 = arith.constant 0 : i32
    return %c0_i32, %c0_i32_0 : i32, i32
  }
  func.func @transform_4(%arg0: i32, %arg1: memref<2xi32, #tpu.memory_space<smem>>) -> (i32, i32) {
    %c0_i32 = arith.constant 0 : i32
    %c0_i32_0 = arith.constant 0 : i32
    %c0_i32_1 = arith.constant 0 : i32
    return %c0_i32, %c0_i32_0 : i32, i32
  }
  func.func @transform_5(%arg0: i32, %arg1: memref<2xi32, #tpu.memory_space<smem>>) -> (i32, i32) {
    %c0_i32 = arith.constant 0 : i32
    %c0_i32_0 = arith.constant 0 : i32
    %c0_i32_1 = arith.constant 0 : i32
    return %c0_i32, %c0_i32_0 : i32, i32
  }
  func.func @transform_6(%arg0: i32, %arg1: memref<2xi32, #tpu.memory_space<smem>>) -> (i32, i32) {
    %c0_i32 = arith.constant 0 : i32
    %c0_i32_0 = arith.constant 0 : i32
    %c0_i32_1 = arith.constant 0 : i32
    return %c0_i32, %c0_i32_0 : i32, i32
  }
  func.func @transform_7(%arg0: i32, %arg1: memref<2xi32, #tpu.memory_space<smem>>) -> (i32, i32) {
    %c0_i32 = arith.constant 0 : i32
    %c0_i32_0 = arith.constant 0 : i32
    %c0_i32_1 = arith.constant 0 : i32
    return %c0_i32, %c0_i32_0 : i32, i32
  }
  func.func @transform_8(%arg0: i32, %arg1: memref<2xi32, #tpu.memory_space<smem>>) -> (i32, i32) {
    %c0_i32 = arith.constant 0 : i32
    %c0_i32_0 = arith.constant 0 : i32
    %c0_i32_1 = arith.constant 0 : i32
    return %c0_i32, %c0_i32_0 : i32, i32
  }
  func.func @transform_9(%arg0: i32, %arg1: memref<2xi32, #tpu.memory_space<smem>>) -> (i32, i32) {
    %c0_i32 = arith.constant 0 : i32
    %c0_i32_0 = arith.constant 0 : i32
    %c0_i32_1 = arith.constant 0 : i32
    return %c0_i32, %c0_i32_0 : i32, i32
  }
  func.func @transform_10(%arg0: i32, %arg1: memref<2xi32, #tpu.memory_space<smem>>) -> (i32, i32) {
    %c0_i32 = arith.constant 0 : i32
    %c0_i32_0 = arith.constant 0 : i32
    %c0_i32_1 = arith.constant 0 : i32
    return %c0_i32, %c0_i32_0 : i32, i32
  }
  func.func @transform_11(%arg0: i32, %arg1: memref<2xi32, #tpu.memory_space<smem>>) -> (i32, i32) {
    %c0_i32 = arith.constant 0 : i32
    %c0_i32_0 = arith.constant 0 : i32
    %c0_i32_1 = arith.constant 0 : i32
    return %c0_i32, %c0_i32_0 : i32, i32
  }
  func.func @transform_12(%arg0: i32, %arg1: memref<2xi32, #tpu.memory_space<smem>>) -> (i32, i32) {
    %c0_i32 = arith.constant 0 : i32
    %c0_i32_0 = arith.constant 0 : i32
    %c0_i32_1 = arith.constant 0 : i32
    return %c0_i32, %c0_i32_0 : i32, i32
  }
  func.func @transform_13(%arg0: i32, %arg1: memref<2xi32, #tpu.memory_space<smem>>) -> (i32, i32, i32) {
    %c0_i32 = arith.constant 0 : i32
    %c0_i32_0 = arith.constant 0 : i32
    %c0_i32_1 = arith.constant 0 : i32
    return %arg0, %c0_i32, %c0_i32_0 : i32, i32, i32
  }
}

module attributes {stable_mosaic.version = 11 : i64} {
  func.func @_proj_ms_kernel(%arg0: i32, %arg1: memref<2xi32, #tpu.memory_space<smem>>, %arg2: memref<1x8x256xf32, #tpu.memory_space<vmem>>, %arg3: memref<256x32xbf16, #tpu.memory_space<vmem>>, %arg4: memref<1x32xf32, #tpu.memory_space<vmem>>, %arg5: memref<1x8x32xf32, #tpu.memory_space<vmem>>) attributes {dimension_semantics = [#tpu.dimension_semantics<parallel>], iteration_bounds = array<i64: 2>, scalar_prefetch = 1 : i64, scratch_operands = 0 : i64, tpu.core_type = #tpu.core_type<tc>, window_params = [{transform_indices = @transform_0, window_bounds = array<i64: 1, 8, 256>}, {pipeline_mode = #tpu.pipeline_mode<synchronous>, transform_indices = @transform_1, window_bounds = array<i64: 256, 32>}, {pipeline_mode = #tpu.pipeline_mode<synchronous>, transform_indices = @transform_2, window_bounds = array<i64: 1, 32>}, {transform_indices = @transform_3, window_bounds = array<i64: 1, 8, 32>}]} {
    %0 = arith.index_cast %arg0 : i32 to index
    %1 = memref.load %arg1[%0] : memref<2xi32, #tpu.memory_space<smem>>
    %c0 = arith.constant 0 : index
    %c0_0 = arith.constant 0 : index
    %c0_1 = arith.constant 0 : index
    %2 = vector.load %arg2[%c0, %c0_0, %c0_1] : memref<1x8x256xf32, #tpu.memory_space<vmem>>, vector<1x8x256xf32>
    %3 = vector.shape_cast %2 : vector<1x8x256xf32> to vector<8x256xf32>
    %4 = arith.truncf %3 : vector<8x256xf32> to vector<8x256xbf16>
    %c0_2 = arith.constant 0 : index
    %c0_3 = arith.constant 0 : index
    %5 = vector.load %arg3[%c0_2, %c0_3] : memref<256x32xbf16, #tpu.memory_space<vmem>>, vector<256x32xbf16>
    %cst = arith.constant dense<0.000000e+00> : vector<8x32xf32>
    %6 = tpu.matmul %4, %5, %cst {dimension_numbers = #tpu.dot_dimension_numbers<[1], [0], [0], [1], [0, 0, 1, 1], [], []>} : vector<8x256xbf16>, vector<256x32xbf16>, vector<8x32xf32> -> vector<8x32xf32>
    %c0_4 = arith.constant 0 : index
    %c0_5 = arith.constant 0 : index
    %7 = vector.load %arg4[%c0_4, %c0_5] : memref<1x32xf32, #tpu.memory_space<vmem>>, vector<1x32xf32>
    %8 = vector.broadcast %7 : vector<1x32xf32> to vector<8x32xf32>
    %9 = arith.addf %6, %8 : vector<8x32xf32>
    %10 = tpu.iota {dimensions = array<i32: 0>} : vector<8x1xi32>
    %11 = vector.broadcast %1 : i32 to vector<8x1xi32>
    %12 = arith.cmpi slt, %10, %11 : vector<8x1xi32>
    %13 = arith.extui %12 : vector<8x1xi1> to vector<8x1xi32>
    %14 = arith.sitofp %13 : vector<8x1xi32> to vector<8x1xf32>
    %15 = vector.broadcast %14 : vector<8x1xf32> to vector<8x32xf32>
    %16 = arith.mulf %9, %15 : vector<8x32xf32>
    %c0_6 = arith.constant 0 : index
    %c0_7 = arith.constant 0 : index
    %c0_8 = arith.constant 0 : index
    %17 = vector.load %arg5[%c0_6, %c0_7, %c0_8] : memref<1x8x32xf32, #tpu.memory_space<vmem>>, vector<1x8x32xf32>
    %18 = vector.shape_cast %17 : vector<1x8x32xf32> to vector<8x32xf32>
    %19 = vector.shape_cast %16 : vector<8x32xf32> to vector<1x8x32xf32>
    tpu.vector_store %arg5[%c0_6, %c0_7, %c0_8], %19 {strides = array<i32>} : memref<1x8x32xf32, #tpu.memory_space<vmem>>, vector<1x8x32xf32>,
    return
  }
  func.func @transform_0(%arg0: i32, %arg1: memref<2xi32, #tpu.memory_space<smem>>) -> (i32, i32, i32) {
    %c0_i32 = arith.constant 0 : i32
    %c0_i32_0 = arith.constant 0 : i32
    %c0_i32_1 = arith.constant 0 : i32
    return %arg0, %c0_i32, %c0_i32_0 : i32, i32, i32
  }
  func.func @transform_1(%arg0: i32, %arg1: memref<2xi32, #tpu.memory_space<smem>>) -> (i32, i32) {
    %c0_i32 = arith.constant 0 : i32
    %c0_i32_0 = arith.constant 0 : i32
    %c0_i32_1 = arith.constant 0 : i32
    return %c0_i32, %c0_i32_0 : i32, i32
  }
  func.func @transform_2(%arg0: i32, %arg1: memref<2xi32, #tpu.memory_space<smem>>) -> (i32, i32) {
    %c0_i32 = arith.constant 0 : i32
    %c0_i32_0 = arith.constant 0 : i32
    %c0_i32_1 = arith.constant 0 : i32
    return %c0_i32, %c0_i32_0 : i32, i32
  }
  func.func @transform_3(%arg0: i32, %arg1: memref<2xi32, #tpu.memory_space<smem>>) -> (i32, i32, i32) {
    %c0_i32 = arith.constant 0 : i32
    %c0_i32_0 = arith.constant 0 : i32
    %c0_i32_1 = arith.constant 0 : i32
    return %arg0, %c0_i32, %c0_i32_0 : i32, i32, i32
  }
}

module attributes {stable_mosaic.version = 11 : i64} {
  func.func @_bmm_kernel(%arg0: i32, %arg1: memref<1x12x8xf32, #tpu.memory_space<vmem>>, %arg2: memref<1x8x32xf32, #tpu.memory_space<vmem>>, %arg3: memref<1x12x32xf32, #tpu.memory_space<vmem>>) attributes {dimension_semantics = [#tpu.dimension_semantics<parallel>], iteration_bounds = array<i64: 2>, scalar_prefetch = 0 : i64, scratch_operands = 0 : i64, tpu.core_type = #tpu.core_type<tc>, window_params = [{transform_indices = @transform_0, window_bounds = array<i64: 1, 12, 8>}, {transform_indices = @transform_1, window_bounds = array<i64: 1, 8, 32>}, {transform_indices = @transform_2, window_bounds = array<i64: 1, 12, 32>}]} {
    %c0 = arith.constant 0 : index
    %c0_0 = arith.constant 0 : index
    %c0_1 = arith.constant 0 : index
    %0 = vector.load %arg1[%c0, %c0_0, %c0_1] : memref<1x12x8xf32, #tpu.memory_space<vmem>>, vector<1x12x8xf32>
    %1 = vector.shape_cast %0 : vector<1x12x8xf32> to vector<12x8xf32>
    %2 = arith.truncf %1 : vector<12x8xf32> to vector<12x8xbf16>
    %c0_2 = arith.constant 0 : index
    %c0_3 = arith.constant 0 : index
    %c0_4 = arith.constant 0 : index
    %3 = vector.load %arg2[%c0_2, %c0_3, %c0_4] : memref<1x8x32xf32, #tpu.memory_space<vmem>>, vector<1x8x32xf32>
    %4 = vector.shape_cast %3 : vector<1x8x32xf32> to vector<8x32xf32>
    %5 = arith.truncf %4 : vector<8x32xf32> to vector<8x32xbf16>
    %cst = arith.constant dense<0.000000e+00> : vector<12x32xf32>
    %6 = tpu.matmul %2, %5, %cst {dimension_numbers = #tpu.dot_dimension_numbers<[1], [0], [0], [1], [0, 0, 1, 1], [], []>} : vector<12x8xbf16>, vector<8x32xbf16>, vector<12x32xf32> -> vector<12x32xf32>
    %c0_5 = arith.constant 0 : index
    %c0_6 = arith.constant 0 : index
    %c0_7 = arith.constant 0 : index
    %7 = vector.load %arg3[%c0_5, %c0_6, %c0_7] : memref<1x12x32xf32, #tpu.memory_space<vmem>>, vector<1x12x32xf32>
    %8 = vector.shape_cast %7 : vector<1x12x32xf32> to vector<12x32xf32>
    %9 = vector.shape_cast %6 : vector<12x32xf32> to vector<1x12x32xf32>
    tpu.vector_store %arg3[%c0_5, %c0_6, %c0_7], %9 {strides = array<i32>} : memref<1x12x32xf32, #tpu.memory_space<vmem>>, vector<1x12x32xf32>,
    return
  }
  func.func @transform_0(%arg0: i32) -> (i32, i32, i32) {
    %c0_i32 = arith.constant 0 : i32
    %c0_i32_0 = arith.constant 0 : i32
    %c0_i32_1 = arith.constant 0 : i32
    return %arg0, %c0_i32, %c0_i32_0 : i32, i32, i32
  }
  func.func @transform_1(%arg0: i32) -> (i32, i32, i32) {
    %c0_i32 = arith.constant 0 : i32
    %c0_i32_0 = arith.constant 0 : i32
    %c0_i32_1 = arith.constant 0 : i32
    return %arg0, %c0_i32, %c0_i32_0 : i32, i32, i32
  }
  func.func @transform_2(%arg0: i32) -> (i32, i32, i32) {
    %c0_i32 = arith.constant 0 : i32
    %c0_i32_0 = arith.constant 0 : i32
    %c0_i32_1 = arith.constant 0 : i32
    return %arg0, %c0_i32, %c0_i32_0 : i32, i32, i32
  }
}

</mosaic_0001>

<llo_original>
// kernel: stylespeech2_forward.8
$region0: #{stylespeech2_forward.8}
  #allocation0 [shape = 'u32[]', space=smem, size = 0x4, offset = 0x4, fixed_abs, tag = 'smem constant byte address 0x4 - core index']
  #allocation1 [shape = 'u32[144,128]{1,0:T(1,128)}', space=vmem, size = 0x12000, scoped, tag = 'internal scratch']
  #allocation2 [shape = 's32[1]{0}', space=sflag, size = 0x4, scoped, tag = 'scoped memory for stylespeech2_forward.8']
  #allocation3 [shape = 'u8[512]{0}', space=smem, size = 0x200, scoped, tag = 'prefetched SMEM operand 0']
  %s0 = inlined_call_operand.vmem [shape: s32[2], index: 0, kind: input, shape index: {}]
  %s1 = inlined_call_operand.vmem [shape: f32[2,8,256], index: 1, kind: input, shape index: {}]
  %s2 = inlined_call_operand.vmem [shape: f32[2,8,256], index: 2, kind: input, shape index: {}]
  %s3 = inlined_call_operand.vmem [shape: f32[2,8,256], index: 3, kind: output, shape index: {}]
  %s4 = sld [smem:[#allocation0]]
  $region41: #{stylespeech2_forward.8} parent=0
    _
  %s6 = ssub.s32 1, %s4
  %s7 = scalar_select 0, %s6, %s4
  %s8 = sshll.u32 %s0, 4
  %s9 = int_to_ptr.vmem [resolvable:$true] %s8
  %11 = dma.vmem_to_smem %s9, 16, [#allocation3], [#allocation2]
  %12 = dma.done [#allocation2], 16
  %13 = sfence
  loop: start=0, step=1, limit=4
  $region2: #{stylespeech2_forward.8} parent=0 // loop_pre_header
    _
  $region3: #{stylespeech2_forward.8} parent=0 // loop_header
    %s15 = sphi 0, %s19
    %p16 = scmp.ge.s32.totalorder %s15, 4
    %s25 = sphi 0, %s27
    %s28 = sphi 0, %s25
    %s29 = sphi 0, %s28
    %s45 = sphi 0, %s29
    %s51 = sphi 0, %s53
    %s54 = sphi 0, %s51
    %s55 = sphi 0, %s54
    %s71 = sphi 0, %s55
    %s77 = sphi 0, %s79
    %s80 = sphi 0, %s77
    %s81 = sphi 0, %s80
    %s97 = sphi 0, %s81
  $region4: #{stylespeech2_forward.8} parent=0 // loop_header_branch
    %18 = sbr.rel (%p16) target = $region8
  $region5: #{stylespeech2_forward.8} parent=0 // loop_body
    %s20 = ssub.s32 %s15, 1
    %s21 = ssub.s32 %s15, 2
    %s22 = sadd.s32 %s15, 1
    %s23 = ssub.s32 %s15, %s22
    %p24 = scmp.eq.s32.totalorder %s23, 0
    %s26 = sadd.s32 %s25, 1
    %s27 = scalar_select %p24, %s25, %s26
    %p30 = pneg %p24
    %p31 = scmp.eq.s32.totalorder %s15, 1
    %p32 = por %p30, %p31
    %p33 = scmp.ne.s32.totalorder %s25, %s28
    %p34 = scmp.eq.s32.totalorder %s15, 0
    %p35 = por %p33, %p34
    %p36 = scmp.ne.s32.totalorder %s25, %s28
    %p37 = scmp.eq.s32.totalorder %s20, 1
    %p38 = por %p36, %p37
    %p39 = scmp.ne.s32.totalorder %s28, %s29
    %p40 = scmp.eq.s32.totalorder %s20, 0
    %p41 = por %p39, %p40
    %p42 = scmp.ne.s32.totalorder %s28, %s29
    %p43 = scmp.eq.s32.totalorder %s21, 1
    %p44 = por %p42, %p43
    %p46 = scmp.ne.s32.totalorder %s29, %s45
    %p47 = scmp.eq.s32.totalorder %s21, 0
    %p48 = por %p46, %p47
    %s49 = ssub.s32 %s15, %s22
    %p50 = scmp.eq.s32.totalorder %s49, 0
    %s52 = sadd.s32 %s51, 1
    %s53 = scalar_select %p50, %s51, %s52
    %p56 = pneg %p50
    %p57 = scmp.eq.s32.totalorder %s15, 1
    %p58 = por %p56, %p57
    %p59 = scmp.ne.s32.totalorder %s51, %s54
    %p60 = scmp.eq.s32.totalorder %s15, 0
    %p61 = por %p59, %p60
    %p62 = scmp.ne.s32.totalorder %s51, %s54
    %p63 = scmp.eq.s32.totalorder %s20, 1
    %p64 = por %p62, %p63
    %p65 = scmp.ne.s32.totalorder %s54, %s55
    %p66 = scmp.eq.s32.totalorder %s20, 0
    %p67 = por %p65, %p66
    %p68 = scmp.ne.s32.totalorder %s54, %s55
    %p69 = scmp.eq.s32.totalorder %s21, 1
    %p70 = por %p68, %p69
    %p72 = scmp.ne.s32.totalorder %s55, %s71
    %p73 = scmp.eq.s32.totalorder %s21, 0
    %p74 = por %p72, %p73
    %s75 = ssub.s32 %s15, %s22
    %p76 = scmp.eq.s32.totalorder %s75, 0
    %s78 = sadd.s32 %s77, 1
    %s79 = scalar_select %p76, %s77, %s78
    %p82 = pneg %p76
    %p83 = scmp.eq.s32.totalorder %s15, 1
    %p84 = por %p82, %p83
    %p85 = scmp.ne.s32.totalorder %s77, %s80
    %p86 = scmp.eq.s32.totalorder %s15, 0
    %p87 = por %p85, %p86
    %p88 = scmp.ne.s32.totalorder %s77, %s80
    %p89 = scmp.eq.s32.totalorder %s20, 1
    %p90 = por %p88, %p89
    %p91 = scmp.ne.s32.totalorder %s80, %s81
    %p92 = scmp.eq.s32.totalorder %s20, 0
    %p93 = por %p91, %p92
    %p94 = scmp.ne.s32.totalorder %s80, %s81
    %p95 = scmp.eq.s32.totalorder %s21, 1
    %p96 = por %p94, %p95
    %p98 = scmp.ne.s32.totalorder %s81, %s97
    %p99 = scmp.eq.s32.totalorder %s21, 0
    %p100 = por %p98, %p99
    %p101 = scmp.le.s32.totalorder 1, %s15
    %p102 = scmp.lt.s32.totalorder %s15, 3
    %p103 = pnand %p101, %p102
    %p104 = pneg %p103
    // Predicated region
    $region9: #{stylespeech2_forward.8} parent=5 // pred_check
      _
    $region10: #{stylespeech2_forward.8} parent=5 // pred_check_branch
      %106 = sbr.rel (%p103) target = $region12
    $region11: #{stylespeech2_forward.8} parent=5 // pred_region
      %s107 = ssub.s32 %s15, 1
    $region12: #{stylespeech2_forward.8} parent=5 // pred_fallthru
      _
    %p108 = scmp.lt.s32.totalorder %s15, 2
    // Predicated region
    $region13: #{stylespeech2_forward.8} parent=5 // pred_check
      %p109 = pneg %p108
    $region14: #{stylespeech2_forward.8} parent=5 // pred_check_branch
      %111 = sbr.rel (%p109) target = $region16
    $region15: #{stylespeech2_forward.8} parent=5 // pred_region
      // Predicated region
      $region17: #{stylespeech2_forward.8} parent=15 // pred_check
        %p112 = pneg %p35
      $region18: #{stylespeech2_forward.8} parent=15 // pred_check_branch
        %114 = sbr.rel (%p112) target = $region20
      $region19: #{stylespeech2_forward.8} parent=15 // pred_region
        %p115 = scmp.lt.s32.totalorder %s15, 1
        %s116 = scalar_select %p115, %s15, 1
        %s117 = smul.addr %s116, 2
        %s118 = smul.addr %s117, 8
        %s119 = scalar_lea.vmem %s1, %s118
      $region20: #{stylespeech2_forward.8} parent=15 // pred_fallthru
        _
      // Predicated region
      $region21: #{stylespeech2_forward.8} parent=15 // pred_check
        %p120 = pneg %p61
      $region22: #{stylespeech2_forward.8} parent=15 // pred_check_branch
        %122 = sbr.rel (%p120) target = $region24
      $region23: #{stylespeech2_forward.8} parent=15 // pred_region
        %p123 = scmp.lt.s32.totalorder %s15, 1
        %s124 = scalar_select %p123, %s15, 1
        %s125 = smul.addr %s124, 2
        %s126 = smul.addr %s125, 8
        %s127 = scalar_lea.vmem %s2, %s126
      $region24: #{stylespeech2_forward.8} parent=15 // pred_fallthru
        _
    $region16: #{stylespeech2_forward.8} parent=5 // pred_fallthru
      _
    %p128 = scmp.le.s32.totalorder 1, %s15
    %p129 = scmp.lt.s32.totalorder %s15, 3
    %p130 = pnand %p128, %p129
    %p131 = pneg %p130
    // Predicated region
    $region25: #{stylespeech2_forward.8} parent=5 // pred_check
      _
    $region26: #{stylespeech2_forward.8} parent=5 // pred_check_branch
      %133 = sbr.rel (%p130) target = $region28
    $region27: #{stylespeech2_forward.8} parent=5 // pred_region
      %s134 = ssub.s32 %s15, 1
      %p135 = scmp.lt.s32.totalorder %s20, 1
      %s136 = scalar_select %p135, %s20, 1
      %s137 = smul.addr %s136, 2
      %s138 = smul.addr %s137, 8
      %s139 = scalar_lea.vmem %s1, %s138
      %p140 = pneg %p41
      %p141 = pneg %p38
      %p142 = scmp.lt.s32.totalorder %s20, 1
      %s143 = scalar_select %p142, %s20, 1
      %s144 = smul.addr %s143, 2
      %s145 = smul.addr %s144, 8
      %s146 = scalar_lea.vmem %s2, %s145
      %p147 = pneg %p67
      %p148 = pneg %p64
      %p149 = pneg %p93
      %p150 = pneg %p90
      %p151 = scmp.lt.s32.totalorder %s20, 1
      %s152 = scalar_select %p151, %s20, 1
      %s153 = smul.addr %s152, 2
      %s154 = smul.addr %s153, 8
      %s155 = scalar_lea.vmem %s3, %s154
      %p156 = scmp.lt.s32.totalorder %s20, 1
      %s157 = scalar_select %p156, %s20, 1
      %s158 = smul.addr %s157, 2
      %s159 = smul.addr %s158, 8
      %s160 = scalar_lea.vmem %s1, %s159
      %p161 = scmp.lt.s32.totalorder %s20, 1
      %s162 = scalar_select %p161, %s20, 1
      %s163 = smul.addr %s162, 2
      %s164 = smul.addr %s163, 8
      %s165 = scalar_lea.vmem %s2, %s164
      %p166 = scmp.lt.s32.totalorder %s20, 1
      %s167 = scalar_select %p166, %s20, 1
      %s168 = smul.addr %s167, 2
      %s169 = smul.addr %s168, 8
      %s170 = scalar_lea.vmem %s3, %s169
      %s171 = sld [smem:[#allocation3 + %s20]]
      %v172 = vld [vmem:[%s160] sm:$0xff]
      %v173 = vld [vmem:[%s160 + $0x8] sm:$0xff]
      %v174 = vld [vmem:[%s165] sm:$0xff]
      %v175 = vld [vmem:[%s165 + $0x8] sm:$0xff]
      %v176 = vadd.f32 %v172, %v174
      %v177 = vadd.f32 %v173, %v175
      %v178 = vlaneseq
      %v179 = vshrl.u32 %v178, 7
      %v180 = vstv %s171
      %vm181 = vcmp.lt.s32.totalorder %v179, %v180
      %v182 = vsel %vm181, 1, 0
      %v183 = vcvt.s32.f32 %v182
      %v184 = vtanh.pop %v176
      %v185 = vtanh.pop %v177
      %v186 = vxor.u32 %v176, 2147483648
      %v187 = vxor.u32 %v177, 2147483648
      %v188 = vmul.f32 %v186, 1.442695
      %v189 = vpow.pop %v188
      %v190 = vmul.f32 %v187, 1.442695
      %v191 = vpow.pop %v190
      %v192 = vadd.f32 %v189, 1.0
      %v193 = vadd.f32 %v191, 1.0
      %v194 = vrcp.pop %v192
      %v195 = vmul.f32 1.0, %v194
      %v196 = vrcp.pop %v193
      %v197 = vmul.f32 1.0, %v196
      %v198 = vmul.f32 %v184, %v195
      %v199 = vmul.f32 %v185, %v197
      %v200 = vmul.f32 %v198, %v183
      %v201 = vmul.f32 %v199, %v183
      %202 = vst [vmem:[%s170] sm:$0xff] %v200
      %203 = vst [vmem:[%s170 + $0x8] sm:$0xff] %v201
      %p204 = scmp.lt.s32.totalorder %s20, 1
      %s205 = scalar_select %p204, %s20, 1
      %s206 = smul.addr %s205, 2
      %s207 = smul.addr %s206, 8
      %s208 = scalar_lea.vmem %s3, %s207
      // Predicated region
      $region29: #{stylespeech2_forward.8} parent=27 // pred_check
        %p209 = pneg %p90
      $region30: #{stylespeech2_forward.8} parent=27 // pred_check_branch
        %211 = sbr.rel (%p209) target = $region32
      $region31: #{stylespeech2_forward.8} parent=27 // pred_region
        _
      $region32: #{stylespeech2_forward.8} parent=27 // pred_fallthru
        _
    $region28: #{stylespeech2_forward.8} parent=5 // pred_fallthru
      _
    %p212 = scmp.le.s32.totalorder 2, %s15
    // Predicated region
    $region33: #{stylespeech2_forward.8} parent=5 // pred_check
      %p213 = pneg %p212
    $region34: #{stylespeech2_forward.8} parent=5 // pred_check_branch
      %215 = sbr.rel (%p213) target = $region36
    $region35: #{stylespeech2_forward.8} parent=5 // pred_region
      %s216 = ssub.s32 %s15, 2
      // Predicated region
      $region37: #{stylespeech2_forward.8} parent=35 // pred_check
        %p217 = pneg %p96
      $region38: #{stylespeech2_forward.8} parent=35 // pred_check_branch
        %219 = sbr.rel (%p217) target = $region40
      $region39: #{stylespeech2_forward.8} parent=35 // pred_region
        %p220 = scmp.lt.s32.totalorder %s21, 1
        %s221 = scalar_select %p220, %s21, 1
        %s222 = smul.addr %s221, 2
        %s223 = smul.addr %s222, 8
        %s224 = scalar_lea.vmem %s3, %s223
      $region40: #{stylespeech2_forward.8} parent=35 // pred_fallthru
        _
    $region36: #{stylespeech2_forward.8} parent=5 // pred_fallthru
      _
  $region6: #{stylespeech2_forward.8} parent=0 // loop_footer
    %s19 = sadd.s32 1, %s15
  $region7: #{stylespeech2_forward.8} parent=0 // loop_footer_branch
    %14 = sbr.rel target = $region3
  $region8: #{stylespeech2_forward.8} parent=0 // loop_exit
    _

// kernel: stylespeech2_forward.9
$region0: #{stylespeech2_forward.9}
  #allocation0 [shape = 'u32[]', space=smem, size = 0x4, offset = 0x4, fixed_abs, tag = 'smem constant byte address 0x4 - core index']
  #allocation1 [shape = 'u32[144,128]{1,0:T(1,128)}', space=vmem, size = 0x12000, scoped, tag = 'internal scratch']
  #allocation2 [shape = 's32[1]{0}', space=sflag, size = 0x4, scoped, tag = 'scoped memory for stylespeech2_forward.9']
  #allocation3 [shape = 'u8[512]{0}', space=smem, size = 0x200, scoped, tag = 'prefetched SMEM operand 0']
  %s0 = inlined_call_operand.vmem [shape: s32[2], index: 0, kind: input, shape index: {}]
  %s1 = inlined_call_operand.vmem [shape: f32[2,8,256], index: 1, kind: input, shape index: {}]
  %s2 = inlined_call_operand.vmem [shape: bf16[768,256], index: 2, kind: input, shape index: {}]
  %s3 = inlined_call_operand.vmem [shape: f32[1,256], index: 3, kind: input, shape index: {}]
  %s4 = inlined_call_operand.vmem [shape: f32[1,256], index: 4, kind: input, shape index: {}]
  %s5 = inlined_call_operand.vmem [shape: f32[1,256], index: 5, kind: input, shape index: {}]
  %s6 = inlined_call_operand.vmem [shape: bf16[768,256], index: 6, kind: input, shape index: {}]
  %s7 = inlined_call_operand.vmem [shape: f32[1,256], index: 7, kind: input, shape index: {}]
  %s8 = inlined_call_operand.vmem [shape: f32[1,256], index: 8, kind: input, shape index: {}]
  %s9 = inlined_call_operand.vmem [shape: f32[1,256], index: 9, kind: input, shape index: {}]
  %s10 = inlined_call_operand.vmem [shape: bf16[256,128], index: 10, kind: input, shape index: {}]
  %s11 = inlined_call_operand.vmem [shape: f32[1,128], index: 11, kind: input, shape index: {}]
  %s12 = inlined_call_operand.vmem [shape: f32[2,8,128], index: 12, kind: output, shape index: {}]
  %s13 = sld [smem:[#allocation0]]
  $region77: #{stylespeech2_forward.9} parent=0
    _
  %s15 = ssub.s32 1, %s13
  %s16 = scalar_select 0, %s15, %s13
  %s17 = sshll.u32 %s0, 4
  %s18 = int_to_ptr.vmem [resolvable:$true] %s17
  %20 = dma.vmem_to_smem %s18, 16, [#allocation3], [#allocation2]
  %21 = dma.done [#allocation2], 16
  %22 = sfence
  loop: start=0, step=1, limit=4
  $region2: #{stylespeech2_forward.9} parent=0 // loop_pre_header
    _
  $region3: #{stylespeech2_forward.9} parent=0 // loop_header
    %s24 = sphi 0, %s28
    %p25 = scmp.ge.s32.totalorder %s24, 4
    %s34 = sphi 0, %s36
    %s37 = sphi 0, %s34
    %s38 = sphi 0, %s37
    %s54 = sphi 0, %s38
    %s58 = sphi 0, %s58
    %s60 = sphi 0, %s58
    %s61 = sphi 0, %s60
    %s75 = sphi 0, %s61
    %s79 = sphi 0, %s79
    %s81 = sphi 0, %s79
    %s82 = sphi 0, %s81
    %s96 = sphi 0, %s82
    %s100 = sphi 0, %s100
    %s102 = sphi 0, %s100
    %s103 = sphi 0, %s102
    %s117 = sphi 0, %s103
    %s121 = sphi 0, %s121
    %s123 = sphi 0, %s121
    %s124 = sphi 0, %s123
    %s138 = sphi 0, %s124
    %s142 = sphi 0, %s142
    %s144 = sphi 0, %s142
    %s145 = sphi 0, %s144
    %s159 = sphi 0, %s145
    %s163 = sphi 0, %s163
    %s165 = sphi 0, %s163
    %s166 = sphi 0, %s165
    %s180 = sphi 0, %s166
    %s184 = sphi 0, %s184
    %s186 = sphi 0, %s184
    %s187 = sphi 0, %s186
    %s201 = sphi 0, %s187
    %s205 = sphi 0, %s205
    %s207 = sphi 0, %s205
    %s208 = sphi 0, %s207
    %s222 = sphi 0, %s208
    %s226 = sphi 0, %s226
    %s228 = sphi 0, %s226
    %s229 = sphi 0, %s228
    %s243 = sphi 0, %s229
    %s247 = sphi 0, %s247
    %s249 = sphi 0, %s247
    %s250 = sphi 0, %s249
    %s264 = sphi 0, %s250
    %s270 = sphi 0, %s272
    %s273 = sphi 0, %s270
    %s274 = sphi 0, %s273
    %s290 = sphi 0, %s274
  $region4: #{stylespeech2_forward.9} parent=0 // loop_header_branch
    %27 = sbr.rel (%p25) target = $region8
  $region5: #{stylespeech2_forward.9} parent=0 // loop_body
    %s29 = ssub.s32 %s24, 1
    %s30 = ssub.s32 %s24, 2
    %s31 = sadd.s32 %s24, 1
    %s32 = ssub.s32 %s24, %s31
    %p33 = scmp.eq.s32.totalorder %s32, 0
    %s35 = sadd.s32 %s34, 1
    %s36 = scalar_select %p33, %s34, %s35
    %p39 = pneg %p33
    %p40 = scmp.eq.s32.totalorder %s24, 1
    %p41 = por %p39, %p40
    %p42 = scmp.ne.s32.totalorder %s34, %s37
    %p43 = scmp.eq.s32.totalorder %s24, 0
    %p44 = por %p42, %p43
    %p45 = scmp.ne.s32.totalorder %s34, %s37
    %p46 = scmp.eq.s32.totalorder %s29, 1
    %p47 = por %p45, %p46
    %p48 = scmp.ne.s32.totalorder %s37, %s38
    %p49 = scmp.eq.s32.totalorder %s29, 0
    %p50 = por %p48, %p49
    %p51 = scmp.ne.s32.totalorder %s37, %s38
    %p52 = scmp.eq.s32.totalorder %s30, 1
    %p53 = por %p51, %p52
    %p55 = scmp.ne.s32.totalorder %s38, %s54
    %p56 = scmp.eq.s32.totalorder %s30, 0
    %p57 = por %p55, %p56
    %s59 = sadd.s32 %s58, 1
    %p62 = scmp.eq.s32.totalorder %s24, 1
    %p63 = scmp.ne.s32.totalorder %s58, %s60
    %p64 = scmp.eq.s32.totalorder %s24, 0
    %p65 = por %p63, %p64
    %p66 = scmp.ne.s32.totalorder %s58, %s60
    %p67 = scmp.eq.s32.totalorder %s29, 1
    %p68 = por %p66, %p67
    %p69 = scmp.ne.s32.totalorder %s60, %s61
    %p70 = scmp.eq.s32.totalorder %s29, 0
    %p71 = por %p69, %p70
    %p72 = scmp.ne.s32.totalorder %s60, %s61
    %p73 = scmp.eq.s32.totalorder %s30, 1
    %p74 = por %p72, %p73
    %p76 = scmp.ne.s32.totalorder %s61, %s75
    %p77 = scmp.eq.s32.totalorder %s30, 0
    %p78 = por %p76, %p77
    %s80 = sadd.s32 %s79, 1
    %p83 = scmp.eq.s32.totalorder %s24, 1
    %p84 = scmp.ne.s32.totalorder %s79, %s81
    %p85 = scmp.eq.s32.totalorder %s24, 0
    %p86 = por %p84, %p85
    %p87 = scmp.ne.s32.totalorder %s79, %s81
    %p88 = scmp.eq.s32.totalorder %s29, 1
    %p89 = por %p87, %p88
    %p90 = scmp.ne.s32.totalorder %s81, %s82
    %p91 = scmp.eq.s32.totalorder %s29, 0
    %p92 = por %p90, %p91
    %p93 = scmp.ne.s32.totalorder %s81, %s82
    %p94 = scmp.eq.s32.totalorder %s30, 1
    %p95 = por %p93, %p94
    %p97 = scmp.ne.s32.totalorder %s82, %s96
    %p98 = scmp.eq.s32.totalorder %s30, 0
    %p99 = por %p97, %p98
    %s101 = sadd.s32 %s100, 1
    %p104 = scmp.eq.s32.totalorder %s24, 1
    %p105 = scmp.ne.s32.totalorder %s100, %s102
    %p106 = scmp.eq.s32.totalorder %s24, 0
    %p107 = por %p105, %p106
    %p108 = scmp.ne.s32.totalorder %s100, %s102
    %p109 = scmp.eq.s32.totalorder %s29, 1
    %p110 = por %p108, %p109
    %p111 = scmp.ne.s32.totalorder %s102, %s103
    %p112 = scmp.eq.s32.totalorder %s29, 0
    %p113 = por %p111, %p112
    %p114 = scmp.ne.s32.totalorder %s102, %s103
    %p115 = scmp.eq.s32.totalorder %s30, 1
    %p116 = por %p114, %p115
    %p118 = scmp.ne.s32.totalorder %s103, %s117
    %p119 = scmp.eq.s32.totalorder %s30, 0
    %p120 = por %p118, %p119
    %s122 = sadd.s32 %s121, 1
    %p125 = scmp.eq.s32.totalorder %s24, 1
    %p126 = scmp.ne.s32.totalorder %s121, %s123
    %p127 = scmp.eq.s32.totalorder %s24, 0
    %p128 = por %p126, %p127
    %p129 = scmp.ne.s32.totalorder %s121, %s123
    %p130 = scmp.eq.s32.totalorder %s29, 1
    %p131 = por %p129, %p130
    %p132 = scmp.ne.s32.totalorder %s123, %s124
    %p133 = scmp.eq.s32.totalorder %s29, 0
    %p134 = por %p132, %p133
    %p135 = scmp.ne.s32.totalorder %s123, %s124
    %p136 = scmp.eq.s32.totalorder %s30, 1
    %p137 = por %p135, %p136
    %p139 = scmp.ne.s32.totalorder %s124, %s138
    %p140 = scmp.eq.s32.totalorder %s30, 0
    %p141 = por %p139, %p140
    %s143 = sadd.s32 %s142, 1
    %p146 = scmp.eq.s32.totalorder %s24, 1
    %p147 = scmp.ne.s32.totalorder %s142, %s144
    %p148 = scmp.eq.s32.totalorder %s24, 0
    %p149 = por %p147, %p148
    %p150 = scmp.ne.s32.totalorder %s142, %s144
    %p151 = scmp.eq.s32.totalorder %s29, 1
    %p152 = por %p150, %p151
    %p153 = scmp.ne.s32.totalorder %s144, %s145
    %p154 = scmp.eq.s32.totalorder %s29, 0
    %p155 = por %p153, %p154
    %p156 = scmp.ne.s32.totalorder %s144, %s145
    %p157 = scmp.eq.s32.totalorder %s30, 1
    %p158 = por %p156, %p157
    %p160 = scmp.ne.s32.totalorder %s145, %s159
    %p161 = scmp.eq.s32.totalorder %s30, 0
    %p162 = por %p160, %p161
    %s164 = sadd.s32 %s163, 1
    %p167 = scmp.eq.s32.totalorder %s24, 1
    %p168 = scmp.ne.s32.totalorder %s163, %s165
    %p169 = scmp.eq.s32.totalorder %s24, 0
    %p170 = por %p168, %p169
    %p171 = scmp.ne.s32.totalorder %s163, %s165
    %p172 = scmp.eq.s32.totalorder %s29, 1
    %p173 = por %p171, %p172
    %p174 = scmp.ne.s32.totalorder %s165, %s166
    %p175 = scmp.eq.s32.totalorder %s29, 0
    %p176 = por %p174, %p175
    %p177 = scmp.ne.s32.totalorder %s165, %s166
    %p178 = scmp.eq.s32.totalorder %s30, 1
    %p179 = por %p177, %p178
    %p181 = scmp.ne.s32.totalorder %s166, %s180
    %p182 = scmp.eq.s32.totalorder %s30, 0
    %p183 = por %p181, %p182
    %s185 = sadd.s32 %s184, 1
    %p188 = scmp.eq.s32.totalorder %s24, 1
    %p189 = scmp.ne.s32.totalorder %s184, %s186
    %p190 = scmp.eq.s32.totalorder %s24, 0
    %p191 = por %p189, %p190
    %p192 = scmp.ne.s32.totalorder %s184, %s186
    %p193 = scmp.eq.s32.totalorder %s29, 1
    %p194 = por %p192, %p193
    %p195 = scmp.ne.s32.totalorder %s186, %s187
    %p196 = scmp.eq.s32.totalorder %s29, 0
    %p197 = por %p195, %p196
    %p198 = scmp.ne.s32.totalorder %s186, %s187
    %p199 = scmp.eq.s32.totalorder %s30, 1
    %p200 = por %p198, %p199
    %p202 = scmp.ne.s32.totalorder %s187, %s201
    %p203 = scmp.eq.s32.totalorder %s30, 0
    %p204 = por %p202, %p203
    %s206 = sadd.s32 %s205, 1
    %p209 = scmp.eq.s32.totalorder %s24, 1
    %p210 = scmp.ne.s32.totalorder %s205, %s207
    %p211 = scmp.eq.s32.totalorder %s24, 0
    %p212 = por %p210, %p211
    %p213 = scmp.ne.s32.totalorder %s205, %s207
    %p214 = scmp.eq.s32.totalorder %s29, 1
    %p215 = por %p213, %p214
    %p216 = scmp.ne.s32.totalorder %s207, %s208
    %p217 = scmp.eq.s32.totalorder %s29, 0
    %p218 = por %p216, %p217
    %p219 = scmp.ne.s32.totalorder %s207, %s208
    %p220 = scmp.eq.s32.totalorder %s30, 1
    %p221 = por %p219, %p220
    %p223 = scmp.ne.s32.totalorder %s208, %s222
    %p224 = scmp.eq.s32.totalorder %s30, 0
    %p225 = por %p223, %p224
    %s227 = sadd.s32 %s226, 1
    %p230 = scmp.eq.s32.totalorder %s24, 1
    %p231 = scmp.ne.s32.totalorder %s226, %s228
    %p232 = scmp.eq.s32.totalorder %s24, 0
    %p233 = por %p231, %p232
    %p234 = scmp.ne.s32.totalorder %s226, %s228
    %p235 = scmp.eq.s32.totalorder %s29, 1
    %p236 = por %p234, %p235
    %p237 = scmp.ne.s32.totalorder %s228, %s229
    %p238 = scmp.eq.s32.totalorder %s29, 0
    %p239 = por %p237, %p238
    %p240 = scmp.ne.s32.totalorder %s228, %s229
    %p241 = scmp.eq.s32.totalorder %s30, 1
    %p242 = por %p240, %p241
    %p244 = scmp.ne.s32.totalorder %s229, %s243
    %p245 = scmp.eq.s32.totalorder %s30, 0
    %p246 = por %p244, %p245
    %s248 = sadd.s32 %s247, 1
    %p251 = scmp.eq.s32.totalorder %s24, 1
    %p252 = scmp.ne.s32.totalorder %s247, %s249
    %p253 = scmp.eq.s32.totalorder %s24, 0
    %p254 = por %p252, %p253
    %p255 = scmp.ne.s32.totalorder %s247, %s249
    %p256 = scmp.eq.s32.totalorder %s29, 1
    %p257 = por %p255, %p256
    %p258 = scmp.ne.s32.totalorder %s249, %s250
    %p259 = scmp.eq.s32.totalorder %s29, 0
    %p260 = por %p258, %p259
    %p261 = scmp.ne.s32.totalorder %s249, %s250
    %p262 = scmp.eq.s32.totalorder %s30, 1
    %p263 = por %p261, %p262
    %p265 = scmp.ne.s32.totalorder %s250, %s264
    %p266 = scmp.eq.s32.totalorder %s30, 0
    %p267 = por %p265, %p266
    %s268 = ssub.s32 %s24, %s31
    %p269 = scmp.eq.s32.totalorder %s268, 0
    %s271 = sadd.s32 %s270, 1
    %s272 = scalar_select %p269, %s270, %s271
    %p275 = pneg %p269
    %p276 = scmp.eq.s32.totalorder %s24, 1
    %p277 = por %p275, %p276
    %p278 = scmp.ne.s32.totalorder %s270, %s273
    %p279 = scmp.eq.s32.totalorder %s24, 0
    %p280 = por %p278, %p279
    %p281 = scmp.ne.s32.totalorder %s270, %s273
    %p282 = scmp.eq.s32.totalorder %s29, 1
    %p283 = por %p281, %p282
    %p284 = scmp.ne.s32.totalorder %s273, %s274
    %p285 = scmp.eq.s32.totalorder %s29, 0
    %p286 = por %p284, %p285
    %p287 = scmp.ne.s32.totalorder %s273, %s274
    %p288 = scmp.eq.s32.totalorder %s30, 1
    %p289 = por %p287, %p288
    %p291 = scmp.ne.s32.totalorder %s274, %s290
    %p292 = scmp.eq.s32.totalorder %s30, 0
    %p293 = por %p291, %p292
    %p294 = scmp.le.s32.totalorder 1, %s24
    %p295 = scmp.lt.s32.totalorder %s24, 3
    %p296 = pnand %p294, %p295
    %p297 = pneg %p296
    // Predicated region
    $region9: #{stylespeech2_forward.9} parent=5 // pred_check
      _
    $region10: #{stylespeech2_forward.9} parent=5 // pred_check_branch
      %299 = sbr.rel (%p296) target = $region12
    $region11: #{stylespeech2_forward.9} parent=5 // pred_region
      %s300 = ssub.s32 %s24, 1
      // Predicated region
      $region13: #{stylespeech2_forward.9} parent=11 // pred_check
        %p301 = pneg %p71
      $region14: #{stylespeech2_forward.9} parent=11 // pred_check_branch
        %303 = sbr.rel (%p301) target = $region16
      $region15: #{stylespeech2_forward.9} parent=11 // pred_region
        _
      $region16: #{stylespeech2_forward.9} parent=11 // pred_fallthru
        _
      // Predicated region
      $region17: #{stylespeech2_forward.9} parent=11 // pred_check
        %p304 = pneg %p92
      $region18: #{stylespeech2_forward.9} parent=11 // pred_check_branch
        %306 = sbr.rel (%p304) target = $region20
      $region19: #{stylespeech2_forward.9} parent=11 // pred_region
        _
      $region20: #{stylespeech2_forward.9} parent=11 // pred_fallthru
        _
      // Predicated region
      $region21: #{stylespeech2_forward.9} parent=11 // pred_check
        %p307 = pneg %p113
      $region22: #{stylespeech2_forward.9} parent=11 // pred_check_branch
        %309 = sbr.rel (%p307) target = $region24
      $region23: #{stylespeech2_forward.9} parent=11 // pred_region
        _
      $region24: #{stylespeech2_forward.9} parent=11 // pred_fallthru
        _
      // Predicated region
      $region25: #{stylespeech2_forward.9} parent=11 // pred_check
        %p310 = pneg %p134
      $region26: #{stylespeech2_forward.9} parent=11 // pred_check_branch
        %312 = sbr.rel (%p310) target = $region28
      $region27: #{stylespeech2_forward.9} parent=11 // pred_region
        _
      $region28: #{stylespeech2_forward.9} parent=11 // pred_fallthru
        _
      // Predicated region
      $region29: #{stylespeech2_forward.9} parent=11 // pred_check
        %p313 = pneg %p155
      $region30: #{stylespeech2_forward.9} parent=11 // pred_check_branch
        %315 = sbr.rel (%p313) target = $region32
      $region31: #{stylespeech2_forward.9} parent=11 // pred_region
        _
      $region32: #{stylespeech2_forward.9} parent=11 // pred_fallthru
        _
      // Predicated region
      $region33: #{stylespeech2_forward.9} parent=11 // pred_check
        %p316 = pneg %p176
      $region34: #{stylespeech2_forward.9} parent=11 // pred_check_branch
        %318 = sbr.rel (%p316) target = $region36
      $region35: #{stylespeech2_forward.9} parent=11 // pred_region
        _
      $region36: #{stylespeech2_forward.9} parent=11 // pred_fallthru
        _
      // Predicated region
      $region37: #{stylespeech2_forward.9} parent=11 // pred_check
        %p319 = pneg %p197
      $region38: #{stylespeech2_forward.9} parent=11 // pred_check_branch
        %321 = sbr.rel (%p319) target = $region40
      $region39: #{stylespeech2_forward.9} parent=11 // pred_region
        _
      $region40: #{stylespeech2_forward.9} parent=11 // pred_fallthru
        _
      // Predicated region
      $region41: #{stylespeech2_forward.9} parent=11 // pred_check
        %p322 = pneg %p218
      $region42: #{stylespeech2_forward.9} parent=11 // pred_check_branch
        %324 = sbr.rel (%p322) target = $region44
      $region43: #{stylespeech2_forward.9} parent=11 // pred_region
        _
      $region44: #{stylespeech2_forward.9} parent=11 // pred_fallthru
        _
      // Predicated region
      $region45: #{stylespeech2_forward.9} parent=11 // pred_check
        %p325 = pneg %p239
      $region46: #{stylespeech2_forward.9} parent=11 // pred_check_branch
        %327 = sbr.rel (%p325) target = $region48
      $region47: #{stylespeech2_forward.9} parent=11 // pred_region
        _
      $region48: #{stylespeech2_forward.9} parent=11 // pred_fallthru
        _
      // Predicated region
      $region49: #{stylespeech2_forward.9} parent=11 // pred_check
        %p328 = pneg %p260
      $region50: #{stylespeech2_forward.9} parent=11 // pred_check_branch
        %330 = sbr.rel (%p328) target = $region52
      $region51: #{stylespeech2_forward.9} parent=11 // pred_region
        _
      $region52: #{stylespeech2_forward.9} parent=11 // pred_fallthru
        _
    $region12: #{stylespeech2_forward.9} parent=5 // pred_fallthru
      _
    %p331 = scmp.lt.s32.totalorder %s24, 2
    // Predicated region
    $region53: #{stylespeech2_forward.9} parent=5 // pred_check
      %p332 = pneg %p331
    $region54: #{stylespeech2_forward.9} parent=5 // pred_check_branch
      %334 = sbr.rel (%p332) target = $region56
    $region55: #{stylespeech2_forward.9} parent=5 // pred_region
      // Predicated region
      $region57: #{stylespeech2_forward.9} parent=55 // pred_check
        %p335 = pneg %p44
      $region58: #{stylespeech2_forward.9} parent=55 // pred_check_branch
        %337 = sbr.rel (%p335) target = $region60
      $region59: #{stylespeech2_forward.9} parent=55 // pred_region
        %p338 = scmp.lt.s32.totalorder %s24, 1
        %s339 = scalar_select %p338, %s24, 1
        %s340 = smul.addr %s339, 2
        %s341 = smul.addr %s340, 8
        %s342 = scalar_lea.vmem %s1, %s341
      $region60: #{stylespeech2_forward.9} parent=55 // pred_fallthru
        _
    $region56: #{stylespeech2_forward.9} parent=5 // pred_fallthru
      _
    %p343 = scmp.le.s32.totalorder 1, %s24
    %p344 = scmp.lt.s32.totalorder %s24, 3
    %p345 = pnand %p343, %p344
    %p346 = pneg %p345
    // Predicated region
    $region61: #{stylespeech2_forward.9} parent=5 // pred_check
      _
    $region62: #{stylespeech2_forward.9} parent=5 // pred_check_branch
      %348 = sbr.rel (%p345) target = $region64
    $region63: #{stylespeech2_forward.9} parent=5 // pred_region
      %s349 = ssub.s32 %s24, 1
      %p350 = scmp.lt.s32.totalorder %s29, 1
      %s351 = scalar_select %p350, %s29, 1
      %s352 = smul.addr %s351, 2
      %s353 = smul.addr %s352, 8
      %s354 = scalar_lea.vmem %s1, %s353
      %p355 = pneg %p50
      %p356 = pneg %p47
      %p357 = pneg %p71
      %p358 = pneg %p68
      %p359 = pneg %p92
      %p360 = pneg %p89
      %p361 = pneg %p113
      %p362 = pneg %p110
      %p363 = pneg %p134
      %p364 = pneg %p131
      %p365 = pneg %p155
      %p366 = pneg %p152
      %p367 = pneg %p176
      %p368 = pneg %p173
      %p369 = pneg %p197
      %p370 = pneg %p194
      %p371 = pneg %p218
      %p372 = pneg %p215
      %p373 = pneg %p239
      %p374 = pneg %p236
      %p375 = pneg %p260
      %p376 = pneg %p257
      %p377 = pneg %p286
      %p378 = pneg %p283
      %p379 = scmp.lt.s32.totalorder %s29, 1
      %s380 = scalar_select %p379, %s29, 1
      %s381 = smul.addr %s380, 8
      %s382 = scalar_lea.vmem %s12, %s381
      %p383 = scmp.lt.s32.totalorder %s29, 1
      %s384 = scalar_select %p383, %s29, 1
      %s385 = smul.addr %s384, 2
      %s386 = smul.addr %s385, 8
      %s387 = scalar_lea.vmem %s1, %s386
      %p388 = scmp.lt.s32.totalorder %s29, 1
      %s389 = scalar_select %p388, %s29, 1
      %s390 = smul.addr %s389, 8
      %s391 = scalar_lea.vmem %s12, %s390
      %s393 = sld [smem:[#allocation3 + %s29]]
      %v394 = vld [vmem:[%s387] sm:$0xff]
      %v395 = vld [vmem:[%s387 + $0x8] sm:$0xff]
      %v396 = vlaneseq
      %v397 = vshrl.u32 %v396, 7
      %v398 = vrot.slane %v394, 7
      %v399 = vrot.slane %v395, 7
      %vm400 = vcmp.ge.s32.totalorder %v397, 1
      %v401 = vsel %vm400, 1, 0
      %vm402 = vcmp.eq.s32.totalorder %v401, 1
      %v403 = vsel %vm402, %v398, 0.0
      %v404 = vsel %vm402, %v399, 0.0
      %v405 = vrot.slane %v394, 1
      %v406 = vrot.slane %v395, 1
      %vm407 = vcmp.lt.s32.totalorder %v397, 7
      %v408 = vsel %vm407, 1, 0
      %vm409 = vcmp.eq.s32.totalorder %v408, 1
      %v410 = vsel %vm409, %v405, 0.0
      %v411 = vsel %vm409, %v406, 0.0
      %v412 = vpack.c.bf16 %v403, %v403
      %v413 = vpack.c.bf16 %v404, %v404
      %v414 = vpack.c.bf16 %v394, %v394
      %v415 = vpack.c.bf16 %v395, %v395
      %v416 = vpack.c.bf16 %v410, %v410
      %v417 = vpack.c.bf16 %v411, %v411
      %v418 = vld [vmem:[%s2] sm:$0xff]
      %v419 = vld [vmem:[%s2 + $0x8] sm:$0xff]
      %v420 = vld [vmem:[%s2 + $0x10] sm:$0xff]
      %v421 = vld [vmem:[%s2 + $0x18] sm:$0xff]
      %v422 = vld [vmem:[%s2 + $0x20] sm:$0xff]
      %v423 = vld [vmem:[%s2 + $0x28] sm:$0xff]
      %v424 = vld [vmem:[%s2 + $0x30] sm:$0xff]
      %v425 = vld [vmem:[%s2 + $0x38] sm:$0xff]
      %v426 = vld [vmem:[%s2 + $0x40] sm:$0xff]
      %v427 = vld [vmem:[%s2 + $0x48] sm:$0xff]
      %v428 = vld [vmem:[%s2 + $0x50] sm:$0xff]
      %v429 = vld [vmem:[%s2 + $0x58] sm:$0xff]
      %v430 = vld [vmem:[%s2 + $0x60] sm:$0xff]
      %v431 = vld [vmem:[%s2 + $0x68] sm:$0xff]
      %v432 = vld [vmem:[%s2 + $0x70] sm:$0xff]
      %v433 = vld [vmem:[%s2 + $0x78] sm:$0xff]
      %v434 = vld [vmem:[%s2 + $0x80] sm:$0xff]
      %v435 = vld [vmem:[%s2 + $0x88] sm:$0xff]
      %v436 = vld [vmem:[%s2 + $0x90] sm:$0xff]
      %v437 = vld [vmem:[%s2 + $0x98] sm:$0xff]
      %v438 = vld [vmem:[%s2 + $0xa0] sm:$0xff]
      %v439 = vld [vmem:[%s2 + $0xa8] sm:$0xff]
      %v440 = vld [vmem:[%s2 + $0xb0] sm:$0xff]
      %v441 = vld [vmem:[%s2 + $0xb8] sm:$0xff]
      %v442 = vld [vmem:[%s2 + $0xc0] sm:$0xff]
      %v443 = vld [vmem:[%s2 + $0xc8] sm:$0xff]
      %v444 = vld [vmem:[%s2 + $0xd0] sm:$0xff]
      %v445 = vld [vmem:[%s2 + $0xd8] sm:$0xff]
      %v446 = vld [vmem:[%s2 + $0xe0] sm:$0xff]
      %v447 = vld [vmem:[%s2 + $0xe8] sm:$0xff]
      %v448 = vld [vmem:[%s2 + $0xf0] sm:$0xff]
      %v449 = vld [vmem:[%s2 + $0xf8] sm:$0xff]
      %v450 = vld [vmem:[%s2 + $0x100] sm:$0xff]
      %v451 = vld [vmem:[%s2 + $0x108] sm:$0xff]
      %v452 = vld [vmem:[%s2 + $0x110] sm:$0xff]
      %v453 = vld [vmem:[%s2 + $0x118] sm:$0xff]
      %v454 = vld [vmem:[%s2 + $0x120] sm:$0xff]
      %v455 = vld [vmem:[%s2 + $0x128] sm:$0xff]
      %v456 = vld [vmem:[%s2 + $0x130] sm:$0xff]
      %v457 = vld [vmem:[%s2 + $0x138] sm:$0xff]
      %v458 = vld [vmem:[%s2 + $0x140] sm:$0xff]
      %v459 = vld [vmem:[%s2 + $0x148] sm:$0xff]
      %v460 = vld [vmem:[%s2 + $0x150] sm:$0xff]
      %v461 = vld [vmem:[%s2 + $0x158] sm:$0xff]
      %v462 = vld [vmem:[%s2 + $0x160] sm:$0xff]
      %v463 = vld [vmem:[%s2 + $0x168] sm:$0xff]
      %v464 = vld [vmem:[%s2 + $0x170] sm:$0xff]
      %v465 = vld [vmem:[%s2 + $0x178] sm:$0xff]
      %v466 = vld [vmem:[%s2 + $0x180] sm:$0xff]
      %v467 = vld [vmem:[%s2 + $0x188] sm:$0xff]
      %v468 = vld [vmem:[%s2 + $0x190] sm:$0xff]
      %v469 = vld [vmem:[%s2 + $0x198] sm:$0xff]
      %v470 = vld [vmem:[%s2 + $0x1a0] sm:$0xff]
      %v471 = vld [vmem:[%s2 + $0x1a8] sm:$0xff]
      %v472 = vld [vmem:[%s2 + $0x1b0] sm:$0xff]
      %v473 = vld [vmem:[%s2 + $0x1b8] sm:$0xff]
      %v474 = vld [vmem:[%s2 + $0x1c0] sm:$0xff]
      %v475 = vld [vmem:[%s2 + $0x1c8] sm:$0xff]
      %v476 = vld [vmem:[%s2 + $0x1d0] sm:$0xff]
      %v477 = vld [vmem:[%s2 + $0x1d8] sm:$0xff]
      %v478 = vld [vmem:[%s2 + $0x1e0] sm:$0xff]
      %v479 = vld [vmem:[%s2 + $0x1e8] sm:$0xff]
      %v480 = vld [vmem:[%s2 + $0x1f0] sm:$0xff]
      %v481 = vld [vmem:[%s2 + $0x1f8] sm:$0xff]
      %v482 = vld [vmem:[%s2 + $0x200] sm:$0xff]
      %v483 = vld [vmem:[%s2 + $0x208] sm:$0xff]
      %v484 = vld [vmem:[%s2 + $0x210] sm:$0xff]
      %v485 = vld [vmem:[%s2 + $0x218] sm:$0xff]
      %v486 = vld [vmem:[%s2 + $0x220] sm:$0xff]
      %v487 = vld [vmem:[%s2 + $0x228] sm:$0xff]
      %v488 = vld [vmem:[%s2 + $0x230] sm:$0xff]
      %v489 = vld [vmem:[%s2 + $0x238] sm:$0xff]
      %v490 = vld [vmem:[%s2 + $0x240] sm:$0xff]
      %v491 = vld [vmem:[%s2 + $0x248] sm:$0xff]
      %v492 = vld [vmem:[%s2 + $0x250] sm:$0xff]
      %v493 = vld [vmem:[%s2 + $0x258] sm:$0xff]
      %v494 = vld [vmem:[%s2 + $0x260] sm:$0xff]
      %v495 = vld [vmem:[%s2 + $0x268] sm:$0xff]
      %v496 = vld [vmem:[%s2 + $0x270] sm:$0xff]
      %v497 = vld [vmem:[%s2 + $0x278] sm:$0xff]
      %v498 = vld [vmem:[%s2 + $0x280] sm:$0xff]
      %v499 = vld [vmem:[%s2 + $0x288] sm:$0xff]
      %v500 = vld [vmem:[%s2 + $0x290] sm:$0xff]
      %v501 = vld [vmem:[%s2 + $0x298] sm:$0xff]
      %v502 = vld [vmem:[%s2 + $0x2a0] sm:$0xff]
      %v503 = vld [vmem:[%s2 + $0x2a8] sm:$0xff]
      %v504 = vld [vmem:[%s2 + $0x2b0] sm:$0xff]
      %v505 = vld [vmem:[%s2 + $0x2b8] sm:$0xff]
      %v506 = vld [vmem:[%s2 + $0x2c0] sm:$0xff]
      %v507 = vld [vmem:[%s2 + $0x2c8] sm:$0xff]
      %v508 = vld [vmem:[%s2 + $0x2d0] sm:$0xff]
      %v509 = vld [vmem:[%s2 + $0x2d8] sm:$0xff]
      %v510 = vld [vmem:[%s2 + $0x2e0] sm:$0xff]
      %v511 = vld [vmem:[%s2 + $0x2e8] sm:$0xff]
      %v512 = vld [vmem:[%s2 + $0x2f0] sm:$0xff]
      %v513 = vld [vmem:[%s2 + $0x2f8] sm:$0xff]
      %v514 = vld [vmem:[%s3] sm:$0x3]
      %v516 = vlaneseq
      %v517 = vshrl.u32 %v516, 7
      %v518 = vsub.s32 0, %v517
      %v519 = vrot.slane %v514, %v518
      %v520 = vlaneseq
      %v521 = vshrl.u32 %v520, 7
      %v522 = vsub.s32 1, %v521
      %v523 = vrot.slane %v514, %v522
      %v622 = vunpack.c.l.b16 %v418
      %v623 = vunpack.c.h.b16 %v418
      %v624 = vunpack.c.l.b16 %v419
      %v625 = vunpack.c.h.b16 %v419
      %v626 = vunpack.c.l.b16 %v420
      %v627 = vunpack.c.h.b16 %v420
      %v628 = vunpack.c.l.b16 %v421
      %v629 = vunpack.c.h.b16 %v421
      %v630 = vunpack.c.l.b16 %v422
      %v631 = vunpack.c.h.b16 %v422
      %v632 = vunpack.c.l.b16 %v423
      %v633 = vunpack.c.h.b16 %v423
      %v634 = vunpack.c.l.b16 %v424
      %v635 = vunpack.c.h.b16 %v424
      %v636 = vunpack.c.l.b16 %v425
      %v637 = vunpack.c.h.b16 %v425
      %v638 = vunpack.c.l.b16 %v426
      %v639 = vunpack.c.h.b16 %v426
      %v640 = vunpack.c.l.b16 %v427
      %v641 = vunpack.c.h.b16 %v427
      %v642 = vunpack.c.l.b16 %v428
      %v643 = vunpack.c.h.b16 %v428
      %v644 = vunpack.c.l.b16 %v429
      %v645 = vunpack.c.h.b16 %v429
      %v646 = vunpack.c.l.b16 %v430
      %v647 = vunpack.c.h.b16 %v430
      %v648 = vunpack.c.l.b16 %v431
      %v649 = vunpack.c.h.b16 %v431
      %v650 = vunpack.c.l.b16 %v432
      %v651 = vunpack.c.h.b16 %v432
      %v652 = vunpack.c.l.b16 %v433
      %v653 = vunpack.c.h.b16 %v433
      %v654 = vunpack.c.l.b16 %v434
      %v655 = vunpack.c.h.b16 %v434
      %v656 = vunpack.c.l.b16 %v435
      %v657 = vunpack.c.h.b16 %v435
      %v658 = vunpack.c.l.b16 %v436
      %v659 = vunpack.c.h.b16 %v436
      %v660 = vunpack.c.l.b16 %v437
      %v661 = vunpack.c.h.b16 %v437
      %v662 = vunpack.c.l.b16 %v438
      %v663 = vunpack.c.h.b16 %v438
      %v664 = vunpack.c.l.b16 %v439
      %v665 = vunpack.c.h.b16 %v439
      %v666 = vunpack.c.l.b16 %v440
      %v667 = vunpack.c.h.b16 %v440
      %v668 = vunpack.c.l.b16 %v441
      %v669 = vunpack.c.h.b16 %v441
      %v670 = vunpack.c.l.b16 %v442
      %v671 = vunpack.c.h.b16 %v442
      %v672 = vunpack.c.l.b16 %v443
      %v673 = vunpack.c.h.b16 %v443
      %v674 = vunpack.c.l.b16 %v444
      %v675 = vunpack.c.h.b16 %v444
      %v676 = vunpack.c.l.b16 %v445
      %v677 = vunpack.c.h.b16 %v445
      %v678 = vunpack.c.l.b16 %v446
      %v679 = vunpack.c.h.b16 %v446
      %v680 = vunpack.c.l.b16 %v447
      %v681 = vunpack.c.h.b16 %v447
      %v682 = vunpack.c.l.b16 %v448
      %v683 = vunpack.c.h.b16 %v448
      %v684 = vunpack.c.l.b16 %v449
      %v685 = vunpack.c.h.b16 %v449
      %v686 = vunpack.c.l.b16 %v450
      %v687 = vunpack.c.h.b16 %v450
      %v688 = vunpack.c.l.b16 %v451
      %v689 = vunpack.c.h.b16 %v451
      %v690 = vunpack.c.l.b16 %v452
      %v691 = vunpack.c.h.b16 %v452
      %v692 = vunpack.c.l.b16 %v453
      %v693 = vunpack.c.h.b16 %v453
      %v694 = vunpack.c.l.b16 %v454
      %v695 = vunpack.c.h.b16 %v454
      %v696 = vunpack.c.l.b16 %v455
      %v697 = vunpack.c.h.b16 %v455
      %v698 = vunpack.c.l.b16 %v456
      %v699 = vunpack.c.h.b16 %v456
      %v700 = vunpack.c.l.b16 %v457
      %v701 = vunpack.c.h.b16 %v457
      %v702 = vunpack.c.l.b16 %v458
      %v703 = vunpack.c.h.b16 %v458
      %v704 = vunpack.c.l.b16 %v459
      %v705 = vunpack.c.h.b16 %v459
      %v706 = vunpack.c.l.b16 %v460
      %v707 = vunpack.c.h.b16 %v460
      %v708 = vunpack.c.l.b16 %v461
      %v709 = vunpack.c.h.b16 %v461
      %v710 = vunpack.c.l.b16 %v462
      %v711 = vunpack.c.h.b16 %v462
      %v712 = vunpack.c.l.b16 %v463
      %v713 = vunpack.c.h.b16 %v463
      %v714 = vunpack.c.l.b16 %v464
      %v715 = vunpack.c.h.b16 %v464
      %v716 = vunpack.c.l.b16 %v465
      %v717 = vunpack.c.h.b16 %v465
      %v718 = vunpack.c.l.b16 %v466
      %v719 = vunpack.c.h.b16 %v466
      %v720 = vunpack.c.l.b16 %v467
      %v721 = vunpack.c.h.b16 %v467
      %v722 = vunpack.c.l.b16 %v468
      %v723 = vunpack.c.h.b16 %v468
      %v724 = vunpack.c.l.b16 %v469
      %v725 = vunpack.c.h.b16 %v469
      %v726 = vunpack.c.l.b16 %v470
      %v727 = vunpack.c.h.b16 %v470
      %v728 = vunpack.c.l.b16 %v471
      %v729 = vunpack.c.h.b16 %v471
      %v730 = vunpack.c.l.b16 %v472
      %v731 = vunpack.c.h.b16 %v472
      %v732 = vunpack.c.l.b16 %v473
      %v733 = vunpack.c.h.b16 %v473
      %v734 = vunpack.c.l.b16 %v474
      %v735 = vunpack.c.h.b16 %v474
      %v736 = vunpack.c.l.b16 %v475
      %v737 = vunpack.c.h.b16 %v475
      %v738 = vunpack.c.l.b16 %v476
      %v739 = vunpack.c.h.b16 %v476
      %v740 = vunpack.c.l.b16 %v477
      %v741 = vunpack.c.h.b16 %v477
      %v742 = vunpack.c.l.b16 %v478
      %v743 = vunpack.c.h.b16 %v478
      %v744 = vunpack.c.l.b16 %v479
      %v745 = vunpack.c.h.b16 %v479
      %v746 = vunpack.c.l.b16 %v480
      %v747 = vunpack.c.h.b16 %v480
      %v748 = vunpack.c.l.b16 %v481
      %v749 = vunpack.c.h.b16 %v481
      %v750 = vunpack.c.l.b16 %v482
      %v751 = vunpack.c.h.b16 %v482
      %v752 = vunpack.c.l.b16 %v483
      %v753 = vunpack.c.h.b16 %v483
      %v754 = vunpack.c.l.b16 %v484
      %v755 = vunpack.c.h.b16 %v484
      %v756 = vunpack.c.l.b16 %v485
      %v757 = vunpack.c.h.b16 %v485
      %v758 = vunpack.c.l.b16 %v486
      %v759 = vunpack.c.h.b16 %v486
      %v760 = vunpack.c.l.b16 %v487
      %v761 = vunpack.c.h.b16 %v487
      %v762 = vunpack.c.l.b16 %v488
      %v763 = vunpack.c.h.b16 %v488
      %v764 = vunpack.c.l.b16 %v489
      %v765 = vunpack.c.h.b16 %v489
      %v766 = vunpack.c.l.b16 %v490
      %v767 = vunpack.c.h.b16 %v490
      %v768 = vunpack.c.l.b16 %v491
      %v769 = vunpack.c.h.b16 %v491
      %v770 = vunpack.c.l.b16 %v492
      %v771 = vunpack.c.h.b16 %v492
      %v772 = vunpack.c.l.b16 %v493
      %v773 = vunpack.c.h.b16 %v493
      %v774 = vunpack.c.l.b16 %v494
      %v775 = vunpack.c.h.b16 %v494
      %v776 = vunpack.c.l.b16 %v495
      %v777 = vunpack.c.h.b16 %v495
      %v778 = vunpack.c.l.b16 %v496
      %v779 = vunpack.c.h.b16 %v496
      %v780 = vunpack.c.l.b16 %v497
      %v781 = vunpack.c.h.b16 %v497
      %v782 = vunpack.c.l.b16 %v498
      %v783 = vunpack.c.h.b16 %v498
      %v784 = vunpack.c.l.b16 %v499
      %v785 = vunpack.c.h.b16 %v499
      %v786 = vunpack.c.l.b16 %v500
      %v787 = vunpack.c.h.b16 %v500
      %v788 = vunpack.c.l.b16 %v501
      %v789 = vunpack.c.h.b16 %v501
      %v790 = vunpack.c.l.b16 %v502
      %v791 = vunpack.c.h.b16 %v502
      %v792 = vunpack.c.l.b16 %v503
      %v793 = vunpack.c.h.b16 %v503
      %v794 = vunpack.c.l.b16 %v504
      %v795 = vunpack.c.h.b16 %v504
      %v796 = vunpack.c.l.b16 %v505
      %v797 = vunpack.c.h.b16 %v505
      %v798 = vunpack.c.l.b16 %v506
      %v799 = vunpack.c.h.b16 %v506
      %v800 = vunpack.c.l.b16 %v507
      %v801 = vunpack.c.h.b16 %v507
      %v802 = vunpack.c.l.b16 %v508
      %v803 = vunpack.c.h.b16 %v508
      %v804 = vunpack.c.l.b16 %v509
      %v805 = vunpack.c.h.b16 %v509
      %v806 = vunpack.c.l.b16 %v510
      %v807 = vunpack.c.h.b16 %v510
      %v808 = vunpack.c.l.b16 %v511
      %v809 = vunpack.c.h.b16 %v511
      %v810 = vunpack.c.l.b16 %v512
      %v811 = vunpack.c.h.b16 %v512
      %v812 = vunpack.c.l.b16 %v513
      %v813 = vunpack.c.h.b16 %v513
      %v814 = vpack.c.b16 %v624, %v622
      %v815 = vpack.c.b16 %v625, %v623
      %v816 = vpack.c.b16 %v628, %v626
      %v817 = vpack.c.b16 %v629, %v627
      %v818 = vpack.c.b16 %v632, %v630
      %v819 = vpack.c.b16 %v633, %v631
      %v820 = vpack.c.b16 %v636, %v634
      %v821 = vpack.c.b16 %v637, %v635
      %v822 = vpack.c.b16 %v640, %v638
      %v823 = vpack.c.b16 %v641, %v639
      %v824 = vpack.c.b16 %v644, %v642
      %v825 = vpack.c.b16 %v645, %v643
      %v826 = vpack.c.b16 %v648, %v646
      %v827 = vpack.c.b16 %v649, %v647
      %v828 = vpack.c.b16 %v652, %v650
      %v829 = vpack.c.b16 %v653, %v651
      %v830 = vpack.c.b16 %v656, %v654
      %v831 = vpack.c.b16 %v657, %v655
      %v832 = vpack.c.b16 %v660, %v658
      %v833 = vpack.c.b16 %v661, %v659
      %v834 = vpack.c.b16 %v664, %v662
      %v835 = vpack.c.b16 %v665, %v663
      %v836 = vpack.c.b16 %v668, %v666
      %v837 = vpack.c.b16 %v669, %v667
      %v838 = vpack.c.b16 %v672, %v670
      %v839 = vpack.c.b16 %v673, %v671
      %v840 = vpack.c.b16 %v676, %v674
      %v841 = vpack.c.b16 %v677, %v675
      %v842 = vpack.c.b16 %v680, %v678
      %v843 = vpack.c.b16 %v681, %v679
      %v844 = vpack.c.b16 %v684, %v682
      %v845 = vpack.c.b16 %v685, %v683
      %v846 = vpack.c.b16 %v688, %v686
      %v847 = vpack.c.b16 %v689, %v687
      %v848 = vpack.c.b16 %v692, %v690
      %v849 = vpack.c.b16 %v693, %v691
      %v850 = vpack.c.b16 %v696, %v694
      %v851 = vpack.c.b16 %v697, %v695
      %v852 = vpack.c.b16 %v700, %v698
      %v853 = vpack.c.b16 %v701, %v699
      %v854 = vpack.c.b16 %v704, %v702
      %v855 = vpack.c.b16 %v705, %v703
      %v856 = vpack.c.b16 %v708, %v706
      %v857 = vpack.c.b16 %v709, %v707
      %v858 = vpack.c.b16 %v712, %v710
      %v859 = vpack.c.b16 %v713, %v711
      %v860 = vpack.c.b16 %v716, %v714
      %v861 = vpack.c.b16 %v717, %v715
      %v862 = vpack.c.b16 %v720, %v718
      %v863 = vpack.c.b16 %v721, %v719
      %v864 = vpack.c.b16 %v724, %v722
      %v865 = vpack.c.b16 %v725, %v723
      %v866 = vpack.c.b16 %v728, %v726
      %v867 = vpack.c.b16 %v729, %v727
      %v868 = vpack.c.b16 %v732, %v730
      %v869 = vpack.c.b16 %v733, %v731
      %v870 = vpack.c.b16 %v736, %v734
      %v871 = vpack.c.b16 %v737, %v735
      %v872 = vpack.c.b16 %v740, %v738
      %v873 = vpack.c.b16 %v741, %v739
      %v874 = vpack.c.b16 %v744, %v742
      %v875 = vpack.c.b16 %v745, %v743
      %v876 = vpack.c.b16 %v748, %v746
      %v877 = vpack.c.b16 %v749, %v747
      %v878 = vpack.c.b16 %v752, %v750
      %v879 = vpack.c.b16 %v753, %v751
      %v880 = vpack.c.b16 %v756, %v754
      %v881 = vpack.c.b16 %v757, %v755
      %v882 = vpack.c.b16 %v760, %v758
      %v883 = vpack.c.b16 %v761, %v759
      %v884 = vpack.c.b16 %v764, %v762
      %v885 = vpack.c.b16 %v765, %v763
      %v886 = vpack.c.b16 %v768, %v766
      %v887 = vpack.c.b16 %v769, %v767
      %v888 = vpack.c.b16 %v772, %v770
      %v889 = vpack.c.b16 %v773, %v771
      %v890 = vpack.c.b16 %v776, %v774
      %v891 = vpack.c.b16 %v777, %v775
      %v892 = vpack.c.b16 %v780, %v778
      %v893 = vpack.c.b16 %v781, %v779
      %v894 = vpack.c.b16 %v784, %v782
      %v895 = vpack.c.b16 %v785, %v783
      %v896 = vpack.c.b16 %v788, %v786
      %v897 = vpack.c.b16 %v789, %v787
      %v898 = vpack.c.b16 %v792, %v790
      %v899 = vpack.c.b16 %v793, %v791
      %v900 = vpack.c.b16 %v796, %v794
      %v901 = vpack.c.b16 %v797, %v795
      %v902 = vpack.c.b16 %v800, %v798
      %v903 = vpack.c.b16 %v801, %v799
      %v904 = vpack.c.b16 %v804, %v802
      %v905 = vpack.c.b16 %v805, %v803
      %v906 = vpack.c.b16 %v808, %v806
      %v907 = vpack.c.b16 %v809, %v807
      %v908 = vpack.c.b16 %v812, %v810
      %v909 = vpack.c.b16 %v813, %v811
      %1006 = vmatprep.subr.bf16.mxu0 %v829
      %1007 = vmatpush1.bf16.msra.mxu0 %v828
      %1008 = vmatprep.subr.bf16.mxu0 %v827
      %1009 = vmatpush1.bf16.msra.mxu0 %v826
      %1010 = vmatprep.subr.bf16.mxu0 %v825
      %1011 = vmatpush1.bf16.msra.mxu0 %v824
      %1012 = vmatprep.subr.bf16.mxu0 %v823
      %1013 = vmatpush1.bf16.msra.mxu0 %v822
      %1014 = vmatprep.subr.bf16.mxu0 %v821
      %1015 = vmatpush1.bf16.msra.mxu0 %v820
      %1016 = vmatprep.subr.bf16.mxu0 %v819
      %1017 = vmatpush1.bf16.msra.mxu0 %v818
      %1018 = vmatprep.subr.bf16.mxu0 %v817
      %1019 = vmatpush1.bf16.msra.mxu0 %v816
      %1020 = vmatprep.subr.bf16.mxu0 %v815
      %1021 = vmatpush1.bf16.msra.mxu0 %v814
      %1022 = vmatprep.subr.bf16.mxu0 %v845
      %1023 = vmatpush2.bf16.msra.mxu0 %v844
      %1024 = vmatprep.subr.bf16.mxu0 %v843
      %1025 = vmatpush2.bf16.msra.mxu0 %v842
      %1026 = vmatprep.subr.bf16.mxu0 %v841
      %1027 = vmatpush2.bf16.msra.mxu0 %v840
      %1028 = vmatprep.subr.bf16.mxu0 %v839
      %1029 = vmatpush2.bf16.msra.mxu0 %v838
      %1030 = vmatprep.subr.bf16.mxu0 %v837
      %1031 = vmatpush2.bf16.msra.mxu0 %v836
      %1032 = vmatprep.subr.bf16.mxu0 %v835
      %1033 = vmatpush2.bf16.msra.mxu0 %v834
      %1034 = vmatprep.subr.bf16.mxu0 %v833
      %1035 = vmatpush2.bf16.msra.mxu0 %v832
      %1036 = vmatprep.subr.bf16.mxu0 %v831
      %1037 = vmatpush2.bf16.msra.mxu0 %v830
      %1038 = vmatprep.mubr.bf16.mxu0 %v413
      %1039 = vmatmul.mubr.bf16.gmra.mxu0 %v412
      %v1040 = vpop.f32.mrf.mxu0
      %v1041 = vadd.f32 %v519, %v1040
      %v1042 = vpop.f32.mrf.mxu0
      %v1043 = vadd.f32 %v523, %v1042
      %v1044 = vpop.f32.mrf.mxu0
      %v1045 = vpop.f32.mrf.mxu0
      %1046 = vdwg.mxu0
      %1047 = vmatprep.subr.bf16.mxu0 %v861
      %1048 = vmatpush1.bf16.msra.mxu0 %v860
      %1049 = vmatprep.subr.bf16.mxu0 %v859
      %1050 = vmatpush1.bf16.msra.mxu0 %v858
      %1051 = vmatprep.subr.bf16.mxu0 %v857
      %1052 = vmatpush1.bf16.msra.mxu0 %v856
      %1053 = vmatprep.subr.bf16.mxu0 %v855
      %1054 = vmatpush1.bf16.msra.mxu0 %v854
      %1055 = vmatprep.subr.bf16.mxu0 %v853
      %1056 = vmatpush1.bf16.msra.mxu0 %v852
      %1057 = vmatprep.subr.bf16.mxu0 %v851
      %1058 = vmatpush1.bf16.msra.mxu0 %v850
      %1059 = vmatprep.subr.bf16.mxu0 %v849
      %1060 = vmatpush1.bf16.msra.mxu0 %v848
      %1061 = vmatprep.subr.bf16.mxu0 %v847
      %1062 = vmatpush1.bf16.msra.mxu0 %v846
      %1063 = vmatprep.subr.bf16.mxu0 %v877
      %1064 = vmatpush2.bf16.msra.mxu0 %v876
      %1065 = vmatprep.subr.bf16.mxu0 %v875
      %1066 = vmatpush2.bf16.msra.mxu0 %v874
      %1067 = vmatprep.subr.bf16.mxu0 %v873
      %1068 = vmatpush2.bf16.msra.mxu0 %v872
      %1069 = vmatprep.subr.bf16.mxu0 %v871
      %1070 = vmatpush2.bf16.msra.mxu0 %v870
      %1071 = vmatprep.subr.bf16.mxu0 %v869
      %1072 = vmatpush2.bf16.msra.mxu0 %v868
      %1073 = vmatprep.subr.bf16.mxu0 %v867
      %1074 = vmatpush2.bf16.msra.mxu0 %v866
      %1075 = vmatprep.subr.bf16.mxu0 %v865
      %1076 = vmatpush2.bf16.msra.mxu0 %v864
      %1077 = vmatprep.subr.bf16.mxu0 %v863
      %1078 = vmatpush2.bf16.msra.mxu0 %v862
      %1079 = vmatprep.mubr.bf16.mxu0 %v415
      %1080 = vmatmul.mubr.bf16.gmra.mxu0 %v414
      %v1081 = vpop.f32.mrf.mxu0
      %v1082 = vadd.f32 %v1041, %v1081
      %v1083 = vpop.f32.mrf.mxu0
      %v1084 = vadd.f32 %v1043, %v1083
      %v1085 = vpop.f32.mrf.mxu0
      %v1086 = vpop.f32.mrf.mxu0
      %1087 = vdwg.mxu0
      %1088 = vmatprep.subr.bf16.mxu0 %v893
      %1089 = vmatpush1.bf16.msra.mxu0 %v892
      %1090 = vmatprep.subr.bf16.mxu0 %v891
      %1091 = vmatpush1.bf16.msra.mxu0 %v890
      %1092 = vmatprep.subr.bf16.mxu0 %v889
      %1093 = vmatpush1.bf16.msra.mxu0 %v888
      %1094 = vmatprep.subr.bf16.mxu0 %v887
      %1095 = vmatpush1.bf16.msra.mxu0 %v886
      %1096 = vmatprep.subr.bf16.mxu0 %v885
      %1097 = vmatpush1.bf16.msra.mxu0 %v884
      %1098 = vmatprep.subr.bf16.mxu0 %v883
      %1099 = vmatpush1.bf16.msra.mxu0 %v882
      %1100 = vmatprep.subr.bf16.mxu0 %v881
      %1101 = vmatpush1.bf16.msra.mxu0 %v880
      %1102 = vmatprep.subr.bf16.mxu0 %v879
      %1103 = vmatpush1.bf16.msra.mxu0 %v878
      %1104 = vmatprep.subr.bf16.mxu0 %v909
      %1105 = vmatpush2.bf16.msra.mxu0 %v908
      %1106 = vmatprep.subr.bf16.mxu0 %v907
      %1107 = vmatpush2.bf16.msra.mxu0 %v906
      %1108 = vmatprep.subr.bf16.mxu0 %v905
      %1109 = vmatpush2.bf16.msra.mxu0 %v904
      %1110 = vmatprep.subr.bf16.mxu0 %v903
      %1111 = vmatpush2.bf16.msra.mxu0 %v902
      %1112 = vmatprep.subr.bf16.mxu0 %v901
      %1113 = vmatpush2.bf16.msra.mxu0 %v900
      %1114 = vmatprep.subr.bf16.mxu0 %v899
      %1115 = vmatpush2.bf16.msra.mxu0 %v898
      %1116 = vmatprep.subr.bf16.mxu0 %v897
      %1117 = vmatpush2.bf16.msra.mxu0 %v896
      %1118 = vmatprep.subr.bf16.mxu0 %v895
      %1119 = vmatpush2.bf16.msra.mxu0 %v894
      %1120 = vmatprep.mubr.bf16.mxu0 %v417
      %1121 = vmatmul.mubr.bf16.gmra.mxu0 %v416
      %v1122 = vpop.f32.mrf.mxu0
      %v1123 = vadd.f32 %v1082, %v1122
      %v1124 = vpop.f32.mrf.mxu0
      %v1125 = vadd.f32 %v1084, %v1124
      %v1126 = vpop.f32.mrf.mxu0
      %v1127 = vpop.f32.mrf.mxu0
      %1128 = vdwg.mxu0
      %v1129 = vmax.f32 %v1123, 0.0
      %v1130 = vmax.f32 %v1125, 0.0
      %v1131 = vld [vmem:[%s4] sm:$0x3]
      %v1132 = vld [vmem:[%s5] sm:$0x3]
      %v1133 = vadd.f32 %v1129, %v1130
      %1134 = vadd.xlane.f32.xlu0 %v1133
      %v1135 = vpop.xlane.xlu0 %1134
      %v1136 = vrcp.pop 256.0
      %v1137 = vmul.f32 %v1135, %v1136
      %v1138 = vsub.f32 %v1129, %v1137
      %v1139 = vsub.f32 %v1130, %v1137
      %v1140 = vmul.f32 %v1138, %v1138
      %v1141 = vmul.f32 %v1139, %v1139
      %v1142 = vadd.f32 %v1140, %v1141
      %1143 = vadd.xlane.f32.xlu0 %v1142
      %v1144 = vpop.xlane.xlu0 %1143
      %v1145 = vmul.f32 %v1144, %v1136
      %v1146 = vadd.f32 %v1145, 1e-05
      %v1147 = vrsqrt.pop %v1146
      %v1148 = vmul.f32 %v1138, %v1147
      %v1149 = vmul.f32 %v1139, %v1147
      %v1151 = vlaneseq
      %v1152 = vshrl.u32 %v1151, 7
      %v1153 = vsub.s32 0, %v1152
      %v1154 = vrot.slane %v1131, %v1153
      %v1155 = vlaneseq
      %v1156 = vshrl.u32 %v1155, 7
      %v1157 = vsub.s32 1, %v1156
      %v1158 = vrot.slane %v1131, %v1157
      %v1161 = vmul.f32 %v1148, %v1154
      %v1162 = vmul.f32 %v1149, %v1158
      %v1164 = vlaneseq
      %v1165 = vshrl.u32 %v1164, 7
      %v1166 = vsub.s32 0, %v1165
      %v1167 = vrot.slane %v1132, %v1166
      %v1168 = vlaneseq
      %v1169 = vshrl.u32 %v1168, 7
      %v1170 = vsub.s32 1, %v1169
      %v1171 = vrot.slane %v1132, %v1170
      %v1174 = vadd.f32 %v1161, %v1167
      %v1175 = vadd.f32 %v1162, %v1171
      %v1176 = vrot.slane %v1174, 7
      %v1177 = vrot.slane %v1175, 7
      %v1178 = vsel %vm402, %v1176, 0.0
      %v1179 = vsel %vm402, %v1177, 0.0
      %v1180 = vrot.slane %v1174, 1
      %v1181 = vrot.slane %v1175, 1
      %v1182 = vsel %vm409, %v1180, 0.0
      %v1183 = vsel %vm409, %v1181, 0.0
      %v1184 = vpack.c.bf16 %v1178, %v1178
      %v1185 = vpack.c.bf16 %v1179, %v1179
      %v1186 = vpack.c.bf16 %v1174, %v1174
      %v1187 = vpack.c.bf16 %v1175, %v1175
      %v1188 = vpack.c.bf16 %v1182, %v1182
      %v1189 = vpack.c.bf16 %v1183, %v1183
      %v1190 = vld [vmem:[%s6] sm:$0xff]
      %v1191 = vld [vmem:[%s6 + $0x8] sm:$0xff]
      %v1192 = vld [vmem:[%s6 + $0x10] sm:$0xff]
      %v1193 = vld [vmem:[%s6 + $0x18] sm:$0xff]
      %v1194 = vld [vmem:[%s6 + $0x20] sm:$0xff]
      %v1195 = vld [vmem:[%s6 + $0x28] sm:$0xff]
      %v1196 = vld [vmem:[%s6 + $0x30] sm:$0xff]
      %v1197 = vld [vmem:[%s6 + $0x38] sm:$0xff]
      %v1198 = vld [vmem:[%s6 + $0x40] sm:$0xff]
      %v1199 = vld [vmem:[%s6 + $0x48] sm:$0xff]
      %v1200 = vld [vmem:[%s6 + $0x50] sm:$0xff]
      %v1201 = vld [vmem:[%s6 + $0x58] sm:$0xff]
      %v1202 = vld [vmem:[%s6 + $0x60] sm:$0xff]
      %v1203 = vld [vmem:[%s6 + $0x68] sm:$0xff]
      %v1204 = vld [vmem:[%s6 + $0x70] sm:$0xff]
      %v1205 = vld [vmem:[%s6 + $0x78] sm:$0xff]
      %v1206 = vld [vmem:[%s6 + $0x80] sm:$0xff]
      %v1207 = vld [vmem:[%s6 + $0x88] sm:$0xff]
      %v1208 = vld [vmem:[%s6 + $0x90] sm:$0xff]
      %v1209 = vld [vmem:[%s6 + $0x98] sm:$0xff]
      %v1210 = vld [vmem:[%s6 + $0xa0] sm:$0xff]
      %v1211 = vld [vmem:[%s6 + $0xa8] sm:$0xff]
      %v1212 = vld [vmem:[%s6 + $0xb0] sm:$0xff]
      %v1213 = vld [vmem:[%s6 + $0xb8] sm:$0xff]
      %v1214 = vld [vmem:[%s6 + $0xc0] sm:$0xff]
      %v1215 = vld [vmem:[%s6 + $0xc8] sm:$0xff]
      %v1216 = vld [vmem:[%s6 + $0xd0] sm:$0xff]
      %v1217 = vld [vmem:[%s6 + $0xd8] sm:$0xff]
      %v1218 = vld [vmem:[%s6 + $0xe0] sm:$0xff]
      %v1219 = vld [vmem:[%s6 + $0xe8] sm:$0xff]
      %v1220 = vld [vmem:[%s6 + $0xf0] sm:$0xff]
      %v1221 = vld [vmem:[%s6 + $0xf8] sm:$0xff]
      %v1222 = vld [vmem:[%s6 + $0x100] sm:$0xff]
      %v1223 = vld [vmem:[%s6 + $0x108] sm:$0xff]
      %v1224 = vld [vmem:[%s6 + $0x110] sm:$0xff]
      %v1225 = vld [vmem:[%s6 + $0x118] sm:$0xff]
      %v1226 = vld [vmem:[%s6 + $0x120] sm:$0xff]
      %v1227 = vld [vmem:[%s6 + $0x128] sm:$0xff]
      %v1228 = vld [vmem:[%s6 + $0x130] sm:$0xff]
      %v1229 = vld [vmem:[%s6 + $0x138] sm:$0xff]
      %v1230 = vld [vmem:[%s6 + $0x140] sm:$0xff]
      %v1231 = vld [vmem:[%s6 + $0x148] sm:$0xff]
      %v1232 = vld [vmem:[%s6 + $0x150] sm:$0xff]
      %v1233 = vld [vmem:[%s6 + $0x158] sm:$0xff]
      %v1234 = vld [vmem:[%s6 + $0x160] sm:$0xff]
      %v1235 = vld [vmem:[%s6 + $0x168] sm:$0xff]
      %v1236 = vld [vmem:[%s6 + $0x170] sm:$0xff]
      %v1237 = vld [vmem:[%s6 + $0x178] sm:$0xff]
      %v1238 = vld [vmem:[%s6 + $0x180] sm:$0xff]
      %v1239 = vld [vmem:[%s6 + $0x188] sm:$0xff]
      %v1240 = vld [vmem:[%s6 + $0x190] sm:$0xff]
      %v1241 = vld [vmem:[%s6 + $0x198] sm:$0xff]
      %v1242 = vld [vmem:[%s6 + $0x1a0] sm:$0xff]
      %v1243 = vld [vmem:[%s6 + $0x1a8] sm:$0xff]
      %v1244 = vld [vmem:[%s6 + $0x1b0] sm:$0xff]
      %v1245 = vld [vmem:[%s6 + $0x1b8] sm:$0xff]
      %v1246 = vld [vmem:[%s6 + $0x1c0] sm:$0xff]
      %v1247 = vld [vmem:[%s6 + $0x1c8] sm:$0xff]
      %v1248 = vld [vmem:[%s6 + $0x1d0] sm:$0xff]
      %v1249 = vld [vmem:[%s6 + $0x1d8] sm:$0xff]
      %v1250 = vld [vmem:[%s6 + $0x1e0] sm:$0xff]
      %v1251 = vld [vmem:[%s6 + $0x1e8] sm:$0xff]
      %v1252 = vld [vmem:[%s6 + $0x1f0] sm:$0xff]
      %v1253 = vld [vmem:[%s6 + $0x1f8] sm:$0xff]
      %v1254 = vld [vmem:[%s6 + $0x200] sm:$0xff]
      %v1255 = vld [vmem:[%s6 + $0x208] sm:$0xff]
      %v1256 = vld [vmem:[%s6 + $0x210] sm:$0xff]
      %v1257 = vld [vmem:[%s6 + $0x218] sm:$0xff]
      %v1258 = vld [vmem:[%s6 + $0x220] sm:$0xff]
      %v1259 = vld [vmem:[%s6 + $0x228] sm:$0xff]
      %v1260 = vld [vmem:[%s6 + $0x230] sm:$0xff]
      %v1261 = vld [vmem:[%s6 + $0x238] sm:$0xff]
      %v1262 = vld [vmem:[%s6 + $0x240] sm:$0xff]
      %v1263 = vld [vmem:[%s6 + $0x248] sm:$0xff]
      %v1264 = vld [vmem:[%s6 + $0x250] sm:$0xff]
      %v1265 = vld [vmem:[%s6 + $0x258] sm:$0xff]
      %v1266 = vld [vmem:[%s6 + $0x260] sm:$0xff]
      %v1267 = vld [vmem:[%s6 + $0x268] sm:$0xff]
      %v1268 = vld [vmem:[%s6 + $0x270] sm:$0xff]
      %v1269 = vld [vmem:[%s6 + $0x278] sm:$0xff]
      %v1270 = vld [vmem:[%s6 + $0x280] sm:$0xff]
      %v1271 = vld [vmem:[%s6 + $0x288] sm:$0xff]
      %v1272 = vld [vmem:[%s6 + $0x290] sm:$0xff]
      %v1273 = vld [vmem:[%s6 + $0x298] sm:$0xff]
      %v1274 = vld [vmem:[%s6 + $0x2a0] sm:$0xff]
      %v1275 = vld [vmem:[%s6 + $0x2a8] sm:$0xff]
      %v1276 = vld [vmem:[%s6 + $0x2b0] sm:$0xff]
      %v1277 = vld [vmem:[%s6 + $0x2b8] sm:$0xff]
      %v1278 = vld [vmem:[%s6 + $0x2c0] sm:$0xff]
      %v1279 = vld [vmem:[%s6 + $0x2c8] sm:$0xff]
      %v1280 = vld [vmem:[%s6 + $0x2d0] sm:$0xff]
      %v1281 = vld [vmem:[%s6 + $0x2d8] sm:$0xff]
      %v1282 = vld [vmem:[%s6 + $0x2e0] sm:$0xff]
      %v1283 = vld [vmem:[%s6 + $0x2e8] sm:$0xff]
      %v1284 = vld [vmem:[%s6 + $0x2f0] sm:$0xff]
      %v1285 = vld [vmem:[%s6 + $0x2f8] sm:$0xff]
      %v1286 = vld [vmem:[%s7] sm:$0x3]
      %v1288 = vlaneseq
      %v1289 = vshrl.u32 %v1288, 7
      %v1290 = vsub.s32 0, %v1289
      %v1291 = vrot.slane %v1286, %v1290
      %v1292 = vlaneseq
      %v1293 = vshrl.u32 %v1292, 7
      %v1294 = vsub.s32 1, %v1293
      %v1295 = vrot.slane %v1286, %v1294
      %v1394 = vunpack.c.l.b16 %v1190
      %v1395 = vunpack.c.h.b16 %v1190
      %v1396 = vunpack.c.l.b16 %v1191
      %v1397 = vunpack.c.h.b16 %v1191
      %v1398 = vunpack.c.l.b16 %v1192
      %v1399 = vunpack.c.h.b16 %v1192
      %v1400 = vunpack.c.l.b16 %v1193
      %v1401 = vunpack.c.h.b16 %v1193
      %v1402 = vunpack.c.l.b16 %v1194
      %v1403 = vunpack.c.h.b16 %v1194
      %v1404 = vunpack.c.l.b16 %v1195
      %v1405 = vunpack.c.h.b16 %v1195
      %v1406 = vunpack.c.l.b16 %v1196
      %v1407 = vunpack.c.h.b16 %v1196
      %v1408 = vunpack.c.l.b16 %v1197
      %v1409 = vunpack.c.h.b16 %v1197
      %v1410 = vunpack.c.l.b16 %v1198
      %v1411 = vunpack.c.h.b16 %v1198
      %v1412 = vunpack.c.l.b16 %v1199
      %v1413 = vunpack.c.h.b16 %v1199
      %v1414 = vunpack.c.l.b16 %v1200
      %v1415 = vunpack.c.h.b16 %v1200
      %v1416 = vunpack.c.l.b16 %v1201
      %v1417 = vunpack.c.h.b16 %v1201
      %v1418 = vunpack.c.l.b16 %v1202
      %v1419 = vunpack.c.h.b16 %v1202
      %v1420 = vunpack.c.l.b16 %v1203
      %v1421 = vunpack.c.h.b16 %v1203
      %v1422 = vunpack.c.l.b16 %v1204
      %v1423 = vunpack.c.h.b16 %v1204
      %v1424 = vunpack.c.l.b16 %v1205
      %v1425 = vunpack.c.h.b16 %v1205
      %v1426 = vunpack.c.l.b16 %v1206
      %v1427 = vunpack.c.h.b16 %v1206
      %v1428 = vunpack.c.l.b16 %v1207
      %v1429 = vunpack.c.h.b16 %v1207
      %v1430 = vunpack.c.l.b16 %v1208
      %v1431 = vunpack.c.h.b16 %v1208
      %v1432 = vunpack.c.l.b16 %v1209
      %v1433 = vunpack.c.h.b16 %v1209
      %v1434 = vunpack.c.l.b16 %v1210
      %v1435 = vunpack.c.h.b16 %v1210
      %v1436 = vunpack.c.l.b16 %v1211
      %v1437 = vunpack.c.h.b16 %v1211
      %v1438 = vunpack.c.l.b16 %v1212
      %v1439 = vunpack.c.h.b16 %v1212
      %v1440 = vunpack.c.l.b16 %v1213
      %v1441 = vunpack.c.h.b16 %v1213
      %v1442 = vunpack.c.l.b16 %v1214
      %v1443 = vunpack.c.h.b16 %v1214
      %v1444 = vunpack.c.l.b16 %v1215
      %v1445 = vunpack.c.h.b16 %v1215
      %v1446 = vunpack.c.l.b16 %v1216
      %v1447 = vunpack.c.h.b16 %v1216
      %v1448 = vunpack.c.l.b16 %v1217
      %v1449 = vunpack.c.h.b16 %v1217
      %v1450 = vunpack.c.l.b16 %v1218
      %v1451 = vunpack.c.h.b16 %v1218
      %v1452 = vunpack.c.l.b16 %v1219
      %v1453 = vunpack.c.h.b16 %v1219
      %v1454 = vunpack.c.l.b16 %v1220
      %v1455 = vunpack.c.h.b16 %v1220
      %v1456 = vunpack.c.l.b16 %v1221
      %v1457 = vunpack.c.h.b16 %v1221
      %v1458 = vunpack.c.l.b16 %v1222
      %v1459 = vunpack.c.h.b16 %v1222
      %v1460 = vunpack.c.l.b16 %v1223
      %v1461 = vunpack.c.h.b16 %v1223
      %v1462 = vunpack.c.l.b16 %v1224
      %v1463 = vunpack.c.h.b16 %v1224
      %v1464 = vunpack.c.l.b16 %v1225
      %v1465 = vunpack.c.h.b16 %v1225
      %v1466 = vunpack.c.l.b16 %v1226
      %v1467 = vunpack.c.h.b16 %v1226
      %v1468 = vunpack.c.l.b16 %v1227
      %v1469 = vunpack.c.h.b16 %v1227
      %v1470 = vunpack.c.l.b16 %v1228
      %v1471 = vunpack.c.h.b16 %v1228
      %v1472 = vunpack.c.l.b16 %v1229
      %v1473 = vunpack.c.h.b16 %v1229
      %v1474 = vunpack.c.l.b16 %v1230
      %v1475 = vunpack.c.h.b16 %v1230
      %v1476 = vunpack.c.l.b16 %v1231
      %v1477 = vunpack.c.h.b16 %v1231
      %v1478 = vunpack.c.l.b16 %v1232
      %v1479 = vunpack.c.h.b16 %v1232
      %v1480 = vunpack.c.l.b16 %v1233
      %v1481 = vunpack.c.h.b16 %v1233
      %v1482 = vunpack.c.l.b16 %v1234
      %v1483 = vunpack.c.h.b16 %v1234
      %v1484 = vunpack.c.l.b16 %v1235
      %v1485 = vunpack.c.h.b16 %v1235
      %v1486 = vunpack.c.l.b16 %v1236
      %v1487 = vunpack.c.h.b16 %v1236
      %v1488 = vunpack.c.l.b16 %v1237
      %v1489 = vunpack.c.h.b16 %v1237
      %v1490 = vunpack.c.l.b16 %v1238
      %v1491 = vunpack.c.h.b16 %v1238
      %v1492 = vunpack.c.l.b16 %v1239
      %v1493 = vunpack.c.h.b16 %v1239
      %v1494 = vunpack.c.l.b16 %v1240
      %v1495 = vunpack.c.h.b16 %v1240
      %v1496 = vunpack.c.l.b16 %v1241
      %v1497 = vunpack.c.h.b16 %v1241
      %v1498 = vunpack.c.l.b16 %v1242
      %v1499 = vunpack.c.h.b16 %v1242
      %v1500 = vunpack.c.l.b16 %v1243
      %v1501 = vunpack.c.h.b16 %v1243
      %v1502 = vunpack.c.l.b16 %v1244
      %v1503 = vunpack.c.h.b16 %v1244
      %v1504 = vunpack.c.l.b16 %v1245
      %v1505 = vunpack.c.h.b16 %v1245
      %v1506 = vunpack.c.l.b16 %v1246
      %v1507 = vunpack.c.h.b16 %v1246
      %v1508 = vunpack.c.l.b16 %v1247
      %v1509 = vunpack.c.h.b16 %v1247
      %v1510 = vunpack.c.l.b16 %v1248
      %v1511 = vunpack.c.h.b16 %v1248
      %v1512 = vunpack.c.l.b16 %v1249
      %v1513 = vunpack.c.h.b16 %v1249
      %v1514 = vunpack.c.l.b16 %v1250
      %v1515 = vunpack.c.h.b16 %v1250
      %v1516 = vunpack.c.l.b16 %v1251
      %v1517 = vunpack.c.h.b16 %v1251
      %v1518 = vunpack.c.l.b16 %v1252
      %v1519 = vunpack.c.h.b16 %v1252
      %v1520 = vunpack.c.l.b16 %v1253
      %v1521 = vunpack.c.h.b16 %v1253
      %v1522 = vunpack.c.l.b16 %v1254
      %v1523 = vunpack.c.h.b16 %v1254
      %v1524 = vunpack.c.l.b16 %v1255
      %v1525 = vunpack.c.h.b16 %v1255
      %v1526 = vunpack.c.l.b16 %v1256
      %v1527 = vunpack.c.h.b16 %v1256
      %v1528 = vunpack.c.l.b16 %v1257
      %v1529 = vunpack.c.h.b16 %v1257
      %v1530 = vunpack.c.l.b16 %v1258
      %v1531 = vunpack.c.h.b16 %v1258
      %v1532 = vunpack.c.l.b16 %v1259
      %v1533 = vunpack.c.h.b16 %v1259
      %v1534 = vunpack.c.l.b16 %v1260
      %v1535 = vunpack.c.h.b16 %v1260
      %v1536 = vunpack.c.l.b16 %v1261
      %v1537 = vunpack.c.h.b16 %v1261
      %v1538 = vunpack.c.l.b16 %v1262
      %v1539 = vunpack.c.h.b16 %v1262
      %v1540 = vunpack.c.l.b16 %v1263
      %v1541 = vunpack.c.h.b16 %v1263
      %v1542 = vunpack.c.l.b16 %v1264
      %v1543 = vunpack.c.h.b16 %v1264
      %v1544 = vunpack.c.l.b16 %v1265
      %v1545 = vunpack.c.h.b16 %v1265
      %v1546 = vunpack.c.l.b16 %v1266
      %v1547 = vunpack.c.h.b16 %v1266
      %v1548 = vunpack.c.l.b16 %v1267
      %v1549 = vunpack.c.h.b16 %v1267
      %v1550 = vunpack.c.l.b16 %v1268
      %v1551 = vunpack.c.h.b16 %v1268
      %v1552 = vunpack.c.l.b16 %v1269
      %v1553 = vunpack.c.h.b16 %v1269
      %v1554 = vunpack.c.l.b16 %v1270
      %v1555 = vunpack.c.h.b16 %v1270
      %v1556 = vunpack.c.l.b16 %v1271
      %v1557 = vunpack.c.h.b16 %v1271
      %v1558 = vunpack.c.l.b16 %v1272
      %v1559 = vunpack.c.h.b16 %v1272
      %v1560 = vunpack.c.l.b16 %v1273
      %v1561 = vunpack.c.h.b16 %v1273
      %v1562 = vunpack.c.l.b16 %v1274
      %v1563 = vunpack.c.h.b16 %v1274
      %v1564 = vunpack.c.l.b16 %v1275
      %v1565 = vunpack.c.h.b16 %v1275
      %v1566 = vunpack.c.l.b16 %v1276
      %v1567 = vunpack.c.h.b16 %v1276
      %v1568 = vunpack.c.l.b16 %v1277
      %v1569 = vunpack.c.h.b16 %v1277
      %v1570 = vunpack.c.l.b16 %v1278
      %v1571 = vunpack.c.h.b16 %v1278
      %v1572 = vunpack.c.l.b16 %v1279
      %v1573 = vunpack.c.h.b16 %v1279
      %v1574 = vunpack.c.l.b16 %v1280
      %v1575 = vunpack.c.h.b16 %v1280
      %v1576 = vunpack.c.l.b16 %v1281
      %v1577 = vunpack.c.h.b16 %v1281
      %v1578 = vunpack.c.l.b16 %v1282
      %v1579 = vunpack.c.h.b16 %v1282
      %v1580 = vunpack.c.l.b16 %v1283
      %v1581 = vunpack.c.h.b16 %v1283
      %v1582 = vunpack.c.l.b16 %v1284
      %v1583 = vunpack.c.h.b16 %v1284
      %v1584 = vunpack.c.l.b16 %v1285
      %v1585 = vunpack.c.h.b16 %v1285
      %v1586 = vpack.c.b16 %v1396, %v1394
      %v1587 = vpack.c.b16 %v1397, %v1395
      %v1588 = vpack.c.b16 %v1400, %v1398
      %v1589 = vpack.c.b16 %v1401, %v1399
      %v1590 = vpack.c.b16 %v1404, %v1402
      %v1591 = vpack.c.b16 %v1405, %v1403
      %v1592 = vpack.c.b16 %v1408, %v1406
      %v1593 = vpack.c.b16 %v1409, %v1407
      %v1594 = vpack.c.b16 %v1412, %v1410
      %v1595 = vpack.c.b16 %v1413, %v1411
      %v1596 = vpack.c.b16 %v1416, %v1414
      %v1597 = vpack.c.b16 %v1417, %v1415
      %v1598 = vpack.c.b16 %v1420, %v1418
      %v1599 = vpack.c.b16 %v1421, %v1419
      %v1600 = vpack.c.b16 %v1424, %v1422
      %v1601 = vpack.c.b16 %v1425, %v1423
      %v1602 = vpack.c.b16 %v1428, %v1426
      %v1603 = vpack.c.b16 %v1429, %v1427
      %v1604 = vpack.c.b16 %v1432, %v1430
      %v1605 = vpack.c.b16 %v1433, %v1431
      %v1606 = vpack.c.b16 %v1436, %v1434
      %v1607 = vpack.c.b16 %v1437, %v1435
      %v1608 = vpack.c.b16 %v1440, %v1438
      %v1609 = vpack.c.b16 %v1441, %v1439
      %v1610 = vpack.c.b16 %v1444, %v1442
      %v1611 = vpack.c.b16 %v1445, %v1443
      %v1612 = vpack.c.b16 %v1448, %v1446
      %v1613 = vpack.c.b16 %v1449, %v1447
      %v1614 = vpack.c.b16 %v1452, %v1450
      %v1615 = vpack.c.b16 %v1453, %v1451
      %v1616 = vpack.c.b16 %v1456, %v1454
      %v1617 = vpack.c.b16 %v1457, %v1455
      %v1618 = vpack.c.b16 %v1460, %v1458
      %v1619 = vpack.c.b16 %v1461, %v1459
      %v1620 = vpack.c.b16 %v1464, %v1462
      %v1621 = vpack.c.b16 %v1465, %v1463
      %v1622 = vpack.c.b16 %v1468, %v1466
      %v1623 = vpack.c.b16 %v1469, %v1467
      %v1624 = vpack.c.b16 %v1472, %v1470
      %v1625 = vpack.c.b16 %v1473, %v1471
      %v1626 = vpack.c.b16 %v1476, %v1474
      %v1627 = vpack.c.b16 %v1477, %v1475
      %v1628 = vpack.c.b16 %v1480, %v1478
      %v1629 = vpack.c.b16 %v1481, %v1479
      %v1630 = vpack.c.b16 %v1484, %v1482
      %v1631 = vpack.c.b16 %v1485, %v1483
      %v1632 = vpack.c.b16 %v1488, %v1486
      %v1633 = vpack.c.b16 %v1489, %v1487
      %v1634 = vpack.c.b16 %v1492, %v1490
      %v1635 = vpack.c.b16 %v1493, %v1491
      %v1636 = vpack.c.b16 %v1496, %v1494
      %v1637 = vpack.c.b16 %v1497, %v1495
      %v1638 = vpack.c.b16 %v1500, %v1498
      %v1639 = vpack.c.b16 %v1501, %v1499
      %v1640 = vpack.c.b16 %v1504, %v1502
      %v1641 = vpack.c.b16 %v1505, %v1503
      %v1642 = vpack.c.b16 %v1508, %v1506
      %v1643 = vpack.c.b16 %v1509, %v1507
      %v1644 = vpack.c.b16 %v1512, %v1510
      %v1645 = vpack.c.b16 %v1513, %v1511
      %v1646 = vpack.c.b16 %v1516, %v1514
      %v1647 = vpack.c.b16 %v1517, %v1515
      %v1648 = vpack.c.b16 %v1520, %v1518
      %v1649 = vpack.c.b16 %v1521, %v1519
      %v1650 = vpack.c.b16 %v1524, %v1522
      %v1651 = vpack.c.b16 %v1525, %v1523
      %v1652 = vpack.c.b16 %v1528, %v1526
      %v1653 = vpack.c.b16 %v1529, %v1527
      %v1654 = vpack.c.b16 %v1532, %v1530
      %v1655 = vpack.c.b16 %v1533, %v1531
      %v1656 = vpack.c.b16 %v1536, %v1534
      %v1657 = vpack.c.b16 %v1537, %v1535
      %v1658 = vpack.c.b16 %v1540, %v1538
      %v1659 = vpack.c.b16 %v1541, %v1539
      %v1660 = vpack.c.b16 %v1544, %v1542
      %v1661 = vpack.c.b16 %v1545, %v1543
      %v1662 = vpack.c.b16 %v1548, %v1546
      %v1663 = vpack.c.b16 %v1549, %v1547
      %v1664 = vpack.c.b16 %v1552, %v1550
      %v1665 = vpack.c.b16 %v1553, %v1551
      %v1666 = vpack.c.b16 %v1556, %v1554
      %v1667 = vpack.c.b16 %v1557, %v1555
      %v1668 = vpack.c.b16 %v1560, %v1558
      %v1669 = vpack.c.b16 %v1561, %v1559
      %v1670 = vpack.c.b16 %v1564, %v1562
      %v1671 = vpack.c.b16 %v1565, %v1563
      %v1672 = vpack.c.b16 %v1568, %v1566
      %v1673 = vpack.c.b16 %v1569, %v1567
      %v1674 = vpack.c.b16 %v1572, %v1570
      %v1675 = vpack.c.b16 %v1573, %v1571
      %v1676 = vpack.c.b16 %v1576, %v1574
      %v1677 = vpack.c.b16 %v1577, %v1575
      %v1678 = vpack.c.b16 %v1580, %v1578
      %v1679 = vpack.c.b16 %v1581, %v1579
      %v1680 = vpack.c.b16 %v1584, %v1582
      %v1681 = vpack.c.b16 %v1585, %v1583
      %1778 = vmatprep.subr.bf16.mxu0 %v1601
      %1779 = vmatpush1.bf16.msra.mxu0 %v1600
      %1780 = vmatprep.subr.bf16.mxu0 %v1599
      %1781 = vmatpush1.bf16.msra.mxu0 %v1598
      %1782 = vmatprep.subr.bf16.mxu0 %v1597
      %1783 = vmatpush1.bf16.msra.mxu0 %v1596
      %1784 = vmatprep.subr.bf16.mxu0 %v1595
      %1785 = vmatpush1.bf16.msra.mxu0 %v1594
      %1786 = vmatprep.subr.bf16.mxu0 %v1593
      %1787 = vmatpush1.bf16.msra.mxu0 %v1592
      %1788 = vmatprep.subr.bf16.mxu0 %v1591
      %1789 = vmatpush1.bf16.msra.mxu0 %v1590
      %1790 = vmatprep.subr.bf16.mxu0 %v1589
      %1791 = vmatpush1.bf16.msra.mxu0 %v1588
      %1792 = vmatprep.subr.bf16.mxu0 %v1587
      %1793 = vmatpush1.bf16.msra.mxu0 %v1586
      %1794 = vmatprep.subr.bf16.mxu0 %v1617
      %1795 = vmatpush2.bf16.msra.mxu0 %v1616
      %1796 = vmatprep.subr.bf16.mxu0 %v1615
      %1797 = vmatpush2.bf16.msra.mxu0 %v1614
      %1798 = vmatprep.subr.bf16.mxu0 %v1613
      %1799 = vmatpush2.bf16.msra.mxu0 %v1612
      %1800 = vmatprep.subr.bf16.mxu0 %v1611
      %1801 = vmatpush2.bf16.msra.mxu0 %v1610
      %1802 = vmatprep.subr.bf16.mxu0 %v1609
      %1803 = vmatpush2.bf16.msra.mxu0 %v1608
      %1804 = vmatprep.subr.bf16.mxu0 %v1607
      %1805 = vmatpush2.bf16.msra.mxu0 %v1606
      %1806 = vmatprep.subr.bf16.mxu0 %v1605
      %1807 = vmatpush2.bf16.msra.mxu0 %v1604
      %1808 = vmatprep.subr.bf16.mxu0 %v1603
      %1809 = vmatpush2.bf16.msra.mxu0 %v1602
      %1810 = vmatprep.mubr.bf16.mxu0 %v1185
      %1811 = vmatmul.mubr.bf16.gmra.mxu0 %v1184
      %v1812 = vpop.f32.mrf.mxu0
      %v1813 = vadd.f32 %v1291, %v1812
      %v1814 = vpop.f32.mrf.mxu0
      %v1815 = vadd.f32 %v1295, %v1814
      %v1816 = vpop.f32.mrf.mxu0
      %v1817 = vpop.f32.mrf.mxu0
      %1818 = vdwg.mxu0
      %1819 = vmatprep.subr.bf16.mxu0 %v1633
      %1820 = vmatpush1.bf16.msra.mxu0 %v1632
      %1821 = vmatprep.subr.bf16.mxu0 %v1631
      %1822 = vmatpush1.bf16.msra.mxu0 %v1630
      %1823 = vmatprep.subr.bf16.mxu0 %v1629
      %1824 = vmatpush1.bf16.msra.mxu0 %v1628
      %1825 = vmatprep.subr.bf16.mxu0 %v1627
      %1826 = vmatpush1.bf16.msra.mxu0 %v1626
      %1827 = vmatprep.subr.bf16.mxu0 %v1625
      %1828 = vmatpush1.bf16.msra.mxu0 %v1624
      %1829 = vmatprep.subr.bf16.mxu0 %v1623
      %1830 = vmatpush1.bf16.msra.mxu0 %v1622
      %1831 = vmatprep.subr.bf16.mxu0 %v1621
      %1832 = vmatpush1.bf16.msra.mxu0 %v1620
      %1833 = vmatprep.subr.bf16.mxu0 %v1619
      %1834 = vmatpush1.bf16.msra.mxu0 %v1618
      %1835 = vmatprep.subr.bf16.mxu0 %v1649
      %1836 = vmatpush2.bf16.msra.mxu0 %v1648
      %1837 = vmatprep.subr.bf16.mxu0 %v1647
      %1838 = vmatpush2.bf16.msra.mxu0 %v1646
      %1839 = vmatprep.subr.bf16.mxu0 %v1645
      %1840 = vmatpush2.bf16.msra.mxu0 %v1644
      %1841 = vmatprep.subr.bf16.mxu0 %v1643
      %1842 = vmatpush2.bf16.msra.mxu0 %v1642
      %1843 = vmatprep.subr.bf16.mxu0 %v1641
      %1844 = vmatpush2.bf16.msra.mxu0 %v1640
      %1845 = vmatprep.subr.bf16.mxu0 %v1639
      %1846 = vmatpush2.bf16.msra.mxu0 %v1638
      %1847 = vmatprep.subr.bf16.mxu0 %v1637
      %1848 = vmatpush2.bf16.msra.mxu0 %v1636
      %1849 = vmatprep.subr.bf16.mxu0 %v1635
      %1850 = vmatpush2.bf16.msra.mxu0 %v1634
      %1851 = vmatprep.mubr.bf16.mxu0 %v1187
      %1852 = vmatmul.mubr.bf16.gmra.mxu0 %v1186
      %v1853 = vpop.f32.mrf.mxu0
      %v1854 = vadd.f32 %v1813, %v1853
      %v1855 = vpop.f32.mrf.mxu0
      %v1856 = vadd.f32 %v1815, %v1855
      %v1857 = vpop.f32.mrf.mxu0
      %v1858 = vpop.f32.mrf.mxu0
      %1859 = vdwg.mxu0
      %1860 = vmatprep.subr.bf16.mxu0 %v1665
      %1861 = vmatpush1.bf16.msra.mxu0 %v1664
      %1862 = vmatprep.subr.bf16.mxu0 %v1663
      %1863 = vmatpush1.bf16.msra.mxu0 %v1662
      %1864 = vmatprep.subr.bf16.mxu0 %v1661
      %1865 = vmatpush1.bf16.msra.mxu0 %v1660
      %1866 = vmatprep.subr.bf16.mxu0 %v1659
      %1867 = vmatpush1.bf16.msra.mxu0 %v1658
      %1868 = vmatprep.subr.bf16.mxu0 %v1657
      %1869 = vmatpush1.bf16.msra.mxu0 %v1656
      %1870 = vmatprep.subr.bf16.mxu0 %v1655
      %1871 = vmatpush1.bf16.msra.mxu0 %v1654
      %1872 = vmatprep.subr.bf16.mxu0 %v1653
      %1873 = vmatpush1.bf16.msra.mxu0 %v1652
      %1874 = vmatprep.subr.bf16.mxu0 %v1651
      %1875 = vmatpush1.bf16.msra.mxu0 %v1650
      %1876 = vmatprep.subr.bf16.mxu0 %v1681
      %1877 = vmatpush2.bf16.msra.mxu0 %v1680
      %1878 = vmatprep.subr.bf16.mxu0 %v1679
      %1879 = vmatpush2.bf16.msra.mxu0 %v1678
      %1880 = vmatprep.subr.bf16.mxu0 %v1677
      %1881 = vmatpush2.bf16.msra.mxu0 %v1676
      %1882 = vmatprep.subr.bf16.mxu0 %v1675
      %1883 = vmatpush2.bf16.msra.mxu0 %v1674
      %1884 = vmatprep.subr.bf16.mxu0 %v1673
      %1885 = vmatpush2.bf16.msra.mxu0 %v1672
      %1886 = vmatprep.subr.bf16.mxu0 %v1671
      %1887 = vmatpush2.bf16.msra.mxu0 %v1670
      %1888 = vmatprep.subr.bf16.mxu0 %v1669
      %1889 = vmatpush2.bf16.msra.mxu0 %v1668
      %1890 = vmatprep.subr.bf16.mxu0 %v1667
      %1891 = vmatpush2.bf16.msra.mxu0 %v1666
      %1892 = vmatprep.mubr.bf16.mxu0 %v1189
      %1893 = vmatmul.mubr.bf16.gmra.mxu0 %v1188
      %v1894 = vpop.f32.mrf.mxu0
      %v1895 = vadd.f32 %v1854, %v1894
      %v1896 = vpop.f32.mrf.mxu0
      %v1897 = vadd.f32 %v1856, %v1896
      %v1898 = vpop.f32.mrf.mxu0
      %v1899 = vpop.f32.mrf.mxu0
      %1900 = vdwg.mxu0
      %v1901 = vmax.f32 %v1895, 0.0
      %v1902 = vmax.f32 %v1897, 0.0
      %v1903 = vld [vmem:[%s8] sm:$0x3]
      %v1904 = vld [vmem:[%s9] sm:$0x3]
      %v1905 = vadd.f32 %v1901, %v1902
      %1906 = vadd.xlane.f32.xlu0 %v1905
      %v1907 = vpop.xlane.xlu0 %1906
      %v1908 = vmul.f32 %v1907, %v1136
      %v1909 = vsub.f32 %v1901, %v1908
      %v1910 = vsub.f32 %v1902, %v1908
      %v1911 = vmul.f32 %v1909, %v1909
      %v1912 = vmul.f32 %v1910, %v1910
      %v1913 = vadd.f32 %v1911, %v1912
      %1914 = vadd.xlane.f32.xlu0 %v1913
      %v1915 = vpop.xlane.xlu0 %1914
      %v1916 = vmul.f32 %v1915, %v1136
      %v1917 = vadd.f32 %v1916, 1e-05
      %v1918 = vrsqrt.pop %v1917
      %v1919 = vmul.f32 %v1909, %v1918
      %v1920 = vmul.f32 %v1910, %v1918
      %v1922 = vlaneseq
      %v1923 = vshrl.u32 %v1922, 7
      %v1924 = vsub.s32 0, %v1923
      %v1925 = vrot.slane %v1903, %v1924
      %v1926 = vlaneseq
      %v1927 = vshrl.u32 %v1926, 7
      %v1928 = vsub.s32 1, %v1927
      %v1929 = vrot.slane %v1903, %v1928
      %v1932 = vmul.f32 %v1919, %v1925
      %v1933 = vmul.f32 %v1920, %v1929
      %v1935 = vlaneseq
      %v1936 = vshrl.u32 %v1935, 7
      %v1937 = vsub.s32 0, %v1936
      %v1938 = vrot.slane %v1904, %v1937
      %v1939 = vlaneseq
      %v1940 = vshrl.u32 %v1939, 7
      %v1941 = vsub.s32 1, %v1940
      %v1942 = vrot.slane %v1904, %v1941
      %v1945 = vadd.f32 %v1932, %v1938
      %v1946 = vadd.f32 %v1933, %v1942
      %v1947 = vpack.c.bf16 %v1945, %v1945
      %v1948 = vpack.c.bf16 %v1946, %v1946
      %v1949 = vld [vmem:[%s10] sm:$0xf]
      %v1950 = vld [vmem:[%s10 + $0x4] sm:$0xf]
      %v1951 = vld [vmem:[%s10 + $0x8] sm:$0xf]
      %v1952 = vld [vmem:[%s10 + $0xc] sm:$0xf]
      %v1953 = vld [vmem:[%s10 + $0x10] sm:$0xf]
      %v1954 = vld [vmem:[%s10 + $0x14] sm:$0xf]
      %v1955 = vld [vmem:[%s10 + $0x18] sm:$0xf]
      %v1956 = vld [vmem:[%s10 + $0x1c] sm:$0xf]
      %v1957 = vld [vmem:[%s10 + $0x20] sm:$0xf]
      %v1958 = vld [vmem:[%s10 + $0x24] sm:$0xf]
      %v1959 = vld [vmem:[%s10 + $0x28] sm:$0xf]
      %v1960 = vld [vmem:[%s10 + $0x2c] sm:$0xf]
      %v1961 = vld [vmem:[%s10 + $0x30] sm:$0xf]
      %v1962 = vld [vmem:[%s10 + $0x34] sm:$0xf]
      %v1963 = vld [vmem:[%s10 + $0x38] sm:$0xf]
      %v1964 = vld [vmem:[%s10 + $0x3c] sm:$0xf]
      %v1965 = vld [vmem:[%s10 + $0x40] sm:$0xf]
      %v1966 = vld [vmem:[%s10 + $0x44] sm:$0xf]
      %v1967 = vld [vmem:[%s10 + $0x48] sm:$0xf]
      %v1968 = vld [vmem:[%s10 + $0x4c] sm:$0xf]
      %v1969 = vld [vmem:[%s10 + $0x50] sm:$0xf]
      %v1970 = vld [vmem:[%s10 + $0x54] sm:$0xf]
      %v1971 = vld [vmem:[%s10 + $0x58] sm:$0xf]
      %v1972 = vld [vmem:[%s10 + $0x5c] sm:$0xf]
      %v1973 = vld [vmem:[%s10 + $0x60] sm:$0xf]
      %v1974 = vld [vmem:[%s10 + $0x64] sm:$0xf]
      %v1975 = vld [vmem:[%s10 + $0x68] sm:$0xf]
      %v1976 = vld [vmem:[%s10 + $0x6c] sm:$0xf]
      %v1977 = vld [vmem:[%s10 + $0x70] sm:$0xf]
      %v1978 = vld [vmem:[%s10 + $0x74] sm:$0xf]
      %v1979 = vld [vmem:[%s10 + $0x78] sm:$0xf]
      %v1980 = vld [vmem:[%s10 + $0x7c] sm:$0xf]
      %v1981 = vld [vmem:[%s11] sm:$0x1]
      %v1983 = vlaneseq
      %v1984 = vshrl.u32 %v1983, 7
      %v1985 = vsub.s32 0, %v1984
      %v1986 = vrot.slane %v1981, %v1985
      %v2020 = vunpack.c.l.b16 %v1949
      %v2021 = vunpack.c.l.b16 %v1950
      %v2022 = vunpack.c.l.b16 %v1951
      %v2023 = vunpack.c.l.b16 %v1952
      %v2024 = vunpack.c.l.b16 %v1953
      %v2025 = vunpack.c.l.b16 %v1954
      %v2026 = vunpack.c.l.b16 %v1955
      %v2027 = vunpack.c.l.b16 %v1956
      %v2028 = vunpack.c.l.b16 %v1957
      %v2029 = vunpack.c.l.b16 %v1958
      %v2030 = vunpack.c.l.b16 %v1959
      %v2031 = vunpack.c.l.b16 %v1960
      %v2032 = vunpack.c.l.b16 %v1961
      %v2033 = vunpack.c.l.b16 %v1962
      %v2034 = vunpack.c.l.b16 %v1963
      %v2035 = vunpack.c.l.b16 %v1964
      %v2036 = vunpack.c.l.b16 %v1965
      %v2037 = vunpack.c.l.b16 %v1966
      %v2038 = vunpack.c.l.b16 %v1967
      %v2039 = vunpack.c.l.b16 %v1968
      %v2040 = vunpack.c.l.b16 %v1969
      %v2041 = vunpack.c.l.b16 %v1970
      %v2042 = vunpack.c.l.b16 %v1971
      %v2043 = vunpack.c.l.b16 %v1972
      %v2044 = vunpack.c.l.b16 %v1973
      %v2045 = vunpack.c.l.b16 %v1974
      %v2046 = vunpack.c.l.b16 %v1975
      %v2047 = vunpack.c.l.b16 %v1976
      %v2048 = vunpack.c.l.b16 %v1977
      %v2049 = vunpack.c.l.b16 %v1978
      %v2050 = vunpack.c.l.b16 %v1979
      %v2051 = vunpack.c.l.b16 %v1980
      %v2052 = vpack.c.b16 %v2021, %v2020
      %v2053 = vpack.c.b16 %v2023, %v2022
      %v2054 = vpack.c.b16 %v2025, %v2024
      %v2055 = vpack.c.b16 %v2027, %v2026
      %v2056 = vpack.c.b16 %v2029, %v2028
      %v2057 = vpack.c.b16 %v2031, %v2030
      %v2058 = vpack.c.b16 %v2033, %v2032
      %v2059 = vpack.c.b16 %v2035, %v2034
      %v2060 = vpack.c.b16 %v2037, %v2036
      %v2061 = vpack.c.b16 %v2039, %v2038
      %v2062 = vpack.c.b16 %v2041, %v2040
      %v2063 = vpack.c.b16 %v2043, %v2042
      %v2064 = vpack.c.b16 %v2045, %v2044
      %v2065 = vpack.c.b16 %v2047, %v2046
      %v2066 = vpack.c.b16 %v2049, %v2048
      %v2067 = vpack.c.b16 %v2051, %v2050
      %2084 = vmatprep.subr.bf16.mxu0 0
      %2085 = vmatpush1.bf16.msra.mxu0 %v2059
      %2086 = vmatprep.subr.bf16.mxu0 0
      %2087 = vmatpush1.bf16.msra.mxu0 %v2058
      %2088 = vmatprep.subr.bf16.mxu0 0
      %2089 = vmatpush1.bf16.msra.mxu0 %v2057
      %2090 = vmatprep.subr.bf16.mxu0 0
      %2091 = vmatpush1.bf16.msra.mxu0 %v2056
      %2092 = vmatprep.subr.bf16.mxu0 0
      %2093 = vmatpush1.bf16.msra.mxu0 %v2055
      %2094 = vmatprep.subr.bf16.mxu0 0
      %2095 = vmatpush1.bf16.msra.mxu0 %v2054
      %2096 = vmatprep.subr.bf16.mxu0 0
      %2097 = vmatpush1.bf16.msra.mxu0 %v2053
      %2098 = vmatprep.subr.bf16.mxu0 0
      %2099 = vmatpush1.bf16.msra.mxu0 %v2052
      %2100 = vmatprep.subr.bf16.mxu0 0
      %2101 = vmatpush2.bf16.msra.mxu0 %v2067
      %2102 = vmatprep.subr.bf16.mxu0 0
      %2103 = vmatpush2.bf16.msra.mxu0 %v2066
      %2104 = vmatprep.subr.bf16.mxu0 0
      %2105 = vmatpush2.bf16.msra.mxu0 %v2065
      %2106 = vmatprep.subr.bf16.mxu0 0
      %2107 = vmatpush2.bf16.msra.mxu0 %v2064
      %2108 = vmatprep.subr.bf16.mxu0 0
      %2109 = vmatpush2.bf16.msra.mxu0 %v2063
      %2110 = vmatprep.subr.bf16.mxu0 0
      %2111 = vmatpush2.bf16.msra.mxu0 %v2062
      %2112 = vmatprep.subr.bf16.mxu0 0
      %2113 = vmatpush2.bf16.msra.mxu0 %v2061
      %2114 = vmatprep.subr.bf16.mxu0 0
      %2115 = vmatpush2.bf16.msra.mxu0 %v2060
      %2116 = vmatprep.mubr.bf16.mxu0 %v1948
      %2117 = vmatmul.mubr.bf16.gmra.mxu0 %v1947
      %v2118 = vpop.f32.mrf.mxu0
      %v2119 = vadd.f32 %v1986, %v2118
      %v2120 = vpop.f32.mrf.mxu0
      %v2121 = vpop.f32.mrf.mxu0
      %v2122 = vpop.f32.mrf.mxu0
      %2123 = vdwg.mxu0
      %v2124 = vstv %s393
      %vm2125 = vcmp.lt.s32.totalorder %v397, %v2124
      %v2126 = vsel %vm2125, 1, 0
      %v2127 = vcvt.s32.f32 %v2126
      %v2128 = vmul.f32 %v2119, %v2127
      %2129 = vst [vmem:[%s391] sm:$0xff] %v2128
      %p2130 = scmp.lt.s32.totalorder %s29, 1
      %s2131 = scalar_select %p2130, %s29, 1
      %s2132 = smul.addr %s2131, 8
      %s2133 = scalar_lea.vmem %s12, %s2132
      // Predicated region
      $region65: #{stylespeech2_forward.9} parent=63 // pred_check
        %p2134 = pneg %p283
      $region66: #{stylespeech2_forward.9} parent=63 // pred_check_branch
        %2136 = sbr.rel (%p2134) target = $region68
      $region67: #{stylespeech2_forward.9} parent=63 // pred_region
        _
      $region68: #{stylespeech2_forward.9} parent=63 // pred_fallthru
        _
    $region64: #{stylespeech2_forward.9} parent=5 // pred_fallthru
      _
    %p2137 = scmp.le.s32.totalorder 2, %s24
    // Predicated region
    $region69: #{stylespeech2_forward.9} parent=5 // pred_check
      %p2138 = pneg %p2137
    $region70: #{stylespeech2_forward.9} parent=5 // pred_check_branch
      %2140 = sbr.rel (%p2138) target = $region72
    $region71: #{stylespeech2_forward.9} parent=5 // pred_region
      %s2141 = ssub.s32 %s24, 2
      // Predicated region
      $region73: #{stylespeech2_forward.9} parent=71 // pred_check
        %p2142 = pneg %p289
      $region74: #{stylespeech2_forward.9} parent=71 // pred_check_branch
        %2144 = sbr.rel (%p2142) target = $region76
      $region75: #{stylespeech2_forward.9} parent=71 // pred_region
        %p2145 = scmp.lt.s32.totalorder %s30, 1
        %s2146 = scalar_select %p2145, %s30, 1
        %s2147 = smul.addr %s2146, 8
        %s2148 = scalar_lea.vmem %s12, %s2147
      $region76: #{stylespeech2_forward.9} parent=71 // pred_fallthru
        _
    $region72: #{stylespeech2_forward.9} parent=5 // pred_fallthru
      _
  $region6: #{stylespeech2_forward.9} parent=0 // loop_footer
    %s28 = sadd.s32 1, %s24
  $region7: #{stylespeech2_forward.9} parent=0 // loop_footer_branch
    %23 = sbr.rel target = $region3
  $region8: #{stylespeech2_forward.9} parent=0 // loop_exit
    _

// kernel: stylespeech2_forward.10
$region0: #{stylespeech2_forward.10}
  #allocation0 [shape = 'u32[]', space=smem, size = 0x4, offset = 0x4, fixed_abs, tag = 'smem constant byte address 0x4 - core index']
  #allocation1 [shape = 'u32[144,128]{1,0:T(1,128)}', space=vmem, size = 0x12000, scoped, tag = 'internal scratch']
  #allocation2 [shape = 's32[1]{0}', space=sflag, size = 0x4, scoped, tag = 'scoped memory for stylespeech2_forward.10']
  #allocation3 [shape = 'u8[512]{0}', space=smem, size = 0x200, scoped, tag = 'prefetched SMEM operand 0']
  %s0 = inlined_call_operand.vmem [shape: s32[2], index: 0, kind: input, shape index: {}]
  %s1 = inlined_call_operand.vmem [shape: f32[2,8,256], index: 1, kind: input, shape index: {}]
  %s2 = inlined_call_operand.vmem [shape: bf16[256,32], index: 2, kind: input, shape index: {}]
  %s3 = inlined_call_operand.vmem [shape: f32[1,32], index: 3, kind: input, shape index: {}]
  %s4 = inlined_call_operand.vmem [shape: f32[2,8,32], index: 4, kind: output, shape index: {}]
  %s5 = sld [smem:[#allocation0]]
  $region45: #{stylespeech2_forward.10} parent=0
    _
  %s7 = ssub.s32 1, %s5
  %s8 = scalar_select 0, %s7, %s5
  %s9 = sshll.u32 %s0, 4
  %s10 = int_to_ptr.vmem [resolvable:$true] %s9
  %12 = dma.vmem_to_smem %s10, 16, [#allocation3], [#allocation2]
  %13 = dma.done [#allocation2], 16
  %14 = sfence
  loop: start=0, step=1, limit=4
  $region2: #{stylespeech2_forward.10} parent=0 // loop_pre_header
    _
  $region3: #{stylespeech2_forward.10} parent=0 // loop_header
    %s16 = sphi 0, %s20
    %p17 = scmp.ge.s32.totalorder %s16, 4
    %s26 = sphi 0, %s28
    %s29 = sphi 0, %s26
    %s30 = sphi 0, %s29
    %s46 = sphi 0, %s30
    %s50 = sphi 0, %s50
    %s52 = sphi 0, %s50
    %s53 = sphi 0, %s52
    %s67 = sphi 0, %s53
    %s71 = sphi 0, %s71
    %s73 = sphi 0, %s71
    %s74 = sphi 0, %s73
    %s88 = sphi 0, %s74
    %s94 = sphi 0, %s96
    %s97 = sphi 0, %s94
    %s98 = sphi 0, %s97
    %s114 = sphi 0, %s98
  $region4: #{stylespeech2_forward.10} parent=0 // loop_header_branch
    %19 = sbr.rel (%p17) target = $region8
  $region5: #{stylespeech2_forward.10} parent=0 // loop_body
    %s21 = ssub.s32 %s16, 1
    %s22 = ssub.s32 %s16, 2
    %s23 = sadd.s32 %s16, 1
    %s24 = ssub.s32 %s16, %s23
    %p25 = scmp.eq.s32.totalorder %s24, 0
    %s27 = sadd.s32 %s26, 1
    %s28 = scalar_select %p25, %s26, %s27
    %p31 = pneg %p25
    %p32 = scmp.eq.s32.totalorder %s16, 1
    %p33 = por %p31, %p32
    %p34 = scmp.ne.s32.totalorder %s26, %s29
    %p35 = scmp.eq.s32.totalorder %s16, 0
    %p36 = por %p34, %p35
    %p37 = scmp.ne.s32.totalorder %s26, %s29
    %p38 = scmp.eq.s32.totalorder %s21, 1
    %p39 = por %p37, %p38
    %p40 = scmp.ne.s32.totalorder %s29, %s30
    %p41 = scmp.eq.s32.totalorder %s21, 0
    %p42 = por %p40, %p41
    %p43 = scmp.ne.s32.totalorder %s29, %s30
    %p44 = scmp.eq.s32.totalorder %s22, 1
    %p45 = por %p43, %p44
    %p47 = scmp.ne.s32.totalorder %s30, %s46
    %p48 = scmp.eq.s32.totalorder %s22, 0
    %p49 = por %p47, %p48
    %s51 = sadd.s32 %s50, 1
    %p54 = scmp.eq.s32.totalorder %s16, 1
    %p55 = scmp.ne.s32.totalorder %s50, %s52
    %p56 = scmp.eq.s32.totalorder %s16, 0
    %p57 = por %p55, %p56
    %p58 = scmp.ne.s32.totalorder %s50, %s52
    %p59 = scmp.eq.s32.totalorder %s21, 1
    %p60 = por %p58, %p59
    %p61 = scmp.ne.s32.totalorder %s52, %s53
    %p62 = scmp.eq.s32.totalorder %s21, 0
    %p63 = por %p61, %p62
    %p64 = scmp.ne.s32.totalorder %s52, %s53
    %p65 = scmp.eq.s32.totalorder %s22, 1
    %p66 = por %p64, %p65
    %p68 = scmp.ne.s32.totalorder %s53, %s67
    %p69 = scmp.eq.s32.totalorder %s22, 0
    %p70 = por %p68, %p69
    %s72 = sadd.s32 %s71, 1
    %p75 = scmp.eq.s32.totalorder %s16, 1
    %p76 = scmp.ne.s32.totalorder %s71, %s73
    %p77 = scmp.eq.s32.totalorder %s16, 0
    %p78 = por %p76, %p77
    %p79 = scmp.ne.s32.totalorder %s71, %s73
    %p80 = scmp.eq.s32.totalorder %s21, 1
    %p81 = por %p79, %p80
    %p82 = scmp.ne.s32.totalorder %s73, %s74
    %p83 = scmp.eq.s32.totalorder %s21, 0
    %p84 = por %p82, %p83
    %p85 = scmp.ne.s32.totalorder %s73, %s74
    %p86 = scmp.eq.s32.totalorder %s22, 1
    %p87 = por %p85, %p86
    %p89 = scmp.ne.s32.totalorder %s74, %s88
    %p90 = scmp.eq.s32.totalorder %s22, 0
    %p91 = por %p89, %p90
    %s92 = ssub.s32 %s16, %s23
    %p93 = scmp.eq.s32.totalorder %s92, 0
    %s95 = sadd.s32 %s94, 1
    %s96 = scalar_select %p93, %s94, %s95
    %p99 = pneg %p93
    %p100 = scmp.eq.s32.totalorder %s16, 1
    %p101 = por %p99, %p100
    %p102 = scmp.ne.s32.totalorder %s94, %s97
    %p103 = scmp.eq.s32.totalorder %s16, 0
    %p104 = por %p102, %p103
    %p105 = scmp.ne.s32.totalorder %s94, %s97
    %p106 = scmp.eq.s32.totalorder %s21, 1
    %p107 = por %p105, %p106
    %p108 = scmp.ne.s32.totalorder %s97, %s98
    %p109 = scmp.eq.s32.totalorder %s21, 0
    %p110 = por %p108, %p109
    %p111 = scmp.ne.s32.totalorder %s97, %s98
    %p112 = scmp.eq.s32.totalorder %s22, 1
    %p113 = por %p111, %p112
    %p115 = scmp.ne.s32.totalorder %s98, %s114
    %p116 = scmp.eq.s32.totalorder %s22, 0
    %p117 = por %p115, %p116
    %p118 = scmp.le.s32.totalorder 1, %s16
    %p119 = scmp.lt.s32.totalorder %s16, 3
    %p120 = pnand %p118, %p119
    %p121 = pneg %p120
    // Predicated region
    $region9: #{stylespeech2_forward.10} parent=5 // pred_check
      _
    $region10: #{stylespeech2_forward.10} parent=5 // pred_check_branch
      %123 = sbr.rel (%p120) target = $region12
    $region11: #{stylespeech2_forward.10} parent=5 // pred_region
      %s124 = ssub.s32 %s16, 1
      // Predicated region
      $region13: #{stylespeech2_forward.10} parent=11 // pred_check
        %p125 = pneg %p63
      $region14: #{stylespeech2_forward.10} parent=11 // pred_check_branch
        %127 = sbr.rel (%p125) target = $region16
      $region15: #{stylespeech2_forward.10} parent=11 // pred_region
        _
      $region16: #{stylespeech2_forward.10} parent=11 // pred_fallthru
        _
      // Predicated region
      $region17: #{stylespeech2_forward.10} parent=11 // pred_check
        %p128 = pneg %p84
      $region18: #{stylespeech2_forward.10} parent=11 // pred_check_branch
        %130 = sbr.rel (%p128) target = $region20
      $region19: #{stylespeech2_forward.10} parent=11 // pred_region
        _
      $region20: #{stylespeech2_forward.10} parent=11 // pred_fallthru
        _
    $region12: #{stylespeech2_forward.10} parent=5 // pred_fallthru
      _
    %p131 = scmp.lt.s32.totalorder %s16, 2
    // Predicated region
    $region21: #{stylespeech2_forward.10} parent=5 // pred_check
      %p132 = pneg %p131
    $region22: #{stylespeech2_forward.10} parent=5 // pred_check_branch
      %134 = sbr.rel (%p132) target = $region24
    $region23: #{stylespeech2_forward.10} parent=5 // pred_region
      // Predicated region
      $region25: #{stylespeech2_forward.10} parent=23 // pred_check
        %p135 = pneg %p36
      $region26: #{stylespeech2_forward.10} parent=23 // pred_check_branch
        %137 = sbr.rel (%p135) target = $region28
      $region27: #{stylespeech2_forward.10} parent=23 // pred_region
        %p138 = scmp.lt.s32.totalorder %s16, 1
        %s139 = scalar_select %p138, %s16, 1
        %s140 = smul.addr %s139, 2
        %s141 = smul.addr %s140, 8
        %s142 = scalar_lea.vmem %s1, %s141
      $region28: #{stylespeech2_forward.10} parent=23 // pred_fallthru
        _
    $region24: #{stylespeech2_forward.10} parent=5 // pred_fallthru
      _
    %p143 = scmp.le.s32.totalorder 1, %s16
    %p144 = scmp.lt.s32.totalorder %s16, 3
    %p145 = pnand %p143, %p144
    %p146 = pneg %p145
    // Predicated region
    $region29: #{stylespeech2_forward.10} parent=5 // pred_check
      _
    $region30: #{stylespeech2_forward.10} parent=5 // pred_check_branch
      %148 = sbr.rel (%p145) target = $region32
    $region31: #{stylespeech2_forward.10} parent=5 // pred_region
      %s149 = ssub.s32 %s16, 1
      %p150 = scmp.lt.s32.totalorder %s21, 1
      %s151 = scalar_select %p150, %s21, 1
      %s152 = smul.addr %s151, 2
      %s153 = smul.addr %s152, 8
      %s154 = scalar_lea.vmem %s1, %s153
      %p155 = pneg %p42
      %p156 = pneg %p39
      %p157 = pneg %p63
      %p158 = pneg %p60
      %p159 = pneg %p84
      %p160 = pneg %p81
      %p161 = pneg %p110
      %p162 = pneg %p107
      %p163 = scmp.lt.s32.totalorder %s21, 1
      %s164 = scalar_select %p163, %s21, 1
      %s165 = smul.addr %s164, 8
      %s166 = scalar_lea.vmem %s4, %s165
      %p167 = scmp.lt.s32.totalorder %s21, 1
      %s168 = scalar_select %p167, %s21, 1
      %s169 = smul.addr %s168, 2
      %s170 = smul.addr %s169, 8
      %s171 = scalar_lea.vmem %s1, %s170
      %p172 = scmp.lt.s32.totalorder %s21, 1
      %s173 = scalar_select %p172, %s21, 1
      %s174 = smul.addr %s173, 8
      %s175 = scalar_lea.vmem %s4, %s174
      %s177 = sld [smem:[#allocation3 + %s21]]
      %v178 = vld [vmem:[%s171] sm:$0xff]
      %v179 = vld [vmem:[%s171 + $0x8] sm:$0xff]
      %v180 = vpack.c.bf16 %v178, %v178
      %v181 = vpack.c.bf16 %v179, %v179
      %v182 = vld [vmem:[%s2] sm:$0xf]
      %v183 = vld [vmem:[%s2 + $0x4] sm:$0xf]
      %v184 = vld [vmem:[%s2 + $0x8] sm:$0xf]
      %v185 = vld [vmem:[%s2 + $0xc] sm:$0xf]
      %v186 = vld [vmem:[%s2 + $0x10] sm:$0xf]
      %v187 = vld [vmem:[%s2 + $0x14] sm:$0xf]
      %v188 = vld [vmem:[%s2 + $0x18] sm:$0xf]
      %v189 = vld [vmem:[%s2 + $0x1c] sm:$0xf]
      %v190 = vld [vmem:[%s2 + $0x20] sm:$0xf]
      %v191 = vld [vmem:[%s2 + $0x24] sm:$0xf]
      %v192 = vld [vmem:[%s2 + $0x28] sm:$0xf]
      %v193 = vld [vmem:[%s2 + $0x2c] sm:$0xf]
      %v194 = vld [vmem:[%s2 + $0x30] sm:$0xf]
      %v195 = vld [vmem:[%s2 + $0x34] sm:$0xf]
      %v196 = vld [vmem:[%s2 + $0x38] sm:$0xf]
      %v197 = vld [vmem:[%s2 + $0x3c] sm:$0xf]
      %v198 = vld [vmem:[%s2 + $0x40] sm:$0xf]
      %v199 = vld [vmem:[%s2 + $0x44] sm:$0xf]
      %v200 = vld [vmem:[%s2 + $0x48] sm:$0xf]
      %v201 = vld [vmem:[%s2 + $0x4c] sm:$0xf]
      %v202 = vld [vmem:[%s2 + $0x50] sm:$0xf]
      %v203 = vld [vmem:[%s2 + $0x54] sm:$0xf]
      %v204 = vld [vmem:[%s2 + $0x58] sm:$0xf]
      %v205 = vld [vmem:[%s2 + $0x5c] sm:$0xf]
      %v206 = vld [vmem:[%s2 + $0x60] sm:$0xf]
      %v207 = vld [vmem:[%s2 + $0x64] sm:$0xf]
      %v208 = vld [vmem:[%s2 + $0x68] sm:$0xf]
      %v209 = vld [vmem:[%s2 + $0x6c] sm:$0xf]
      %v210 = vld [vmem:[%s2 + $0x70] sm:$0xf]
      %v211 = vld [vmem:[%s2 + $0x74] sm:$0xf]
      %v212 = vld [vmem:[%s2 + $0x78] sm:$0xf]
      %v213 = vld [vmem:[%s2 + $0x7c] sm:$0xf]
      %v214 = vld [vmem:[%s3] sm:$0x1]
      %v216 = vlaneseq
      %v217 = vshrl.u32 %v216, 7
      %v218 = vsub.s32 0, %v217
      %v219 = vrot.slane %v214, %v218
      %v253 = vunpack.c.l.b16 %v182
      %v254 = vunpack.c.l.b16 %v183
      %v255 = vunpack.c.l.b16 %v184
      %v256 = vunpack.c.l.b16 %v185
      %v257 = vunpack.c.l.b16 %v186
      %v258 = vunpack.c.l.b16 %v187
      %v259 = vunpack.c.l.b16 %v188
      %v260 = vunpack.c.l.b16 %v189
      %v261 = vunpack.c.l.b16 %v190
      %v262 = vunpack.c.l.b16 %v191
      %v263 = vunpack.c.l.b16 %v192
      %v264 = vunpack.c.l.b16 %v193
      %v265 = vunpack.c.l.b16 %v194
      %v266 = vunpack.c.l.b16 %v195
      %v267 = vunpack.c.l.b16 %v196
      %v268 = vunpack.c.l.b16 %v197
      %v269 = vunpack.c.l.b16 %v198
      %v270 = vunpack.c.l.b16 %v199
      %v271 = vunpack.c.l.b16 %v200
      %v272 = vunpack.c.l.b16 %v201
      %v273 = vunpack.c.l.b16 %v202
      %v274 = vunpack.c.l.b16 %v203
      %v275 = vunpack.c.l.b16 %v204
      %v276 = vunpack.c.l.b16 %v205
      %v277 = vunpack.c.l.b16 %v206
      %v278 = vunpack.c.l.b16 %v207
      %v279 = vunpack.c.l.b16 %v208
      %v280 = vunpack.c.l.b16 %v209
      %v281 = vunpack.c.l.b16 %v210
      %v282 = vunpack.c.l.b16 %v211
      %v283 = vunpack.c.l.b16 %v212
      %v284 = vunpack.c.l.b16 %v213
      %v285 = vpack.c.b16 %v254, %v253
      %v286 = vpack.c.b16 %v256, %v255
      %v287 = vpack.c.b16 %v258, %v257
      %v288 = vpack.c.b16 %v260, %v259
      %v289 = vpack.c.b16 %v262, %v261
      %v290 = vpack.c.b16 %v264, %v263
      %v291 = vpack.c.b16 %v266, %v265
      %v292 = vpack.c.b16 %v268, %v267
      %v293 = vpack.c.b16 %v270, %v269
      %v294 = vpack.c.b16 %v272, %v271
      %v295 = vpack.c.b16 %v274, %v273
      %v296 = vpack.c.b16 %v276, %v275
      %v297 = vpack.c.b16 %v278, %v277
      %v298 = vpack.c.b16 %v280, %v279
      %v299 = vpack.c.b16 %v282, %v281
      %v300 = vpack.c.b16 %v284, %v283
      %317 = vmatprep.subr.bf16.mxu0 0
      %318 = vmatpush1.bf16.msra.mxu0 %v292
      %319 = vmatprep.subr.bf16.mxu0 0
      %320 = vmatpush1.bf16.msra.mxu0 %v291
      %321 = vmatprep.subr.bf16.mxu0 0
      %322 = vmatpush1.bf16.msra.mxu0 %v290
      %323 = vmatprep.subr.bf16.mxu0 0
      %324 = vmatpush1.bf16.msra.mxu0 %v289
      %325 = vmatprep.subr.bf16.mxu0 0
      %326 = vmatpush1.bf16.msra.mxu0 %v288
      %327 = vmatprep.subr.bf16.mxu0 0
      %328 = vmatpush1.bf16.msra.mxu0 %v287
      %329 = vmatprep.subr.bf16.mxu0 0
      %330 = vmatpush1.bf16.msra.mxu0 %v286
      %331 = vmatprep.subr.bf16.mxu0 0
      %332 = vmatpush1.bf16.msra.mxu0 %v285
      %333 = vmatprep.subr.bf16.mxu0 0
      %334 = vmatpush2.bf16.msra.mxu0 %v300
      %335 = vmatprep.subr.bf16.mxu0 0
      %336 = vmatpush2.bf16.msra.mxu0 %v299
      %337 = vmatprep.subr.bf16.mxu0 0
      %338 = vmatpush2.bf16.msra.mxu0 %v298
      %339 = vmatprep.subr.bf16.mxu0 0
      %340 = vmatpush2.bf16.msra.mxu0 %v297
      %341 = vmatprep.subr.bf16.mxu0 0
      %342 = vmatpush2.bf16.msra.mxu0 %v296
      %343 = vmatprep.subr.bf16.mxu0 0
      %344 = vmatpush2.bf16.msra.mxu0 %v295
      %345 = vmatprep.subr.bf16.mxu0 0
      %346 = vmatpush2.bf16.msra.mxu0 %v294
      %347 = vmatprep.subr.bf16.mxu0 0
      %348 = vmatpush2.bf16.msra.mxu0 %v293
      %349 = vmatprep.mubr.bf16.mxu0 %v181
      %350 = vmatmul.mubr.bf16.gmra.mxu0 %v180
      %v351 = vpop.f32.mrf.mxu0
      %v352 = vadd.f32 %v219, %v351
      %v353 = vpop.f32.mrf.mxu0
      %v354 = vpop.f32.mrf.mxu0
      %v355 = vpop.f32.mrf.mxu0
      %356 = vdwg.mxu0
      %v357 = vlaneseq
      %v358 = vshrl.u32 %v357, 7
      %v359 = vstv %s177
      %vm360 = vcmp.lt.s32.totalorder %v358, %v359
      %v361 = vsel %vm360, 1, 0
      %v362 = vcvt.s32.f32 %v361
      %v363 = vmul.f32 %v352, %v362
      %vm364 = vcmask 261120
      %365 = vst.msk [vmem:[%s175] sm:$0xff] %vm364, %v363
      %p366 = scmp.lt.s32.totalorder %s21, 1
      %s367 = scalar_select %p366, %s21, 1
      %s368 = smul.addr %s367, 8
      %s369 = scalar_lea.vmem %s4, %s368
      // Predicated region
      $region33: #{stylespeech2_forward.10} parent=31 // pred_check
        %p370 = pneg %p107
      $region34: #{stylespeech2_forward.10} parent=31 // pred_check_branch
        %372 = sbr.rel (%p370) target = $region36
      $region35: #{stylespeech2_forward.10} parent=31 // pred_region
        _
      $region36: #{stylespeech2_forward.10} parent=31 // pred_fallthru
        _
    $region32: #{stylespeech2_forward.10} parent=5 // pred_fallthru
      _
    %p373 = scmp.le.s32.totalorder 2, %s16
    // Predicated region
    $region37: #{stylespeech2_forward.10} parent=5 // pred_check
      %p374 = pneg %p373
    $region38: #{stylespeech2_forward.10} parent=5 // pred_check_branch
      %376 = sbr.rel (%p374) target = $region40
    $region39: #{stylespeech2_forward.10} parent=5 // pred_region
      %s377 = ssub.s32 %s16, 2
      // Predicated region
      $region41: #{stylespeech2_forward.10} parent=39 // pred_check
        %p378 = pneg %p113
      $region42: #{stylespeech2_forward.10} parent=39 // pred_check_branch
        %380 = sbr.rel (%p378) target = $region44
      $region43: #{stylespeech2_forward.10} parent=39 // pred_region
        %p381 = scmp.lt.s32.totalorder %s22, 1
        %s382 = scalar_select %p381, %s22, 1
        %s383 = smul.addr %s382, 8
        %s384 = scalar_lea.vmem %s4, %s383
      $region44: #{stylespeech2_forward.10} parent=39 // pred_fallthru
        _
    $region40: #{stylespeech2_forward.10} parent=5 // pred_fallthru
      _
  $region6: #{stylespeech2_forward.10} parent=0 // loop_footer
    %s20 = sadd.s32 1, %s16
  $region7: #{stylespeech2_forward.10} parent=0 // loop_footer_branch
    %15 = sbr.rel target = $region3
  $region8: #{stylespeech2_forward.10} parent=0 // loop_exit
    _

// kernel: stylespeech2_forward.6
$region0: #{stylespeech2_forward.6}
  #allocation0 [shape = 'u32[]', space=smem, size = 0x4, offset = 0x4, fixed_abs, tag = 'smem constant byte address 0x4 - core index']
  #allocation1 [shape = 'u32[144,128]{1,0:T(1,128)}', space=vmem, size = 0x12000, scoped, tag = 'internal scratch']
  #allocation2 [shape = 's32[1]{0}', space=sflag, size = 0x4, scoped, tag = 'scoped memory for stylespeech2_forward.6']
  #allocation3 [shape = 'u8[512]{0}', space=smem, size = 0x200, scoped, tag = 'prefetched SMEM operand 0']
  %s0 = inlined_call_operand.vmem [shape: s32[2], index: 0, kind: input, shape index: {}]
  %s1 = inlined_call_operand.vmem [shape: f32[2,8,256], index: 1, kind: input, shape index: {}]
  %s2 = inlined_call_operand.hbm [shape: bf16[256,768], index: 2, kind: input, shape index: {}]
  %s3 = inlined_call_operand.vmem [shape: f32[1,768], index: 3, kind: input, shape index: {}]
  %s4 = inlined_call_operand.vmem [shape: bf16[256,256], index: 4, kind: input, shape index: {}]
  %s5 = inlined_call_operand.vmem [shape: f32[1,256], index: 5, kind: input, shape index: {}]
  %s6 = inlined_call_operand.vmem [shape: f32[1,256], index: 6, kind: input, shape index: {}]
  %s7 = inlined_call_operand.vmem [shape: f32[1,256], index: 7, kind: input, shape index: {}]
  %s8 = inlined_call_operand.hbm [shape: bf16[768,256], index: 8, kind: input, shape index: {}]
  %s9 = inlined_call_operand.vmem [shape: f32[1,256], index: 9, kind: input, shape index: {}]
  %s10 = inlined_call_operand.hbm [shape: bf16[768,256], index: 10, kind: input, shape index: {}]
  %s11 = inlined_call_operand.vmem [shape: f32[1,256], index: 11, kind: input, shape index: {}]
  %s12 = inlined_call_operand.vmem [shape: f32[1,256], index: 12, kind: input, shape index: {}]
  %s13 = inlined_call_operand.vmem [shape: f32[1,256], index: 13, kind: input, shape index: {}]
  %s14 = inlined_call_operand.vmem [shape: f32[2,8,256], index: 14, kind: output, shape index: {}]
  %s15 = sld [smem:[#allocation0]]
  $region97: #{stylespeech2_forward.6} parent=0
    _
  %s17 = ssub.s32 1, %s15
  %s18 = scalar_select 0, %s17, %s15
  %s19 = sshll.u32 %s0, 4
  %s20 = int_to_ptr.vmem [resolvable:$true] %s19
  %22 = dma.vmem_to_smem %s20, 16, [#allocation3], [#allocation2]
  %23 = dma.done [#allocation2], 16
  %24 = sfence
  $region1: #{stylespeech2_forward.6} parent=0
    #allocation4 [shape = 'u8[393216]{0}', space=vmem, size = 0x60000, scoped, tag = 'input window, operand 2, single buffered']
    #allocation5 [shape = 's32[2]{0}', space=sflag, size = 0x8, scoped, tag = 'scoped memory for stylespeech2_forward.6']
    #allocation6 [shape = 'u8[393216]{0}', space=vmem, size = 0x60000, scoped, tag = 'input window, operand 8, single buffered']
    #allocation7 [shape = 's32[1]{0}', space=sflag, size = 0x4, scoped, tag = 'scoped memory for stylespeech2_forward.6']
    #allocation8 [shape = 'u8[393216]{0}', space=vmem, size = 0x60000, scoped, tag = 'input window, operand 10, single buffered']
    %25 = vsyncpa [#allocation5], 0
    %26 = vsyncpa [#allocation7], 0
    loop: start=0, step=1, limit=4
    $region2: #{stylespeech2_forward.6} parent=1 // loop_pre_header
      _
    $region3: #{stylespeech2_forward.6} parent=1 // loop_header
      %s28 = sphi 0, %s32
      %p29 = scmp.ge.s32.totalorder %s28, 4
      %s38 = sphi 0, %s40
      %s41 = sphi 0, %s38
      %s42 = sphi 0, %s41
      %s58 = sphi 0, %s42
      %s62 = sphi 0, %s62
      %s64 = sphi 0, %s62
      %s65 = sphi 0, %s64
      %s79 = sphi 0, %s65
      %s83 = sphi 0, %s83
      %s85 = sphi 0, %s83
      %s86 = sphi 0, %s85
      %s100 = sphi 0, %s86
      %s104 = sphi 0, %s104
      %s106 = sphi 0, %s104
      %s107 = sphi 0, %s106
      %s121 = sphi 0, %s107
      %s125 = sphi 0, %s125
      %s127 = sphi 0, %s125
      %s128 = sphi 0, %s127
      %s142 = sphi 0, %s128
      %s146 = sphi 0, %s146
      %s148 = sphi 0, %s146
      %s149 = sphi 0, %s148
      %s163 = sphi 0, %s149
      %s167 = sphi 0, %s167
      %s169 = sphi 0, %s167
      %s170 = sphi 0, %s169
      %s184 = sphi 0, %s170
      %s188 = sphi 0, %s188
      %s190 = sphi 0, %s188
      %s191 = sphi 0, %s190
      %s205 = sphi 0, %s191
      %s209 = sphi 0, %s209
      %s211 = sphi 0, %s209
      %s212 = sphi 0, %s211
      %s226 = sphi 0, %s212
      %s230 = sphi 0, %s230
      %s232 = sphi 0, %s230
      %s233 = sphi 0, %s232
      %s247 = sphi 0, %s233
      %s251 = sphi 0, %s251
      %s253 = sphi 0, %s251
      %s254 = sphi 0, %s253
      %s268 = sphi 0, %s254
      %s272 = sphi 0, %s272
      %s274 = sphi 0, %s272
      %s275 = sphi 0, %s274
      %s289 = sphi 0, %s275
      %s293 = sphi 0, %s293
      %s295 = sphi 0, %s293
      %s296 = sphi 0, %s295
      %s310 = sphi 0, %s296
      %s316 = sphi 0, %s318
      %s319 = sphi 0, %s316
      %s320 = sphi 0, %s319
      %s336 = sphi 0, %s320
    $region4: #{stylespeech2_forward.6} parent=1 // loop_header_branch
      %31 = sbr.rel (%p29) target = $region8
    $region5: #{stylespeech2_forward.6} parent=1 // loop_body
      %s33 = ssub.s32 %s28, 1
      %s34 = ssub.s32 %s28, 2
      %s35 = sadd.s32 %s28, 1
      %s36 = ssub.s32 %s28, %s35
      %p37 = scmp.eq.s32.totalorder %s36, 0
      %s39 = sadd.s32 %s38, 1
      %s40 = scalar_select %p37, %s38, %s39
      %p43 = pneg %p37
      %p44 = scmp.eq.s32.totalorder %s28, 1
      %p45 = por %p43, %p44
      %p46 = scmp.ne.s32.totalorder %s38, %s41
      %p47 = scmp.eq.s32.totalorder %s28, 0
      %p48 = por %p46, %p47
      %p49 = scmp.ne.s32.totalorder %s38, %s41
      %p50 = scmp.eq.s32.totalorder %s33, 1
      %p51 = por %p49, %p50
      %p52 = scmp.ne.s32.totalorder %s41, %s42
      %p53 = scmp.eq.s32.totalorder %s33, 0
      %p54 = por %p52, %p53
      %p55 = scmp.ne.s32.totalorder %s41, %s42
      %p56 = scmp.eq.s32.totalorder %s34, 1
      %p57 = por %p55, %p56
      %p59 = scmp.ne.s32.totalorder %s42, %s58
      %p60 = scmp.eq.s32.totalorder %s34, 0
      %p61 = por %p59, %p60
      %s63 = sadd.s32 %s62, 1
      %p66 = scmp.eq.s32.totalorder %s28, 1
      %p67 = scmp.ne.s32.totalorder %s62, %s64
      %p68 = scmp.eq.s32.totalorder %s28, 0
      %p69 = por %p67, %p68
      %p70 = scmp.ne.s32.totalorder %s62, %s64
      %p71 = scmp.eq.s32.totalorder %s33, 1
      %p72 = por %p70, %p71
      %p73 = scmp.ne.s32.totalorder %s64, %s65
      %p74 = scmp.eq.s32.totalorder %s33, 0
      %p75 = por %p73, %p74
      %p76 = scmp.ne.s32.totalorder %s64, %s65
      %p77 = scmp.eq.s32.totalorder %s34, 1
      %p78 = por %p76, %p77
      %p80 = scmp.ne.s32.totalorder %s65, %s79
      %p81 = scmp.eq.s32.totalorder %s34, 0
      %p82 = por %p80, %p81
      %s84 = sadd.s32 %s83, 1
      %p87 = scmp.eq.s32.totalorder %s28, 1
      %p88 = scmp.ne.s32.totalorder %s83, %s85
      %p89 = scmp.eq.s32.totalorder %s28, 0
      %p90 = por %p88, %p89
      %p91 = scmp.ne.s32.totalorder %s83, %s85
      %p92 = scmp.eq.s32.totalorder %s33, 1
      %p93 = por %p91, %p92
      %p94 = scmp.ne.s32.totalorder %s85, %s86
      %p95 = scmp.eq.s32.totalorder %s33, 0
      %p96 = por %p94, %p95
      %p97 = scmp.ne.s32.totalorder %s85, %s86
      %p98 = scmp.eq.s32.totalorder %s34, 1
      %p99 = por %p97, %p98
      %p101 = scmp.ne.s32.totalorder %s86, %s100
      %p102 = scmp.eq.s32.totalorder %s34, 0
      %p103 = por %p101, %p102
      %s105 = sadd.s32 %s104, 1
      %p108 = scmp.eq.s32.totalorder %s28, 1
      %p109 = scmp.ne.s32.totalorder %s104, %s106
      %p110 = scmp.eq.s32.totalorder %s28, 0
      %p111 = por %p109, %p110
      %p112 = scmp.ne.s32.totalorder %s104, %s106
      %p113 = scmp.eq.s32.totalorder %s33, 1
      %p114 = por %p112, %p113
      %p115 = scmp.ne.s32.totalorder %s106, %s107
      %p116 = scmp.eq.s32.totalorder %s33, 0
      %p117 = por %p115, %p116
      %p118 = scmp.ne.s32.totalorder %s106, %s107
      %p119 = scmp.eq.s32.totalorder %s34, 1
      %p120 = por %p118, %p119
      %p122 = scmp.ne.s32.totalorder %s107, %s121
      %p123 = scmp.eq.s32.totalorder %s34, 0
      %p124 = por %p122, %p123
      %s126 = sadd.s32 %s125, 1
      %p129 = scmp.eq.s32.totalorder %s28, 1
      %p130 = scmp.ne.s32.totalorder %s125, %s127
      %p131 = scmp.eq.s32.totalorder %s28, 0
      %p132 = por %p130, %p131
      %p133 = scmp.ne.s32.totalorder %s125, %s127
      %p134 = scmp.eq.s32.totalorder %s33, 1
      %p135 = por %p133, %p134
      %p136 = scmp.ne.s32.totalorder %s127, %s128
      %p137 = scmp.eq.s32.totalorder %s33, 0
      %p138 = por %p136, %p137
      %p139 = scmp.ne.s32.totalorder %s127, %s128
      %p140 = scmp.eq.s32.totalorder %s34, 1
      %p141 = por %p139, %p140
      %p143 = scmp.ne.s32.totalorder %s128, %s142
      %p144 = scmp.eq.s32.totalorder %s34, 0
      %p145 = por %p143, %p144
      %s147 = sadd.s32 %s146, 1
      %p150 = scmp.eq.s32.totalorder %s28, 1
      %p151 = scmp.ne.s32.totalorder %s146, %s148
      %p152 = scmp.eq.s32.totalorder %s28, 0
      %p153 = por %p151, %p152
      %p154 = scmp.ne.s32.totalorder %s146, %s148
      %p155 = scmp.eq.s32.totalorder %s33, 1
      %p156 = por %p154, %p155
      %p157 = scmp.ne.s32.totalorder %s148, %s149
      %p158 = scmp.eq.s32.totalorder %s33, 0
      %p159 = por %p157, %p158
      %p160 = scmp.ne.s32.totalorder %s148, %s149
      %p161 = scmp.eq.s32.totalorder %s34, 1
      %p162 = por %p160, %p161
      %p164 = scmp.ne.s32.totalorder %s149, %s163
      %p165 = scmp.eq.s32.totalorder %s34, 0
      %p166 = por %p164, %p165
      %s168 = sadd.s32 %s167, 1
      %p171 = scmp.eq.s32.totalorder %s28, 1
      %p172 = scmp.ne.s32.totalorder %s167, %s169
      %p173 = scmp.eq.s32.totalorder %s28, 0
      %p174 = por %p172, %p173
      %p175 = scmp.ne.s32.totalorder %s167, %s169
      %p176 = scmp.eq.s32.totalorder %s33, 1
      %p177 = por %p175, %p176
      %p178 = scmp.ne.s32.totalorder %s169, %s170
      %p179 = scmp.eq.s32.totalorder %s33, 0
      %p180 = por %p178, %p179
      %p181 = scmp.ne.s32.totalorder %s169, %s170
      %p182 = scmp.eq.s32.totalorder %s34, 1
      %p183 = por %p181, %p182
      %p185 = scmp.ne.s32.totalorder %s170, %s184
      %p186 = scmp.eq.s32.totalorder %s34, 0
      %p187 = por %p185, %p186
      %s189 = sadd.s32 %s188, 1
      %p192 = scmp.eq.s32.totalorder %s28, 1
      %p193 = scmp.ne.s32.totalorder %s188, %s190
      %p194 = scmp.eq.s32.totalorder %s28, 0
      %p195 = por %p193, %p194
      %p196 = scmp.ne.s32.totalorder %s188, %s190
      %p197 = scmp.eq.s32.totalorder %s33, 1
      %p198 = por %p196, %p197
      %p199 = scmp.ne.s32.totalorder %s190, %s191
      %p200 = scmp.eq.s32.totalorder %s33, 0
      %p201 = por %p199, %p200
      %p202 = scmp.ne.s32.totalorder %s190, %s191
      %p203 = scmp.eq.s32.totalorder %s34, 1
      %p204 = por %p202, %p203
      %p206 = scmp.ne.s32.totalorder %s191, %s205
      %p207 = scmp.eq.s32.totalorder %s34, 0
      %p208 = por %p206, %p207
      %s210 = sadd.s32 %s209, 1
      %p213 = scmp.eq.s32.totalorder %s28, 1
      %p214 = scmp.ne.s32.totalorder %s209, %s211
      %p215 = scmp.eq.s32.totalorder %s28, 0
      %p216 = por %p214, %p215
      %p217 = scmp.ne.s32.totalorder %s209, %s211
      %p218 = scmp.eq.s32.totalorder %s33, 1
      %p219 = por %p217, %p218
      %p220 = scmp.ne.s32.totalorder %s211, %s212
      %p221 = scmp.eq.s32.totalorder %s33, 0
      %p222 = por %p220, %p221
      %p223 = scmp.ne.s32.totalorder %s211, %s212
      %p224 = scmp.eq.s32.totalorder %s34, 1
      %p225 = por %p223, %p224
      %p227 = scmp.ne.s32.totalorder %s212, %s226
      %p228 = scmp.eq.s32.totalorder %s34, 0
      %p229 = por %p227, %p228
      %s231 = sadd.s32 %s230, 1
      %p234 = scmp.eq.s32.totalorder %s28, 1
      %p235 = scmp.ne.s32.totalorder %s230, %s232
      %p236 = scmp.eq.s32.totalorder %s28, 0
      %p237 = por %p235, %p236
      %p238 = scmp.ne.s32.totalorder %s230, %s232
      %p239 = scmp.eq.s32.totalorder %s33, 1
      %p240 = por %p238, %p239
      %p241 = scmp.ne.s32.totalorder %s232, %s233
      %p242 = scmp.eq.s32.totalorder %s33, 0
      %p243 = por %p241, %p242
      %p244 = scmp.ne.s32.totalorder %s232, %s233
      %p245 = scmp.eq.s32.totalorder %s34, 1
      %p246 = por %p244, %p245
      %p248 = scmp.ne.s32.totalorder %s233, %s247
      %p249 = scmp.eq.s32.totalorder %s34, 0
      %p250 = por %p248, %p249
      %s252 = sadd.s32 %s251, 1
      %p255 = scmp.eq.s32.totalorder %s28, 1
      %p256 = scmp.ne.s32.totalorder %s251, %s253
      %p257 = scmp.eq.s32.totalorder %s28, 0
      %p258 = por %p256, %p257
      %p259 = scmp.ne.s32.totalorder %s251, %s253
      %p260 = scmp.eq.s32.totalorder %s33, 1
      %p261 = por %p259, %p260
      %p262 = scmp.ne.s32.totalorder %s253, %s254
      %p263 = scmp.eq.s32.totalorder %s33, 0
      %p264 = por %p262, %p263
      %p265 = scmp.ne.s32.totalorder %s253, %s254
      %p266 = scmp.eq.s32.totalorder %s34, 1
      %p267 = por %p265, %p266
      %p269 = scmp.ne.s32.totalorder %s254, %s268
      %p270 = scmp.eq.s32.totalorder %s34, 0
      %p271 = por %p269, %p270
      %s273 = sadd.s32 %s272, 1
      %p276 = scmp.eq.s32.totalorder %s28, 1
      %p277 = scmp.ne.s32.totalorder %s272, %s274
      %p278 = scmp.eq.s32.totalorder %s28, 0
      %p279 = por %p277, %p278
      %p280 = scmp.ne.s32.totalorder %s272, %s274
      %p281 = scmp.eq.s32.totalorder %s33, 1
      %p282 = por %p280, %p281
      %p283 = scmp.ne.s32.totalorder %s274, %s275
      %p284 = scmp.eq.s32.totalorder %s33, 0
      %p285 = por %p283, %p284
      %p286 = scmp.ne.s32.totalorder %s274, %s275
      %p287 = scmp.eq.s32.totalorder %s34, 1
      %p288 = por %p286, %p287
      %p290 = scmp.ne.s32.totalorder %s275, %s289
      %p291 = scmp.eq.s32.totalorder %s34, 0
      %p292 = por %p290, %p291
      %s294 = sadd.s32 %s293, 1
      %p297 = scmp.eq.s32.totalorder %s28, 1
      %p298 = scmp.ne.s32.totalorder %s293, %s295
      %p299 = scmp.eq.s32.totalorder %s28, 0
      %p300 = por %p298, %p299
      %p301 = scmp.ne.s32.totalorder %s293, %s295
      %p302 = scmp.eq.s32.totalorder %s33, 1
      %p303 = por %p301, %p302
      %p304 = scmp.ne.s32.totalorder %s295, %s296
      %p305 = scmp.eq.s32.totalorder %s33, 0
      %p306 = por %p304, %p305
      %p307 = scmp.ne.s32.totalorder %s295, %s296
      %p308 = scmp.eq.s32.totalorder %s34, 1
      %p309 = por %p307, %p308
      %p311 = scmp.ne.s32.totalorder %s296, %s310
      %p312 = scmp.eq.s32.totalorder %s34, 0
      %p313 = por %p311, %p312
      %s314 = ssub.s32 %s28, %s35
      %p315 = scmp.eq.s32.totalorder %s314, 0
      %s317 = sadd.s32 %s316, 1
      %s318 = scalar_select %p315, %s316, %s317
      %p321 = pneg %p315
      %p322 = scmp.eq.s32.totalorder %s28, 1
      %p323 = por %p321, %p322
      %p324 = scmp.ne.s32.totalorder %s316, %s319
      %p325 = scmp.eq.s32.totalorder %s28, 0
      %p326 = por %p324, %p325
      %p327 = scmp.ne.s32.totalorder %s316, %s319
      %p328 = scmp.eq.s32.totalorder %s33, 1
      %p329 = por %p327, %p328
      %p330 = scmp.ne.s32.totalorder %s319, %s320
      %p331 = scmp.eq.s32.totalorder %s33, 0
      %p332 = por %p330, %p331
      %p333 = scmp.ne.s32.totalorder %s319, %s320
      %p334 = scmp.eq.s32.totalorder %s34, 1
      %p335 = por %p333, %p334
      %p337 = scmp.ne.s32.totalorder %s320, %s336
      %p338 = scmp.eq.s32.totalorder %s34, 0
      %p339 = por %p337, %p338
      %p340 = scmp.le.s32.totalorder 1, %s28
      %p341 = scmp.lt.s32.totalorder %s28, 3
      %p342 = pnand %p340, %p341
      %p343 = pneg %p342
      // Predicated region
      $region9: #{stylespeech2_forward.6} parent=5 // pred_check
        _
      $region10: #{stylespeech2_forward.6} parent=5 // pred_check_branch
        %345 = sbr.rel (%p342) target = $region12
      $region11: #{stylespeech2_forward.6} parent=5 // pred_region
        %s346 = ssub.s32 %s28, 1
        // Predicated region
        $region13: #{stylespeech2_forward.6} parent=11 // pred_check
          %p347 = pneg %p75
        $region14: #{stylespeech2_forward.6} parent=11 // pred_check_branch
          %349 = sbr.rel (%p347) target = $region16
        $region15: #{stylespeech2_forward.6} parent=11 // pred_region
          %s351 = ssub.s32 12288, 12288
          %352 = vsyncadd [#allocation5], %s351
          %s353 = sshll.u32 [#allocation4], 4
          %s354 = int_to_ptr.vmem [resolvable:$true] %s353
          %359 = dma.hbm_to_vmem [thread:$0]  %s2, 12288, %s354, [#allocation5], 384, 384, 24
        $region16: #{stylespeech2_forward.6} parent=11 // pred_fallthru
          _
        // Predicated region
        $region17: #{stylespeech2_forward.6} parent=11 // pred_check
          %p360 = pneg %p96
        $region18: #{stylespeech2_forward.6} parent=11 // pred_check_branch
          %362 = sbr.rel (%p360) target = $region20
        $region19: #{stylespeech2_forward.6} parent=11 // pred_region
          _
        $region20: #{stylespeech2_forward.6} parent=11 // pred_fallthru
          _
        // Predicated region
        $region21: #{stylespeech2_forward.6} parent=11 // pred_check
          %p363 = pneg %p117
        $region22: #{stylespeech2_forward.6} parent=11 // pred_check_branch
          %365 = sbr.rel (%p363) target = $region24
        $region23: #{stylespeech2_forward.6} parent=11 // pred_region
          _
        $region24: #{stylespeech2_forward.6} parent=11 // pred_fallthru
          _
        // Predicated region
        $region25: #{stylespeech2_forward.6} parent=11 // pred_check
          %p366 = pneg %p138
        $region26: #{stylespeech2_forward.6} parent=11 // pred_check_branch
          %368 = sbr.rel (%p366) target = $region28
        $region27: #{stylespeech2_forward.6} parent=11 // pred_region
          _
        $region28: #{stylespeech2_forward.6} parent=11 // pred_fallthru
          _
        // Predicated region
        $region29: #{stylespeech2_forward.6} parent=11 // pred_check
          %p369 = pneg %p159
        $region30: #{stylespeech2_forward.6} parent=11 // pred_check_branch
          %371 = sbr.rel (%p369) target = $region32
        $region31: #{stylespeech2_forward.6} parent=11 // pred_region
          _
        $region32: #{stylespeech2_forward.6} parent=11 // pred_fallthru
          _
        // Predicated region
        $region33: #{stylespeech2_forward.6} parent=11 // pred_check
          %p372 = pneg %p180
        $region34: #{stylespeech2_forward.6} parent=11 // pred_check_branch
          %374 = sbr.rel (%p372) target = $region36
        $region35: #{stylespeech2_forward.6} parent=11 // pred_region
          _
        $region36: #{stylespeech2_forward.6} parent=11 // pred_fallthru
          _
        // Predicated region
        $region37: #{stylespeech2_forward.6} parent=11 // pred_check
          %p375 = pneg %p201
        $region38: #{stylespeech2_forward.6} parent=11 // pred_check_branch
          %377 = sbr.rel (%p375) target = $region40
        $region39: #{stylespeech2_forward.6} parent=11 // pred_region
          %s379 = ssub.s32 12288, 12288
          %380 = vsyncadd [#allocation7], %s379
          %s381 = sshll.u32 [#allocation6], 4
          %s382 = int_to_ptr.vmem [resolvable:$true] %s381
          %387 = dma.hbm_to_vmem [thread:$0]  %s8, 12288, %s382, [#allocation7], 128, 128, 8
        $region40: #{stylespeech2_forward.6} parent=11 // pred_fallthru
          _
        // Predicated region
        $region41: #{stylespeech2_forward.6} parent=11 // pred_check
          %p388 = pneg %p222
        $region42: #{stylespeech2_forward.6} parent=11 // pred_check_branch
          %390 = sbr.rel (%p388) target = $region44
        $region43: #{stylespeech2_forward.6} parent=11 // pred_region
          _
        $region44: #{stylespeech2_forward.6} parent=11 // pred_fallthru
          _
        // Predicated region
        $region45: #{stylespeech2_forward.6} parent=11 // pred_check
          %p391 = pneg %p243
        $region46: #{stylespeech2_forward.6} parent=11 // pred_check_branch
          %393 = sbr.rel (%p391) target = $region48
        $region47: #{stylespeech2_forward.6} parent=11 // pred_region
          %s395 = ssub.s32 12288, 12288
          %396 = vsyncadd [#allocation7], %s395
          %s397 = sshll.u32 [#allocation8], 4
          %s398 = int_to_ptr.vmem [resolvable:$true] %s397
          %403 = dma.hbm_to_vmem [thread:$0]  %s10, 12288, %s398, [#allocation7], 128, 128, 8
        $region48: #{stylespeech2_forward.6} parent=11 // pred_fallthru
          _
        // Predicated region
        $region49: #{stylespeech2_forward.6} parent=11 // pred_check
          %p404 = pneg %p264
        $region50: #{stylespeech2_forward.6} parent=11 // pred_check_branch
          %406 = sbr.rel (%p404) target = $region52
        $region51: #{stylespeech2_forward.6} parent=11 // pred_region
          _
        $region52: #{stylespeech2_forward.6} parent=11 // pred_fallthru
          _
        // Predicated region
        $region53: #{stylespeech2_forward.6} parent=11 // pred_check
          %p407 = pneg %p285
        $region54: #{stylespeech2_forward.6} parent=11 // pred_check_branch
          %409 = sbr.rel (%p407) target = $region56
        $region55: #{stylespeech2_forward.6} parent=11 // pred_region
          _
        $region56: #{stylespeech2_forward.6} parent=11 // pred_fallthru
          _
        // Predicated region
        $region57: #{stylespeech2_forward.6} parent=11 // pred_check
          %p410 = pneg %p306
        $region58: #{stylespeech2_forward.6} parent=11 // pred_check_branch
          %412 = sbr.rel (%p410) target = $region60
        $region59: #{stylespeech2_forward.6} parent=11 // pred_region
          _
        $region60: #{stylespeech2_forward.6} parent=11 // pred_fallthru
          _
      $region12: #{stylespeech2_forward.6} parent=5 // pred_fallthru
        _
      %p413 = scmp.lt.s32.totalorder %s28, 2
      // Predicated region
      $region61: #{stylespeech2_forward.6} parent=5 // pred_check
        %p414 = pneg %p413
      $region62: #{stylespeech2_forward.6} parent=5 // pred_check_branch
        %416 = sbr.rel (%p414) target = $region64
      $region63: #{stylespeech2_forward.6} parent=5 // pred_region
        // Predicated region
        $region65: #{stylespeech2_forward.6} parent=63 // pred_check
          %p417 = pneg %p48
        $region66: #{stylespeech2_forward.6} parent=63 // pred_check_branch
          %419 = sbr.rel (%p417) target = $region68
        $region67: #{stylespeech2_forward.6} parent=63 // pred_region
          %p420 = scmp.lt.s32.totalorder %s28, 1
          %s421 = scalar_select %p420, %s28, 1
          %s422 = smul.addr %s421, 2
          %s423 = smul.addr %s422, 8
          %s424 = scalar_lea.vmem %s1, %s423
        $region68: #{stylespeech2_forward.6} parent=63 // pred_fallthru
          _
      $region64: #{stylespeech2_forward.6} parent=5 // pred_fallthru
        _
      %p425 = scmp.le.s32.totalorder 1, %s28
      %p426 = scmp.lt.s32.totalorder %s28, 3
      %p427 = pnand %p425, %p426
      %p428 = pneg %p427
      // Predicated region
      $region69: #{stylespeech2_forward.6} parent=5 // pred_check
        _
      $region70: #{stylespeech2_forward.6} parent=5 // pred_check_branch
        %430 = sbr.rel (%p427) target = $region72
      $region71: #{stylespeech2_forward.6} parent=5 // pred_region
        %s431 = ssub.s32 %s28, 1
        // Predicated region
        $region73: #{stylespeech2_forward.6} parent=71 // pred_check
          %p432 = pneg %p75
        $region74: #{stylespeech2_forward.6} parent=71 // pred_check_branch
          %434 = sbr.rel (%p432) target = $region76
        $region75: #{stylespeech2_forward.6} parent=71 // pred_region
          %435 = dma.done [#allocation5], 12288
        $region76: #{stylespeech2_forward.6} parent=71 // pred_fallthru
          _
        // Predicated region
        $region77: #{stylespeech2_forward.6} parent=71 // pred_check
          %p436 = pneg %p201
        $region78: #{stylespeech2_forward.6} parent=71 // pred_check_branch
          %438 = sbr.rel (%p436) target = $region80
        $region79: #{stylespeech2_forward.6} parent=71 // pred_region
          %439 = dma.done [#allocation7], 12288
        $region80: #{stylespeech2_forward.6} parent=71 // pred_fallthru
          _
        // Predicated region
        $region81: #{stylespeech2_forward.6} parent=71 // pred_check
          %p440 = pneg %p243
        $region82: #{stylespeech2_forward.6} parent=71 // pred_check_branch
          %442 = sbr.rel (%p440) target = $region84
        $region83: #{stylespeech2_forward.6} parent=71 // pred_region
          %443 = dma.done [#allocation7], 12288
        $region84: #{stylespeech2_forward.6} parent=71 // pred_fallthru
          _
        %p444 = scmp.lt.s32.totalorder %s33, 1
        %s445 = scalar_select %p444, %s33, 1
        %s446 = smul.addr %s445, 2
        %s447 = smul.addr %s446, 8
        %s448 = scalar_lea.vmem %s1, %s447
        %p449 = pneg %p54
        %p450 = pneg %p51
        %p451 = pneg %p75
        %p452 = pneg %p72
        %p453 = pneg %p96
        %p454 = pneg %p93
        %p455 = pneg %p117
        %p456 = pneg %p114
        %p457 = pneg %p138
        %p458 = pneg %p135
        %p459 = pneg %p159
        %p460 = pneg %p156
        %p461 = pneg %p180
        %p462 = pneg %p177
        %p463 = pneg %p201
        %p464 = pneg %p198
        %p465 = pneg %p222
        %p466 = pneg %p219
        %p467 = pneg %p243
        %p468 = pneg %p240
        %p469 = pneg %p264
        %p470 = pneg %p261
        %p471 = pneg %p285
        %p472 = pneg %p282
        %p473 = pneg %p306
        %p474 = pneg %p303
        %p475 = pneg %p332
        %p476 = pneg %p329
        %p477 = scmp.lt.s32.totalorder %s33, 1
        %s478 = scalar_select %p477, %s33, 1
        %s479 = smul.addr %s478, 2
        %s480 = smul.addr %s479, 8
        %s481 = scalar_lea.vmem %s14, %s480
        %p482 = scmp.lt.s32.totalorder %s33, 1
        %s483 = scalar_select %p482, %s33, 1
        %s484 = smul.addr %s483, 2
        %s485 = smul.addr %s484, 8
        %s486 = scalar_lea.vmem %s1, %s485
        %p487 = scmp.lt.s32.totalorder %s33, 1
        %s488 = scalar_select %p487, %s33, 1
        %s489 = smul.addr %s488, 2
        %s490 = smul.addr %s489, 8
        %s491 = scalar_lea.vmem %s14, %s490
        %s493 = sld [smem:[#allocation3 + %s33]]
        %v494 = vld [vmem:[%s486] sm:$0xff]
        %v495 = vld [vmem:[%s486 + $0x8] sm:$0xff]
        %v496 = vpack.c.bf16 %v494, %v494
        %v497 = vpack.c.bf16 %v495, %v495
        %v498 = vld [vmem:[#allocation4] sm:$0xff]
        %v499 = vld [vmem:[#allocation4 + $0x8] sm:$0xff]
        %v500 = vld [vmem:[#allocation4 + $0x10] sm:$0xff]
        %v501 = vld [vmem:[#allocation4 + $0x18] sm:$0xff]
        %v502 = vld [vmem:[#allocation4 + $0x20] sm:$0xff]
        %v503 = vld [vmem:[#allocation4 + $0x28] sm:$0xff]
        %v504 = vld [vmem:[#allocation4 + $0x30] sm:$0xff]
        %v505 = vld [vmem:[#allocation4 + $0x38] sm:$0xff]
        %v506 = vld [vmem:[#allocation4 + $0x40] sm:$0xff]
        %v507 = vld [vmem:[#allocation4 + $0x48] sm:$0xff]
        %v508 = vld [vmem:[#allocation4 + $0x50] sm:$0xff]
        %v509 = vld [vmem:[#allocation4 + $0x58] sm:$0xff]
        %v510 = vld [vmem:[#allocation4 + $0x60] sm:$0xff]
        %v511 = vld [vmem:[#allocation4 + $0x68] sm:$0xff]
        %v512 = vld [vmem:[#allocation4 + $0x70] sm:$0xff]
        %v513 = vld [vmem:[#allocation4 + $0x78] sm:$0xff]
        %v514 = vld [vmem:[#allocation4 + $0x80] sm:$0xff]
        %v515 = vld [vmem:[#allocation4 + $0x88] sm:$0xff]
        %v516 = vld [vmem:[#allocation4 + $0x90] sm:$0xff]
        %v517 = vld [vmem:[#allocation4 + $0x98] sm:$0xff]
        %v518 = vld [vmem:[#allocation4 + $0xa0] sm:$0xff]
        %v519 = vld [vmem:[#allocation4 + $0xa8] sm:$0xff]
        %v520 = vld [vmem:[#allocation4 + $0xb0] sm:$0xff]
        %v521 = vld [vmem:[#allocation4 + $0xb8] sm:$0xff]
        %v522 = vld [vmem:[#allocation4 + $0xc0] sm:$0xff]
        %v523 = vld [vmem:[#allocation4 + $0xc8] sm:$0xff]
        %v524 = vld [vmem:[#allocation4 + $0xd0] sm:$0xff]
        %v525 = vld [vmem:[#allocation4 + $0xd8] sm:$0xff]
        %v526 = vld [vmem:[#allocation4 + $0xe0] sm:$0xff]
        %v527 = vld [vmem:[#allocation4 + $0xe8] sm:$0xff]
        %v528 = vld [vmem:[#allocation4 + $0xf0] sm:$0xff]
        %v529 = vld [vmem:[#allocation4 + $0xf8] sm:$0xff]
        %v530 = vld [vmem:[#allocation4 + $0x100] sm:$0xff]
        %v531 = vld [vmem:[#allocation4 + $0x108] sm:$0xff]
        %v532 = vld [vmem:[#allocation4 + $0x110] sm:$0xff]
        %v533 = vld [vmem:[#allocation4 + $0x118] sm:$0xff]
        %v534 = vld [vmem:[#allocation4 + $0x120] sm:$0xff]
        %v535 = vld [vmem:[#allocation4 + $0x128] sm:$0xff]
        %v536 = vld [vmem:[#allocation4 + $0x130] sm:$0xff]
        %v537 = vld [vmem:[#allocation4 + $0x138] sm:$0xff]
        %v538 = vld [vmem:[#allocation4 + $0x140] sm:$0xff]
        %v539 = vld [vmem:[#allocation4 + $0x148] sm:$0xff]
        %v540 = vld [vmem:[#allocation4 + $0x150] sm:$0xff]
        %v541 = vld [vmem:[#allocation4 + $0x158] sm:$0xff]
        %v542 = vld [vmem:[#allocation4 + $0x160] sm:$0xff]
        %v543 = vld [vmem:[#allocation4 + $0x168] sm:$0xff]
        %v544 = vld [vmem:[#allocation4 + $0x170] sm:$0xff]
        %v545 = vld [vmem:[#allocation4 + $0x178] sm:$0xff]
        %v546 = vld [vmem:[#allocation4 + $0x180] sm:$0xff]
        %v547 = vld [vmem:[#allocation4 + $0x188] sm:$0xff]
        %v548 = vld [vmem:[#allocation4 + $0x190] sm:$0xff]
        %v549 = vld [vmem:[#allocation4 + $0x198] sm:$0xff]
        %v550 = vld [vmem:[#allocation4 + $0x1a0] sm:$0xff]
        %v551 = vld [vmem:[#allocation4 + $0x1a8] sm:$0xff]
        %v552 = vld [vmem:[#allocation4 + $0x1b0] sm:$0xff]
        %v553 = vld [vmem:[#allocation4 + $0x1b8] sm:$0xff]
        %v554 = vld [vmem:[#allocation4 + $0x1c0] sm:$0xff]
        %v555 = vld [vmem:[#allocation4 + $0x1c8] sm:$0xff]
        %v556 = vld [vmem:[#allocation4 + $0x1d0] sm:$0xff]
        %v557 = vld [vmem:[#allocation4 + $0x1d8] sm:$0xff]
        %v558 = vld [vmem:[#allocation4 + $0x1e0] sm:$0xff]
        %v559 = vld [vmem:[#allocation4 + $0x1e8] sm:$0xff]
        %v560 = vld [vmem:[#allocation4 + $0x1f0] sm:$0xff]
        %v561 = vld [vmem:[#allocation4 + $0x1f8] sm:$0xff]
        %v562 = vld [vmem:[#allocation4 + $0x200] sm:$0xff]
        %v563 = vld [vmem:[#allocation4 + $0x208] sm:$0xff]
        %v564 = vld [vmem:[#allocation4 + $0x210] sm:$0xff]
        %v565 = vld [vmem:[#allocation4 + $0x218] sm:$0xff]
        %v566 = vld [vmem:[#allocation4 + $0x220] sm:$0xff]
        %v567 = vld [vmem:[#allocation4 + $0x228] sm:$0xff]
        %v568 = vld [vmem:[#allocation4 + $0x230] sm:$0xff]
        %v569 = vld [vmem:[#allocation4 + $0x238] sm:$0xff]
        %v570 = vld [vmem:[#allocation4 + $0x240] sm:$0xff]
        %v571 = vld [vmem:[#allocation4 + $0x248] sm:$0xff]
        %v572 = vld [vmem:[#allocation4 + $0x250] sm:$0xff]
        %v573 = vld [vmem:[#allocation4 + $0x258] sm:$0xff]
        %v574 = vld [vmem:[#allocation4 + $0x260] sm:$0xff]
        %v575 = vld [vmem:[#allocation4 + $0x268] sm:$0xff]
        %v576 = vld [vmem:[#allocation4 + $0x270] sm:$0xff]
        %v577 = vld [vmem:[#allocation4 + $0x278] sm:$0xff]
        %v578 = vld [vmem:[#allocation4 + $0x280] sm:$0xff]
        %v579 = vld [vmem:[#allocation4 + $0x288] sm:$0xff]
        %v580 = vld [vmem:[#allocation4 + $0x290] sm:$0xff]
        %v581 = vld [vmem:[#allocation4 + $0x298] sm:$0xff]
        %v582 = vld [vmem:[#allocation4 + $0x2a0] sm:$0xff]
        %v583 = vld [vmem:[#allocation4 + $0x2a8] sm:$0xff]
        %v584 = vld [vmem:[#allocation4 + $0x2b0] sm:$0xff]
        %v585 = vld [vmem:[#allocation4 + $0x2b8] sm:$0xff]
        %v586 = vld [vmem:[#allocation4 + $0x2c0] sm:$0xff]
        %v587 = vld [vmem:[#allocation4 + $0x2c8] sm:$0xff]
        %v588 = vld [vmem:[#allocation4 + $0x2d0] sm:$0xff]
        %v589 = vld [vmem:[#allocation4 + $0x2d8] sm:$0xff]
        %v590 = vld [vmem:[#allocation4 + $0x2e0] sm:$0xff]
        %v591 = vld [vmem:[#allocation4 + $0x2e8] sm:$0xff]
        %v592 = vld [vmem:[#allocation4 + $0x2f0] sm:$0xff]
        %v593 = vld [vmem:[#allocation4 + $0x2f8] sm:$0xff]
        %v594 = vld [vmem:[%s3] sm:$0x3f]
        %v596 = vlaneseq
        %v597 = vshrl.u32 %v596, 7
        %v598 = vsub.s32 0, %v597
        %v599 = vrot.slane %v594, %v598
        %v600 = vlaneseq
        %v601 = vshrl.u32 %v600, 7
        %v602 = vsub.s32 1, %v601
        %v603 = vrot.slane %v594, %v602
        %v604 = vlaneseq
        %v605 = vshrl.u32 %v604, 7
        %v606 = vsub.s32 2, %v605
        %v607 = vrot.slane %v594, %v606
        %v608 = vlaneseq
        %v609 = vshrl.u32 %v608, 7
        %v610 = vsub.s32 3, %v609
        %v611 = vrot.slane %v594, %v610
        %v612 = vlaneseq
        %v613 = vshrl.u32 %v612, 7
        %v614 = vsub.s32 4, %v613
        %v615 = vrot.slane %v594, %v614
        %v616 = vlaneseq
        %v617 = vshrl.u32 %v616, 7
        %v618 = vsub.s32 5, %v617
        %v619 = vrot.slane %v594, %v618
        %v722 = vunpack.c.l.b16 %v498
        %v723 = vunpack.c.h.b16 %v498
        %v724 = vunpack.c.l.b16 %v499
        %v725 = vunpack.c.h.b16 %v499
        %v726 = vunpack.c.l.b16 %v500
        %v727 = vunpack.c.h.b16 %v500
        %v728 = vunpack.c.l.b16 %v501
        %v729 = vunpack.c.h.b16 %v501
        %v730 = vunpack.c.l.b16 %v502
        %v731 = vunpack.c.h.b16 %v502
        %v732 = vunpack.c.l.b16 %v503
        %v733 = vunpack.c.h.b16 %v503
        %v734 = vunpack.c.l.b16 %v504
        %v735 = vunpack.c.h.b16 %v504
        %v736 = vunpack.c.l.b16 %v505
        %v737 = vunpack.c.h.b16 %v505
        %v738 = vunpack.c.l.b16 %v506
        %v739 = vunpack.c.h.b16 %v506
        %v740 = vunpack.c.l.b16 %v507
        %v741 = vunpack.c.h.b16 %v507
        %v742 = vunpack.c.l.b16 %v508
        %v743 = vunpack.c.h.b16 %v508
        %v744 = vunpack.c.l.b16 %v509
        %v745 = vunpack.c.h.b16 %v509
        %v746 = vunpack.c.l.b16 %v510
        %v747 = vunpack.c.h.b16 %v510
        %v748 = vunpack.c.l.b16 %v511
        %v749 = vunpack.c.h.b16 %v511
        %v750 = vunpack.c.l.b16 %v512
        %v751 = vunpack.c.h.b16 %v512
        %v752 = vunpack.c.l.b16 %v513
        %v753 = vunpack.c.h.b16 %v513
        %v754 = vunpack.c.l.b16 %v514
        %v755 = vunpack.c.h.b16 %v514
        %v756 = vunpack.c.l.b16 %v515
        %v757 = vunpack.c.h.b16 %v515
        %v758 = vunpack.c.l.b16 %v516
        %v759 = vunpack.c.h.b16 %v516
        %v760 = vunpack.c.l.b16 %v517
        %v761 = vunpack.c.h.b16 %v517
        %v762 = vunpack.c.l.b16 %v518
        %v763 = vunpack.c.h.b16 %v518
        %v764 = vunpack.c.l.b16 %v519
        %v765 = vunpack.c.h.b16 %v519
        %v766 = vunpack.c.l.b16 %v520
        %v767 = vunpack.c.h.b16 %v520
        %v768 = vunpack.c.l.b16 %v521
        %v769 = vunpack.c.h.b16 %v521
        %v770 = vunpack.c.l.b16 %v522
        %v771 = vunpack.c.h.b16 %v522
        %v772 = vunpack.c.l.b16 %v523
        %v773 = vunpack.c.h.b16 %v523
        %v774 = vunpack.c.l.b16 %v524
        %v775 = vunpack.c.h.b16 %v524
        %v776 = vunpack.c.l.b16 %v525
        %v777 = vunpack.c.h.b16 %v525
        %v778 = vunpack.c.l.b16 %v526
        %v779 = vunpack.c.h.b16 %v526
        %v780 = vunpack.c.l.b16 %v527
        %v781 = vunpack.c.h.b16 %v527
        %v782 = vunpack.c.l.b16 %v528
        %v783 = vunpack.c.h.b16 %v528
        %v784 = vunpack.c.l.b16 %v529
        %v785 = vunpack.c.h.b16 %v529
        %v786 = vunpack.c.l.b16 %v530
        %v787 = vunpack.c.h.b16 %v530
        %v788 = vunpack.c.l.b16 %v531
        %v789 = vunpack.c.h.b16 %v531
        %v790 = vunpack.c.l.b16 %v532
        %v791 = vunpack.c.h.b16 %v532
        %v792 = vunpack.c.l.b16 %v533
        %v793 = vunpack.c.h.b16 %v533
        %v794 = vunpack.c.l.b16 %v534
        %v795 = vunpack.c.h.b16 %v534
        %v796 = vunpack.c.l.b16 %v535
        %v797 = vunpack.c.h.b16 %v535
        %v798 = vunpack.c.l.b16 %v536
        %v799 = vunpack.c.h.b16 %v536
        %v800 = vunpack.c.l.b16 %v537
        %v801 = vunpack.c.h.b16 %v537
        %v802 = vunpack.c.l.b16 %v538
        %v803 = vunpack.c.h.b16 %v538
        %v804 = vunpack.c.l.b16 %v539
        %v805 = vunpack.c.h.b16 %v539
        %v806 = vunpack.c.l.b16 %v540
        %v807 = vunpack.c.h.b16 %v540
        %v808 = vunpack.c.l.b16 %v541
        %v809 = vunpack.c.h.b16 %v541
        %v810 = vunpack.c.l.b16 %v542
        %v811 = vunpack.c.h.b16 %v542
        %v812 = vunpack.c.l.b16 %v543
        %v813 = vunpack.c.h.b16 %v543
        %v814 = vunpack.c.l.b16 %v544
        %v815 = vunpack.c.h.b16 %v544
        %v816 = vunpack.c.l.b16 %v545
        %v817 = vunpack.c.h.b16 %v545
        %v818 = vunpack.c.l.b16 %v546
        %v819 = vunpack.c.h.b16 %v546
        %v820 = vunpack.c.l.b16 %v547
        %v821 = vunpack.c.h.b16 %v547
        %v822 = vunpack.c.l.b16 %v548
        %v823 = vunpack.c.h.b16 %v548
        %v824 = vunpack.c.l.b16 %v549
        %v825 = vunpack.c.h.b16 %v549
        %v826 = vunpack.c.l.b16 %v550
        %v827 = vunpack.c.h.b16 %v550
        %v828 = vunpack.c.l.b16 %v551
        %v829 = vunpack.c.h.b16 %v551
        %v830 = vunpack.c.l.b16 %v552
        %v831 = vunpack.c.h.b16 %v552
        %v832 = vunpack.c.l.b16 %v553
        %v833 = vunpack.c.h.b16 %v553
        %v834 = vunpack.c.l.b16 %v554
        %v835 = vunpack.c.h.b16 %v554
        %v836 = vunpack.c.l.b16 %v555
        %v837 = vunpack.c.h.b16 %v555
        %v838 = vunpack.c.l.b16 %v556
        %v839 = vunpack.c.h.b16 %v556
        %v840 = vunpack.c.l.b16 %v557
        %v841 = vunpack.c.h.b16 %v557
        %v842 = vunpack.c.l.b16 %v558
        %v843 = vunpack.c.h.b16 %v558
        %v844 = vunpack.c.l.b16 %v559
        %v845 = vunpack.c.h.b16 %v559
        %v846 = vunpack.c.l.b16 %v560
        %v847 = vunpack.c.h.b16 %v560
        %v848 = vunpack.c.l.b16 %v561
        %v849 = vunpack.c.h.b16 %v561
        %v850 = vunpack.c.l.b16 %v562
        %v851 = vunpack.c.h.b16 %v562
        %v852 = vunpack.c.l.b16 %v563
        %v853 = vunpack.c.h.b16 %v563
        %v854 = vunpack.c.l.b16 %v564
        %v855 = vunpack.c.h.b16 %v564
        %v856 = vunpack.c.l.b16 %v565
        %v857 = vunpack.c.h.b16 %v565
        %v858 = vunpack.c.l.b16 %v566
        %v859 = vunpack.c.h.b16 %v566
        %v860 = vunpack.c.l.b16 %v567
        %v861 = vunpack.c.h.b16 %v567
        %v862 = vunpack.c.l.b16 %v568
        %v863 = vunpack.c.h.b16 %v568
        %v864 = vunpack.c.l.b16 %v569
        %v865 = vunpack.c.h.b16 %v569
        %v866 = vunpack.c.l.b16 %v570
        %v867 = vunpack.c.h.b16 %v570
        %v868 = vunpack.c.l.b16 %v571
        %v869 = vunpack.c.h.b16 %v571
        %v870 = vunpack.c.l.b16 %v572
        %v871 = vunpack.c.h.b16 %v572
        %v872 = vunpack.c.l.b16 %v573
        %v873 = vunpack.c.h.b16 %v573
        %v874 = vunpack.c.l.b16 %v574
        %v875 = vunpack.c.h.b16 %v574
        %v876 = vunpack.c.l.b16 %v575
        %v877 = vunpack.c.h.b16 %v575
        %v878 = vunpack.c.l.b16 %v576
        %v879 = vunpack.c.h.b16 %v576
        %v880 = vunpack.c.l.b16 %v577
        %v881 = vunpack.c.h.b16 %v577
        %v882 = vunpack.c.l.b16 %v578
        %v883 = vunpack.c.h.b16 %v578
        %v884 = vunpack.c.l.b16 %v579
        %v885 = vunpack.c.h.b16 %v579
        %v886 = vunpack.c.l.b16 %v580
        %v887 = vunpack.c.h.b16 %v580
        %v888 = vunpack.c.l.b16 %v581
        %v889 = vunpack.c.h.b16 %v581
        %v890 = vunpack.c.l.b16 %v582
        %v891 = vunpack.c.h.b16 %v582
        %v892 = vunpack.c.l.b16 %v583
        %v893 = vunpack.c.h.b16 %v583
        %v894 = vunpack.c.l.b16 %v584
        %v895 = vunpack.c.h.b16 %v584
        %v896 = vunpack.c.l.b16 %v585
        %v897 = vunpack.c.h.b16 %v585
        %v898 = vunpack.c.l.b16 %v586
        %v899 = vunpack.c.h.b16 %v586
        %v900 = vunpack.c.l.b16 %v587
        %v901 = vunpack.c.h.b16 %v587
        %v902 = vunpack.c.l.b16 %v588
        %v903 = vunpack.c.h.b16 %v588
        %v904 = vunpack.c.l.b16 %v589
        %v905 = vunpack.c.h.b16 %v589
        %v906 = vunpack.c.l.b16 %v590
        %v907 = vunpack.c.h.b16 %v590
        %v908 = vunpack.c.l.b16 %v591
        %v909 = vunpack.c.h.b16 %v591
        %v910 = vunpack.c.l.b16 %v592
        %v911 = vunpack.c.h.b16 %v592
        %v912 = vunpack.c.l.b16 %v593
        %v913 = vunpack.c.h.b16 %v593
        %v914 = vpack.c.b16 %v728, %v722
        %v915 = vpack.c.b16 %v729, %v723
        %v916 = vpack.c.b16 %v730, %v724
        %v917 = vpack.c.b16 %v731, %v725
        %v918 = vpack.c.b16 %v732, %v726
        %v919 = vpack.c.b16 %v733, %v727
        %v920 = vpack.c.b16 %v740, %v734
        %v921 = vpack.c.b16 %v741, %v735
        %v922 = vpack.c.b16 %v742, %v736
        %v923 = vpack.c.b16 %v743, %v737
        %v924 = vpack.c.b16 %v744, %v738
        %v925 = vpack.c.b16 %v745, %v739
        %v926 = vpack.c.b16 %v752, %v746
        %v927 = vpack.c.b16 %v753, %v747
        %v928 = vpack.c.b16 %v754, %v748
        %v929 = vpack.c.b16 %v755, %v749
        %v930 = vpack.c.b16 %v756, %v750
        %v931 = vpack.c.b16 %v757, %v751
        %v932 = vpack.c.b16 %v764, %v758
        %v933 = vpack.c.b16 %v765, %v759
        %v934 = vpack.c.b16 %v766, %v760
        %v935 = vpack.c.b16 %v767, %v761
        %v936 = vpack.c.b16 %v768, %v762
        %v937 = vpack.c.b16 %v769, %v763
        %v938 = vpack.c.b16 %v776, %v770
        %v939 = vpack.c.b16 %v777, %v771
        %v940 = vpack.c.b16 %v778, %v772
        %v941 = vpack.c.b16 %v779, %v773
        %v942 = vpack.c.b16 %v780, %v774
        %v943 = vpack.c.b16 %v781, %v775
        %v944 = vpack.c.b16 %v788, %v782
        %v945 = vpack.c.b16 %v789, %v783
        %v946 = vpack.c.b16 %v790, %v784
        %v947 = vpack.c.b16 %v791, %v785
        %v948 = vpack.c.b16 %v792, %v786
        %v949 = vpack.c.b16 %v793, %v787
        %v950 = vpack.c.b16 %v800, %v794
        %v951 = vpack.c.b16 %v801, %v795
        %v952 = vpack.c.b16 %v802, %v796
        %v953 = vpack.c.b16 %v803, %v797
        %v954 = vpack.c.b16 %v804, %v798
        %v955 = vpack.c.b16 %v805, %v799
        %v956 = vpack.c.b16 %v812, %v806
        %v957 = vpack.c.b16 %v813, %v807
        %v958 = vpack.c.b16 %v814, %v808
        %v959 = vpack.c.b16 %v815, %v809
        %v960 = vpack.c.b16 %v816, %v810
        %v961 = vpack.c.b16 %v817, %v811
        %v962 = vpack.c.b16 %v824, %v818
        %v963 = vpack.c.b16 %v825, %v819
        %v964 = vpack.c.b16 %v826, %v820
        %v965 = vpack.c.b16 %v827, %v821
        %v966 = vpack.c.b16 %v828, %v822
        %v967 = vpack.c.b16 %v829, %v823
        %v968 = vpack.c.b16 %v836, %v830
        %v969 = vpack.c.b16 %v837, %v831
        %v970 = vpack.c.b16 %v838, %v832
        %v971 = vpack.c.b16 %v839, %v833
        %v972 = vpack.c.b16 %v840, %v834
        %v973 = vpack.c.b16 %v841, %v835
        %v974 = vpack.c.b16 %v848, %v842
        %v975 = vpack.c.b16 %v849, %v843
        %v976 = vpack.c.b16 %v850, %v844
        %v977 = vpack.c.b16 %v851, %v845
        %v978 = vpack.c.b16 %v852, %v846
        %v979 = vpack.c.b16 %v853, %v847
        %v980 = vpack.c.b16 %v860, %v854
        %v981 = vpack.c.b16 %v861, %v855
        %v982 = vpack.c.b16 %v862, %v856
        %v983 = vpack.c.b16 %v863, %v857
        %v984 = vpack.c.b16 %v864, %v858
        %v985 = vpack.c.b16 %v865, %v859
        %v986 = vpack.c.b16 %v872, %v866
        %v987 = vpack.c.b16 %v873, %v867
        %v988 = vpack.c.b16 %v874, %v868
        %v989 = vpack.c.b16 %v875, %v869
        %v990 = vpack.c.b16 %v876, %v870
        %v991 = vpack.c.b16 %v877, %v871
        %v992 = vpack.c.b16 %v884, %v878
        %v993 = vpack.c.b16 %v885, %v879
        %v994 = vpack.c.b16 %v886, %v880
        %v995 = vpack.c.b16 %v887, %v881
        %v996 = vpack.c.b16 %v888, %v882
        %v997 = vpack.c.b16 %v889, %v883
        %v998 = vpack.c.b16 %v896, %v890
        %v999 = vpack.c.b16 %v897, %v891
        %v1000 = vpack.c.b16 %v898, %v892
        %v1001 = vpack.c.b16 %v899, %v893
        %v1002 = vpack.c.b16 %v900, %v894
        %v1003 = vpack.c.b16 %v901, %v895
        %v1004 = vpack.c.b16 %v908, %v902
        %v1005 = vpack.c.b16 %v909, %v903
        %v1006 = vpack.c.b16 %v910, %v904
        %v1007 = vpack.c.b16 %v911, %v905
        %v1008 = vpack.c.b16 %v912, %v906
        %v1009 = vpack.c.b16 %v913, %v907
        %1106 = vmatprep.subr.bf16.mxu0 %v957
        %1107 = vmatpush1.bf16.msra.mxu0 %v956
        %1108 = vmatprep.subr.bf16.mxu0 %v951
        %1109 = vmatpush1.bf16.msra.mxu0 %v950
        %1110 = vmatprep.subr.bf16.mxu0 %v945
        %1111 = vmatpush1.bf16.msra.mxu0 %v944
        %1112 = vmatprep.subr.bf16.mxu0 %v939
        %1113 = vmatpush1.bf16.msra.mxu0 %v938
        %1114 = vmatprep.subr.bf16.mxu0 %v933
        %1115 = vmatpush1.bf16.msra.mxu0 %v932
        %1116 = vmatprep.subr.bf16.mxu0 %v927
        %1117 = vmatpush1.bf16.msra.mxu0 %v926
        %1118 = vmatprep.subr.bf16.mxu0 %v921
        %1119 = vmatpush1.bf16.msra.mxu0 %v920
        %1120 = vmatprep.subr.bf16.mxu0 %v915
        %1121 = vmatpush1.bf16.msra.mxu0 %v914
        %1122 = vmatprep.subr.bf16.mxu0 %v1005
        %1123 = vmatpush2.bf16.msra.mxu0 %v1004
        %1124 = vmatprep.subr.bf16.mxu0 %v999
        %1125 = vmatpush2.bf16.msra.mxu0 %v998
        %1126 = vmatprep.subr.bf16.mxu0 %v993
        %1127 = vmatpush2.bf16.msra.mxu0 %v992
        %1128 = vmatprep.subr.bf16.mxu0 %v987
        %1129 = vmatpush2.bf16.msra.mxu0 %v986
        %1130 = vmatprep.subr.bf16.mxu0 %v981
        %1131 = vmatpush2.bf16.msra.mxu0 %v980
        %1132 = vmatprep.subr.bf16.mxu0 %v975
        %1133 = vmatpush2.bf16.msra.mxu0 %v974
        %1134 = vmatprep.subr.bf16.mxu0 %v969
        %1135 = vmatpush2.bf16.msra.mxu0 %v968
        %1136 = vmatprep.subr.bf16.mxu0 %v963
        %1137 = vmatpush2.bf16.msra.mxu0 %v962
        %1138 = vmatprep.mubr.bf16.mxu0 %v497
        %1139 = vmatmul.mubr.bf16.gmra.mxu0 %v496
        %v1140 = vpop.f32.mrf.mxu0
        %v1141 = vadd.f32 %v599, %v1140
        %v1142 = vpop.f32.mrf.mxu0
        %v1143 = vadd.f32 %v603, %v1142
        %v1144 = vpop.f32.mrf.mxu0
        %v1145 = vpop.f32.mrf.mxu0
        %1146 = vdwg.mxu0
        %1147 = vmatprep.subr.bf16.mxu0 %v959
        %1148 = vmatpush1.bf16.msra.mxu0 %v958
        %1149 = vmatprep.subr.bf16.mxu0 %v953
        %1150 = vmatpush1.bf16.msra.mxu0 %v952
        %1151 = vmatprep.subr.bf16.mxu0 %v947
        %1152 = vmatpush1.bf16.msra.mxu0 %v946
        %1153 = vmatprep.subr.bf16.mxu0 %v941
        %1154 = vmatpush1.bf16.msra.mxu0 %v940
        %1155 = vmatprep.subr.bf16.mxu0 %v935
        %1156 = vmatpush1.bf16.msra.mxu0 %v934
        %1157 = vmatprep.subr.bf16.mxu0 %v929
        %1158 = vmatpush1.bf16.msra.mxu0 %v928
        %1159 = vmatprep.subr.bf16.mxu0 %v923
        %1160 = vmatpush1.bf16.msra.mxu0 %v922
        %1161 = vmatprep.subr.bf16.mxu0 %v917
        %1162 = vmatpush1.bf16.msra.mxu0 %v916
        %1163 = vmatprep.subr.bf16.mxu0 %v1007
        %1164 = vmatpush2.bf16.msra.mxu0 %v1006
        %1165 = vmatprep.subr.bf16.mxu0 %v1001
        %1166 = vmatpush2.bf16.msra.mxu0 %v1000
        %1167 = vmatprep.subr.bf16.mxu0 %v995
        %1168 = vmatpush2.bf16.msra.mxu0 %v994
        %1169 = vmatprep.subr.bf16.mxu0 %v989
        %1170 = vmatpush2.bf16.msra.mxu0 %v988
        %1171 = vmatprep.subr.bf16.mxu0 %v983
        %1172 = vmatpush2.bf16.msra.mxu0 %v982
        %1173 = vmatprep.subr.bf16.mxu0 %v977
        %1174 = vmatpush2.bf16.msra.mxu0 %v976
        %1175 = vmatprep.subr.bf16.mxu0 %v971
        %1176 = vmatpush2.bf16.msra.mxu0 %v970
        %1177 = vmatprep.subr.bf16.mxu0 %v965
        %1178 = vmatpush2.bf16.msra.mxu0 %v964
        %1179 = vmatprep.mubr.bf16.mxu0 %v497
        %1180 = vmatmul.mubr.bf16.gmra.mxu0 %v496
        %v1181 = vpop.f32.mrf.mxu0
        %v1182 = vadd.f32 %v607, %v1181
        %v1183 = vpop.f32.mrf.mxu0
        %v1184 = vadd.f32 %v611, %v1183
        %v1185 = vpop.f32.mrf.mxu0
        %v1186 = vpop.f32.mrf.mxu0
        %1187 = vdwg.mxu0
        %1188 = vmatprep.subr.bf16.mxu0 %v961
        %1189 = vmatpush1.bf16.msra.mxu0 %v960
        %1190 = vmatprep.subr.bf16.mxu0 %v955
        %1191 = vmatpush1.bf16.msra.mxu0 %v954
        %1192 = vmatprep.subr.bf16.mxu0 %v949
        %1193 = vmatpush1.bf16.msra.mxu0 %v948
        %1194 = vmatprep.subr.bf16.mxu0 %v943
        %1195 = vmatpush1.bf16.msra.mxu0 %v942
        %1196 = vmatprep.subr.bf16.mxu0 %v937
        %1197 = vmatpush1.bf16.msra.mxu0 %v936
        %1198 = vmatprep.subr.bf16.mxu0 %v931
        %1199 = vmatpush1.bf16.msra.mxu0 %v930
        %1200 = vmatprep.subr.bf16.mxu0 %v925
        %1201 = vmatpush1.bf16.msra.mxu0 %v924
        %1202 = vmatprep.subr.bf16.mxu0 %v919
        %1203 = vmatpush1.bf16.msra.mxu0 %v918
        %1204 = vmatprep.subr.bf16.mxu0 %v1009
        %1205 = vmatpush2.bf16.msra.mxu0 %v1008
        %1206 = vmatprep.subr.bf16.mxu0 %v1003
        %1207 = vmatpush2.bf16.msra.mxu0 %v1002
        %1208 = vmatprep.subr.bf16.mxu0 %v997
        %1209 = vmatpush2.bf16.msra.mxu0 %v996
        %1210 = vmatprep.subr.bf16.mxu0 %v991
        %1211 = vmatpush2.bf16.msra.mxu0 %v990
        %1212 = vmatprep.subr.bf16.mxu0 %v985
        %1213 = vmatpush2.bf16.msra.mxu0 %v984
        %1214 = vmatprep.subr.bf16.mxu0 %v979
        %1215 = vmatpush2.bf16.msra.mxu0 %v978
        %1216 = vmatprep.subr.bf16.mxu0 %v973
        %1217 = vmatpush2.bf16.msra.mxu0 %v972
        %1218 = vmatprep.subr.bf16.mxu0 %v967
        %1219 = vmatpush2.bf16.msra.mxu0 %v966
        %1220 = vmatprep.mubr.bf16.mxu0 %v497
        %1221 = vmatmul.mubr.bf16.gmra.mxu0 %v496
        %v1222 = vpop.f32.mrf.mxu0
        %v1223 = vadd.f32 %v615, %v1222
        %v1224 = vpop.f32.mrf.mxu0
        %v1225 = vadd.f32 %v619, %v1224
        %v1226 = vpop.f32.mrf.mxu0
        %v1227 = vpop.f32.mrf.mxu0
        %1228 = vdwg.mxu0
        %v1229 = vmul.f32 %v1141, 0.088388346
        %v1230 = vmul.f32 %v1143, 0.088388346
        %v1231 = vlaneseq
        %v1232 = vand.u32 %v1231, 127
        %v1233 = vstv %s493
        %vm1234 = vcmp.ge.s32.totalorder %v1232, %v1233
        %v1235 = vsel %vm1234, -1e+30, 0.0
        %v1236 = vpack.c.bf16 %v1229, %v1229
        %v1237 = vpack.c.bf16 %v1182, %v1182
        %1238 = vmatprep.subr.bf16.mxu0 0
        %1239 = vmatpush1.bf16.xpose.msra.mxu0 0
        %1240 = vmatprep.subr.bf16.mxu0 0
        %1241 = vmatpush1.bf16.xpose.msra.mxu0 0
        %1242 = vmatprep.subr.bf16.mxu0 0
        %1243 = vmatpush1.bf16.xpose.msra.mxu0 0
        %1244 = vmatprep.subr.bf16.mxu0 0
        %1245 = vmatpush1.bf16.xpose.msra.mxu0 0
        %1246 = vmatprep.subr.bf16.mxu0 0
        %1247 = vmatpush1.bf16.xpose.msra.mxu0 0
        %1248 = vmatprep.subr.bf16.mxu0 0
        %1249 = vmatpush1.bf16.xpose.msra.mxu0 0
        %1250 = vmatprep.subr.bf16.mxu0 0
        %1251 = vmatpush1.bf16.xpose.msra.mxu0 0
        %1252 = vmatprep.subr.bf16.mxu0 0
        %1253 = vmatpush1.bf16.xpose.msra.mxu0 %v1237
        %1254 = vmatprep.subr.bf16.mxu0 0
        %1255 = vmatpush2.bf16.xpose.msra.mxu0 0
        %1256 = vmatprep.subr.bf16.mxu0 0
        %1257 = vmatpush2.bf16.xpose.msra.mxu0 0
        %1258 = vmatprep.subr.bf16.mxu0 0
        %1259 = vmatpush2.bf16.xpose.msra.mxu0 0
        %1260 = vmatprep.subr.bf16.mxu0 0
        %1261 = vmatpush2.bf16.xpose.msra.mxu0 0
        %1262 = vmatprep.subr.bf16.mxu0 0
        %1263 = vmatpush2.bf16.xpose.msra.mxu0 0
        %1264 = vmatprep.subr.bf16.mxu0 0
        %1265 = vmatpush2.bf16.xpose.msra.mxu0 0
        %1266 = vmatprep.subr.bf16.mxu0 0
        %1267 = vmatpush2.bf16.xpose.msra.mxu0 0
        %1268 = vmatprep.subr.bf16.mxu0 0
        %1269 = vmatpush2.bf16.xpose.msra.mxu0 0
        %1270 = vmatprep.mubr.bf16.mxu0 0
        %1271 = vmatmul.mubr.bf16.gmra.mxu0 %v1236
        %v1272 = vpop.f32.mrf.mxu0
        %v1273 = vadd.f32 %v1235, %v1272
        %v1274 = vpop.f32.mrf.mxu0
        %v1275 = vpop.f32.mrf.mxu0
        %v1276 = vpop.f32.mrf.mxu0
        %1277 = vdwg.mxu0
        %vm1278 = vcmask 64512
        %v1279 = vsel %vm1278, %v1273, -inf
        %1280 = vmax.xlane.f32.xlu0 %v1279
        %v1281 = vpop.xlane.xlu0 %1280
        %v1282 = vsub.f32 %v1273, %v1281
        %v1283 = vmul.f32 %v1282, 1.442695
        %v1284 = vpow.pop %v1283
        %v1285 = vsel %vm1278, %v1284, 0.0
        %1286 = vadd.xlane.f32.xlu0 %v1285
        %v1287 = vpop.xlane.xlu0 %1286
        %v1288 = vrcp.pop %v1287
        %v1289 = vmul.f32 %v1284, %v1288
        %v1290 = vpack.c.bf16 %v1289, %v1289
        %v1291 = vpack.c.bf16 %v1223, %v1223
        %v1293 = vsel %vm1278, %v1290, 0
        %vm1295 = vcmask 1043456
        %v1297 = vsel %vm1295, %v1291, 0
        %1299 = vmatprep.subr.bf16.mxu0 0
        %1300 = vmatpush1.bf16.msra.mxu0 0
        %1301 = vmatprep.subr.bf16.mxu0 0
        %1302 = vmatpush1.bf16.msra.mxu0 0
        %1303 = vmatprep.subr.bf16.mxu0 0
        %1304 = vmatpush1.bf16.msra.mxu0 0
        %1305 = vmatprep.subr.bf16.mxu0 0
        %1306 = vmatpush1.bf16.msra.mxu0 0
        %1307 = vmatprep.subr.bf16.mxu0 0
        %1308 = vmatpush1.bf16.msra.mxu0 0
        %1309 = vmatprep.subr.bf16.mxu0 0
        %1310 = vmatpush1.bf16.msra.mxu0 0
        %1311 = vmatprep.subr.bf16.mxu0 0
        %1312 = vmatpush1.bf16.msra.mxu0 0
        %1313 = vmatprep.subr.bf16.mxu0 0
        %1314 = vmatpush1.bf16.msra.mxu0 %v1297
        %1315 = vmatprep.subr.bf16.mxu0 0
        %1316 = vmatpush2.bf16.msra.mxu0 0
        %1317 = vmatprep.subr.bf16.mxu0 0
        %1318 = vmatpush2.bf16.msra.mxu0 0
        %1319 = vmatprep.subr.bf16.mxu0 0
        %1320 = vmatpush2.bf16.msra.mxu0 0
        %1321 = vmatprep.subr.bf16.mxu0 0
        %1322 = vmatpush2.bf16.msra.mxu0 0
        %1323 = vmatprep.subr.bf16.mxu0 0
        %1324 = vmatpush2.bf16.msra.mxu0 0
        %1325 = vmatprep.subr.bf16.mxu0 0
        %1326 = vmatpush2.bf16.msra.mxu0 0
        %1327 = vmatprep.subr.bf16.mxu0 0
        %1328 = vmatpush2.bf16.msra.mxu0 0
        %1329 = vmatprep.subr.bf16.mxu0 0
        %1330 = vmatpush2.bf16.msra.mxu0 0
        %1331 = vmatprep.mubr.bf16.mxu0 0
        %1332 = vmatmul.mubr.bf16.gmra.mxu0 %v1293
        %v1333 = vpop.f32.mrf.mxu0
        %v1334 = vadd.f32 0.0, %v1333
        %v1335 = vpop.f32.mrf.mxu0
        %v1336 = vpop.f32.mrf.mxu0
        %v1337 = vpop.f32.mrf.mxu0
        %1338 = vdwg.mxu0
        %v1339 = vpack.c.bf16 %v1230, %v1230
        %v1340 = vpack.c.bf16 %v1184, %v1184
        %1341 = vmatprep.subr.bf16.mxu0 0
        %1342 = vmatpush1.bf16.xpose.msra.mxu0 0
        %1343 = vmatprep.subr.bf16.mxu0 0
        %1344 = vmatpush1.bf16.xpose.msra.mxu0 0
        %1345 = vmatprep.subr.bf16.mxu0 0
        %1346 = vmatpush1.bf16.xpose.msra.mxu0 0
        %1347 = vmatprep.subr.bf16.mxu0 0
        %1348 = vmatpush1.bf16.xpose.msra.mxu0 0
        %1349 = vmatprep.subr.bf16.mxu0 0
        %1350 = vmatpush1.bf16.xpose.msra.mxu0 0
        %1351 = vmatprep.subr.bf16.mxu0 0
        %1352 = vmatpush1.bf16.xpose.msra.mxu0 0
        %1353 = vmatprep.subr.bf16.mxu0 0
        %1354 = vmatpush1.bf16.xpose.msra.mxu0 0
        %1355 = vmatprep.subr.bf16.mxu0 0
        %1356 = vmatpush1.bf16.xpose.msra.mxu0 %v1340
        %1357 = vmatprep.subr.bf16.mxu0 0
        %1358 = vmatpush2.bf16.xpose.msra.mxu0 0
        %1359 = vmatprep.subr.bf16.mxu0 0
        %1360 = vmatpush2.bf16.xpose.msra.mxu0 0
        %1361 = vmatprep.subr.bf16.mxu0 0
        %1362 = vmatpush2.bf16.xpose.msra.mxu0 0
        %1363 = vmatprep.subr.bf16.mxu0 0
        %1364 = vmatpush2.bf16.xpose.msra.mxu0 0
        %1365 = vmatprep.subr.bf16.mxu0 0
        %1366 = vmatpush2.bf16.xpose.msra.mxu0 0
        %1367 = vmatprep.subr.bf16.mxu0 0
        %1368 = vmatpush2.bf16.xpose.msra.mxu0 0
        %1369 = vmatprep.subr.bf16.mxu0 0
        %1370 = vmatpush2.bf16.xpose.msra.mxu0 0
        %1371 = vmatprep.subr.bf16.mxu0 0
        %1372 = vmatpush2.bf16.xpose.msra.mxu0 0
        %1373 = vmatprep.mubr.bf16.mxu0 0
        %1374 = vmatmul.mubr.bf16.gmra.mxu0 %v1339
        %v1375 = vpop.f32.mrf.mxu0
        %v1376 = vadd.f32 %v1235, %v1375
        %v1377 = vpop.f32.mrf.mxu0
        %v1378 = vpop.f32.mrf.mxu0
        %v1379 = vpop.f32.mrf.mxu0
        %1380 = vdwg.mxu0
        %v1381 = vsel %vm1278, %v1376, -inf
        %1382 = vmax.xlane.f32.xlu0 %v1381
        %v1383 = vpop.xlane.xlu0 %1382
        %v1384 = vsub.f32 %v1376, %v1383
        %v1385 = vmul.f32 %v1384, 1.442695
        %v1386 = vpow.pop %v1385
        %v1387 = vsel %vm1278, %v1386, 0.0
        %1388 = vadd.xlane.f32.xlu0 %v1387
        %v1389 = vpop.xlane.xlu0 %1388
        %v1390 = vrcp.pop %v1389
        %v1391 = vmul.f32 %v1386, %v1390
        %v1392 = vpack.c.bf16 %v1391, %v1391
        %v1393 = vpack.c.bf16 %v1225, %v1225
        %v1395 = vsel %vm1278, %v1392, 0
        %v1398 = vsel %vm1295, %v1393, 0
        %1400 = vmatprep.subr.bf16.mxu0 0
        %1401 = vmatpush1.bf16.msra.mxu0 0
        %1402 = vmatprep.subr.bf16.mxu0 0
        %1403 = vmatpush1.bf16.msra.mxu0 0
        %1404 = vmatprep.subr.bf16.mxu0 0
        %1405 = vmatpush1.bf16.msra.mxu0 0
        %1406 = vmatprep.subr.bf16.mxu0 0
        %1407 = vmatpush1.bf16.msra.mxu0 0
        %1408 = vmatprep.subr.bf16.mxu0 0
        %1409 = vmatpush1.bf16.msra.mxu0 0
        %1410 = vmatprep.subr.bf16.mxu0 0
        %1411 = vmatpush1.bf16.msra.mxu0 0
        %1412 = vmatprep.subr.bf16.mxu0 0
        %1413 = vmatpush1.bf16.msra.mxu0 0
        %1414 = vmatprep.subr.bf16.mxu0 0
        %1415 = vmatpush1.bf16.msra.mxu0 %v1398
        %1416 = vmatprep.subr.bf16.mxu0 0
        %1417 = vmatpush2.bf16.msra.mxu0 0
        %1418 = vmatprep.subr.bf16.mxu0 0
        %1419 = vmatpush2.bf16.msra.mxu0 0
        %1420 = vmatprep.subr.bf16.mxu0 0
        %1421 = vmatpush2.bf16.msra.mxu0 0
        %1422 = vmatprep.subr.bf16.mxu0 0
        %1423 = vmatpush2.bf16.msra.mxu0 0
        %1424 = vmatprep.subr.bf16.mxu0 0
        %1425 = vmatpush2.bf16.msra.mxu0 0
        %1426 = vmatprep.subr.bf16.mxu0 0
        %1427 = vmatpush2.bf16.msra.mxu0 0
        %1428 = vmatprep.subr.bf16.mxu0 0
        %1429 = vmatpush2.bf16.msra.mxu0 0
        %1430 = vmatprep.subr.bf16.mxu0 0
        %1431 = vmatpush2.bf16.msra.mxu0 0
        %1432 = vmatprep.mubr.bf16.mxu0 0
        %1433 = vmatmul.mubr.bf16.gmra.mxu0 %v1395
        %v1434 = vpop.f32.mrf.mxu0
        %v1435 = vadd.f32 0.0, %v1434
        %v1436 = vpop.f32.mrf.mxu0
        %v1437 = vpop.f32.mrf.mxu0
        %v1438 = vpop.f32.mrf.mxu0
        %1439 = vdwg.mxu0
        %v1440 = vpack.c.bf16 %v1334, %v1334
        %v1441 = vpack.c.bf16 %v1435, %v1435
        %v1442 = vld [vmem:[%s4] sm:$0xff]
        %v1443 = vld [vmem:[%s4 + $0x8] sm:$0xff]
        %v1444 = vld [vmem:[%s4 + $0x10] sm:$0xff]
        %v1445 = vld [vmem:[%s4 + $0x18] sm:$0xff]
        %v1446 = vld [vmem:[%s4 + $0x20] sm:$0xff]
        %v1447 = vld [vmem:[%s4 + $0x28] sm:$0xff]
        %v1448 = vld [vmem:[%s4 + $0x30] sm:$0xff]
        %v1449 = vld [vmem:[%s4 + $0x38] sm:$0xff]
        %v1450 = vld [vmem:[%s4 + $0x40] sm:$0xff]
        %v1451 = vld [vmem:[%s4 + $0x48] sm:$0xff]
        %v1452 = vld [vmem:[%s4 + $0x50] sm:$0xff]
        %v1453 = vld [vmem:[%s4 + $0x58] sm:$0xff]
        %v1454 = vld [vmem:[%s4 + $0x60] sm:$0xff]
        %v1455 = vld [vmem:[%s4 + $0x68] sm:$0xff]
        %v1456 = vld [vmem:[%s4 + $0x70] sm:$0xff]
        %v1457 = vld [vmem:[%s4 + $0x78] sm:$0xff]
        %v1458 = vld [vmem:[%s4 + $0x80] sm:$0xff]
        %v1459 = vld [vmem:[%s4 + $0x88] sm:$0xff]
        %v1460 = vld [vmem:[%s4 + $0x90] sm:$0xff]
        %v1461 = vld [vmem:[%s4 + $0x98] sm:$0xff]
        %v1462 = vld [vmem:[%s4 + $0xa0] sm:$0xff]
        %v1463 = vld [vmem:[%s4 + $0xa8] sm:$0xff]
        %v1464 = vld [vmem:[%s4 + $0xb0] sm:$0xff]
        %v1465 = vld [vmem:[%s4 + $0xb8] sm:$0xff]
        %v1466 = vld [vmem:[%s4 + $0xc0] sm:$0xff]
        %v1467 = vld [vmem:[%s4 + $0xc8] sm:$0xff]
        %v1468 = vld [vmem:[%s4 + $0xd0] sm:$0xff]
        %v1469 = vld [vmem:[%s4 + $0xd8] sm:$0xff]
        %v1470 = vld [vmem:[%s4 + $0xe0] sm:$0xff]
        %v1471 = vld [vmem:[%s4 + $0xe8] sm:$0xff]
        %v1472 = vld [vmem:[%s4 + $0xf0] sm:$0xff]
        %v1473 = vld [vmem:[%s4 + $0xf8] sm:$0xff]
        %v1474 = vld [vmem:[%s5] sm:$0x3]
        %v1476 = vlaneseq
        %v1477 = vshrl.u32 %v1476, 7
        %v1478 = vsub.s32 0, %v1477
        %v1479 = vrot.slane %v1474, %v1478
        %v1480 = vlaneseq
        %v1481 = vshrl.u32 %v1480, 7
        %v1482 = vsub.s32 1, %v1481
        %v1483 = vrot.slane %v1474, %v1482
        %v1518 = vunpack.c.l.b16 %v1442
        %v1519 = vunpack.c.h.b16 %v1442
        %v1520 = vunpack.c.l.b16 %v1443
        %v1521 = vunpack.c.h.b16 %v1443
        %v1522 = vunpack.c.l.b16 %v1444
        %v1523 = vunpack.c.h.b16 %v1444
        %v1524 = vunpack.c.l.b16 %v1445
        %v1525 = vunpack.c.h.b16 %v1445
        %v1526 = vunpack.c.l.b16 %v1446
        %v1527 = vunpack.c.h.b16 %v1446
        %v1528 = vunpack.c.l.b16 %v1447
        %v1529 = vunpack.c.h.b16 %v1447
        %v1530 = vunpack.c.l.b16 %v1448
        %v1531 = vunpack.c.h.b16 %v1448
        %v1532 = vunpack.c.l.b16 %v1449
        %v1533 = vunpack.c.h.b16 %v1449
        %v1534 = vunpack.c.l.b16 %v1450
        %v1535 = vunpack.c.h.b16 %v1450
        %v1536 = vunpack.c.l.b16 %v1451
        %v1537 = vunpack.c.h.b16 %v1451
        %v1538 = vunpack.c.l.b16 %v1452
        %v1539 = vunpack.c.h.b16 %v1452
        %v1540 = vunpack.c.l.b16 %v1453
        %v1541 = vunpack.c.h.b16 %v1453
        %v1542 = vunpack.c.l.b16 %v1454
        %v1543 = vunpack.c.h.b16 %v1454
        %v1544 = vunpack.c.l.b16 %v1455
        %v1545 = vunpack.c.h.b16 %v1455
        %v1546 = vunpack.c.l.b16 %v1456
        %v1547 = vunpack.c.h.b16 %v1456
        %v1548 = vunpack.c.l.b16 %v1457
        %v1549 = vunpack.c.h.b16 %v1457
        %v1550 = vunpack.c.l.b16 %v1458
        %v1551 = vunpack.c.h.b16 %v1458
        %v1552 = vunpack.c.l.b16 %v1459
        %v1553 = vunpack.c.h.b16 %v1459
        %v1554 = vunpack.c.l.b16 %v1460
        %v1555 = vunpack.c.h.b16 %v1460
        %v1556 = vunpack.c.l.b16 %v1461
        %v1557 = vunpack.c.h.b16 %v1461
        %v1558 = vunpack.c.l.b16 %v1462
        %v1559 = vunpack.c.h.b16 %v1462
        %v1560 = vunpack.c.l.b16 %v1463
        %v1561 = vunpack.c.h.b16 %v1463
        %v1562 = vunpack.c.l.b16 %v1464
        %v1563 = vunpack.c.h.b16 %v1464
        %v1564 = vunpack.c.l.b16 %v1465
        %v1565 = vunpack.c.h.b16 %v1465
        %v1566 = vunpack.c.l.b16 %v1466
        %v1567 = vunpack.c.h.b16 %v1466
        %v1568 = vunpack.c.l.b16 %v1467
        %v1569 = vunpack.c.h.b16 %v1467
        %v1570 = vunpack.c.l.b16 %v1468
        %v1571 = vunpack.c.h.b16 %v1468
        %v1572 = vunpack.c.l.b16 %v1469
        %v1573 = vunpack.c.h.b16 %v1469
        %v1574 = vunpack.c.l.b16 %v1470
        %v1575 = vunpack.c.h.b16 %v1470
        %v1576 = vunpack.c.l.b16 %v1471
        %v1577 = vunpack.c.h.b16 %v1471
        %v1578 = vunpack.c.l.b16 %v1472
        %v1579 = vunpack.c.h.b16 %v1472
        %v1580 = vunpack.c.l.b16 %v1473
        %v1581 = vunpack.c.h.b16 %v1473
        %v1582 = vpack.c.b16 %v1520, %v1518
        %v1583 = vpack.c.b16 %v1521, %v1519
        %v1584 = vpack.c.b16 %v1524, %v1522
        %v1585 = vpack.c.b16 %v1525, %v1523
        %v1586 = vpack.c.b16 %v1528, %v1526
        %v1587 = vpack.c.b16 %v1529, %v1527
        %v1588 = vpack.c.b16 %v1532, %v1530
        %v1589 = vpack.c.b16 %v1533, %v1531
        %v1590 = vpack.c.b16 %v1536, %v1534
        %v1591 = vpack.c.b16 %v1537, %v1535
        %v1592 = vpack.c.b16 %v1540, %v1538
        %v1593 = vpack.c.b16 %v1541, %v1539
        %v1594 = vpack.c.b16 %v1544, %v1542
        %v1595 = vpack.c.b16 %v1545, %v1543
        %v1596 = vpack.c.b16 %v1548, %v1546
        %v1597 = vpack.c.b16 %v1549, %v1547
        %v1598 = vpack.c.b16 %v1552, %v1550
        %v1599 = vpack.c.b16 %v1553, %v1551
        %v1600 = vpack.c.b16 %v1556, %v1554
        %v1601 = vpack.c.b16 %v1557, %v1555
        %v1602 = vpack.c.b16 %v1560, %v1558
        %v1603 = vpack.c.b16 %v1561, %v1559
        %v1604 = vpack.c.b16 %v1564, %v1562
        %v1605 = vpack.c.b16 %v1565, %v1563
        %v1606 = vpack.c.b16 %v1568, %v1566
        %v1607 = vpack.c.b16 %v1569, %v1567
        %v1608 = vpack.c.b16 %v1572, %v1570
        %v1609 = vpack.c.b16 %v1573, %v1571
        %v1610 = vpack.c.b16 %v1576, %v1574
        %v1611 = vpack.c.b16 %v1577, %v1575
        %v1612 = vpack.c.b16 %v1580, %v1578
        %v1613 = vpack.c.b16 %v1581, %v1579
        %1646 = vmatprep.subr.bf16.mxu0 %v1597
        %1647 = vmatpush1.bf16.msra.mxu0 %v1596
        %1648 = vmatprep.subr.bf16.mxu0 %v1595
        %1649 = vmatpush1.bf16.msra.mxu0 %v1594
        %1650 = vmatprep.subr.bf16.mxu0 %v1593
        %1651 = vmatpush1.bf16.msra.mxu0 %v1592
        %1652 = vmatprep.subr.bf16.mxu0 %v1591
        %1653 = vmatpush1.bf16.msra.mxu0 %v1590
        %1654 = vmatprep.subr.bf16.mxu0 %v1589
        %1655 = vmatpush1.bf16.msra.mxu0 %v1588
        %1656 = vmatprep.subr.bf16.mxu0 %v1587
        %1657 = vmatpush1.bf16.msra.mxu0 %v1586
        %1658 = vmatprep.subr.bf16.mxu0 %v1585
        %1659 = vmatpush1.bf16.msra.mxu0 %v1584
        %1660 = vmatprep.subr.bf16.mxu0 %v1583
        %1661 = vmatpush1.bf16.msra.mxu0 %v1582
        %1662 = vmatprep.subr.bf16.mxu0 %v1613
        %1663 = vmatpush2.bf16.msra.mxu0 %v1612
        %1664 = vmatprep.subr.bf16.mxu0 %v1611
        %1665 = vmatpush2.bf16.msra.mxu0 %v1610
        %1666 = vmatprep.subr.bf16.mxu0 %v1609
        %1667 = vmatpush2.bf16.msra.mxu0 %v1608
        %1668 = vmatprep.subr.bf16.mxu0 %v1607
        %1669 = vmatpush2.bf16.msra.mxu0 %v1606
        %1670 = vmatprep.subr.bf16.mxu0 %v1605
        %1671 = vmatpush2.bf16.msra.mxu0 %v1604
        %1672 = vmatprep.subr.bf16.mxu0 %v1603
        %1673 = vmatpush2.bf16.msra.mxu0 %v1602
        %1674 = vmatprep.subr.bf16.mxu0 %v1601
        %1675 = vmatpush2.bf16.msra.mxu0 %v1600
        %1676 = vmatprep.subr.bf16.mxu0 %v1599
        %1677 = vmatpush2.bf16.msra.mxu0 %v1598
        %1678 = vmatprep.mubr.bf16.mxu0 %v1441
        %1679 = vmatmul.mubr.bf16.gmra.mxu0 %v1440
        %v1680 = vpop.f32.mrf.mxu0
        %v1681 = vadd.f32 %v1479, %v1680
        %v1682 = vpop.f32.mrf.mxu0
        %v1683 = vadd.f32 %v1483, %v1682
        %v1684 = vpop.f32.mrf.mxu0
        %v1685 = vpop.f32.mrf.mxu0
        %1686 = vdwg.mxu0
        %v1687 = vadd.f32 %v1681, %v494
        %v1688 = vadd.f32 %v1683, %v495
        %v1689 = vld [vmem:[%s6] sm:$0x3]
        %v1690 = vld [vmem:[%s7] sm:$0x3]
        %v1691 = vadd.f32 %v1687, %v1688
        %1692 = vadd.xlane.f32.xlu0 %v1691
        %v1693 = vpop.xlane.xlu0 %1692
        %v1694 = vrcp.pop 256.0
        %v1695 = vmul.f32 %v1693, %v1694
        %v1696 = vsub.f32 %v1687, %v1695
        %v1697 = vsub.f32 %v1688, %v1695
        %v1698 = vmul.f32 %v1696, %v1696
        %v1699 = vmul.f32 %v1697, %v1697
        %v1700 = vadd.f32 %v1698, %v1699
        %1701 = vadd.xlane.f32.xlu0 %v1700
        %v1702 = vpop.xlane.xlu0 %1701
        %v1703 = vmul.f32 %v1702, %v1694
        %v1704 = vadd.f32 %v1703, 1e-05
        %v1705 = vrsqrt.pop %v1704
        %v1706 = vmul.f32 %v1696, %v1705
        %v1707 = vmul.f32 %v1697, %v1705
        %v1709 = vlaneseq
        %v1710 = vshrl.u32 %v1709, 7
        %v1711 = vsub.s32 0, %v1710
        %v1712 = vrot.slane %v1689, %v1711
        %v1713 = vlaneseq
        %v1714 = vshrl.u32 %v1713, 7
        %v1715 = vsub.s32 1, %v1714
        %v1716 = vrot.slane %v1689, %v1715
        %v1719 = vmul.f32 %v1706, %v1712
        %v1720 = vmul.f32 %v1707, %v1716
        %v1722 = vlaneseq
        %v1723 = vshrl.u32 %v1722, 7
        %v1724 = vsub.s32 0, %v1723
        %v1725 = vrot.slane %v1690, %v1724
        %v1726 = vlaneseq
        %v1727 = vshrl.u32 %v1726, 7
        %v1728 = vsub.s32 1, %v1727
        %v1729 = vrot.slane %v1690, %v1728
        %v1732 = vadd.f32 %v1719, %v1725
        %v1733 = vadd.f32 %v1720, %v1729
        %v1734 = vlaneseq
        %v1735 = vshrl.u32 %v1734, 7
        %vm1736 = vcmp.lt.s32.totalorder %v1735, %v1233
        %v1737 = vsel %vm1736, 1, 0
        %v1738 = vcvt.s32.f32 %v1737
        %v1739 = vmul.f32 %v1732, %v1738
        %v1740 = vmul.f32 %v1733, %v1738
        %v1741 = vrot.slane %v1739, 7
        %v1742 = vrot.slane %v1740, 7
        %vm1743 = vcmp.ge.s32.totalorder %v1735, 1
        %v1744 = vsel %vm1743, 1, 0
        %vm1745 = vcmp.eq.s32.totalorder %v1744, 1
        %v1746 = vsel %vm1745, %v1741, 0.0
        %v1747 = vsel %vm1745, %v1742, 0.0
        %v1748 = vrot.slane %v1739, 1
        %v1749 = vrot.slane %v1740, 1
        %vm1750 = vcmp.lt.s32.totalorder %v1735, 7
        %v1751 = vsel %vm1750, 1, 0
        %vm1752 = vcmp.eq.s32.totalorder %v1751, 1
        %v1753 = vsel %vm1752, %v1748, 0.0
        %v1754 = vsel %vm1752, %v1749, 0.0
        %v1755 = vpack.c.bf16 %v1746, %v1746
        %v1756 = vpack.c.bf16 %v1747, %v1747
        %v1757 = vpack.c.bf16 %v1739, %v1739
        %v1758 = vpack.c.bf16 %v1740, %v1740
        %v1759 = vpack.c.bf16 %v1753, %v1753
        %v1760 = vpack.c.bf16 %v1754, %v1754
        %v1761 = vld [vmem:[#allocation6] sm:$0xff]
        %v1762 = vld [vmem:[#allocation6 + $0x8] sm:$0xff]
        %v1763 = vld [vmem:[#allocation6 + $0x10] sm:$0xff]
        %v1764 = vld [vmem:[#allocation6 + $0x18] sm:$0xff]
        %v1765 = vld [vmem:[#allocation6 + $0x20] sm:$0xff]
        %v1766 = vld [vmem:[#allocation6 + $0x28] sm:$0xff]
        %v1767 = vld [vmem:[#allocation6 + $0x30] sm:$0xff]
        %v1768 = vld [vmem:[#allocation6 + $0x38] sm:$0xff]
        %v1769 = vld [vmem:[#allocation6 + $0x40] sm:$0xff]
        %v1770 = vld [vmem:[#allocation6 + $0x48] sm:$0xff]
        %v1771 = vld [vmem:[#allocation6 + $0x50] sm:$0xff]
        %v1772 = vld [vmem:[#allocation6 + $0x58] sm:$0xff]
        %v1773 = vld [vmem:[#allocation6 + $0x60] sm:$0xff]
        %v1774 = vld [vmem:[#allocation6 + $0x68] sm:$0xff]
        %v1775 = vld [vmem:[#allocation6 + $0x70] sm:$0xff]
        %v1776 = vld [vmem:[#allocation6 + $0x78] sm:$0xff]
        %v1777 = vld [vmem:[#allocation6 + $0x80] sm:$0xff]
        %v1778 = vld [vmem:[#allocation6 + $0x88] sm:$0xff]
        %v1779 = vld [vmem:[#allocation6 + $0x90] sm:$0xff]
        %v1780 = vld [vmem:[#allocation6 + $0x98] sm:$0xff]
        %v1781 = vld [vmem:[#allocation6 + $0xa0] sm:$0xff]
        %v1782 = vld [vmem:[#allocation6 + $0xa8] sm:$0xff]
        %v1783 = vld [vmem:[#allocation6 + $0xb0] sm:$0xff]
        %v1784 = vld [vmem:[#allocation6 + $0xb8] sm:$0xff]
        %v1785 = vld [vmem:[#allocation6 + $0xc0] sm:$0xff]
        %v1786 = vld [vmem:[#allocation6 + $0xc8] sm:$0xff]
        %v1787 = vld [vmem:[#allocation6 + $0xd0] sm:$0xff]
        %v1788 = vld [vmem:[#allocation6 + $0xd8] sm:$0xff]
        %v1789 = vld [vmem:[#allocation6 + $0xe0] sm:$0xff]
        %v1790 = vld [vmem:[#allocation6 + $0xe8] sm:$0xff]
        %v1791 = vld [vmem:[#allocation6 + $0xf0] sm:$0xff]
        %v1792 = vld [vmem:[#allocation6 + $0xf8] sm:$0xff]
        %v1793 = vld [vmem:[#allocation6 + $0x100] sm:$0xff]
        %v1794 = vld [vmem:[#allocation6 + $0x108] sm:$0xff]
        %v1795 = vld [vmem:[#allocation6 + $0x110] sm:$0xff]
        %v1796 = vld [vmem:[#allocation6 + $0x118] sm:$0xff]
        %v1797 = vld [vmem:[#allocation6 + $0x120] sm:$0xff]
        %v1798 = vld [vmem:[#allocation6 + $0x128] sm:$0xff]
        %v1799 = vld [vmem:[#allocation6 + $0x130] sm:$0xff]
        %v1800 = vld [vmem:[#allocation6 + $0x138] sm:$0xff]
        %v1801 = vld [vmem:[#allocation6 + $0x140] sm:$0xff]
        %v1802 = vld [vmem:[#allocation6 + $0x148] sm:$0xff]
        %v1803 = vld [vmem:[#allocation6 + $0x150] sm:$0xff]
        %v1804 = vld [vmem:[#allocation6 + $0x158] sm:$0xff]
        %v1805 = vld [vmem:[#allocation6 + $0x160] sm:$0xff]
        %v1806 = vld [vmem:[#allocation6 + $0x168] sm:$0xff]
        %v1807 = vld [vmem:[#allocation6 + $0x170] sm:$0xff]
        %v1808 = vld [vmem:[#allocation6 + $0x178] sm:$0xff]
        %v1809 = vld [vmem:[#allocation6 + $0x180] sm:$0xff]
        %v1810 = vld [vmem:[#allocation6 + $0x188] sm:$0xff]
        %v1811 = vld [vmem:[#allocation6 + $0x190] sm:$0xff]
        %v1812 = vld [vmem:[#allocation6 + $0x198] sm:$0xff]
        %v1813 = vld [vmem:[#allocation6 + $0x1a0] sm:$0xff]
        %v1814 = vld [vmem:[#allocation6 + $0x1a8] sm:$0xff]
        %v1815 = vld [vmem:[#allocation6 + $0x1b0] sm:$0xff]
        %v1816 = vld [vmem:[#allocation6 + $0x1b8] sm:$0xff]
        %v1817 = vld [vmem:[#allocation6 + $0x1c0] sm:$0xff]
        %v1818 = vld [vmem:[#allocation6 + $0x1c8] sm:$0xff]
        %v1819 = vld [vmem:[#allocation6 + $0x1d0] sm:$0xff]
        %v1820 = vld [vmem:[#allocation6 + $0x1d8] sm:$0xff]
        %v1821 = vld [vmem:[#allocation6 + $0x1e0] sm:$0xff]
        %v1822 = vld [vmem:[#allocation6 + $0x1e8] sm:$0xff]
        %v1823 = vld [vmem:[#allocation6 + $0x1f0] sm:$0xff]
        %v1824 = vld [vmem:[#allocation6 + $0x1f8] sm:$0xff]
        %v1825 = vld [vmem:[#allocation6 + $0x200] sm:$0xff]
        %v1826 = vld [vmem:[#allocation6 + $0x208] sm:$0xff]
        %v1827 = vld [vmem:[#allocation6 + $0x210] sm:$0xff]
        %v1828 = vld [vmem:[#allocation6 + $0x218] sm:$0xff]
        %v1829 = vld [vmem:[#allocation6 + $0x220] sm:$0xff]
        %v1830 = vld [vmem:[#allocation6 + $0x228] sm:$0xff]
        %v1831 = vld [vmem:[#allocation6 + $0x230] sm:$0xff]
        %v1832 = vld [vmem:[#allocation6 + $0x238] sm:$0xff]
        %v1833 = vld [vmem:[#allocation6 + $0x240] sm:$0xff]
        %v1834 = vld [vmem:[#allocation6 + $0x248] sm:$0xff]
        %v1835 = vld [vmem:[#allocation6 + $0x250] sm:$0xff]
        %v1836 = vld [vmem:[#allocation6 + $0x258] sm:$0xff]
        %v1837 = vld [vmem:[#allocation6 + $0x260] sm:$0xff]
        %v1838 = vld [vmem:[#allocation6 + $0x268] sm:$0xff]
        %v1839 = vld [vmem:[#allocation6 + $0x270] sm:$0xff]
        %v1840 = vld [vmem:[#allocation6 + $0x278] sm:$0xff]
        %v1841 = vld [vmem:[#allocation6 + $0x280] sm:$0xff]
        %v1842 = vld [vmem:[#allocation6 + $0x288] sm:$0xff]
        %v1843 = vld [vmem:[#allocation6 + $0x290] sm:$0xff]
        %v1844 = vld [vmem:[#allocation6 + $0x298] sm:$0xff]
        %v1845 = vld [vmem:[#allocation6 + $0x2a0] sm:$0xff]
        %v1846 = vld [vmem:[#allocation6 + $0x2a8] sm:$0xff]
        %v1847 = vld [vmem:[#allocation6 + $0x2b0] sm:$0xff]
        %v1848 = vld [vmem:[#allocation6 + $0x2b8] sm:$0xff]
        %v1849 = vld [vmem:[#allocation6 + $0x2c0] sm:$0xff]
        %v1850 = vld [vmem:[#allocation6 + $0x2c8] sm:$0xff]
        %v1851 = vld [vmem:[#allocation6 + $0x2d0] sm:$0xff]
        %v1852 = vld [vmem:[#allocation6 + $0x2d8] sm:$0xff]
        %v1853 = vld [vmem:[#allocation6 + $0x2e0] sm:$0xff]
        %v1854 = vld [vmem:[#allocation6 + $0x2e8] sm:$0xff]
        %v1855 = vld [vmem:[#allocation6 + $0x2f0] sm:$0xff]
        %v1856 = vld [vmem:[#allocation6 + $0x2f8] sm:$0xff]
        %v1857 = vld [vmem:[%s9] sm:$0x3]
        %v1859 = vlaneseq
        %v1860 = vshrl.u32 %v1859, 7
        %v1861 = vsub.s32 0, %v1860
        %v1862 = vrot.slane %v1857, %v1861
        %v1863 = vlaneseq
        %v1864 = vshrl.u32 %v1863, 7
        %v1865 = vsub.s32 1, %v1864
        %v1866 = vrot.slane %v1857, %v1865
        %v1965 = vunpack.c.l.b16 %v1761
        %v1966 = vunpack.c.h.b16 %v1761
        %v1967 = vunpack.c.l.b16 %v1762
        %v1968 = vunpack.c.h.b16 %v1762
        %v1969 = vunpack.c.l.b16 %v1763
        %v1970 = vunpack.c.h.b16 %v1763
        %v1971 = vunpack.c.l.b16 %v1764
        %v1972 = vunpack.c.h.b16 %v1764
        %v1973 = vunpack.c.l.b16 %v1765
        %v1974 = vunpack.c.h.b16 %v1765
        %v1975 = vunpack.c.l.b16 %v1766
        %v1976 = vunpack.c.h.b16 %v1766
        %v1977 = vunpack.c.l.b16 %v1767
        %v1978 = vunpack.c.h.b16 %v1767
        %v1979 = vunpack.c.l.b16 %v1768
        %v1980 = vunpack.c.h.b16 %v1768
        %v1981 = vunpack.c.l.b16 %v1769
        %v1982 = vunpack.c.h.b16 %v1769
        %v1983 = vunpack.c.l.b16 %v1770
        %v1984 = vunpack.c.h.b16 %v1770
        %v1985 = vunpack.c.l.b16 %v1771
        %v1986 = vunpack.c.h.b16 %v1771
        %v1987 = vunpack.c.l.b16 %v1772
        %v1988 = vunpack.c.h.b16 %v1772
        %v1989 = vunpack.c.l.b16 %v1773
        %v1990 = vunpack.c.h.b16 %v1773
        %v1991 = vunpack.c.l.b16 %v1774
        %v1992 = vunpack.c.h.b16 %v1774
        %v1993 = vunpack.c.l.b16 %v1775
        %v1994 = vunpack.c.h.b16 %v1775
        %v1995 = vunpack.c.l.b16 %v1776
        %v1996 = vunpack.c.h.b16 %v1776
        %v1997 = vunpack.c.l.b16 %v1777
        %v1998 = vunpack.c.h.b16 %v1777
        %v1999 = vunpack.c.l.b16 %v1778
        %v2000 = vunpack.c.h.b16 %v1778
        %v2001 = vunpack.c.l.b16 %v1779
        %v2002 = vunpack.c.h.b16 %v1779
        %v2003 = vunpack.c.l.b16 %v1780
        %v2004 = vunpack.c.h.b16 %v1780
        %v2005 = vunpack.c.l.b16 %v1781
        %v2006 = vunpack.c.h.b16 %v1781
        %v2007 = vunpack.c.l.b16 %v1782
        %v2008 = vunpack.c.h.b16 %v1782
        %v2009 = vunpack.c.l.b16 %v1783
        %v2010 = vunpack.c.h.b16 %v1783
        %v2011 = vunpack.c.l.b16 %v1784
        %v2012 = vunpack.c.h.b16 %v1784
        %v2013 = vunpack.c.l.b16 %v1785
        %v2014 = vunpack.c.h.b16 %v1785
        %v2015 = vunpack.c.l.b16 %v1786
        %v2016 = vunpack.c.h.b16 %v1786
        %v2017 = vunpack.c.l.b16 %v1787
        %v2018 = vunpack.c.h.b16 %v1787
        %v2019 = vunpack.c.l.b16 %v1788
        %v2020 = vunpack.c.h.b16 %v1788
        %v2021 = vunpack.c.l.b16 %v1789
        %v2022 = vunpack.c.h.b16 %v1789
        %v2023 = vunpack.c.l.b16 %v1790
        %v2024 = vunpack.c.h.b16 %v1790
        %v2025 = vunpack.c.l.b16 %v1791
        %v2026 = vunpack.c.h.b16 %v1791
        %v2027 = vunpack.c.l.b16 %v1792
        %v2028 = vunpack.c.h.b16 %v1792
        %v2029 = vunpack.c.l.b16 %v1793
        %v2030 = vunpack.c.h.b16 %v1793
        %v2031 = vunpack.c.l.b16 %v1794
        %v2032 = vunpack.c.h.b16 %v1794
        %v2033 = vunpack.c.l.b16 %v1795
        %v2034 = vunpack.c.h.b16 %v1795
        %v2035 = vunpack.c.l.b16 %v1796
        %v2036 = vunpack.c.h.b16 %v1796
        %v2037 = vunpack.c.l.b16 %v1797
        %v2038 = vunpack.c.h.b16 %v1797
        %v2039 = vunpack.c.l.b16 %v1798
        %v2040 = vunpack.c.h.b16 %v1798
        %v2041 = vunpack.c.l.b16 %v1799
        %v2042 = vunpack.c.h.b16 %v1799
        %v2043 = vunpack.c.l.b16 %v1800
        %v2044 = vunpack.c.h.b16 %v1800
        %v2045 = vunpack.c.l.b16 %v1801
        %v2046 = vunpack.c.h.b16 %v1801
        %v2047 = vunpack.c.l.b16 %v1802
        %v2048 = vunpack.c.h.b16 %v1802
        %v2049 = vunpack.c.l.b16 %v1803
        %v2050 = vunpack.c.h.b16 %v1803
        %v2051 = vunpack.c.l.b16 %v1804
        %v2052 = vunpack.c.h.b16 %v1804
        %v2053 = vunpack.c.l.b16 %v1805
        %v2054 = vunpack.c.h.b16 %v1805
        %v2055 = vunpack.c.l.b16 %v1806
        %v2056 = vunpack.c.h.b16 %v1806
        %v2057 = vunpack.c.l.b16 %v1807
        %v2058 = vunpack.c.h.b16 %v1807
        %v2059 = vunpack.c.l.b16 %v1808
        %v2060 = vunpack.c.h.b16 %v1808
        %v2061 = vunpack.c.l.b16 %v1809
        %v2062 = vunpack.c.h.b16 %v1809
        %v2063 = vunpack.c.l.b16 %v1810
        %v2064 = vunpack.c.h.b16 %v1810
        %v2065 = vunpack.c.l.b16 %v1811
        %v2066 = vunpack.c.h.b16 %v1811
        %v2067 = vunpack.c.l.b16 %v1812
        %v2068 = vunpack.c.h.b16 %v1812
        %v2069 = vunpack.c.l.b16 %v1813
        %v2070 = vunpack.c.h.b16 %v1813
        %v2071 = vunpack.c.l.b16 %v1814
        %v2072 = vunpack.c.h.b16 %v1814
        %v2073 = vunpack.c.l.b16 %v1815
        %v2074 = vunpack.c.h.b16 %v1815
        %v2075 = vunpack.c.l.b16 %v1816
        %v2076 = vunpack.c.h.b16 %v1816
        %v2077 = vunpack.c.l.b16 %v1817
        %v2078 = vunpack.c.h.b16 %v1817
        %v2079 = vunpack.c.l.b16 %v1818
        %v2080 = vunpack.c.h.b16 %v1818
        %v2081 = vunpack.c.l.b16 %v1819
        %v2082 = vunpack.c.h.b16 %v1819
        %v2083 = vunpack.c.l.b16 %v1820
        %v2084 = vunpack.c.h.b16 %v1820
        %v2085 = vunpack.c.l.b16 %v1821
        %v2086 = vunpack.c.h.b16 %v1821
        %v2087 = vunpack.c.l.b16 %v1822
        %v2088 = vunpack.c.h.b16 %v1822
        %v2089 = vunpack.c.l.b16 %v1823
        %v2090 = vunpack.c.h.b16 %v1823
        %v2091 = vunpack.c.l.b16 %v1824
        %v2092 = vunpack.c.h.b16 %v1824
        %v2093 = vunpack.c.l.b16 %v1825
        %v2094 = vunpack.c.h.b16 %v1825
        %v2095 = vunpack.c.l.b16 %v1826
        %v2096 = vunpack.c.h.b16 %v1826
        %v2097 = vunpack.c.l.b16 %v1827
        %v2098 = vunpack.c.h.b16 %v1827
        %v2099 = vunpack.c.l.b16 %v1828
        %v2100 = vunpack.c.h.b16 %v1828
        %v2101 = vunpack.c.l.b16 %v1829
        %v2102 = vunpack.c.h.b16 %v1829
        %v2103 = vunpack.c.l.b16 %v1830
        %v2104 = vunpack.c.h.b16 %v1830
        %v2105 = vunpack.c.l.b16 %v1831
        %v2106 = vunpack.c.h.b16 %v1831
        %v2107 = vunpack.c.l.b16 %v1832
        %v2108 = vunpack.c.h.b16 %v1832
        %v2109 = vunpack.c.l.b16 %v1833
        %v2110 = vunpack.c.h.b16 %v1833
        %v2111 = vunpack.c.l.b16 %v1834
        %v2112 = vunpack.c.h.b16 %v1834
        %v2113 = vunpack.c.l.b16 %v1835
        %v2114 = vunpack.c.h.b16 %v1835
        %v2115 = vunpack.c.l.b16 %v1836
        %v2116 = vunpack.c.h.b16 %v1836
        %v2117 = vunpack.c.l.b16 %v1837
        %v2118 = vunpack.c.h.b16 %v1837
        %v2119 = vunpack.c.l.b16 %v1838
        %v2120 = vunpack.c.h.b16 %v1838
        %v2121 = vunpack.c.l.b16 %v1839
        %v2122 = vunpack.c.h.b16 %v1839
        %v2123 = vunpack.c.l.b16 %v1840
        %v2124 = vunpack.c.h.b16 %v1840
        %v2125 = vunpack.c.l.b16 %v1841
        %v2126 = vunpack.c.h.b16 %v1841
        %v2127 = vunpack.c.l.b16 %v1842
        %v2128 = vunpack.c.h.b16 %v1842
        %v2129 = vunpack.c.l.b16 %v1843
        %v2130 = vunpack.c.h.b16 %v1843
        %v2131 = vunpack.c.l.b16 %v1844
        %v2132 = vunpack.c.h.b16 %v1844
        %v2133 = vunpack.c.l.b16 %v1845
        %v2134 = vunpack.c.h.b16 %v1845
        %v2135 = vunpack.c.l.b16 %v1846
        %v2136 = vunpack.c.h.b16 %v1846
        %v2137 = vunpack.c.l.b16 %v1847
        %v2138 = vunpack.c.h.b16 %v1847
        %v2139 = vunpack.c.l.b16 %v1848
        %v2140 = vunpack.c.h.b16 %v1848
        %v2141 = vunpack.c.l.b16 %v1849
        %v2142 = vunpack.c.h.b16 %v1849
        %v2143 = vunpack.c.l.b16 %v1850
        %v2144 = vunpack.c.h.b16 %v1850
        %v2145 = vunpack.c.l.b16 %v1851
        %v2146 = vunpack.c.h.b16 %v1851
        %v2147 = vunpack.c.l.b16 %v1852
        %v2148 = vunpack.c.h.b16 %v1852
        %v2149 = vunpack.c.l.b16 %v1853
        %v2150 = vunpack.c.h.b16 %v1853
        %v2151 = vunpack.c.l.b16 %v1854
        %v2152 = vunpack.c.h.b16 %v1854
        %v2153 = vunpack.c.l.b16 %v1855
        %v2154 = vunpack.c.h.b16 %v1855
        %v2155 = vunpack.c.l.b16 %v1856
        %v2156 = vunpack.c.h.b16 %v1856
        %v2157 = vpack.c.b16 %v1967, %v1965
        %v2158 = vpack.c.b16 %v1968, %v1966
        %v2159 = vpack.c.b16 %v1971, %v1969
        %v2160 = vpack.c.b16 %v1972, %v1970
        %v2161 = vpack.c.b16 %v1975, %v1973
        %v2162 = vpack.c.b16 %v1976, %v1974
        %v2163 = vpack.c.b16 %v1979, %v1977
        %v2164 = vpack.c.b16 %v1980, %v1978
        %v2165 = vpack.c.b16 %v1983, %v1981
        %v2166 = vpack.c.b16 %v1984, %v1982
        %v2167 = vpack.c.b16 %v1987, %v1985
        %v2168 = vpack.c.b16 %v1988, %v1986
        %v2169 = vpack.c.b16 %v1991, %v1989
        %v2170 = vpack.c.b16 %v1992, %v1990
        %v2171 = vpack.c.b16 %v1995, %v1993
        %v2172 = vpack.c.b16 %v1996, %v1994
        %v2173 = vpack.c.b16 %v1999, %v1997
        %v2174 = vpack.c.b16 %v2000, %v1998
        %v2175 = vpack.c.b16 %v2003, %v2001
        %v2176 = vpack.c.b16 %v2004, %v2002
        %v2177 = vpack.c.b16 %v2007, %v2005
        %v2178 = vpack.c.b16 %v2008, %v2006
        %v2179 = vpack.c.b16 %v2011, %v2009
        %v2180 = vpack.c.b16 %v2012, %v2010
        %v2181 = vpack.c.b16 %v2015, %v2013
        %v2182 = vpack.c.b16 %v2016, %v2014
        %v2183 = vpack.c.b16 %v2019, %v2017
        %v2184 = vpack.c.b16 %v2020, %v2018
        %v2185 = vpack.c.b16 %v2023, %v2021
        %v2186 = vpack.c.b16 %v2024, %v2022
        %v2187 = vpack.c.b16 %v2027, %v2025
        %v2188 = vpack.c.b16 %v2028, %v2026
        %v2189 = vpack.c.b16 %v2031, %v2029
        %v2190 = vpack.c.b16 %v2032, %v2030
        %v2191 = vpack.c.b16 %v2035, %v2033
        %v2192 = vpack.c.b16 %v2036, %v2034
        %v2193 = vpack.c.b16 %v2039, %v2037
        %v2194 = vpack.c.b16 %v2040, %v2038
        %v2195 = vpack.c.b16 %v2043, %v2041
        %v2196 = vpack.c.b16 %v2044, %v2042
        %v2197 = vpack.c.b16 %v2047, %v2045
        %v2198 = vpack.c.b16 %v2048, %v2046
        %v2199 = vpack.c.b16 %v2051, %v2049
        %v2200 = vpack.c.b16 %v2052, %v2050
        %v2201 = vpack.c.b16 %v2055, %v2053
        %v2202 = vpack.c.b16 %v2056, %v2054
        %v2203 = vpack.c.b16 %v2059, %v2057
        %v2204 = vpack.c.b16 %v2060, %v2058
        %v2205 = vpack.c.b16 %v2063, %v2061
        %v2206 = vpack.c.b16 %v2064, %v2062
        %v2207 = vpack.c.b16 %v2067, %v2065
        %v2208 = vpack.c.b16 %v2068, %v2066
        %v2209 = vpack.c.b16 %v2071, %v2069
        %v2210 = vpack.c.b16 %v2072, %v2070
        %v2211 = vpack.c.b16 %v2075, %v2073
        %v2212 = vpack.c.b16 %v2076, %v2074
        %v2213 = vpack.c.b16 %v2079, %v2077
        %v2214 = vpack.c.b16 %v2080, %v2078
        %v2215 = vpack.c.b16 %v2083, %v2081
        %v2216 = vpack.c.b16 %v2084, %v2082
        %v2217 = vpack.c.b16 %v2087, %v2085
        %v2218 = vpack.c.b16 %v2088, %v2086
        %v2219 = vpack.c.b16 %v2091, %v2089
        %v2220 = vpack.c.b16 %v2092, %v2090
        %v2221 = vpack.c.b16 %v2095, %v2093
        %v2222 = vpack.c.b16 %v2096, %v2094
        %v2223 = vpack.c.b16 %v2099, %v2097
        %v2224 = vpack.c.b16 %v2100, %v2098
        %v2225 = vpack.c.b16 %v2103, %v2101
        %v2226 = vpack.c.b16 %v2104, %v2102
        %v2227 = vpack.c.b16 %v2107, %v2105
        %v2228 = vpack.c.b16 %v2108, %v2106
        %v2229 = vpack.c.b16 %v2111, %v2109
        %v2230 = vpack.c.b16 %v2112, %v2110
        %v2231 = vpack.c.b16 %v2115, %v2113
        %v2232 = vpack.c.b16 %v2116, %v2114
        %v2233 = vpack.c.b16 %v2119, %v2117
        %v2234 = vpack.c.b16 %v2120, %v2118
        %v2235 = vpack.c.b16 %v2123, %v2121
        %v2236 = vpack.c.b16 %v2124, %v2122
        %v2237 = vpack.c.b16 %v2127, %v2125
        %v2238 = vpack.c.b16 %v2128, %v2126
        %v2239 = vpack.c.b16 %v2131, %v2129
        %v2240 = vpack.c.b16 %v2132, %v2130
        %v2241 = vpack.c.b16 %v2135, %v2133
        %v2242 = vpack.c.b16 %v2136, %v2134
        %v2243 = vpack.c.b16 %v2139, %v2137
        %v2244 = vpack.c.b16 %v2140, %v2138
        %v2245 = vpack.c.b16 %v2143, %v2141
        %v2246 = vpack.c.b16 %v2144, %v2142
        %v2247 = vpack.c.b16 %v2147, %v2145
        %v2248 = vpack.c.b16 %v2148, %v2146
        %v2249 = vpack.c.b16 %v2151, %v2149
        %v2250 = vpack.c.b16 %v2152, %v2150
        %v2251 = vpack.c.b16 %v2155, %v2153
        %v2252 = vpack.c.b16 %v2156, %v2154
        %2349 = vmatprep.subr.bf16.mxu0 %v2172
        %2350 = vmatpush1.bf16.msra.mxu0 %v2171
        %2351 = vmatprep.subr.bf16.mxu0 %v2170
        %2352 = vmatpush1.bf16.msra.mxu0 %v2169
        %2353 = vmatprep.subr.bf16.mxu0 %v2168
        %2354 = vmatpush1.bf16.msra.mxu0 %v2167
        %2355 = vmatprep.subr.bf16.mxu0 %v2166
        %2356 = vmatpush1.bf16.msra.mxu0 %v2165
        %2357 = vmatprep.subr.bf16.mxu0 %v2164
        %2358 = vmatpush1.bf16.msra.mxu0 %v2163
        %2359 = vmatprep.subr.bf16.mxu0 %v2162
        %2360 = vmatpush1.bf16.msra.mxu0 %v2161
        %2361 = vmatprep.subr.bf16.mxu0 %v2160
        %2362 = vmatpush1.bf16.msra.mxu0 %v2159
        %2363 = vmatprep.subr.bf16.mxu0 %v2158
        %2364 = vmatpush1.bf16.msra.mxu0 %v2157
        %2365 = vmatprep.subr.bf16.mxu0 %v2188
        %2366 = vmatpush2.bf16.msra.mxu0 %v2187
        %2367 = vmatprep.subr.bf16.mxu0 %v2186
        %2368 = vmatpush2.bf16.msra.mxu0 %v2185
        %2369 = vmatprep.subr.bf16.mxu0 %v2184
        %2370 = vmatpush2.bf16.msra.mxu0 %v2183
        %2371 = vmatprep.subr.bf16.mxu0 %v2182
        %2372 = vmatpush2.bf16.msra.mxu0 %v2181
        %2373 = vmatprep.subr.bf16.mxu0 %v2180
        %2374 = vmatpush2.bf16.msra.mxu0 %v2179
        %2375 = vmatprep.subr.bf16.mxu0 %v2178
        %2376 = vmatpush2.bf16.msra.mxu0 %v2177
        %2377 = vmatprep.subr.bf16.mxu0 %v2176
        %2378 = vmatpush2.bf16.msra.mxu0 %v2175
        %2379 = vmatprep.subr.bf16.mxu0 %v2174
        %2380 = vmatpush2.bf16.msra.mxu0 %v2173
        %2381 = vmatprep.mubr.bf16.mxu0 %v1756
        %2382 = vmatmul.mubr.bf16.gmra.mxu0 %v1755
        %v2383 = vpop.f32.mrf.mxu0
        %v2384 = vadd.f32 %v1862, %v2383
        %v2385 = vpop.f32.mrf.mxu0
        %v2386 = vadd.f32 %v1866, %v2385
        %v2387 = vpop.f32.mrf.mxu0
        %v2388 = vpop.f32.mrf.mxu0
        %2389 = vdwg.mxu0
        %2390 = vmatprep.subr.bf16.mxu0 %v2204
        %2391 = vmatpush1.bf16.msra.mxu0 %v2203
        %2392 = vmatprep.subr.bf16.mxu0 %v2202
        %2393 = vmatpush1.bf16.msra.mxu0 %v2201
        %2394 = vmatprep.subr.bf16.mxu0 %v2200
        %2395 = vmatpush1.bf16.msra.mxu0 %v2199
        %2396 = vmatprep.subr.bf16.mxu0 %v2198
        %2397 = vmatpush1.bf16.msra.mxu0 %v2197
        %2398 = vmatprep.subr.bf16.mxu0 %v2196
        %2399 = vmatpush1.bf16.msra.mxu0 %v2195
        %2400 = vmatprep.subr.bf16.mxu0 %v2194
        %2401 = vmatpush1.bf16.msra.mxu0 %v2193
        %2402 = vmatprep.subr.bf16.mxu0 %v2192
        %2403 = vmatpush1.bf16.msra.mxu0 %v2191
        %2404 = vmatprep.subr.bf16.mxu0 %v2190
        %2405 = vmatpush1.bf16.msra.mxu0 %v2189
        %2406 = vmatprep.subr.bf16.mxu0 %v2220
        %2407 = vmatpush2.bf16.msra.mxu0 %v2219
        %2408 = vmatprep.subr.bf16.mxu0 %v2218
        %2409 = vmatpush2.bf16.msra.mxu0 %v2217
        %2410 = vmatprep.subr.bf16.mxu0 %v2216
        %2411 = vmatpush2.bf16.msra.mxu0 %v2215
        %2412 = vmatprep.subr.bf16.mxu0 %v2214
        %2413 = vmatpush2.bf16.msra.mxu0 %v2213
        %2414 = vmatprep.subr.bf16.mxu0 %v2212
        %2415 = vmatpush2.bf16.msra.mxu0 %v2211
        %2416 = vmatprep.subr.bf16.mxu0 %v2210
        %2417 = vmatpush2.bf16.msra.mxu0 %v2209
        %2418 = vmatprep.subr.bf16.mxu0 %v2208
        %2419 = vmatpush2.bf16.msra.mxu0 %v2207
        %2420 = vmatprep.subr.bf16.mxu0 %v2206
        %2421 = vmatpush2.bf16.msra.mxu0 %v2205
        %2422 = vmatprep.mubr.bf16.mxu0 %v1758
        %2423 = vmatmul.mubr.bf16.gmra.mxu0 %v1757
        %v2424 = vpop.f32.mrf.mxu0
        %v2425 = vadd.f32 %v2384, %v2424
        %v2426 = vpop.f32.mrf.mxu0
        %v2427 = vadd.f32 %v2386, %v2426
        %v2428 = vpop.f32.mrf.mxu0
        %v2429 = vpop.f32.mrf.mxu0
        %2430 = vdwg.mxu0
        %2431 = vmatprep.subr.bf16.mxu0 %v2236
        %2432 = vmatpush1.bf16.msra.mxu0 %v2235
        %2433 = vmatprep.subr.bf16.mxu0 %v2234
        %2434 = vmatpush1.bf16.msra.mxu0 %v2233
        %2435 = vmatprep.subr.bf16.mxu0 %v2232
        %2436 = vmatpush1.bf16.msra.mxu0 %v2231
        %2437 = vmatprep.subr.bf16.mxu0 %v2230
        %2438 = vmatpush1.bf16.msra.mxu0 %v2229
        %2439 = vmatprep.subr.bf16.mxu0 %v2228
        %2440 = vmatpush1.bf16.msra.mxu0 %v2227
        %2441 = vmatprep.subr.bf16.mxu0 %v2226
        %2442 = vmatpush1.bf16.msra.mxu0 %v2225
        %2443 = vmatprep.subr.bf16.mxu0 %v2224
        %2444 = vmatpush1.bf16.msra.mxu0 %v2223
        %2445 = vmatprep.subr.bf16.mxu0 %v2222
        %2446 = vmatpush1.bf16.msra.mxu0 %v2221
        %2447 = vmatprep.subr.bf16.mxu0 %v2252
        %2448 = vmatpush2.bf16.msra.mxu0 %v2251
        %2449 = vmatprep.subr.bf16.mxu0 %v2250
        %2450 = vmatpush2.bf16.msra.mxu0 %v2249
        %2451 = vmatprep.subr.bf16.mxu0 %v2248
        %2452 = vmatpush2.bf16.msra.mxu0 %v2247
        %2453 = vmatprep.subr.bf16.mxu0 %v2246
        %2454 = vmatpush2.bf16.msra.mxu0 %v2245
        %2455 = vmatprep.subr.bf16.mxu0 %v2244
        %2456 = vmatpush2.bf16.msra.mxu0 %v2243
        %2457 = vmatprep.subr.bf16.mxu0 %v2242
        %2458 = vmatpush2.bf16.msra.mxu0 %v2241
        %2459 = vmatprep.subr.bf16.mxu0 %v2240
        %2460 = vmatpush2.bf16.msra.mxu0 %v2239
        %2461 = vmatprep.subr.bf16.mxu0 %v2238
        %2462 = vmatpush2.bf16.msra.mxu0 %v2237
        %2463 = vmatprep.mubr.bf16.mxu0 %v1760
        %2464 = vmatmul.mubr.bf16.gmra.mxu0 %v1759
        %v2465 = vpop.f32.mrf.mxu0
        %v2466 = vadd.f32 %v2425, %v2465
        %v2467 = vpop.f32.mrf.mxu0
        %v2468 = vadd.f32 %v2427, %v2467
        %v2469 = vpop.f32.mrf.mxu0
        %v2470 = vpop.f32.mrf.mxu0
        %2471 = vdwg.mxu0
        %v2472 = vmax.f32 %v2466, 0.0
        %v2473 = vmax.f32 %v2468, 0.0
        %v2474 = vrot.slane %v2472, 7
        %v2475 = vrot.slane %v2473, 7
        %v2476 = vsel %vm1745, %v2474, 0.0
        %v2477 = vsel %vm1745, %v2475, 0.0
        %v2478 = vrot.slane %v2472, 1
        %v2479 = vrot.slane %v2473, 1
        %v2480 = vsel %vm1752, %v2478, 0.0
        %v2481 = vsel %vm1752, %v2479, 0.0
        %v2482 = vpack.c.bf16 %v2476, %v2476
        %v2483 = vpack.c.bf16 %v2477, %v2477
        %v2484 = vpack.c.bf16 %v2472, %v2472
        %v2485 = vpack.c.bf16 %v2473, %v2473
        %v2486 = vpack.c.bf16 %v2480, %v2480
        %v2487 = vpack.c.bf16 %v2481, %v2481
        %v2488 = vld [vmem:[#allocation8] sm:$0xff]
        %v2489 = vld [vmem:[#allocation8 + $0x8] sm:$0xff]
        %v2490 = vld [vmem:[#allocation8 + $0x10] sm:$0xff]
        %v2491 = vld [vmem:[#allocation8 + $0x18] sm:$0xff]
        %v2492 = vld [vmem:[#allocation8 + $0x20] sm:$0xff]
        %v2493 = vld [vmem:[#allocation8 + $0x28] sm:$0xff]
        %v2494 = vld [vmem:[#allocation8 + $0x30] sm:$0xff]
        %v2495 = vld [vmem:[#allocation8 + $0x38] sm:$0xff]
        %v2496 = vld [vmem:[#allocation8 + $0x40] sm:$0xff]
        %v2497 = vld [vmem:[#allocation8 + $0x48] sm:$0xff]
        %v2498 = vld [vmem:[#allocation8 + $0x50] sm:$0xff]
        %v2499 = vld [vmem:[#allocation8 + $0x58] sm:$0xff]
        %v2500 = vld [vmem:[#allocation8 + $0x60] sm:$0xff]
        %v2501 = vld [vmem:[#allocation8 + $0x68] sm:$0xff]
        %v2502 = vld [vmem:[#allocation8 + $0x70] sm:$0xff]
        %v2503 = vld [vmem:[#allocation8 + $0x78] sm:$0xff]
        %v2504 = vld [vmem:[#allocation8 + $0x80] sm:$0xff]
        %v2505 = vld [vmem:[#allocation8 + $0x88] sm:$0xff]
        %v2506 = vld [vmem:[#allocation8 + $0x90] sm:$0xff]
        %v2507 = vld [vmem:[#allocation8 + $0x98] sm:$0xff]
        %v2508 = vld [vmem:[#allocation8 + $0xa0] sm:$0xff]
        %v2509 = vld [vmem:[#allocation8 + $0xa8] sm:$0xff]
        %v2510 = vld [vmem:[#allocation8 + $0xb0] sm:$0xff]
        %v2511 = vld [vmem:[#allocation8 + $0xb8] sm:$0xff]
        %v2512 = vld [vmem:[#allocation8 + $0xc0] sm:$0xff]
        %v2513 = vld [vmem:[#allocation8 + $0xc8] sm:$0xff]
        %v2514 = vld [vmem:[#allocation8 + $0xd0] sm:$0xff]
        %v2515 = vld [vmem:[#allocation8 + $0xd8] sm:$0xff]
        %v2516 = vld [vmem:[#allocation8 + $0xe0] sm:$0xff]
        %v2517 = vld [vmem:[#allocation8 + $0xe8] sm:$0xff]
        %v2518 = vld [vmem:[#allocation8 + $0xf0] sm:$0xff]
        %v2519 = vld [vmem:[#allocation8 + $0xf8] sm:$0xff]
        %v2520 = vld [vmem:[#allocation8 + $0x100] sm:$0xff]
        %v2521 = vld [vmem:[#allocation8 + $0x108] sm:$0xff]
        %v2522 = vld [vmem:[#allocation8 + $0x110] sm:$0xff]
        %v2523 = vld [vmem:[#allocation8 + $0x118] sm:$0xff]
        %v2524 = vld [vmem:[#allocation8 + $0x120] sm:$0xff]
        %v2525 = vld [vmem:[#allocation8 + $0x128] sm:$0xff]
        %v2526 = vld [vmem:[#allocation8 + $0x130] sm:$0xff]
        %v2527 = vld [vmem:[#allocation8 + $0x138] sm:$0xff]
        %v2528 = vld [vmem:[#allocation8 + $0x140] sm:$0xff]
        %v2529 = vld [vmem:[#allocation8 + $0x148] sm:$0xff]
        %v2530 = vld [vmem:[#allocation8 + $0x150] sm:$0xff]
        %v2531 = vld [vmem:[#allocation8 + $0x158] sm:$0xff]
        %v2532 = vld [vmem:[#allocation8 + $0x160] sm:$0xff]
        %v2533 = vld [vmem:[#allocation8 + $0x168] sm:$0xff]
        %v2534 = vld [vmem:[#allocation8 + $0x170] sm:$0xff]
        %v2535 = vld [vmem:[#allocation8 + $0x178] sm:$0xff]
        %v2536 = vld [vmem:[#allocation8 + $0x180] sm:$0xff]
        %v2537 = vld [vmem:[#allocation8 + $0x188] sm:$0xff]
        %v2538 = vld [vmem:[#allocation8 + $0x190] sm:$0xff]
        %v2539 = vld [vmem:[#allocation8 + $0x198] sm:$0xff]
        %v2540 = vld [vmem:[#allocation8 + $0x1a0] sm:$0xff]
        %v2541 = vld [vmem:[#allocation8 + $0x1a8] sm:$0xff]
        %v2542 = vld [vmem:[#allocation8 + $0x1b0] sm:$0xff]
        %v2543 = vld [vmem:[#allocation8 + $0x1b8] sm:$0xff]
        %v2544 = vld [vmem:[#allocation8 + $0x1c0] sm:$0xff]
        %v2545 = vld [vmem:[#allocation8 + $0x1c8] sm:$0xff]
        %v2546 = vld [vmem:[#allocation8 + $0x1d0] sm:$0xff]
        %v2547 = vld [vmem:[#allocation8 + $0x1d8] sm:$0xff]
        %v2548 = vld [vmem:[#allocation8 + $0x1e0] sm:$0xff]
        %v2549 = vld [vmem:[#allocation8 + $0x1e8] sm:$0xff]
        %v2550 = vld [vmem:[#allocation8 + $0x1f0] sm:$0xff]
        %v2551 = vld [vmem:[#allocation8 + $0x1f8] sm:$0xff]
        %v2552 = vld [vmem:[#allocation8 + $0x200] sm:$0xff]
        %v2553 = vld [vmem:[#allocation8 + $0x208] sm:$0xff]
        %v2554 = vld [vmem:[#allocation8 + $0x210] sm:$0xff]
        %v2555 = vld [vmem:[#allocation8 + $0x218] sm:$0xff]
        %v2556 = vld [vmem:[#allocation8 + $0x220] sm:$0xff]
        %v2557 = vld [vmem:[#allocation8 + $0x228] sm:$0xff]
        %v2558 = vld [vmem:[#allocation8 + $0x230] sm:$0xff]
        %v2559 = vld [vmem:[#allocation8 + $0x238] sm:$0xff]
        %v2560 = vld [vmem:[#allocation8 + $0x240] sm:$0xff]
        %v2561 = vld [vmem:[#allocation8 + $0x248] sm:$0xff]
        %v2562 = vld [vmem:[#allocation8 + $0x250] sm:$0xff]
        %v2563 = vld [vmem:[#allocation8 + $0x258] sm:$0xff]
        %v2564 = vld [vmem:[#allocation8 + $0x260] sm:$0xff]
        %v2565 = vld [vmem:[#allocation8 + $0x268] sm:$0xff]
        %v2566 = vld [vmem:[#allocation8 + $0x270] sm:$0xff]
        %v2567 = vld [vmem:[#allocation8 + $0x278] sm:$0xff]
        %v2568 = vld [vmem:[#allocation8 + $0x280] sm:$0xff]
        %v2569 = vld [vmem:[#allocation8 + $0x288] sm:$0xff]
        %v2570 = vld [vmem:[#allocation8 + $0x290] sm:$0xff]
        %v2571 = vld [vmem:[#allocation8 + $0x298] sm:$0xff]
        %v2572 = vld [vmem:[#allocation8 + $0x2a0] sm:$0xff]
        %v2573 = vld [vmem:[#allocation8 + $0x2a8] sm:$0xff]
        %v2574 = vld [vmem:[#allocation8 + $0x2b0] sm:$0xff]
        %v2575 = vld [vmem:[#allocation8 + $0x2b8] sm:$0xff]
        %v2576 = vld [vmem:[#allocation8 + $0x2c0] sm:$0xff]
        %v2577 = vld [vmem:[#allocation8 + $0x2c8] sm:$0xff]
        %v2578 = vld [vmem:[#allocation8 + $0x2d0] sm:$0xff]
        %v2579 = vld [vmem:[#allocation8 + $0x2d8] sm:$0xff]
        %v2580 = vld [vmem:[#allocation8 + $0x2e0] sm:$0xff]
        %v2581 = vld [vmem:[#allocation8 + $0x2e8] sm:$0xff]
        %v2582 = vld [vmem:[#allocation8 + $0x2f0] sm:$0xff]
        %v2583 = vld [vmem:[#allocation8 + $0x2f8] sm:$0xff]
        %v2584 = vld [vmem:[%s11] sm:$0x3]
        %v2586 = vlaneseq
        %v2587 = vshrl.u32 %v2586, 7
        %v2588 = vsub.s32 0, %v2587
        %v2589 = vrot.slane %v2584, %v2588
        %v2590 = vlaneseq
        %v2591 = vshrl.u32 %v2590, 7
        %v2592 = vsub.s32 1, %v2591
        %v2593 = vrot.slane %v2584, %v2592
        %v2692 = vunpack.c.l.b16 %v2488
        %v2693 = vunpack.c.h.b16 %v2488
        %v2694 = vunpack.c.l.b16 %v2489
        %v2695 = vunpack.c.h.b16 %v2489
        %v2696 = vunpack.c.l.b16 %v2490
        %v2697 = vunpack.c.h.b16 %v2490
        %v2698 = vunpack.c.l.b16 %v2491
        %v2699 = vunpack.c.h.b16 %v2491
        %v2700 = vunpack.c.l.b16 %v2492
        %v2701 = vunpack.c.h.b16 %v2492
        %v2702 = vunpack.c.l.b16 %v2493
        %v2703 = vunpack.c.h.b16 %v2493
        %v2704 = vunpack.c.l.b16 %v2494
        %v2705 = vunpack.c.h.b16 %v2494
        %v2706 = vunpack.c.l.b16 %v2495
        %v2707 = vunpack.c.h.b16 %v2495
        %v2708 = vunpack.c.l.b16 %v2496
        %v2709 = vunpack.c.h.b16 %v2496
        %v2710 = vunpack.c.l.b16 %v2497
        %v2711 = vunpack.c.h.b16 %v2497
        %v2712 = vunpack.c.l.b16 %v2498
        %v2713 = vunpack.c.h.b16 %v2498
        %v2714 = vunpack.c.l.b16 %v2499
        %v2715 = vunpack.c.h.b16 %v2499
        %v2716 = vunpack.c.l.b16 %v2500
        %v2717 = vunpack.c.h.b16 %v2500
        %v2718 = vunpack.c.l.b16 %v2501
        %v2719 = vunpack.c.h.b16 %v2501
        %v2720 = vunpack.c.l.b16 %v2502
        %v2721 = vunpack.c.h.b16 %v2502
        %v2722 = vunpack.c.l.b16 %v2503
        %v2723 = vunpack.c.h.b16 %v2503
        %v2724 = vunpack.c.l.b16 %v2504
        %v2725 = vunpack.c.h.b16 %v2504
        %v2726 = vunpack.c.l.b16 %v2505
        %v2727 = vunpack.c.h.b16 %v2505
        %v2728 = vunpack.c.l.b16 %v2506
        %v2729 = vunpack.c.h.b16 %v2506
        %v2730 = vunpack.c.l.b16 %v2507
        %v2731 = vunpack.c.h.b16 %v2507
        %v2732 = vunpack.c.l.b16 %v2508
        %v2733 = vunpack.c.h.b16 %v2508
        %v2734 = vunpack.c.l.b16 %v2509
        %v2735 = vunpack.c.h.b16 %v2509
        %v2736 = vunpack.c.l.b16 %v2510
        %v2737 = vunpack.c.h.b16 %v2510
        %v2738 = vunpack.c.l.b16 %v2511
        %v2739 = vunpack.c.h.b16 %v2511
        %v2740 = vunpack.c.l.b16 %v2512
        %v2741 = vunpack.c.h.b16 %v2512
        %v2742 = vunpack.c.l.b16 %v2513
        %v2743 = vunpack.c.h.b16 %v2513
        %v2744 = vunpack.c.l.b16 %v2514
        %v2745 = vunpack.c.h.b16 %v2514
        %v2746 = vunpack.c.l.b16 %v2515
        %v2747 = vunpack.c.h.b16 %v2515
        %v2748 = vunpack.c.l.b16 %v2516
        %v2749 = vunpack.c.h.b16 %v2516
        %v2750 = vunpack.c.l.b16 %v2517
        %v2751 = vunpack.c.h.b16 %v2517
        %v2752 = vunpack.c.l.b16 %v2518
        %v2753 = vunpack.c.h.b16 %v2518
        %v2754 = vunpack.c.l.b16 %v2519
        %v2755 = vunpack.c.h.b16 %v2519
        %v2756 = vunpack.c.l.b16 %v2520
        %v2757 = vunpack.c.h.b16 %v2520
        %v2758 = vunpack.c.l.b16 %v2521
        %v2759 = vunpack.c.h.b16 %v2521
        %v2760 = vunpack.c.l.b16 %v2522
        %v2761 = vunpack.c.h.b16 %v2522
        %v2762 = vunpack.c.l.b16 %v2523
        %v2763 = vunpack.c.h.b16 %v2523
        %v2764 = vunpack.c.l.b16 %v2524
        %v2765 = vunpack.c.h.b16 %v2524
        %v2766 = vunpack.c.l.b16 %v2525
        %v2767 = vunpack.c.h.b16 %v2525
        %v2768 = vunpack.c.l.b16 %v2526
        %v2769 = vunpack.c.h.b16 %v2526
        %v2770 = vunpack.c.l.b16 %v2527
        %v2771 = vunpack.c.h.b16 %v2527
        %v2772 = vunpack.c.l.b16 %v2528
        %v2773 = vunpack.c.h.b16 %v2528
        %v2774 = vunpack.c.l.b16 %v2529
        %v2775 = vunpack.c.h.b16 %v2529
        %v2776 = vunpack.c.l.b16 %v2530
        %v2777 = vunpack.c.h.b16 %v2530
        %v2778 = vunpack.c.l.b16 %v2531
        %v2779 = vunpack.c.h.b16 %v2531
        %v2780 = vunpack.c.l.b16 %v2532
        %v2781 = vunpack.c.h.b16 %v2532
        %v2782 = vunpack.c.l.b16 %v2533
        %v2783 = vunpack.c.h.b16 %v2533
        %v2784 = vunpack.c.l.b16 %v2534
        %v2785 = vunpack.c.h.b16 %v2534
        %v2786 = vunpack.c.l.b16 %v2535
        %v2787 = vunpack.c.h.b16 %v2535
        %v2788 = vunpack.c.l.b16 %v2536
        %v2789 = vunpack.c.h.b16 %v2536
        %v2790 = vunpack.c.l.b16 %v2537
        %v2791 = vunpack.c.h.b16 %v2537
        %v2792 = vunpack.c.l.b16 %v2538
        %v2793 = vunpack.c.h.b16 %v2538
        %v2794 = vunpack.c.l.b16 %v2539
        %v2795 = vunpack.c.h.b16 %v2539
        %v2796 = vunpack.c.l.b16 %v2540
        %v2797 = vunpack.c.h.b16 %v2540
        %v2798 = vunpack.c.l.b16 %v2541
        %v2799 = vunpack.c.h.b16 %v2541
        %v2800 = vunpack.c.l.b16 %v2542
        %v2801 = vunpack.c.h.b16 %v2542
        %v2802 = vunpack.c.l.b16 %v2543
        %v2803 = vunpack.c.h.b16 %v2543
        %v2804 = vunpack.c.l.b16 %v2544
        %v2805 = vunpack.c.h.b16 %v2544
        %v2806 = vunpack.c.l.b16 %v2545
        %v2807 = vunpack.c.h.b16 %v2545
        %v2808 = vunpack.c.l.b16 %v2546
        %v2809 = vunpack.c.h.b16 %v2546
        %v2810 = vunpack.c.l.b16 %v2547
        %v2811 = vunpack.c.h.b16 %v2547
        %v2812 = vunpack.c.l.b16 %v2548
        %v2813 = vunpack.c.h.b16 %v2548
        %v2814 = vunpack.c.l.b16 %v2549
        %v2815 = vunpack.c.h.b16 %v2549
        %v2816 = vunpack.c.l.b16 %v2550
        %v2817 = vunpack.c.h.b16 %v2550
        %v2818 = vunpack.c.l.b16 %v2551
        %v2819 = vunpack.c.h.b16 %v2551
        %v2820 = vunpack.c.l.b16 %v2552
        %v2821 = vunpack.c.h.b16 %v2552
        %v2822 = vunpack.c.l.b16 %v2553
        %v2823 = vunpack.c.h.b16 %v2553
        %v2824 = vunpack.c.l.b16 %v2554
        %v2825 = vunpack.c.h.b16 %v2554
        %v2826 = vunpack.c.l.b16 %v2555
        %v2827 = vunpack.c.h.b16 %v2555
        %v2828 = vunpack.c.l.b16 %v2556
        %v2829 = vunpack.c.h.b16 %v2556
        %v2830 = vunpack.c.l.b16 %v2557
        %v2831 = vunpack.c.h.b16 %v2557
        %v2832 = vunpack.c.l.b16 %v2558
        %v2833 = vunpack.c.h.b16 %v2558
        %v2834 = vunpack.c.l.b16 %v2559
        %v2835 = vunpack.c.h.b16 %v2559
        %v2836 = vunpack.c.l.b16 %v2560
        %v2837 = vunpack.c.h.b16 %v2560
        %v2838 = vunpack.c.l.b16 %v2561
        %v2839 = vunpack.c.h.b16 %v2561
        %v2840 = vunpack.c.l.b16 %v2562
        %v2841 = vunpack.c.h.b16 %v2562
        %v2842 = vunpack.c.l.b16 %v2563
        %v2843 = vunpack.c.h.b16 %v2563
        %v2844 = vunpack.c.l.b16 %v2564
        %v2845 = vunpack.c.h.b16 %v2564
        %v2846 = vunpack.c.l.b16 %v2565
        %v2847 = vunpack.c.h.b16 %v2565
        %v2848 = vunpack.c.l.b16 %v2566
        %v2849 = vunpack.c.h.b16 %v2566
        %v2850 = vunpack.c.l.b16 %v2567
        %v2851 = vunpack.c.h.b16 %v2567
        %v2852 = vunpack.c.l.b16 %v2568
        %v2853 = vunpack.c.h.b16 %v2568
        %v2854 = vunpack.c.l.b16 %v2569
        %v2855 = vunpack.c.h.b16 %v2569
        %v2856 = vunpack.c.l.b16 %v2570
        %v2857 = vunpack.c.h.b16 %v2570
        %v2858 = vunpack.c.l.b16 %v2571
        %v2859 = vunpack.c.h.b16 %v2571
        %v2860 = vunpack.c.l.b16 %v2572
        %v2861 = vunpack.c.h.b16 %v2572
        %v2862 = vunpack.c.l.b16 %v2573
        %v2863 = vunpack.c.h.b16 %v2573
        %v2864 = vunpack.c.l.b16 %v2574
        %v2865 = vunpack.c.h.b16 %v2574
        %v2866 = vunpack.c.l.b16 %v2575
        %v2867 = vunpack.c.h.b16 %v2575
        %v2868 = vunpack.c.l.b16 %v2576
        %v2869 = vunpack.c.h.b16 %v2576
        %v2870 = vunpack.c.l.b16 %v2577
        %v2871 = vunpack.c.h.b16 %v2577
        %v2872 = vunpack.c.l.b16 %v2578
        %v2873 = vunpack.c.h.b16 %v2578
        %v2874 = vunpack.c.l.b16 %v2579
        %v2875 = vunpack.c.h.b16 %v2579
        %v2876 = vunpack.c.l.b16 %v2580
        %v2877 = vunpack.c.h.b16 %v2580
        %v2878 = vunpack.c.l.b16 %v2581
        %v2879 = vunpack.c.h.b16 %v2581
        %v2880 = vunpack.c.l.b16 %v2582
        %v2881 = vunpack.c.h.b16 %v2582
        %v2882 = vunpack.c.l.b16 %v2583
        %v2883 = vunpack.c.h.b16 %v2583
        %v2884 = vpack.c.b16 %v2694, %v2692
        %v2885 = vpack.c.b16 %v2695, %v2693
        %v2886 = vpack.c.b16 %v2698, %v2696
        %v2887 = vpack.c.b16 %v2699, %v2697
        %v2888 = vpack.c.b16 %v2702, %v2700
        %v2889 = vpack.c.b16 %v2703, %v2701
        %v2890 = vpack.c.b16 %v2706, %v2704
        %v2891 = vpack.c.b16 %v2707, %v2705
        %v2892 = vpack.c.b16 %v2710, %v2708
        %v2893 = vpack.c.b16 %v2711, %v2709
        %v2894 = vpack.c.b16 %v2714, %v2712
        %v2895 = vpack.c.b16 %v2715, %v2713
        %v2896 = vpack.c.b16 %v2718, %v2716
        %v2897 = vpack.c.b16 %v2719, %v2717
        %v2898 = vpack.c.b16 %v2722, %v2720
        %v2899 = vpack.c.b16 %v2723, %v2721
        %v2900 = vpack.c.b16 %v2726, %v2724
        %v2901 = vpack.c.b16 %v2727, %v2725
        %v2902 = vpack.c.b16 %v2730, %v2728
        %v2903 = vpack.c.b16 %v2731, %v2729
        %v2904 = vpack.c.b16 %v2734, %v2732
        %v2905 = vpack.c.b16 %v2735, %v2733
        %v2906 = vpack.c.b16 %v2738, %v2736
        %v2907 = vpack.c.b16 %v2739, %v2737
        %v2908 = vpack.c.b16 %v2742, %v2740
        %v2909 = vpack.c.b16 %v2743, %v2741
        %v2910 = vpack.c.b16 %v2746, %v2744
        %v2911 = vpack.c.b16 %v2747, %v2745
        %v2912 = vpack.c.b16 %v2750, %v2748
        %v2913 = vpack.c.b16 %v2751, %v2749
        %v2914 = vpack.c.b16 %v2754, %v2752
        %v2915 = vpack.c.b16 %v2755, %v2753
        %v2916 = vpack.c.b16 %v2758, %v2756
        %v2917 = vpack.c.b16 %v2759, %v2757
        %v2918 = vpack.c.b16 %v2762, %v2760
        %v2919 = vpack.c.b16 %v2763, %v2761
        %v2920 = vpack.c.b16 %v2766, %v2764
        %v2921 = vpack.c.b16 %v2767, %v2765
        %v2922 = vpack.c.b16 %v2770, %v2768
        %v2923 = vpack.c.b16 %v2771, %v2769
        %v2924 = vpack.c.b16 %v2774, %v2772
        %v2925 = vpack.c.b16 %v2775, %v2773
        %v2926 = vpack.c.b16 %v2778, %v2776
        %v2927 = vpack.c.b16 %v2779, %v2777
        %v2928 = vpack.c.b16 %v2782, %v2780
        %v2929 = vpack.c.b16 %v2783, %v2781
        %v2930 = vpack.c.b16 %v2786, %v2784
        %v2931 = vpack.c.b16 %v2787, %v2785
        %v2932 = vpack.c.b16 %v2790, %v2788
        %v2933 = vpack.c.b16 %v2791, %v2789
        %v2934 = vpack.c.b16 %v2794, %v2792
        %v2935 = vpack.c.b16 %v2795, %v2793
        %v2936 = vpack.c.b16 %v2798, %v2796
        %v2937 = vpack.c.b16 %v2799, %v2797
        %v2938 = vpack.c.b16 %v2802, %v2800
        %v2939 = vpack.c.b16 %v2803, %v2801
        %v2940 = vpack.c.b16 %v2806, %v2804
        %v2941 = vpack.c.b16 %v2807, %v2805
        %v2942 = vpack.c.b16 %v2810, %v2808
        %v2943 = vpack.c.b16 %v2811, %v2809
        %v2944 = vpack.c.b16 %v2814, %v2812
        %v2945 = vpack.c.b16 %v2815, %v2813
        %v2946 = vpack.c.b16 %v2818, %v2816
        %v2947 = vpack.c.b16 %v2819, %v2817
        %v2948 = vpack.c.b16 %v2822, %v2820
        %v2949 = vpack.c.b16 %v2823, %v2821
        %v2950 = vpack.c.b16 %v2826, %v2824
        %v2951 = vpack.c.b16 %v2827, %v2825
        %v2952 = vpack.c.b16 %v2830, %v2828
        %v2953 = vpack.c.b16 %v2831, %v2829
        %v2954 = vpack.c.b16 %v2834, %v2832
        %v2955 = vpack.c.b16 %v2835, %v2833
        %v2956 = vpack.c.b16 %v2838, %v2836
        %v2957 = vpack.c.b16 %v2839, %v2837
        %v2958 = vpack.c.b16 %v2842, %v2840
        %v2959 = vpack.c.b16 %v2843, %v2841
        %v2960 = vpack.c.b16 %v2846, %v2844
        %v2961 = vpack.c.b16 %v2847, %v2845
        %v2962 = vpack.c.b16 %v2850, %v2848
        %v2963 = vpack.c.b16 %v2851, %v2849
        %v2964 = vpack.c.b16 %v2854, %v2852
        %v2965 = vpack.c.b16 %v2855, %v2853
        %v2966 = vpack.c.b16 %v2858, %v2856
        %v2967 = vpack.c.b16 %v2859, %v2857
        %v2968 = vpack.c.b16 %v2862, %v2860
        %v2969 = vpack.c.b16 %v2863, %v2861
        %v2970 = vpack.c.b16 %v2866, %v2864
        %v2971 = vpack.c.b16 %v2867, %v2865
        %v2972 = vpack.c.b16 %v2870, %v2868
        %v2973 = vpack.c.b16 %v2871, %v2869
        %v2974 = vpack.c.b16 %v2874, %v2872
        %v2975 = vpack.c.b16 %v2875, %v2873
        %v2976 = vpack.c.b16 %v2878, %v2876
        %v2977 = vpack.c.b16 %v2879, %v2877
        %v2978 = vpack.c.b16 %v2882, %v2880
        %v2979 = vpack.c.b16 %v2883, %v2881
        %3076 = vmatprep.subr.bf16.mxu0 %v2899
        %3077 = vmatpush1.bf16.msra.mxu0 %v2898
        %3078 = vmatprep.subr.bf16.mxu0 %v2897
        %3079 = vmatpush1.bf16.msra.mxu0 %v2896
        %3080 = vmatprep.subr.bf16.mxu0 %v2895
        %3081 = vmatpush1.bf16.msra.mxu0 %v2894
        %3082 = vmatprep.subr.bf16.mxu0 %v2893
        %3083 = vmatpush1.bf16.msra.mxu0 %v2892
        %3084 = vmatprep.subr.bf16.mxu0 %v2891
        %3085 = vmatpush1.bf16.msra.mxu0 %v2890
        %3086 = vmatprep.subr.bf16.mxu0 %v2889
        %3087 = vmatpush1.bf16.msra.mxu0 %v2888
        %3088 = vmatprep.subr.bf16.mxu0 %v2887
        %3089 = vmatpush1.bf16.msra.mxu0 %v2886
        %3090 = vmatprep.subr.bf16.mxu0 %v2885
        %3091 = vmatpush1.bf16.msra.mxu0 %v2884
        %3092 = vmatprep.subr.bf16.mxu0 %v2915
        %3093 = vmatpush2.bf16.msra.mxu0 %v2914
        %3094 = vmatprep.subr.bf16.mxu0 %v2913
        %3095 = vmatpush2.bf16.msra.mxu0 %v2912
        %3096 = vmatprep.subr.bf16.mxu0 %v2911
        %3097 = vmatpush2.bf16.msra.mxu0 %v2910
        %3098 = vmatprep.subr.bf16.mxu0 %v2909
        %3099 = vmatpush2.bf16.msra.mxu0 %v2908
        %3100 = vmatprep.subr.bf16.mxu0 %v2907
        %3101 = vmatpush2.bf16.msra.mxu0 %v2906
        %3102 = vmatprep.subr.bf16.mxu0 %v2905
        %3103 = vmatpush2.bf16.msra.mxu0 %v2904
        %3104 = vmatprep.subr.bf16.mxu0 %v2903
        %3105 = vmatpush2.bf16.msra.mxu0 %v2902
        %3106 = vmatprep.subr.bf16.mxu0 %v2901
        %3107 = vmatpush2.bf16.msra.mxu0 %v2900
        %3108 = vmatprep.mubr.bf16.mxu0 %v2483
        %3109 = vmatmul.mubr.bf16.gmra.mxu0 %v2482
        %v3110 = vpop.f32.mrf.mxu0
        %v3111 = vadd.f32 %v2589, %v3110
        %v3112 = vpop.f32.mrf.mxu0
        %v3113 = vadd.f32 %v2593, %v3112
        %v3114 = vpop.f32.mrf.mxu0
        %v3115 = vpop.f32.mrf.mxu0
        %3116 = vdwg.mxu0
        %3117 = vmatprep.subr.bf16.mxu0 %v2931
        %3118 = vmatpush1.bf16.msra.mxu0 %v2930
        %3119 = vmatprep.subr.bf16.mxu0 %v2929
        %3120 = vmatpush1.bf16.msra.mxu0 %v2928
        %3121 = vmatprep.subr.bf16.mxu0 %v2927
        %3122 = vmatpush1.bf16.msra.mxu0 %v2926
        %3123 = vmatprep.subr.bf16.mxu0 %v2925
        %3124 = vmatpush1.bf16.msra.mxu0 %v2924
        %3125 = vmatprep.subr.bf16.mxu0 %v2923
        %3126 = vmatpush1.bf16.msra.mxu0 %v2922
        %3127 = vmatprep.subr.bf16.mxu0 %v2921
        %3128 = vmatpush1.bf16.msra.mxu0 %v2920
        %3129 = vmatprep.subr.bf16.mxu0 %v2919
        %3130 = vmatpush1.bf16.msra.mxu0 %v2918
        %3131 = vmatprep.subr.bf16.mxu0 %v2917
        %3132 = vmatpush1.bf16.msra.mxu0 %v2916
        %3133 = vmatprep.subr.bf16.mxu0 %v2947
        %3134 = vmatpush2.bf16.msra.mxu0 %v2946
        %3135 = vmatprep.subr.bf16.mxu0 %v2945
        %3136 = vmatpush2.bf16.msra.mxu0 %v2944
        %3137 = vmatprep.subr.bf16.mxu0 %v2943
        %3138 = vmatpush2.bf16.msra.mxu0 %v2942
        %3139 = vmatprep.subr.bf16.mxu0 %v2941
        %3140 = vmatpush2.bf16.msra.mxu0 %v2940
        %3141 = vmatprep.subr.bf16.mxu0 %v2939
        %3142 = vmatpush2.bf16.msra.mxu0 %v2938
        %3143 = vmatprep.subr.bf16.mxu0 %v2937
        %3144 = vmatpush2.bf16.msra.mxu0 %v2936
        %3145 = vmatprep.subr.bf16.mxu0 %v2935
        %3146 = vmatpush2.bf16.msra.mxu0 %v2934
        %3147 = vmatprep.subr.bf16.mxu0 %v2933
        %3148 = vmatpush2.bf16.msra.mxu0 %v2932
        %3149 = vmatprep.mubr.bf16.mxu0 %v2485
        %3150 = vmatmul.mubr.bf16.gmra.mxu0 %v2484
        %v3151 = vpop.f32.mrf.mxu0
        %v3152 = vadd.f32 %v3111, %v3151
        %v3153 = vpop.f32.mrf.mxu0
        %v3154 = vadd.f32 %v3113, %v3153
        %v3155 = vpop.f32.mrf.mxu0
        %v3156 = vpop.f32.mrf.mxu0
        %3157 = vdwg.mxu0
        %3158 = vmatprep.subr.bf16.mxu0 %v2963
        %3159 = vmatpush1.bf16.msra.mxu0 %v2962
        %3160 = vmatprep.subr.bf16.mxu0 %v2961
        %3161 = vmatpush1.bf16.msra.mxu0 %v2960
        %3162 = vmatprep.subr.bf16.mxu0 %v2959
        %3163 = vmatpush1.bf16.msra.mxu0 %v2958
        %3164 = vmatprep.subr.bf16.mxu0 %v2957
        %3165 = vmatpush1.bf16.msra.mxu0 %v2956
        %3166 = vmatprep.subr.bf16.mxu0 %v2955
        %3167 = vmatpush1.bf16.msra.mxu0 %v2954
        %3168 = vmatprep.subr.bf16.mxu0 %v2953
        %3169 = vmatpush1.bf16.msra.mxu0 %v2952
        %3170 = vmatprep.subr.bf16.mxu0 %v2951
        %3171 = vmatpush1.bf16.msra.mxu0 %v2950
        %3172 = vmatprep.subr.bf16.mxu0 %v2949
        %3173 = vmatpush1.bf16.msra.mxu0 %v2948
        %3174 = vmatprep.subr.bf16.mxu0 %v2979
        %3175 = vmatpush2.bf16.msra.mxu0 %v2978
        %3176 = vmatprep.subr.bf16.mxu0 %v2977
        %3177 = vmatpush2.bf16.msra.mxu0 %v2976
        %3178 = vmatprep.subr.bf16.mxu0 %v2975
        %3179 = vmatpush2.bf16.msra.mxu0 %v2974
        %3180 = vmatprep.subr.bf16.mxu0 %v2973
        %3181 = vmatpush2.bf16.msra.mxu0 %v2972
        %3182 = vmatprep.subr.bf16.mxu0 %v2971
        %3183 = vmatpush2.bf16.msra.mxu0 %v2970
        %3184 = vmatprep.subr.bf16.mxu0 %v2969
        %3185 = vmatpush2.bf16.msra.mxu0 %v2968
        %3186 = vmatprep.subr.bf16.mxu0 %v2967
        %3187 = vmatpush2.bf16.msra.mxu0 %v2966
        %3188 = vmatprep.subr.bf16.mxu0 %v2965
        %3189 = vmatpush2.bf16.msra.mxu0 %v2964
        %3190 = vmatprep.mubr.bf16.mxu0 %v2487
        %3191 = vmatmul.mubr.bf16.gmra.mxu0 %v2486
        %v3192 = vpop.f32.mrf.mxu0
        %v3193 = vadd.f32 %v3152, %v3192
        %v3194 = vpop.f32.mrf.mxu0
        %v3195 = vadd.f32 %v3154, %v3194
        %v3196 = vpop.f32.mrf.mxu0
        %v3197 = vpop.f32.mrf.mxu0
        %3198 = vdwg.mxu0
        %v3199 = vadd.f32 %v3193, %v1739
        %v3200 = vadd.f32 %v3195, %v1740
        %v3201 = vld [vmem:[%s12] sm:$0x3]
        %v3202 = vld [vmem:[%s13] sm:$0x3]
        %v3203 = vadd.f32 %v3199, %v3200
        %3204 = vadd.xlane.f32.xlu0 %v3203
        %v3205 = vpop.xlane.xlu0 %3204
        %v3206 = vmul.f32 %v3205, %v1694
        %v3207 = vsub.f32 %v3199, %v3206
        %v3208 = vsub.f32 %v3200, %v3206
        %v3209 = vmul.f32 %v3207, %v3207
        %v3210 = vmul.f32 %v3208, %v3208
        %v3211 = vadd.f32 %v3209, %v3210
        %3212 = vadd.xlane.f32.xlu0 %v3211
        %v3213 = vpop.xlane.xlu0 %3212
        %v3214 = vmul.f32 %v3213, %v1694
        %v3215 = vadd.f32 %v3214, 1e-05
        %v3216 = vrsqrt.pop %v3215
        %v3217 = vmul.f32 %v3207, %v3216
        %v3218 = vmul.f32 %v3208, %v3216
        %v3220 = vlaneseq
        %v3221 = vshrl.u32 %v3220, 7
        %v3222 = vsub.s32 0, %v3221
        %v3223 = vrot.slane %v3201, %v3222
        %v3224 = vlaneseq
        %v3225 = vshrl.u32 %v3224, 7
        %v3226 = vsub.s32 1, %v3225
        %v3227 = vrot.slane %v3201, %v3226
        %v3230 = vmul.f32 %v3217, %v3223
        %v3231 = vmul.f32 %v3218, %v3227
        %v3233 = vlaneseq
        %v3234 = vshrl.u32 %v3233, 7
        %v3235 = vsub.s32 0, %v3234
        %v3236 = vrot.slane %v3202, %v3235
        %v3237 = vlaneseq
        %v3238 = vshrl.u32 %v3237, 7
        %v3239 = vsub.s32 1, %v3238
        %v3240 = vrot.slane %v3202, %v3239
        %v3243 = vadd.f32 %v3230, %v3236
        %v3244 = vadd.f32 %v3231, %v3240
        %v3245 = vmul.f32 %v3243, %v1738
        %v3246 = vmul.f32 %v3244, %v1738
        %3247 = vst [vmem:[%s491] sm:$0xff] %v3245
        %3248 = vst [vmem:[%s491 + $0x8] sm:$0xff] %v3246
        %p3249 = scmp.lt.s32.totalorder %s33, 1
        %s3250 = scalar_select %p3249, %s33, 1
        %s3251 = smul.addr %s3250, 2
        %s3252 = smul.addr %s3251, 8
        %s3253 = scalar_lea.vmem %s14, %s3252
        // Predicated region
        $region85: #{stylespeech2_forward.6} parent=71 // pred_check
          %p3254 = pneg %p329
        $region86: #{stylespeech2_forward.6} parent=71 // pred_check_branch
          %3256 = sbr.rel (%p3254) target = $region88
        $region87: #{stylespeech2_forward.6} parent=71 // pred_region
          _
        $region88: #{stylespeech2_forward.6} parent=71 // pred_fallthru
          _
      $region72: #{stylespeech2_forward.6} parent=5 // pred_fallthru
        _
      %p3257 = scmp.le.s32.totalorder 2, %s28
      // Predicated region
      $region89: #{stylespeech2_forward.6} parent=5 // pred_check
        %p3258 = pneg %p3257
      $region90: #{stylespeech2_forward.6} parent=5 // pred_check_branch
        %3260 = sbr.rel (%p3258) target = $region92
      $region91: #{stylespeech2_forward.6} parent=5 // pred_region
        %s3261 = ssub.s32 %s28, 2
        // Predicated region
        $region93: #{stylespeech2_forward.6} parent=91 // pred_check
          %p3262 = pneg %p335
        $region94: #{stylespeech2_forward.6} parent=91 // pred_check_branch
          %3264 = sbr.rel (%p3262) target = $region96
        $region95: #{stylespeech2_forward.6} parent=91 // pred_region
          %p3265 = scmp.lt.s32.totalorder %s34, 1
          %s3266 = scalar_select %p3265, %s34, 1
          %s3267 = smul.addr %s3266, 2
          %s3268 = smul.addr %s3267, 8
          %s3269 = scalar_lea.vmem %s14, %s3268
        $region96: #{stylespeech2_forward.6} parent=91 // pred_fallthru
          _
      $region92: #{stylespeech2_forward.6} parent=5 // pred_fallthru
        _
    $region6: #{stylespeech2_forward.6} parent=1 // loop_footer
      %s32 = sadd.s32 1, %s28
    $region7: #{stylespeech2_forward.6} parent=1 // loop_footer_branch
      %27 = sbr.rel target = $region3
    $region8: #{stylespeech2_forward.6} parent=1 // loop_exit
      _
    %3270 = vsyncpa [#allocation5], 1
    %s3271 = scalar_lea.sflag [#allocation5], 1
    %3272 = vsyncpa %s3271, 1
    %3273 = vsyncpa [#allocation7], 1

// kernel: stylespeech2_forward.7
$region0: #{stylespeech2_forward.7}
  #allocation0 [shape = 'u32[]', space=smem, size = 0x4, offset = 0x4, fixed_abs, tag = 'smem constant byte address 0x4 - core index']
  #allocation1 [shape = 'u32[144,128]{1,0:T(1,128)}', space=vmem, size = 0x12000, scoped, tag = 'internal scratch']
  #allocation2 [shape = 's32[1]{0}', space=sflag, size = 0x4, scoped, tag = 'scoped memory for stylespeech2_forward.7']
  #allocation3 [shape = 'u8[512]{0}', space=smem, size = 0x200, scoped, tag = 'prefetched SMEM operand 0']
  %s0 = inlined_call_operand.vmem [shape: s32[2], index: 0, kind: input, shape index: {}]
  %s1 = inlined_call_operand.vmem [shape: f32[2,8,256], index: 1, kind: input, shape index: {}]
  %s2 = inlined_call_operand.vmem [shape: bf16[256,768], index: 2, kind: input, shape index: {}]
  %s3 = inlined_call_operand.vmem [shape: f32[1,768], index: 3, kind: input, shape index: {}]
  %s4 = inlined_call_operand.vmem [shape: bf16[256,256], index: 4, kind: input, shape index: {}]
  %s5 = inlined_call_operand.vmem [shape: f32[1,256], index: 5, kind: input, shape index: {}]
  %s6 = inlined_call_operand.vmem [shape: f32[1,256], index: 6, kind: input, shape index: {}]
  %s7 = inlined_call_operand.vmem [shape: f32[1,256], index: 7, kind: input, shape index: {}]
  %s8 = inlined_call_operand.vmem [shape: bf16[768,256], index: 8, kind: input, shape index: {}]
  %s9 = inlined_call_operand.vmem [shape: f32[1,256], index: 9, kind: input, shape index: {}]
  %s10 = inlined_call_operand.vmem [shape: bf16[768,256], index: 10, kind: input, shape index: {}]
  %s11 = inlined_call_operand.vmem [shape: f32[1,256], index: 11, kind: input, shape index: {}]
  %s12 = inlined_call_operand.vmem [shape: f32[1,256], index: 12, kind: input, shape index: {}]
  %s13 = inlined_call_operand.vmem [shape: f32[1,256], index: 13, kind: input, shape index: {}]
  %s14 = inlined_call_operand.vmem [shape: f32[2,8,256], index: 14, kind: output, shape index: {}]
  %s15 = sld [smem:[#allocation0]]
  $region85: #{stylespeech2_forward.7} parent=0
    _
  %s17 = ssub.s32 1, %s15
  %s18 = scalar_select 0, %s17, %s15
  %s19 = sshll.u32 %s0, 4
  %s20 = int_to_ptr.vmem [resolvable:$true] %s19
  %22 = dma.vmem_to_smem %s20, 16, [#allocation3], [#allocation2]
  %23 = dma.done [#allocation2], 16
  %24 = sfence
  loop: start=0, step=1, limit=4
  $region2: #{stylespeech2_forward.7} parent=0 // loop_pre_header
    _
  $region3: #{stylespeech2_forward.7} parent=0 // loop_header
    %s26 = sphi 0, %s30
    %p27 = scmp.ge.s32.totalorder %s26, 4
    %s36 = sphi 0, %s38
    %s39 = sphi 0, %s36
    %s40 = sphi 0, %s39
    %s56 = sphi 0, %s40
    %s60 = sphi 0, %s60
    %s62 = sphi 0, %s60
    %s63 = sphi 0, %s62
    %s77 = sphi 0, %s63
    %s81 = sphi 0, %s81
    %s83 = sphi 0, %s81
    %s84 = sphi 0, %s83
    %s98 = sphi 0, %s84
    %s102 = sphi 0, %s102
    %s104 = sphi 0, %s102
    %s105 = sphi 0, %s104
    %s119 = sphi 0, %s105
    %s123 = sphi 0, %s123
    %s125 = sphi 0, %s123
    %s126 = sphi 0, %s125
    %s140 = sphi 0, %s126
    %s144 = sphi 0, %s144
    %s146 = sphi 0, %s144
    %s147 = sphi 0, %s146
    %s161 = sphi 0, %s147
    %s165 = sphi 0, %s165
    %s167 = sphi 0, %s165
    %s168 = sphi 0, %s167
    %s182 = sphi 0, %s168
    %s186 = sphi 0, %s186
    %s188 = sphi 0, %s186
    %s189 = sphi 0, %s188
    %s203 = sphi 0, %s189
    %s207 = sphi 0, %s207
    %s209 = sphi 0, %s207
    %s210 = sphi 0, %s209
    %s224 = sphi 0, %s210
    %s228 = sphi 0, %s228
    %s230 = sphi 0, %s228
    %s231 = sphi 0, %s230
    %s245 = sphi 0, %s231
    %s249 = sphi 0, %s249
    %s251 = sphi 0, %s249
    %s252 = sphi 0, %s251
    %s266 = sphi 0, %s252
    %s270 = sphi 0, %s270
    %s272 = sphi 0, %s270
    %s273 = sphi 0, %s272
    %s287 = sphi 0, %s273
    %s291 = sphi 0, %s291
    %s293 = sphi 0, %s291
    %s294 = sphi 0, %s293
    %s308 = sphi 0, %s294
    %s314 = sphi 0, %s316
    %s317 = sphi 0, %s314
    %s318 = sphi 0, %s317
    %s334 = sphi 0, %s318
  $region4: #{stylespeech2_forward.7} parent=0 // loop_header_branch
    %29 = sbr.rel (%p27) target = $region8
  $region5: #{stylespeech2_forward.7} parent=0 // loop_body
    %s31 = ssub.s32 %s26, 1
    %s32 = ssub.s32 %s26, 2
    %s33 = sadd.s32 %s26, 1
    %s34 = ssub.s32 %s26, %s33
    %p35 = scmp.eq.s32.totalorder %s34, 0
    %s37 = sadd.s32 %s36, 1
    %s38 = scalar_select %p35, %s36, %s37
    %p41 = pneg %p35
    %p42 = scmp.eq.s32.totalorder %s26, 1
    %p43 = por %p41, %p42
    %p44 = scmp.ne.s32.totalorder %s36, %s39
    %p45 = scmp.eq.s32.totalorder %s26, 0
    %p46 = por %p44, %p45
    %p47 = scmp.ne.s32.totalorder %s36, %s39
    %p48 = scmp.eq.s32.totalorder %s31, 1
    %p49 = por %p47, %p48
    %p50 = scmp.ne.s32.totalorder %s39, %s40
    %p51 = scmp.eq.s32.totalorder %s31, 0
    %p52 = por %p50, %p51
    %p53 = scmp.ne.s32.totalorder %s39, %s40
    %p54 = scmp.eq.s32.totalorder %s32, 1
    %p55 = por %p53, %p54
    %p57 = scmp.ne.s32.totalorder %s40, %s56
    %p58 = scmp.eq.s32.totalorder %s32, 0
    %p59 = por %p57, %p58
    %s61 = sadd.s32 %s60, 1
    %p64 = scmp.eq.s32.totalorder %s26, 1
    %p65 = scmp.ne.s32.totalorder %s60, %s62
    %p66 = scmp.eq.s32.totalorder %s26, 0
    %p67 = por %p65, %p66
    %p68 = scmp.ne.s32.totalorder %s60, %s62
    %p69 = scmp.eq.s32.totalorder %s31, 1
    %p70 = por %p68, %p69
    %p71 = scmp.ne.s32.totalorder %s62, %s63
    %p72 = scmp.eq.s32.totalorder %s31, 0
    %p73 = por %p71, %p72
    %p74 = scmp.ne.s32.totalorder %s62, %s63
    %p75 = scmp.eq.s32.totalorder %s32, 1
    %p76 = por %p74, %p75
    %p78 = scmp.ne.s32.totalorder %s63, %s77
    %p79 = scmp.eq.s32.totalorder %s32, 0
    %p80 = por %p78, %p79
    %s82 = sadd.s32 %s81, 1
    %p85 = scmp.eq.s32.totalorder %s26, 1
    %p86 = scmp.ne.s32.totalorder %s81, %s83
    %p87 = scmp.eq.s32.totalorder %s26, 0
    %p88 = por %p86, %p87
    %p89 = scmp.ne.s32.totalorder %s81, %s83
    %p90 = scmp.eq.s32.totalorder %s31, 1
    %p91 = por %p89, %p90
    %p92 = scmp.ne.s32.totalorder %s83, %s84
    %p93 = scmp.eq.s32.totalorder %s31, 0
    %p94 = por %p92, %p93
    %p95 = scmp.ne.s32.totalorder %s83, %s84
    %p96 = scmp.eq.s32.totalorder %s32, 1
    %p97 = por %p95, %p96
    %p99 = scmp.ne.s32.totalorder %s84, %s98
    %p100 = scmp.eq.s32.totalorder %s32, 0
    %p101 = por %p99, %p100
    %s103 = sadd.s32 %s102, 1
    %p106 = scmp.eq.s32.totalorder %s26, 1
    %p107 = scmp.ne.s32.totalorder %s102, %s104
    %p108 = scmp.eq.s32.totalorder %s26, 0
    %p109 = por %p107, %p108
    %p110 = scmp.ne.s32.totalorder %s102, %s104
    %p111 = scmp.eq.s32.totalorder %s31, 1
    %p112 = por %p110, %p111
    %p113 = scmp.ne.s32.totalorder %s104, %s105
    %p114 = scmp.eq.s32.totalorder %s31, 0
    %p115 = por %p113, %p114
    %p116 = scmp.ne.s32.totalorder %s104, %s105
    %p117 = scmp.eq.s32.totalorder %s32, 1
    %p118 = por %p116, %p117
    %p120 = scmp.ne.s32.totalorder %s105, %s119
    %p121 = scmp.eq.s32.totalorder %s32, 0
    %p122 = por %p120, %p121
    %s124 = sadd.s32 %s123, 1
    %p127 = scmp.eq.s32.totalorder %s26, 1
    %p128 = scmp.ne.s32.totalorder %s123, %s125
    %p129 = scmp.eq.s32.totalorder %s26, 0
    %p130 = por %p128, %p129
    %p131 = scmp.ne.s32.totalorder %s123, %s125
    %p132 = scmp.eq.s32.totalorder %s31, 1
    %p133 = por %p131, %p132
    %p134 = scmp.ne.s32.totalorder %s125, %s126
    %p135 = scmp.eq.s32.totalorder %s31, 0
    %p136 = por %p134, %p135
    %p137 = scmp.ne.s32.totalorder %s125, %s126
    %p138 = scmp.eq.s32.totalorder %s32, 1
    %p139 = por %p137, %p138
    %p141 = scmp.ne.s32.totalorder %s126, %s140
    %p142 = scmp.eq.s32.totalorder %s32, 0
    %p143 = por %p141, %p142
    %s145 = sadd.s32 %s144, 1
    %p148 = scmp.eq.s32.totalorder %s26, 1
    %p149 = scmp.ne.s32.totalorder %s144, %s146
    %p150 = scmp.eq.s32.totalorder %s26, 0
    %p151 = por %p149, %p150
    %p152 = scmp.ne.s32.totalorder %s144, %s146
    %p153 = scmp.eq.s32.totalorder %s31, 1
    %p154 = por %p152, %p153
    %p155 = scmp.ne.s32.totalorder %s146, %s147
    %p156 = scmp.eq.s32.totalorder %s31, 0
    %p157 = por %p155, %p156
    %p158 = scmp.ne.s32.totalorder %s146, %s147
    %p159 = scmp.eq.s32.totalorder %s32, 1
    %p160 = por %p158, %p159
    %p162 = scmp.ne.s32.totalorder %s147, %s161
    %p163 = scmp.eq.s32.totalorder %s32, 0
    %p164 = por %p162, %p163
    %s166 = sadd.s32 %s165, 1
    %p169 = scmp.eq.s32.totalorder %s26, 1
    %p170 = scmp.ne.s32.totalorder %s165, %s167
    %p171 = scmp.eq.s32.totalorder %s26, 0
    %p172 = por %p170, %p171
    %p173 = scmp.ne.s32.totalorder %s165, %s167
    %p174 = scmp.eq.s32.totalorder %s31, 1
    %p175 = por %p173, %p174
    %p176 = scmp.ne.s32.totalorder %s167, %s168
    %p177 = scmp.eq.s32.totalorder %s31, 0
    %p178 = por %p176, %p177
    %p179 = scmp.ne.s32.totalorder %s167, %s168
    %p180 = scmp.eq.s32.totalorder %s32, 1
    %p181 = por %p179, %p180
    %p183 = scmp.ne.s32.totalorder %s168, %s182
    %p184 = scmp.eq.s32.totalorder %s32, 0
    %p185 = por %p183, %p184
    %s187 = sadd.s32 %s186, 1
    %p190 = scmp.eq.s32.totalorder %s26, 1
    %p191 = scmp.ne.s32.totalorder %s186, %s188
    %p192 = scmp.eq.s32.totalorder %s26, 0
    %p193 = por %p191, %p192
    %p194 = scmp.ne.s32.totalorder %s186, %s188
    %p195 = scmp.eq.s32.totalorder %s31, 1
    %p196 = por %p194, %p195
    %p197 = scmp.ne.s32.totalorder %s188, %s189
    %p198 = scmp.eq.s32.totalorder %s31, 0
    %p199 = por %p197, %p198
    %p200 = scmp.ne.s32.totalorder %s188, %s189
    %p201 = scmp.eq.s32.totalorder %s32, 1
    %p202 = por %p200, %p201
    %p204 = scmp.ne.s32.totalorder %s189, %s203
    %p205 = scmp.eq.s32.totalorder %s32, 0
    %p206 = por %p204, %p205
    %s208 = sadd.s32 %s207, 1
    %p211 = scmp.eq.s32.totalorder %s26, 1
    %p212 = scmp.ne.s32.totalorder %s207, %s209
    %p213 = scmp.eq.s32.totalorder %s26, 0
    %p214 = por %p212, %p213
    %p215 = scmp.ne.s32.totalorder %s207, %s209
    %p216 = scmp.eq.s32.totalorder %s31, 1
    %p217 = por %p215, %p216
    %p218 = scmp.ne.s32.totalorder %s209, %s210
    %p219 = scmp.eq.s32.totalorder %s31, 0
    %p220 = por %p218, %p219
    %p221 = scmp.ne.s32.totalorder %s209, %s210
    %p222 = scmp.eq.s32.totalorder %s32, 1
    %p223 = por %p221, %p222
    %p225 = scmp.ne.s32.totalorder %s210, %s224
    %p226 = scmp.eq.s32.totalorder %s32, 0
    %p227 = por %p225, %p226
    %s229 = sadd.s32 %s228, 1
    %p232 = scmp.eq.s32.totalorder %s26, 1
    %p233 = scmp.ne.s32.totalorder %s228, %s230
    %p234 = scmp.eq.s32.totalorder %s26, 0
    %p235 = por %p233, %p234
    %p236 = scmp.ne.s32.totalorder %s228, %s230
    %p237 = scmp.eq.s32.totalorder %s31, 1
    %p238 = por %p236, %p237
    %p239 = scmp.ne.s32.totalorder %s230, %s231
    %p240 = scmp.eq.s32.totalorder %s31, 0
    %p241 = por %p239, %p240
    %p242 = scmp.ne.s32.totalorder %s230, %s231
    %p243 = scmp.eq.s32.totalorder %s32, 1
    %p244 = por %p242, %p243
    %p246 = scmp.ne.s32.totalorder %s231, %s245
    %p247 = scmp.eq.s32.totalorder %s32, 0
    %p248 = por %p246, %p247
    %s250 = sadd.s32 %s249, 1
    %p253 = scmp.eq.s32.totalorder %s26, 1
    %p254 = scmp.ne.s32.totalorder %s249, %s251
    %p255 = scmp.eq.s32.totalorder %s26, 0
    %p256 = por %p254, %p255
    %p257 = scmp.ne.s32.totalorder %s249, %s251
    %p258 = scmp.eq.s32.totalorder %s31, 1
    %p259 = por %p257, %p258
    %p260 = scmp.ne.s32.totalorder %s251, %s252
    %p261 = scmp.eq.s32.totalorder %s31, 0
    %p262 = por %p260, %p261
    %p263 = scmp.ne.s32.totalorder %s251, %s252
    %p264 = scmp.eq.s32.totalorder %s32, 1
    %p265 = por %p263, %p264
    %p267 = scmp.ne.s32.totalorder %s252, %s266
    %p268 = scmp.eq.s32.totalorder %s32, 0
    %p269 = por %p267, %p268
    %s271 = sadd.s32 %s270, 1
    %p274 = scmp.eq.s32.totalorder %s26, 1
    %p275 = scmp.ne.s32.totalorder %s270, %s272
    %p276 = scmp.eq.s32.totalorder %s26, 0
    %p277 = por %p275, %p276
    %p278 = scmp.ne.s32.totalorder %s270, %s272
    %p279 = scmp.eq.s32.totalorder %s31, 1
    %p280 = por %p278, %p279
    %p281 = scmp.ne.s32.totalorder %s272, %s273
    %p282 = scmp.eq.s32.totalorder %s31, 0
    %p283 = por %p281, %p282
    %p284 = scmp.ne.s32.totalorder %s272, %s273
    %p285 = scmp.eq.s32.totalorder %s32, 1
    %p286 = por %p284, %p285
    %p288 = scmp.ne.s32.totalorder %s273, %s287
    %p289 = scmp.eq.s32.totalorder %s32, 0
    %p290 = por %p288, %p289
    %s292 = sadd.s32 %s291, 1
    %p295 = scmp.eq.s32.totalorder %s26, 1
    %p296 = scmp.ne.s32.totalorder %s291, %s293
    %p297 = scmp.eq.s32.totalorder %s26, 0
    %p298 = por %p296, %p297
    %p299 = scmp.ne.s32.totalorder %s291, %s293
    %p300 = scmp.eq.s32.totalorder %s31, 1
    %p301 = por %p299, %p300
    %p302 = scmp.ne.s32.totalorder %s293, %s294
    %p303 = scmp.eq.s32.totalorder %s31, 0
    %p304 = por %p302, %p303
    %p305 = scmp.ne.s32.totalorder %s293, %s294
    %p306 = scmp.eq.s32.totalorder %s32, 1
    %p307 = por %p305, %p306
    %p309 = scmp.ne.s32.totalorder %s294, %s308
    %p310 = scmp.eq.s32.totalorder %s32, 0
    %p311 = por %p309, %p310
    %s312 = ssub.s32 %s26, %s33
    %p313 = scmp.eq.s32.totalorder %s312, 0
    %s315 = sadd.s32 %s314, 1
    %s316 = scalar_select %p313, %s314, %s315
    %p319 = pneg %p313
    %p320 = scmp.eq.s32.totalorder %s26, 1
    %p321 = por %p319, %p320
    %p322 = scmp.ne.s32.totalorder %s314, %s317
    %p323 = scmp.eq.s32.totalorder %s26, 0
    %p324 = por %p322, %p323
    %p325 = scmp.ne.s32.totalorder %s314, %s317
    %p326 = scmp.eq.s32.totalorder %s31, 1
    %p327 = por %p325, %p326
    %p328 = scmp.ne.s32.totalorder %s317, %s318
    %p329 = scmp.eq.s32.totalorder %s31, 0
    %p330 = por %p328, %p329
    %p331 = scmp.ne.s32.totalorder %s317, %s318
    %p332 = scmp.eq.s32.totalorder %s32, 1
    %p333 = por %p331, %p332
    %p335 = scmp.ne.s32.totalorder %s318, %s334
    %p336 = scmp.eq.s32.totalorder %s32, 0
    %p337 = por %p335, %p336
    %p338 = scmp.le.s32.totalorder 1, %s26
    %p339 = scmp.lt.s32.totalorder %s26, 3
    %p340 = pnand %p338, %p339
    %p341 = pneg %p340
    // Predicated region
    $region9: #{stylespeech2_forward.7} parent=5 // pred_check
      _
    $region10: #{stylespeech2_forward.7} parent=5 // pred_check_branch
      %343 = sbr.rel (%p340) target = $region12
    $region11: #{stylespeech2_forward.7} parent=5 // pred_region
      %s344 = ssub.s32 %s26, 1
      // Predicated region
      $region13: #{stylespeech2_forward.7} parent=11 // pred_check
        %p345 = pneg %p73
      $region14: #{stylespeech2_forward.7} parent=11 // pred_check_branch
        %347 = sbr.rel (%p345) target = $region16
      $region15: #{stylespeech2_forward.7} parent=11 // pred_region
        _
      $region16: #{stylespeech2_forward.7} parent=11 // pred_fallthru
        _
      // Predicated region
      $region17: #{stylespeech2_forward.7} parent=11 // pred_check
        %p348 = pneg %p94
      $region18: #{stylespeech2_forward.7} parent=11 // pred_check_branch
        %350 = sbr.rel (%p348) target = $region20
      $region19: #{stylespeech2_forward.7} parent=11 // pred_region
        _
      $region20: #{stylespeech2_forward.7} parent=11 // pred_fallthru
        _
      // Predicated region
      $region21: #{stylespeech2_forward.7} parent=11 // pred_check
        %p351 = pneg %p115
      $region22: #{stylespeech2_forward.7} parent=11 // pred_check_branch
        %353 = sbr.rel (%p351) target = $region24
      $region23: #{stylespeech2_forward.7} parent=11 // pred_region
        _
      $region24: #{stylespeech2_forward.7} parent=11 // pred_fallthru
        _
      // Predicated region
      $region25: #{stylespeech2_forward.7} parent=11 // pred_check
        %p354 = pneg %p136
      $region26: #{stylespeech2_forward.7} parent=11 // pred_check_branch
        %356 = sbr.rel (%p354) target = $region28
      $region27: #{stylespeech2_forward.7} parent=11 // pred_region
        _
      $region28: #{stylespeech2_forward.7} parent=11 // pred_fallthru
        _
      // Predicated region
      $region29: #{stylespeech2_forward.7} parent=11 // pred_check
        %p357 = pneg %p157
      $region30: #{stylespeech2_forward.7} parent=11 // pred_check_branch
        %359 = sbr.rel (%p357) target = $region32
      $region31: #{stylespeech2_forward.7} parent=11 // pred_region
        _
      $region32: #{stylespeech2_forward.7} parent=11 // pred_fallthru
        _
      // Predicated region
      $region33: #{stylespeech2_forward.7} parent=11 // pred_check
        %p360 = pneg %p178
      $region34: #{stylespeech2_forward.7} parent=11 // pred_check_branch
        %362 = sbr.rel (%p360) target = $region36
      $region35: #{stylespeech2_forward.7} parent=11 // pred_region
        _
      $region36: #{stylespeech2_forward.7} parent=11 // pred_fallthru
        _
      // Predicated region
      $region37: #{stylespeech2_forward.7} parent=11 // pred_check
        %p363 = pneg %p199
      $region38: #{stylespeech2_forward.7} parent=11 // pred_check_branch
        %365 = sbr.rel (%p363) target = $region40
      $region39: #{stylespeech2_forward.7} parent=11 // pred_region
        _
      $region40: #{stylespeech2_forward.7} parent=11 // pred_fallthru
        _
      // Predicated region
      $region41: #{stylespeech2_forward.7} parent=11 // pred_check
        %p366 = pneg %p220
      $region42: #{stylespeech2_forward.7} parent=11 // pred_check_branch
        %368 = sbr.rel (%p366) target = $region44
      $region43: #{stylespeech2_forward.7} parent=11 // pred_region
        _
      $region44: #{stylespeech2_forward.7} parent=11 // pred_fallthru
        _
      // Predicated region
      $region45: #{stylespeech2_forward.7} parent=11 // pred_check
        %p369 = pneg %p241
      $region46: #{stylespeech2_forward.7} parent=11 // pred_check_branch
        %371 = sbr.rel (%p369) target = $region48
      $region47: #{stylespeech2_forward.7} parent=11 // pred_region
        _
      $region48: #{stylespeech2_forward.7} parent=11 // pred_fallthru
        _
      // Predicated region
      $region49: #{stylespeech2_forward.7} parent=11 // pred_check
        %p372 = pneg %p262
      $region50: #{stylespeech2_forward.7} parent=11 // pred_check_branch
        %374 = sbr.rel (%p372) target = $region52
      $region51: #{stylespeech2_forward.7} parent=11 // pred_region
        _
      $region52: #{stylespeech2_forward.7} parent=11 // pred_fallthru
        _
      // Predicated region
      $region53: #{stylespeech2_forward.7} parent=11 // pred_check
        %p375 = pneg %p283
      $region54: #{stylespeech2_forward.7} parent=11 // pred_check_branch
        %377 = sbr.rel (%p375) target = $region56
      $region55: #{stylespeech2_forward.7} parent=11 // pred_region
        _
      $region56: #{stylespeech2_forward.7} parent=11 // pred_fallthru
        _
      // Predicated region
      $region57: #{stylespeech2_forward.7} parent=11 // pred_check
        %p378 = pneg %p304
      $region58: #{stylespeech2_forward.7} parent=11 // pred_check_branch
        %380 = sbr.rel (%p378) target = $region60
      $region59: #{stylespeech2_forward.7} parent=11 // pred_region
        _
      $region60: #{stylespeech2_forward.7} parent=11 // pred_fallthru
        _
    $region12: #{stylespeech2_forward.7} parent=5 // pred_fallthru
      _
    %p381 = scmp.lt.s32.totalorder %s26, 2
    // Predicated region
    $region61: #{stylespeech2_forward.7} parent=5 // pred_check
      %p382 = pneg %p381
    $region62: #{stylespeech2_forward.7} parent=5 // pred_check_branch
      %384 = sbr.rel (%p382) target = $region64
    $region63: #{stylespeech2_forward.7} parent=5 // pred_region
      // Predicated region
      $region65: #{stylespeech2_forward.7} parent=63 // pred_check
        %p385 = pneg %p46
      $region66: #{stylespeech2_forward.7} parent=63 // pred_check_branch
        %387 = sbr.rel (%p385) target = $region68
      $region67: #{stylespeech2_forward.7} parent=63 // pred_region
        %p388 = scmp.lt.s32.totalorder %s26, 1
        %s389 = scalar_select %p388, %s26, 1
        %s390 = smul.addr %s389, 2
        %s391 = smul.addr %s390, 8
        %s392 = scalar_lea.vmem %s1, %s391
      $region68: #{stylespeech2_forward.7} parent=63 // pred_fallthru
        _
    $region64: #{stylespeech2_forward.7} parent=5 // pred_fallthru
      _
    %p393 = scmp.le.s32.totalorder 1, %s26
    %p394 = scmp.lt.s32.totalorder %s26, 3
    %p395 = pnand %p393, %p394
    %p396 = pneg %p395
    // Predicated region
    $region69: #{stylespeech2_forward.7} parent=5 // pred_check
      _
    $region70: #{stylespeech2_forward.7} parent=5 // pred_check_branch
      %398 = sbr.rel (%p395) target = $region72
    $region71: #{stylespeech2_forward.7} parent=5 // pred_region
      %s399 = ssub.s32 %s26, 1
      %p400 = scmp.lt.s32.totalorder %s31, 1
      %s401 = scalar_select %p400, %s31, 1
      %s402 = smul.addr %s401, 2
      %s403 = smul.addr %s402, 8
      %s404 = scalar_lea.vmem %s1, %s403
      %p405 = pneg %p52
      %p406 = pneg %p49
      %p407 = pneg %p73
      %p408 = pneg %p70
      %p409 = pneg %p94
      %p410 = pneg %p91
      %p411 = pneg %p115
      %p412 = pneg %p112
      %p413 = pneg %p136
      %p414 = pneg %p133
      %p415 = pneg %p157
      %p416 = pneg %p154
      %p417 = pneg %p178
      %p418 = pneg %p175
      %p419 = pneg %p199
      %p420 = pneg %p196
      %p421 = pneg %p220
      %p422 = pneg %p217
      %p423 = pneg %p241
      %p424 = pneg %p238
      %p425 = pneg %p262
      %p426 = pneg %p259
      %p427 = pneg %p283
      %p428 = pneg %p280
      %p429 = pneg %p304
      %p430 = pneg %p301
      %p431 = pneg %p330
      %p432 = pneg %p327
      %p433 = scmp.lt.s32.totalorder %s31, 1
      %s434 = scalar_select %p433, %s31, 1
      %s435 = smul.addr %s434, 2
      %s436 = smul.addr %s435, 8
      %s437 = scalar_lea.vmem %s14, %s436
      %p438 = scmp.lt.s32.totalorder %s31, 1
      %s439 = scalar_select %p438, %s31, 1
      %s440 = smul.addr %s439, 2
      %s441 = smul.addr %s440, 8
      %s442 = scalar_lea.vmem %s1, %s441
      %p443 = scmp.lt.s32.totalorder %s31, 1
      %s444 = scalar_select %p443, %s31, 1
      %s445 = smul.addr %s444, 2
      %s446 = smul.addr %s445, 8
      %s447 = scalar_lea.vmem %s14, %s446
      %s449 = sld [smem:[#allocation3 + %s31]]
      %v450 = vld [vmem:[%s442] sm:$0xff]
      %v451 = vld [vmem:[%s442 + $0x8] sm:$0xff]
      %v452 = vpack.c.bf16 %v450, %v450
      %v453 = vpack.c.bf16 %v451, %v451
      %v454 = vld [vmem:[%s2] sm:$0xff]
      %v455 = vld [vmem:[%s2 + $0x8] sm:$0xff]
      %v456 = vld [vmem:[%s2 + $0x10] sm:$0xff]
      %v457 = vld [vmem:[%s2 + $0x18] sm:$0xff]
      %v458 = vld [vmem:[%s2 + $0x20] sm:$0xff]
      %v459 = vld [vmem:[%s2 + $0x28] sm:$0xff]
      %v460 = vld [vmem:[%s2 + $0x30] sm:$0xff]
      %v461 = vld [vmem:[%s2 + $0x38] sm:$0xff]
      %v462 = vld [vmem:[%s2 + $0x40] sm:$0xff]
      %v463 = vld [vmem:[%s2 + $0x48] sm:$0xff]
      %v464 = vld [vmem:[%s2 + $0x50] sm:$0xff]
      %v465 = vld [vmem:[%s2 + $0x58] sm:$0xff]
      %v466 = vld [vmem:[%s2 + $0x60] sm:$0xff]
      %v467 = vld [vmem:[%s2 + $0x68] sm:$0xff]
      %v468 = vld [vmem:[%s2 + $0x70] sm:$0xff]
      %v469 = vld [vmem:[%s2 + $0x78] sm:$0xff]
      %v470 = vld [vmem:[%s2 + $0x80] sm:$0xff]
      %v471 = vld [vmem:[%s2 + $0x88] sm:$0xff]
      %v472 = vld [vmem:[%s2 + $0x90] sm:$0xff]
      %v473 = vld [vmem:[%s2 + $0x98] sm:$0xff]
      %v474 = vld [vmem:[%s2 + $0xa0] sm:$0xff]
      %v475 = vld [vmem:[%s2 + $0xa8] sm:$0xff]
      %v476 = vld [vmem:[%s2 + $0xb0] sm:$0xff]
      %v477 = vld [vmem:[%s2 + $0xb8] sm:$0xff]
      %v478 = vld [vmem:[%s2 + $0xc0] sm:$0xff]
      %v479 = vld [vmem:[%s2 + $0xc8] sm:$0xff]
      %v480 = vld [vmem:[%s2 + $0xd0] sm:$0xff]
      %v481 = vld [vmem:[%s2 + $0xd8] sm:$0xff]
      %v482 = vld [vmem:[%s2 + $0xe0] sm:$0xff]
      %v483 = vld [vmem:[%s2 + $0xe8] sm:$0xff]
      %v484 = vld [vmem:[%s2 + $0xf0] sm:$0xff]
      %v485 = vld [vmem:[%s2 + $0xf8] sm:$0xff]
      %v486 = vld [vmem:[%s2 + $0x100] sm:$0xff]
      %v487 = vld [vmem:[%s2 + $0x108] sm:$0xff]
      %v488 = vld [vmem:[%s2 + $0x110] sm:$0xff]
      %v489 = vld [vmem:[%s2 + $0x118] sm:$0xff]
      %v490 = vld [vmem:[%s2 + $0x120] sm:$0xff]
      %v491 = vld [vmem:[%s2 + $0x128] sm:$0xff]
      %v492 = vld [vmem:[%s2 + $0x130] sm:$0xff]
      %v493 = vld [vmem:[%s2 + $0x138] sm:$0xff]
      %v494 = vld [vmem:[%s2 + $0x140] sm:$0xff]
      %v495 = vld [vmem:[%s2 + $0x148] sm:$0xff]
      %v496 = vld [vmem:[%s2 + $0x150] sm:$0xff]
      %v497 = vld [vmem:[%s2 + $0x158] sm:$0xff]
      %v498 = vld [vmem:[%s2 + $0x160] sm:$0xff]
      %v499 = vld [vmem:[%s2 + $0x168] sm:$0xff]
      %v500 = vld [vmem:[%s2 + $0x170] sm:$0xff]
      %v501 = vld [vmem:[%s2 + $0x178] sm:$0xff]
      %v502 = vld [vmem:[%s2 + $0x180] sm:$0xff]
      %v503 = vld [vmem:[%s2 + $0x188] sm:$0xff]
      %v504 = vld [vmem:[%s2 + $0x190] sm:$0xff]
      %v505 = vld [vmem:[%s2 + $0x198] sm:$0xff]
      %v506 = vld [vmem:[%s2 + $0x1a0] sm:$0xff]
      %v507 = vld [vmem:[%s2 + $0x1a8] sm:$0xff]
      %v508 = vld [vmem:[%s2 + $0x1b0] sm:$0xff]
      %v509 = vld [vmem:[%s2 + $0x1b8] sm:$0xff]
      %v510 = vld [vmem:[%s2 + $0x1c0] sm:$0xff]
      %v511 = vld [vmem:[%s2 + $0x1c8] sm:$0xff]
      %v512 = vld [vmem:[%s2 + $0x1d0] sm:$0xff]
      %v513 = vld [vmem:[%s2 + $0x1d8] sm:$0xff]
      %v514 = vld [vmem:[%s2 + $0x1e0] sm:$0xff]
      %v515 = vld [vmem:[%s2 + $0x1e8] sm:$0xff]
      %v516 = vld [vmem:[%s2 + $0x1f0] sm:$0xff]
      %v517 = vld [vmem:[%s2 + $0x1f8] sm:$0xff]
      %v518 = vld [vmem:[%s2 + $0x200] sm:$0xff]
      %v519 = vld [vmem:[%s2 + $0x208] sm:$0xff]
      %v520 = vld [vmem:[%s2 + $0x210] sm:$0xff]
      %v521 = vld [vmem:[%s2 + $0x218] sm:$0xff]
      %v522 = vld [vmem:[%s2 + $0x220] sm:$0xff]
      %v523 = vld [vmem:[%s2 + $0x228] sm:$0xff]
      %v524 = vld [vmem:[%s2 + $0x230] sm:$0xff]
      %v525 = vld [vmem:[%s2 + $0x238] sm:$0xff]
      %v526 = vld [vmem:[%s2 + $0x240] sm:$0xff]
      %v527 = vld [vmem:[%s2 + $0x248] sm:$0xff]
      %v528 = vld [vmem:[%s2 + $0x250] sm:$0xff]
      %v529 = vld [vmem:[%s2 + $0x258] sm:$0xff]
      %v530 = vld [vmem:[%s2 + $0x260] sm:$0xff]
      %v531 = vld [vmem:[%s2 + $0x268] sm:$0xff]
      %v532 = vld [vmem:[%s2 + $0x270] sm:$0xff]
      %v533 = vld [vmem:[%s2 + $0x278] sm:$0xff]
      %v534 = vld [vmem:[%s2 + $0x280] sm:$0xff]
      %v535 = vld [vmem:[%s2 + $0x288] sm:$0xff]
      %v536 = vld [vmem:[%s2 + $0x290] sm:$0xff]
      %v537 = vld [vmem:[%s2 + $0x298] sm:$0xff]
      %v538 = vld [vmem:[%s2 + $0x2a0] sm:$0xff]
      %v539 = vld [vmem:[%s2 + $0x2a8] sm:$0xff]
      %v540 = vld [vmem:[%s2 + $0x2b0] sm:$0xff]
      %v541 = vld [vmem:[%s2 + $0x2b8] sm:$0xff]
      %v542 = vld [vmem:[%s2 + $0x2c0] sm:$0xff]
      %v543 = vld [vmem:[%s2 + $0x2c8] sm:$0xff]
      %v544 = vld [vmem:[%s2 + $0x2d0] sm:$0xff]
      %v545 = vld [vmem:[%s2 + $0x2d8] sm:$0xff]
      %v546 = vld [vmem:[%s2 + $0x2e0] sm:$0xff]
      %v547 = vld [vmem:[%s2 + $0x2e8] sm:$0xff]
      %v548 = vld [vmem:[%s2 + $0x2f0] sm:$0xff]
      %v549 = vld [vmem:[%s2 + $0x2f8] sm:$0xff]
      %v550 = vld [vmem:[%s3] sm:$0x3f]
      %v552 = vlaneseq
      %v553 = vshrl.u32 %v552, 7
      %v554 = vsub.s32 0, %v553
      %v555 = vrot.slane %v550, %v554
      %v556 = vlaneseq
      %v557 = vshrl.u32 %v556, 7
      %v558 = vsub.s32 1, %v557
      %v559 = vrot.slane %v550, %v558
      %v560 = vlaneseq
      %v561 = vshrl.u32 %v560, 7
      %v562 = vsub.s32 2, %v561
      %v563 = vrot.slane %v550, %v562
      %v564 = vlaneseq
      %v565 = vshrl.u32 %v564, 7
      %v566 = vsub.s32 3, %v565
      %v567 = vrot.slane %v550, %v566
      %v568 = vlaneseq
      %v569 = vshrl.u32 %v568, 7
      %v570 = vsub.s32 4, %v569
      %v571 = vrot.slane %v550, %v570
      %v572 = vlaneseq
      %v573 = vshrl.u32 %v572, 7
      %v574 = vsub.s32 5, %v573
      %v575 = vrot.slane %v550, %v574
      %v678 = vunpack.c.l.b16 %v454
      %v679 = vunpack.c.h.b16 %v454
      %v680 = vunpack.c.l.b16 %v455
      %v681 = vunpack.c.h.b16 %v455
      %v682 = vunpack.c.l.b16 %v456
      %v683 = vunpack.c.h.b16 %v456
      %v684 = vunpack.c.l.b16 %v457
      %v685 = vunpack.c.h.b16 %v457
      %v686 = vunpack.c.l.b16 %v458
      %v687 = vunpack.c.h.b16 %v458
      %v688 = vunpack.c.l.b16 %v459
      %v689 = vunpack.c.h.b16 %v459
      %v690 = vunpack.c.l.b16 %v460
      %v691 = vunpack.c.h.b16 %v460
      %v692 = vunpack.c.l.b16 %v461
      %v693 = vunpack.c.h.b16 %v461
      %v694 = vunpack.c.l.b16 %v462
      %v695 = vunpack.c.h.b16 %v462
      %v696 = vunpack.c.l.b16 %v463
      %v697 = vunpack.c.h.b16 %v463
      %v698 = vunpack.c.l.b16 %v464
      %v699 = vunpack.c.h.b16 %v464
      %v700 = vunpack.c.l.b16 %v465
      %v701 = vunpack.c.h.b16 %v465
      %v702 = vunpack.c.l.b16 %v466
      %v703 = vunpack.c.h.b16 %v466
      %v704 = vunpack.c.l.b16 %v467
      %v705 = vunpack.c.h.b16 %v467
      %v706 = vunpack.c.l.b16 %v468
      %v707 = vunpack.c.h.b16 %v468
      %v708 = vunpack.c.l.b16 %v469
      %v709 = vunpack.c.h.b16 %v469
      %v710 = vunpack.c.l.b16 %v470
      %v711 = vunpack.c.h.b16 %v470
      %v712 = vunpack.c.l.b16 %v471
      %v713 = vunpack.c.h.b16 %v471
      %v714 = vunpack.c.l.b16 %v472
      %v715 = vunpack.c.h.b16 %v472
      %v716 = vunpack.c.l.b16 %v473
      %v717 = vunpack.c.h.b16 %v473
      %v718 = vunpack.c.l.b16 %v474
      %v719 = vunpack.c.h.b16 %v474
      %v720 = vunpack.c.l.b16 %v475
      %v721 = vunpack.c.h.b16 %v475
      %v722 = vunpack.c.l.b16 %v476
      %v723 = vunpack.c.h.b16 %v476
      %v724 = vunpack.c.l.b16 %v477
      %v725 = vunpack.c.h.b16 %v477
      %v726 = vunpack.c.l.b16 %v478
      %v727 = vunpack.c.h.b16 %v478
      %v728 = vunpack.c.l.b16 %v479
      %v729 = vunpack.c.h.b16 %v479
      %v730 = vunpack.c.l.b16 %v480
      %v731 = vunpack.c.h.b16 %v480
      %v732 = vunpack.c.l.b16 %v481
      %v733 = vunpack.c.h.b16 %v481
      %v734 = vunpack.c.l.b16 %v482
      %v735 = vunpack.c.h.b16 %v482
      %v736 = vunpack.c.l.b16 %v483
      %v737 = vunpack.c.h.b16 %v483
      %v738 = vunpack.c.l.b16 %v484
      %v739 = vunpack.c.h.b16 %v484
      %v740 = vunpack.c.l.b16 %v485
      %v741 = vunpack.c.h.b16 %v485
      %v742 = vunpack.c.l.b16 %v486
      %v743 = vunpack.c.h.b16 %v486
      %v744 = vunpack.c.l.b16 %v487
      %v745 = vunpack.c.h.b16 %v487
      %v746 = vunpack.c.l.b16 %v488
      %v747 = vunpack.c.h.b16 %v488
      %v748 = vunpack.c.l.b16 %v489
      %v749 = vunpack.c.h.b16 %v489
      %v750 = vunpack.c.l.b16 %v490
      %v751 = vunpack.c.h.b16 %v490
      %v752 = vunpack.c.l.b16 %v491
      %v753 = vunpack.c.h.b16 %v491
      %v754 = vunpack.c.l.b16 %v492
      %v755 = vunpack.c.h.b16 %v492
      %v756 = vunpack.c.l.b16 %v493
      %v757 = vunpack.c.h.b16 %v493
      %v758 = vunpack.c.l.b16 %v494
      %v759 = vunpack.c.h.b16 %v494
      %v760 = vunpack.c.l.b16 %v495
      %v761 = vunpack.c.h.b16 %v495
      %v762 = vunpack.c.l.b16 %v496
      %v763 = vunpack.c.h.b16 %v496
      %v764 = vunpack.c.l.b16 %v497
      %v765 = vunpack.c.h.b16 %v497
      %v766 = vunpack.c.l.b16 %v498
      %v767 = vunpack.c.h.b16 %v498
      %v768 = vunpack.c.l.b16 %v499
      %v769 = vunpack.c.h.b16 %v499
      %v770 = vunpack.c.l.b16 %v500
      %v771 = vunpack.c.h.b16 %v500
      %v772 = vunpack.c.l.b16 %v501
      %v773 = vunpack.c.h.b16 %v501
      %v774 = vunpack.c.l.b16 %v502
      %v775 = vunpack.c.h.b16 %v502
      %v776 = vunpack.c.l.b16 %v503
      %v777 = vunpack.c.h.b16 %v503
      %v778 = vunpack.c.l.b16 %v504
      %v779 = vunpack.c.h.b16 %v504
      %v780 = vunpack.c.l.b16 %v505
      %v781 = vunpack.c.h.b16 %v505
      %v782 = vunpack.c.l.b16 %v506
      %v783 = vunpack.c.h.b16 %v506
      %v784 = vunpack.c.l.b16 %v507
      %v785 = vunpack.c.h.b16 %v507
      %v786 = vunpack.c.l.b16 %v508
      %v787 = vunpack.c.h.b16 %v508
      %v788 = vunpack.c.l.b16 %v509
      %v789 = vunpack.c.h.b16 %v509
      %v790 = vunpack.c.l.b16 %v510
      %v791 = vunpack.c.h.b16 %v510
      %v792 = vunpack.c.l.b16 %v511
      %v793 = vunpack.c.h.b16 %v511
      %v794 = vunpack.c.l.b16 %v512
      %v795 = vunpack.c.h.b16 %v512
      %v796 = vunpack.c.l.b16 %v513
      %v797 = vunpack.c.h.b16 %v513
      %v798 = vunpack.c.l.b16 %v514
      %v799 = vunpack.c.h.b16 %v514
      %v800 = vunpack.c.l.b16 %v515
      %v801 = vunpack.c.h.b16 %v515
      %v802 = vunpack.c.l.b16 %v516
      %v803 = vunpack.c.h.b16 %v516
      %v804 = vunpack.c.l.b16 %v517
      %v805 = vunpack.c.h.b16 %v517
      %v806 = vunpack.c.l.b16 %v518
      %v807 = vunpack.c.h.b16 %v518
      %v808 = vunpack.c.l.b16 %v519
      %v809 = vunpack.c.h.b16 %v519
      %v810 = vunpack.c.l.b16 %v520
      %v811 = vunpack.c.h.b16 %v520
      %v812 = vunpack.c.l.b16 %v521
      %v813 = vunpack.c.h.b16 %v521
      %v814 = vunpack.c.l.b16 %v522
      %v815 = vunpack.c.h.b16 %v522
      %v816 = vunpack.c.l.b16 %v523
      %v817 = vunpack.c.h.b16 %v523
      %v818 = vunpack.c.l.b16 %v524
      %v819 = vunpack.c.h.b16 %v524
      %v820 = vunpack.c.l.b16 %v525
      %v821 = vunpack.c.h.b16 %v525
      %v822 = vunpack.c.l.b16 %v526
      %v823 = vunpack.c.h.b16 %v526
      %v824 = vunpack.c.l.b16 %v527
      %v825 = vunpack.c.h.b16 %v527
      %v826 = vunpack.c.l.b16 %v528
      %v827 = vunpack.c.h.b16 %v528
      %v828 = vunpack.c.l.b16 %v529
      %v829 = vunpack.c.h.b16 %v529
      %v830 = vunpack.c.l.b16 %v530
      %v831 = vunpack.c.h.b16 %v530
      %v832 = vunpack.c.l.b16 %v531
      %v833 = vunpack.c.h.b16 %v531
      %v834 = vunpack.c.l.b16 %v532
      %v835 = vunpack.c.h.b16 %v532
      %v836 = vunpack.c.l.b16 %v533
      %v837 = vunpack.c.h.b16 %v533
      %v838 = vunpack.c.l.b16 %v534
      %v839 = vunpack.c.h.b16 %v534
      %v840 = vunpack.c.l.b16 %v535
      %v841 = vunpack.c.h.b16 %v535
      %v842 = vunpack.c.l.b16 %v536
      %v843 = vunpack.c.h.b16 %v536
      %v844 = vunpack.c.l.b16 %v537
      %v845 = vunpack.c.h.b16 %v537
      %v846 = vunpack.c.l.b16 %v538
      %v847 = vunpack.c.h.b16 %v538
      %v848 = vunpack.c.l.b16 %v539
      %v849 = vunpack.c.h.b16 %v539
      %v850 = vunpack.c.l.b16 %v540
      %v851 = vunpack.c.h.b16 %v540
      %v852 = vunpack.c.l.b16 %v541
      %v853 = vunpack.c.h.b16 %v541
      %v854 = vunpack.c.l.b16 %v542
      %v855 = vunpack.c.h.b16 %v542
      %v856 = vunpack.c.l.b16 %v543
      %v857 = vunpack.c.h.b16 %v543
      %v858 = vunpack.c.l.b16 %v544
      %v859 = vunpack.c.h.b16 %v544
      %v860 = vunpack.c.l.b16 %v545
      %v861 = vunpack.c.h.b16 %v545
      %v862 = vunpack.c.l.b16 %v546
      %v863 = vunpack.c.h.b16 %v546
      %v864 = vunpack.c.l.b16 %v547
      %v865 = vunpack.c.h.b16 %v547
      %v866 = vunpack.c.l.b16 %v548
      %v867 = vunpack.c.h.b16 %v548
      %v868 = vunpack.c.l.b16 %v549
      %v869 = vunpack.c.h.b16 %v549
      %v870 = vpack.c.b16 %v684, %v678
      %v871 = vpack.c.b16 %v685, %v679
      %v872 = vpack.c.b16 %v686, %v680
      %v873 = vpack.c.b16 %v687, %v681
      %v874 = vpack.c.b16 %v688, %v682
      %v875 = vpack.c.b16 %v689, %v683
      %v876 = vpack.c.b16 %v696, %v690
      %v877 = vpack.c.b16 %v697, %v691
      %v878 = vpack.c.b16 %v698, %v692
      %v879 = vpack.c.b16 %v699, %v693
      %v880 = vpack.c.b16 %v700, %v694
      %v881 = vpack.c.b16 %v701, %v695
      %v882 = vpack.c.b16 %v708, %v702
      %v883 = vpack.c.b16 %v709, %v703
      %v884 = vpack.c.b16 %v710, %v704
      %v885 = vpack.c.b16 %v711, %v705
      %v886 = vpack.c.b16 %v712, %v706
      %v887 = vpack.c.b16 %v713, %v707
      %v888 = vpack.c.b16 %v720, %v714
      %v889 = vpack.c.b16 %v721, %v715
      %v890 = vpack.c.b16 %v722, %v716
      %v891 = vpack.c.b16 %v723, %v717
      %v892 = vpack.c.b16 %v724, %v718
      %v893 = vpack.c.b16 %v725, %v719
      %v894 = vpack.c.b16 %v732, %v726
      %v895 = vpack.c.b16 %v733, %v727
      %v896 = vpack.c.b16 %v734, %v728
      %v897 = vpack.c.b16 %v735, %v729
      %v898 = vpack.c.b16 %v736, %v730
      %v899 = vpack.c.b16 %v737, %v731
      %v900 = vpack.c.b16 %v744, %v738
      %v901 = vpack.c.b16 %v745, %v739
      %v902 = vpack.c.b16 %v746, %v740
      %v903 = vpack.c.b16 %v747, %v741
      %v904 = vpack.c.b16 %v748, %v742
      %v905 = vpack.c.b16 %v749, %v743
      %v906 = vpack.c.b16 %v756, %v750
      %v907 = vpack.c.b16 %v757, %v751
      %v908 = vpack.c.b16 %v758, %v752
      %v909 = vpack.c.b16 %v759, %v753
      %v910 = vpack.c.b16 %v760, %v754
      %v911 = vpack.c.b16 %v761, %v755
      %v912 = vpack.c.b16 %v768, %v762
      %v913 = vpack.c.b16 %v769, %v763
      %v914 = vpack.c.b16 %v770, %v764
      %v915 = vpack.c.b16 %v771, %v765
      %v916 = vpack.c.b16 %v772, %v766
      %v917 = vpack.c.b16 %v773, %v767
      %v918 = vpack.c.b16 %v780, %v774
      %v919 = vpack.c.b16 %v781, %v775
      %v920 = vpack.c.b16 %v782, %v776
      %v921 = vpack.c.b16 %v783, %v777
      %v922 = vpack.c.b16 %v784, %v778
      %v923 = vpack.c.b16 %v785, %v779
      %v924 = vpack.c.b16 %v792, %v786
      %v925 = vpack.c.b16 %v793, %v787
      %v926 = vpack.c.b16 %v794, %v788
      %v927 = vpack.c.b16 %v795, %v789
      %v928 = vpack.c.b16 %v796, %v790
      %v929 = vpack.c.b16 %v797, %v791
      %v930 = vpack.c.b16 %v804, %v798
      %v931 = vpack.c.b16 %v805, %v799
      %v932 = vpack.c.b16 %v806, %v800
      %v933 = vpack.c.b16 %v807, %v801
      %v934 = vpack.c.b16 %v808, %v802
      %v935 = vpack.c.b16 %v809, %v803
      %v936 = vpack.c.b16 %v816, %v810
      %v937 = vpack.c.b16 %v817, %v811
      %v938 = vpack.c.b16 %v818, %v812
      %v939 = vpack.c.b16 %v819, %v813
      %v940 = vpack.c.b16 %v820, %v814
      %v941 = vpack.c.b16 %v821, %v815
      %v942 = vpack.c.b16 %v828, %v822
      %v943 = vpack.c.b16 %v829, %v823
      %v944 = vpack.c.b16 %v830, %v824
      %v945 = vpack.c.b16 %v831, %v825
      %v946 = vpack.c.b16 %v832, %v826
      %v947 = vpack.c.b16 %v833, %v827
      %v948 = vpack.c.b16 %v840, %v834
      %v949 = vpack.c.b16 %v841, %v835
      %v950 = vpack.c.b16 %v842, %v836
      %v951 = vpack.c.b16 %v843, %v837
      %v952 = vpack.c.b16 %v844, %v838
      %v953 = vpack.c.b16 %v845, %v839
      %v954 = vpack.c.b16 %v852, %v846
      %v955 = vpack.c.b16 %v853, %v847
      %v956 = vpack.c.b16 %v854, %v848
      %v957 = vpack.c.b16 %v855, %v849
      %v958 = vpack.c.b16 %v856, %v850
      %v959 = vpack.c.b16 %v857, %v851
      %v960 = vpack.c.b16 %v864, %v858
      %v961 = vpack.c.b16 %v865, %v859
      %v962 = vpack.c.b16 %v866, %v860
      %v963 = vpack.c.b16 %v867, %v861
      %v964 = vpack.c.b16 %v868, %v862
      %v965 = vpack.c.b16 %v869, %v863
      %1062 = vmatprep.subr.bf16.mxu0 %v913
      %1063 = vmatpush1.bf16.msra.mxu0 %v912
      %1064 = vmatprep.subr.bf16.mxu0 %v907
      %1065 = vmatpush1.bf16.msra.mxu0 %v906
      %1066 = vmatprep.subr.bf16.mxu0 %v901
      %1067 = vmatpush1.bf16.msra.mxu0 %v900
      %1068 = vmatprep.subr.bf16.mxu0 %v895
      %1069 = vmatpush1.bf16.msra.mxu0 %v894
      %1070 = vmatprep.subr.bf16.mxu0 %v889
      %1071 = vmatpush1.bf16.msra.mxu0 %v888
      %1072 = vmatprep.subr.bf16.mxu0 %v883
      %1073 = vmatpush1.bf16.msra.mxu0 %v882
      %1074 = vmatprep.subr.bf16.mxu0 %v877
      %1075 = vmatpush1.bf16.msra.mxu0 %v876
      %1076 = vmatprep.subr.bf16.mxu0 %v871
      %1077 = vmatpush1.bf16.msra.mxu0 %v870
      %1078 = vmatprep.subr.bf16.mxu0 %v961
      %1079 = vmatpush2.bf16.msra.mxu0 %v960
      %1080 = vmatprep.subr.bf16.mxu0 %v955
      %1081 = vmatpush2.bf16.msra.mxu0 %v954
      %1082 = vmatprep.subr.bf16.mxu0 %v949
      %1083 = vmatpush2.bf16.msra.mxu0 %v948
      %1084 = vmatprep.subr.bf16.mxu0 %v943
      %1085 = vmatpush2.bf16.msra.mxu0 %v942
      %1086 = vmatprep.subr.bf16.mxu0 %v937
      %1087 = vmatpush2.bf16.msra.mxu0 %v936
      %1088 = vmatprep.subr.bf16.mxu0 %v931
      %1089 = vmatpush2.bf16.msra.mxu0 %v930
      %1090 = vmatprep.subr.bf16.mxu0 %v925
      %1091 = vmatpush2.bf16.msra.mxu0 %v924
      %1092 = vmatprep.subr.bf16.mxu0 %v919
      %1093 = vmatpush2.bf16.msra.mxu0 %v918
      %1094 = vmatprep.mubr.bf16.mxu0 %v453
      %1095 = vmatmul.mubr.bf16.gmra.mxu0 %v452
      %v1096 = vpop.f32.mrf.mxu0
      %v1097 = vadd.f32 %v555, %v1096
      %v1098 = vpop.f32.mrf.mxu0
      %v1099 = vadd.f32 %v559, %v1098
      %v1100 = vpop.f32.mrf.mxu0
      %v1101 = vpop.f32.mrf.mxu0
      %1102 = vdwg.mxu0
      %1103 = vmatprep.subr.bf16.mxu0 %v915
      %1104 = vmatpush1.bf16.msra.mxu0 %v914
      %1105 = vmatprep.subr.bf16.mxu0 %v909
      %1106 = vmatpush1.bf16.msra.mxu0 %v908
      %1107 = vmatprep.subr.bf16.mxu0 %v903
      %1108 = vmatpush1.bf16.msra.mxu0 %v902
      %1109 = vmatprep.subr.bf16.mxu0 %v897
      %1110 = vmatpush1.bf16.msra.mxu0 %v896
      %1111 = vmatprep.subr.bf16.mxu0 %v891
      %1112 = vmatpush1.bf16.msra.mxu0 %v890
      %1113 = vmatprep.subr.bf16.mxu0 %v885
      %1114 = vmatpush1.bf16.msra.mxu0 %v884
      %1115 = vmatprep.subr.bf16.mxu0 %v879
      %1116 = vmatpush1.bf16.msra.mxu0 %v878
      %1117 = vmatprep.subr.bf16.mxu0 %v873
      %1118 = vmatpush1.bf16.msra.mxu0 %v872
      %1119 = vmatprep.subr.bf16.mxu0 %v963
      %1120 = vmatpush2.bf16.msra.mxu0 %v962
      %1121 = vmatprep.subr.bf16.mxu0 %v957
      %1122 = vmatpush2.bf16.msra.mxu0 %v956
      %1123 = vmatprep.subr.bf16.mxu0 %v951
      %1124 = vmatpush2.bf16.msra.mxu0 %v950
      %1125 = vmatprep.subr.bf16.mxu0 %v945
      %1126 = vmatpush2.bf16.msra.mxu0 %v944
      %1127 = vmatprep.subr.bf16.mxu0 %v939
      %1128 = vmatpush2.bf16.msra.mxu0 %v938
      %1129 = vmatprep.subr.bf16.mxu0 %v933
      %1130 = vmatpush2.bf16.msra.mxu0 %v932
      %1131 = vmatprep.subr.bf16.mxu0 %v927
      %1132 = vmatpush2.bf16.msra.mxu0 %v926
      %1133 = vmatprep.subr.bf16.mxu0 %v921
      %1134 = vmatpush2.bf16.msra.mxu0 %v920
      %1135 = vmatprep.mubr.bf16.mxu0 %v453
      %1136 = vmatmul.mubr.bf16.gmra.mxu0 %v452
      %v1137 = vpop.f32.mrf.mxu0
      %v1138 = vadd.f32 %v563, %v1137
      %v1139 = vpop.f32.mrf.mxu0
      %v1140 = vadd.f32 %v567, %v1139
      %v1141 = vpop.f32.mrf.mxu0
      %v1142 = vpop.f32.mrf.mxu0
      %1143 = vdwg.mxu0
      %1144 = vmatprep.subr.bf16.mxu0 %v917
      %1145 = vmatpush1.bf16.msra.mxu0 %v916
      %1146 = vmatprep.subr.bf16.mxu0 %v911
      %1147 = vmatpush1.bf16.msra.mxu0 %v910
      %1148 = vmatprep.subr.bf16.mxu0 %v905
      %1149 = vmatpush1.bf16.msra.mxu0 %v904
      %1150 = vmatprep.subr.bf16.mxu0 %v899
      %1151 = vmatpush1.bf16.msra.mxu0 %v898
      %1152 = vmatprep.subr.bf16.mxu0 %v893
      %1153 = vmatpush1.bf16.msra.mxu0 %v892
      %1154 = vmatprep.subr.bf16.mxu0 %v887
      %1155 = vmatpush1.bf16.msra.mxu0 %v886
      %1156 = vmatprep.subr.bf16.mxu0 %v881
      %1157 = vmatpush1.bf16.msra.mxu0 %v880
      %1158 = vmatprep.subr.bf16.mxu0 %v875
      %1159 = vmatpush1.bf16.msra.mxu0 %v874
      %1160 = vmatprep.subr.bf16.mxu0 %v965
      %1161 = vmatpush2.bf16.msra.mxu0 %v964
      %1162 = vmatprep.subr.bf16.mxu0 %v959
      %1163 = vmatpush2.bf16.msra.mxu0 %v958
      %1164 = vmatprep.subr.bf16.mxu0 %v953
      %1165 = vmatpush2.bf16.msra.mxu0 %v952
      %1166 = vmatprep.subr.bf16.mxu0 %v947
      %1167 = vmatpush2.bf16.msra.mxu0 %v946
      %1168 = vmatprep.subr.bf16.mxu0 %v941
      %1169 = vmatpush2.bf16.msra.mxu0 %v940
      %1170 = vmatprep.subr.bf16.mxu0 %v935
      %1171 = vmatpush2.bf16.msra.mxu0 %v934
      %1172 = vmatprep.subr.bf16.mxu0 %v929
      %1173 = vmatpush2.bf16.msra.mxu0 %v928
      %1174 = vmatprep.subr.bf16.mxu0 %v923
      %1175 = vmatpush2.bf16.msra.mxu0 %v922
      %1176 = vmatprep.mubr.bf16.mxu0 %v453
      %1177 = vmatmul.mubr.bf16.gmra.mxu0 %v452
      %v1178 = vpop.f32.mrf.mxu0
      %v1179 = vadd.f32 %v571, %v1178
      %v1180 = vpop.f32.mrf.mxu0
      %v1181 = vadd.f32 %v575, %v1180
      %v1182 = vpop.f32.mrf.mxu0
      %v1183 = vpop.f32.mrf.mxu0
      %1184 = vdwg.mxu0
      %v1185 = vmul.f32 %v1097, 0.088388346
      %v1186 = vmul.f32 %v1099, 0.088388346
      %v1187 = vlaneseq
      %v1188 = vand.u32 %v1187, 127
      %v1189 = vstv %s449
      %vm1190 = vcmp.ge.s32.totalorder %v1188, %v1189
      %v1191 = vsel %vm1190, -1e+30, 0.0
      %v1192 = vpack.c.bf16 %v1185, %v1185
      %v1193 = vpack.c.bf16 %v1138, %v1138
      %1194 = vmatprep.subr.bf16.mxu0 0
      %1195 = vmatpush1.bf16.xpose.msra.mxu0 0
      %1196 = vmatprep.subr.bf16.mxu0 0
      %1197 = vmatpush1.bf16.xpose.msra.mxu0 0
      %1198 = vmatprep.subr.bf16.mxu0 0
      %1199 = vmatpush1.bf16.xpose.msra.mxu0 0
      %1200 = vmatprep.subr.bf16.mxu0 0
      %1201 = vmatpush1.bf16.xpose.msra.mxu0 0
      %1202 = vmatprep.subr.bf16.mxu0 0
      %1203 = vmatpush1.bf16.xpose.msra.mxu0 0
      %1204 = vmatprep.subr.bf16.mxu0 0
      %1205 = vmatpush1.bf16.xpose.msra.mxu0 0
      %1206 = vmatprep.subr.bf16.mxu0 0
      %1207 = vmatpush1.bf16.xpose.msra.mxu0 0
      %1208 = vmatprep.subr.bf16.mxu0 0
      %1209 = vmatpush1.bf16.xpose.msra.mxu0 %v1193
      %1210 = vmatprep.subr.bf16.mxu0 0
      %1211 = vmatpush2.bf16.xpose.msra.mxu0 0
      %1212 = vmatprep.subr.bf16.mxu0 0
      %1213 = vmatpush2.bf16.xpose.msra.mxu0 0
      %1214 = vmatprep.subr.bf16.mxu0 0
      %1215 = vmatpush2.bf16.xpose.msra.mxu0 0
      %1216 = vmatprep.subr.bf16.mxu0 0
      %1217 = vmatpush2.bf16.xpose.msra.mxu0 0
      %1218 = vmatprep.subr.bf16.mxu0 0
      %1219 = vmatpush2.bf16.xpose.msra.mxu0 0
      %1220 = vmatprep.subr.bf16.mxu0 0
      %1221 = vmatpush2.bf16.xpose.msra.mxu0 0
      %1222 = vmatprep.subr.bf16.mxu0 0
      %1223 = vmatpush2.bf16.xpose.msra.mxu0 0
      %1224 = vmatprep.subr.bf16.mxu0 0
      %1225 = vmatpush2.bf16.xpose.msra.mxu0 0
      %1226 = vmatprep.mubr.bf16.mxu0 0
      %1227 = vmatmul.mubr.bf16.gmra.mxu0 %v1192
      %v1228 = vpop.f32.mrf.mxu0
      %v1229 = vadd.f32 %v1191, %v1228
      %v1230 = vpop.f32.mrf.mxu0
      %v1231 = vpop.f32.mrf.mxu0
      %v1232 = vpop.f32.mrf.mxu0
      %1233 = vdwg.mxu0
      %vm1234 = vcmask 64512
      %v1235 = vsel %vm1234, %v1229, -inf
      %1236 = vmax.xlane.f32.xlu0 %v1235
      %v1237 = vpop.xlane.xlu0 %1236
      %v1238 = vsub.f32 %v1229, %v1237
      %v1239 = vmul.f32 %v1238, 1.442695
      %v1240 = vpow.pop %v1239
      %v1241 = vsel %vm1234, %v1240, 0.0
      %1242 = vadd.xlane.f32.xlu0 %v1241
      %v1243 = vpop.xlane.xlu0 %1242
      %v1244 = vrcp.pop %v1243
      %v1245 = vmul.f32 %v1240, %v1244
      %v1246 = vpack.c.bf16 %v1245, %v1245
      %v1247 = vpack.c.bf16 %v1179, %v1179
      %v1249 = vsel %vm1234, %v1246, 0
      %vm1251 = vcmask 1043456
      %v1253 = vsel %vm1251, %v1247, 0
      %1255 = vmatprep.subr.bf16.mxu0 0
      %1256 = vmatpush1.bf16.msra.mxu0 0
      %1257 = vmatprep.subr.bf16.mxu0 0
      %1258 = vmatpush1.bf16.msra.mxu0 0
      %1259 = vmatprep.subr.bf16.mxu0 0
      %1260 = vmatpush1.bf16.msra.mxu0 0
      %1261 = vmatprep.subr.bf16.mxu0 0
      %1262 = vmatpush1.bf16.msra.mxu0 0
      %1263 = vmatprep.subr.bf16.mxu0 0
      %1264 = vmatpush1.bf16.msra.mxu0 0
      %1265 = vmatprep.subr.bf16.mxu0 0
      %1266 = vmatpush1.bf16.msra.mxu0 0
      %1267 = vmatprep.subr.bf16.mxu0 0
      %1268 = vmatpush1.bf16.msra.mxu0 0
      %1269 = vmatprep.subr.bf16.mxu0 0
      %1270 = vmatpush1.bf16.msra.mxu0 %v1253
      %1271 = vmatprep.subr.bf16.mxu0 0
      %1272 = vmatpush2.bf16.msra.mxu0 0
      %1273 = vmatprep.subr.bf16.mxu0 0
      %1274 = vmatpush2.bf16.msra.mxu0 0
      %1275 = vmatprep.subr.bf16.mxu0 0
      %1276 = vmatpush2.bf16.msra.mxu0 0
      %1277 = vmatprep.subr.bf16.mxu0 0
      %1278 = vmatpush2.bf16.msra.mxu0 0
      %1279 = vmatprep.subr.bf16.mxu0 0
      %1280 = vmatpush2.bf16.msra.mxu0 0
      %1281 = vmatprep.subr.bf16.mxu0 0
      %1282 = vmatpush2.bf16.msra.mxu0 0
      %1283 = vmatprep.subr.bf16.mxu0 0
      %1284 = vmatpush2.bf16.msra.mxu0 0
      %1285 = vmatprep.subr.bf16.mxu0 0
      %1286 = vmatpush2.bf16.msra.mxu0 0
      %1287 = vmatprep.mubr.bf16.mxu0 0
      %1288 = vmatmul.mubr.bf16.gmra.mxu0 %v1249
      %v1289 = vpop.f32.mrf.mxu0
      %v1290 = vadd.f32 0.0, %v1289
      %v1291 = vpop.f32.mrf.mxu0
      %v1292 = vpop.f32.mrf.mxu0
      %v1293 = vpop.f32.mrf.mxu0
      %1294 = vdwg.mxu0
      %v1295 = vpack.c.bf16 %v1186, %v1186
      %v1296 = vpack.c.bf16 %v1140, %v1140
      %1297 = vmatprep.subr.bf16.mxu0 0
      %1298 = vmatpush1.bf16.xpose.msra.mxu0 0
      %1299 = vmatprep.subr.bf16.mxu0 0
      %1300 = vmatpush1.bf16.xpose.msra.mxu0 0
      %1301 = vmatprep.subr.bf16.mxu0 0
      %1302 = vmatpush1.bf16.xpose.msra.mxu0 0
      %1303 = vmatprep.subr.bf16.mxu0 0
      %1304 = vmatpush1.bf16.xpose.msra.mxu0 0
      %1305 = vmatprep.subr.bf16.mxu0 0
      %1306 = vmatpush1.bf16.xpose.msra.mxu0 0
      %1307 = vmatprep.subr.bf16.mxu0 0
      %1308 = vmatpush1.bf16.xpose.msra.mxu0 0
      %1309 = vmatprep.subr.bf16.mxu0 0
      %1310 = vmatpush1.bf16.xpose.msra.mxu0 0
      %1311 = vmatprep.subr.bf16.mxu0 0
      %1312 = vmatpush1.bf16.xpose.msra.mxu0 %v1296
      %1313 = vmatprep.subr.bf16.mxu0 0
      %1314 = vmatpush2.bf16.xpose.msra.mxu0 0
      %1315 = vmatprep.subr.bf16.mxu0 0
      %1316 = vmatpush2.bf16.xpose.msra.mxu0 0
      %1317 = vmatprep.subr.bf16.mxu0 0
      %1318 = vmatpush2.bf16.xpose.msra.mxu0 0
      %1319 = vmatprep.subr.bf16.mxu0 0
      %1320 = vmatpush2.bf16.xpose.msra.mxu0 0
      %1321 = vmatprep.subr.bf16.mxu0 0
      %1322 = vmatpush2.bf16.xpose.msra.mxu0 0
      %1323 = vmatprep.subr.bf16.mxu0 0
      %1324 = vmatpush2.bf16.xpose.msra.mxu0 0
      %1325 = vmatprep.subr.bf16.mxu0 0
      %1326 = vmatpush2.bf16.xpose.msra.mxu0 0
      %1327 = vmatprep.subr.bf16.mxu0 0
      %1328 = vmatpush2.bf16.xpose.msra.mxu0 0
      %1329 = vmatprep.mubr.bf16.mxu0 0
      %1330 = vmatmul.mubr.bf16.gmra.mxu0 %v1295
      %v1331 = vpop.f32.mrf.mxu0
      %v1332 = vadd.f32 %v1191, %v1331
      %v1333 = vpop.f32.mrf.mxu0
      %v1334 = vpop.f32.mrf.mxu0
      %v1335 = vpop.f32.mrf.mxu0
      %1336 = vdwg.mxu0
      %v1337 = vsel %vm1234, %v1332, -inf
      %1338 = vmax.xlane.f32.xlu0 %v1337
      %v1339 = vpop.xlane.xlu0 %1338
      %v1340 = vsub.f32 %v1332, %v1339
      %v1341 = vmul.f32 %v1340, 1.442695
      %v1342 = vpow.pop %v1341
      %v1343 = vsel %vm1234, %v1342, 0.0
      %1344 = vadd.xlane.f32.xlu0 %v1343
      %v1345 = vpop.xlane.xlu0 %1344
      %v1346 = vrcp.pop %v1345
      %v1347 = vmul.f32 %v1342, %v1346
      %v1348 = vpack.c.bf16 %v1347, %v1347
      %v1349 = vpack.c.bf16 %v1181, %v1181
      %v1351 = vsel %vm1234, %v1348, 0
      %v1354 = vsel %vm1251, %v1349, 0
      %1356 = vmatprep.subr.bf16.mxu0 0
      %1357 = vmatpush1.bf16.msra.mxu0 0
      %1358 = vmatprep.subr.bf16.mxu0 0
      %1359 = vmatpush1.bf16.msra.mxu0 0
      %1360 = vmatprep.subr.bf16.mxu0 0
      %1361 = vmatpush1.bf16.msra.mxu0 0
      %1362 = vmatprep.subr.bf16.mxu0 0
      %1363 = vmatpush1.bf16.msra.mxu0 0
      %1364 = vmatprep.subr.bf16.mxu0 0
      %1365 = vmatpush1.bf16.msra.mxu0 0
      %1366 = vmatprep.subr.bf16.mxu0 0
      %1367 = vmatpush1.bf16.msra.mxu0 0
      %1368 = vmatprep.subr.bf16.mxu0 0
      %1369 = vmatpush1.bf16.msra.mxu0 0
      %1370 = vmatprep.subr.bf16.mxu0 0
      %1371 = vmatpush1.bf16.msra.mxu0 %v1354
      %1372 = vmatprep.subr.bf16.mxu0 0
      %1373 = vmatpush2.bf16.msra.mxu0 0
      %1374 = vmatprep.subr.bf16.mxu0 0
      %1375 = vmatpush2.bf16.msra.mxu0 0
      %1376 = vmatprep.subr.bf16.mxu0 0
      %1377 = vmatpush2.bf16.msra.mxu0 0
      %1378 = vmatprep.subr.bf16.mxu0 0
      %1379 = vmatpush2.bf16.msra.mxu0 0
      %1380 = vmatprep.subr.bf16.mxu0 0
      %1381 = vmatpush2.bf16.msra.mxu0 0
      %1382 = vmatprep.subr.bf16.mxu0 0
      %1383 = vmatpush2.bf16.msra.mxu0 0
      %1384 = vmatprep.subr.bf16.mxu0 0
      %1385 = vmatpush2.bf16.msra.mxu0 0
      %1386 = vmatprep.subr.bf16.mxu0 0
      %1387 = vmatpush2.bf16.msra.mxu0 0
      %1388 = vmatprep.mubr.bf16.mxu0 0
      %1389 = vmatmul.mubr.bf16.gmra.mxu0 %v1351
      %v1390 = vpop.f32.mrf.mxu0
      %v1391 = vadd.f32 0.0, %v1390
      %v1392 = vpop.f32.mrf.mxu0
      %v1393 = vpop.f32.mrf.mxu0
      %v1394 = vpop.f32.mrf.mxu0
      %1395 = vdwg.mxu0
      %v1396 = vpack.c.bf16 %v1290, %v1290
      %v1397 = vpack.c.bf16 %v1391, %v1391
      %v1398 = vld [vmem:[%s4] sm:$0xff]
      %v1399 = vld [vmem:[%s4 + $0x8] sm:$0xff]
      %v1400 = vld [vmem:[%s4 + $0x10] sm:$0xff]
      %v1401 = vld [vmem:[%s4 + $0x18] sm:$0xff]
      %v1402 = vld [vmem:[%s4 + $0x20] sm:$0xff]
      %v1403 = vld [vmem:[%s4 + $0x28] sm:$0xff]
      %v1404 = vld [vmem:[%s4 + $0x30] sm:$0xff]
      %v1405 = vld [vmem:[%s4 + $0x38] sm:$0xff]
      %v1406 = vld [vmem:[%s4 + $0x40] sm:$0xff]
      %v1407 = vld [vmem:[%s4 + $0x48] sm:$0xff]
      %v1408 = vld [vmem:[%s4 + $0x50] sm:$0xff]
      %v1409 = vld [vmem:[%s4 + $0x58] sm:$0xff]
      %v1410 = vld [vmem:[%s4 + $0x60] sm:$0xff]
      %v1411 = vld [vmem:[%s4 + $0x68] sm:$0xff]
      %v1412 = vld [vmem:[%s4 + $0x70] sm:$0xff]
      %v1413 = vld [vmem:[%s4 + $0x78] sm:$0xff]
      %v1414 = vld [vmem:[%s4 + $0x80] sm:$0xff]
      %v1415 = vld [vmem:[%s4 + $0x88] sm:$0xff]
      %v1416 = vld [vmem:[%s4 + $0x90] sm:$0xff]
      %v1417 = vld [vmem:[%s4 + $0x98] sm:$0xff]
      %v1418 = vld [vmem:[%s4 + $0xa0] sm:$0xff]
      %v1419 = vld [vmem:[%s4 + $0xa8] sm:$0xff]
      %v1420 = vld [vmem:[%s4 + $0xb0] sm:$0xff]
      %v1421 = vld [vmem:[%s4 + $0xb8] sm:$0xff]
      %v1422 = vld [vmem:[%s4 + $0xc0] sm:$0xff]
      %v1423 = vld [vmem:[%s4 + $0xc8] sm:$0xff]
      %v1424 = vld [vmem:[%s4 + $0xd0] sm:$0xff]
      %v1425 = vld [vmem:[%s4 + $0xd8] sm:$0xff]
      %v1426 = vld [vmem:[%s4 + $0xe0] sm:$0xff]
      %v1427 = vld [vmem:[%s4 + $0xe8] sm:$0xff]
      %v1428 = vld [vmem:[%s4 + $0xf0] sm:$0xff]
      %v1429 = vld [vmem:[%s4 + $0xf8] sm:$0xff]
      %v1430 = vld [vmem:[%s5] sm:$0x3]
      %v1432 = vlaneseq
      %v1433 = vshrl.u32 %v1432, 7
      %v1434 = vsub.s32 0, %v1433
      %v1435 = vrot.slane %v1430, %v1434
      %v1436 = vlaneseq
      %v1437 = vshrl.u32 %v1436, 7
      %v1438 = vsub.s32 1, %v1437
      %v1439 = vrot.slane %v1430, %v1438
      %v1474 = vunpack.c.l.b16 %v1398
      %v1475 = vunpack.c.h.b16 %v1398
      %v1476 = vunpack.c.l.b16 %v1399
      %v1477 = vunpack.c.h.b16 %v1399
      %v1478 = vunpack.c.l.b16 %v1400
      %v1479 = vunpack.c.h.b16 %v1400
      %v1480 = vunpack.c.l.b16 %v1401
      %v1481 = vunpack.c.h.b16 %v1401
      %v1482 = vunpack.c.l.b16 %v1402
      %v1483 = vunpack.c.h.b16 %v1402
      %v1484 = vunpack.c.l.b16 %v1403
      %v1485 = vunpack.c.h.b16 %v1403
      %v1486 = vunpack.c.l.b16 %v1404
      %v1487 = vunpack.c.h.b16 %v1404
      %v1488 = vunpack.c.l.b16 %v1405
      %v1489 = vunpack.c.h.b16 %v1405
      %v1490 = vunpack.c.l.b16 %v1406
      %v1491 = vunpack.c.h.b16 %v1406
      %v1492 = vunpack.c.l.b16 %v1407
      %v1493 = vunpack.c.h.b16 %v1407
      %v1494 = vunpack.c.l.b16 %v1408
      %v1495 = vunpack.c.h.b16 %v1408
      %v1496 = vunpack.c.l.b16 %v1409
      %v1497 = vunpack.c.h.b16 %v1409
      %v1498 = vunpack.c.l.b16 %v1410
      %v1499 = vunpack.c.h.b16 %v1410
      %v1500 = vunpack.c.l.b16 %v1411
      %v1501 = vunpack.c.h.b16 %v1411
      %v1502 = vunpack.c.l.b16 %v1412
      %v1503 = vunpack.c.h.b16 %v1412
      %v1504 = vunpack.c.l.b16 %v1413
      %v1505 = vunpack.c.h.b16 %v1413
      %v1506 = vunpack.c.l.b16 %v1414
      %v1507 = vunpack.c.h.b16 %v1414
      %v1508 = vunpack.c.l.b16 %v1415
      %v1509 = vunpack.c.h.b16 %v1415
      %v1510 = vunpack.c.l.b16 %v1416
      %v1511 = vunpack.c.h.b16 %v1416
      %v1512 = vunpack.c.l.b16 %v1417
      %v1513 = vunpack.c.h.b16 %v1417
      %v1514 = vunpack.c.l.b16 %v1418
      %v1515 = vunpack.c.h.b16 %v1418
      %v1516 = vunpack.c.l.b16 %v1419
      %v1517 = vunpack.c.h.b16 %v1419
      %v1518 = vunpack.c.l.b16 %v1420
      %v1519 = vunpack.c.h.b16 %v1420
      %v1520 = vunpack.c.l.b16 %v1421
      %v1521 = vunpack.c.h.b16 %v1421
      %v1522 = vunpack.c.l.b16 %v1422
      %v1523 = vunpack.c.h.b16 %v1422
      %v1524 = vunpack.c.l.b16 %v1423
      %v1525 = vunpack.c.h.b16 %v1423
      %v1526 = vunpack.c.l.b16 %v1424
      %v1527 = vunpack.c.h.b16 %v1424
      %v1528 = vunpack.c.l.b16 %v1425
      %v1529 = vunpack.c.h.b16 %v1425
      %v1530 = vunpack.c.l.b16 %v1426
      %v1531 = vunpack.c.h.b16 %v1426
      %v1532 = vunpack.c.l.b16 %v1427
      %v1533 = vunpack.c.h.b16 %v1427
      %v1534 = vunpack.c.l.b16 %v1428
      %v1535 = vunpack.c.h.b16 %v1428
      %v1536 = vunpack.c.l.b16 %v1429
      %v1537 = vunpack.c.h.b16 %v1429
      %v1538 = vpack.c.b16 %v1476, %v1474
      %v1539 = vpack.c.b16 %v1477, %v1475
      %v1540 = vpack.c.b16 %v1480, %v1478
      %v1541 = vpack.c.b16 %v1481, %v1479
      %v1542 = vpack.c.b16 %v1484, %v1482
      %v1543 = vpack.c.b16 %v1485, %v1483
      %v1544 = vpack.c.b16 %v1488, %v1486
      %v1545 = vpack.c.b16 %v1489, %v1487
      %v1546 = vpack.c.b16 %v1492, %v1490
      %v1547 = vpack.c.b16 %v1493, %v1491
      %v1548 = vpack.c.b16 %v1496, %v1494
      %v1549 = vpack.c.b16 %v1497, %v1495
      %v1550 = vpack.c.b16 %v1500, %v1498
      %v1551 = vpack.c.b16 %v1501, %v1499
      %v1552 = vpack.c.b16 %v1504, %v1502
      %v1553 = vpack.c.b16 %v1505, %v1503
      %v1554 = vpack.c.b16 %v1508, %v1506
      %v1555 = vpack.c.b16 %v1509, %v1507
      %v1556 = vpack.c.b16 %v1512, %v1510
      %v1557 = vpack.c.b16 %v1513, %v1511
      %v1558 = vpack.c.b16 %v1516, %v1514
      %v1559 = vpack.c.b16 %v1517, %v1515
      %v1560 = vpack.c.b16 %v1520, %v1518
      %v1561 = vpack.c.b16 %v1521, %v1519
      %v1562 = vpack.c.b16 %v1524, %v1522
      %v1563 = vpack.c.b16 %v1525, %v1523
      %v1564 = vpack.c.b16 %v1528, %v1526
      %v1565 = vpack.c.b16 %v1529, %v1527
      %v1566 = vpack.c.b16 %v1532, %v1530
      %v1567 = vpack.c.b16 %v1533, %v1531
      %v1568 = vpack.c.b16 %v1536, %v1534
      %v1569 = vpack.c.b16 %v1537, %v1535
      %1602 = vmatprep.subr.bf16.mxu0 %v1553
      %1603 = vmatpush1.bf16.msra.mxu0 %v1552
      %1604 = vmatprep.subr.bf16.mxu0 %v1551
      %1605 = vmatpush1.bf16.msra.mxu0 %v1550
      %1606 = vmatprep.subr.bf16.mxu0 %v1549
      %1607 = vmatpush1.bf16.msra.mxu0 %v1548
      %1608 = vmatprep.subr.bf16.mxu0 %v1547
      %1609 = vmatpush1.bf16.msra.mxu0 %v1546
      %1610 = vmatprep.subr.bf16.mxu0 %v1545
      %1611 = vmatpush1.bf16.msra.mxu0 %v1544
      %1612 = vmatprep.subr.bf16.mxu0 %v1543
      %1613 = vmatpush1.bf16.msra.mxu0 %v1542
      %1614 = vmatprep.subr.bf16.mxu0 %v1541
      %1615 = vmatpush1.bf16.msra.mxu0 %v1540
      %1616 = vmatprep.subr.bf16.mxu0 %v1539
      %1617 = vmatpush1.bf16.msra.mxu0 %v1538
      %1618 = vmatprep.subr.bf16.mxu0 %v1569
      %1619 = vmatpush2.bf16.msra.mxu0 %v1568
      %1620 = vmatprep.subr.bf16.mxu0 %v1567
      %1621 = vmatpush2.bf16.msra.mxu0 %v1566
      %1622 = vmatprep.subr.bf16.mxu0 %v1565
      %1623 = vmatpush2.bf16.msra.mxu0 %v1564
      %1624 = vmatprep.subr.bf16.mxu0 %v1563
      %1625 = vmatpush2.bf16.msra.mxu0 %v1562
      %1626 = vmatprep.subr.bf16.mxu0 %v1561
      %1627 = vmatpush2.bf16.msra.mxu0 %v1560
      %1628 = vmatprep.subr.bf16.mxu0 %v1559
      %1629 = vmatpush2.bf16.msra.mxu0 %v1558
      %1630 = vmatprep.subr.bf16.mxu0 %v1557
      %1631 = vmatpush2.bf16.msra.mxu0 %v1556
      %1632 = vmatprep.subr.bf16.mxu0 %v1555
      %1633 = vmatpush2.bf16.msra.mxu0 %v1554
      %1634 = vmatprep.mubr.bf16.mxu0 %v1397
      %1635 = vmatmul.mubr.bf16.gmra.mxu0 %v1396
      %v1636 = vpop.f32.mrf.mxu0
      %v1637 = vadd.f32 %v1435, %v1636
      %v1638 = vpop.f32.mrf.mxu0
      %v1639 = vadd.f32 %v1439, %v1638
      %v1640 = vpop.f32.mrf.mxu0
      %v1641 = vpop.f32.mrf.mxu0
      %1642 = vdwg.mxu0
      %v1643 = vadd.f32 %v1637, %v450
      %v1644 = vadd.f32 %v1639, %v451
      %v1645 = vld [vmem:[%s6] sm:$0x3]
      %v1646 = vld [vmem:[%s7] sm:$0x3]
      %v1647 = vadd.f32 %v1643, %v1644
      %1648 = vadd.xlane.f32.xlu0 %v1647
      %v1649 = vpop.xlane.xlu0 %1648
      %v1650 = vrcp.pop 256.0
      %v1651 = vmul.f32 %v1649, %v1650
      %v1652 = vsub.f32 %v1643, %v1651
      %v1653 = vsub.f32 %v1644, %v1651
      %v1654 = vmul.f32 %v1652, %v1652
      %v1655 = vmul.f32 %v1653, %v1653
      %v1656 = vadd.f32 %v1654, %v1655
      %1657 = vadd.xlane.f32.xlu0 %v1656
      %v1658 = vpop.xlane.xlu0 %1657
      %v1659 = vmul.f32 %v1658, %v1650
      %v1660 = vadd.f32 %v1659, 1e-05
      %v1661 = vrsqrt.pop %v1660
      %v1662 = vmul.f32 %v1652, %v1661
      %v1663 = vmul.f32 %v1653, %v1661
      %v1665 = vlaneseq
      %v1666 = vshrl.u32 %v1665, 7
      %v1667 = vsub.s32 0, %v1666
      %v1668 = vrot.slane %v1645, %v1667
      %v1669 = vlaneseq
      %v1670 = vshrl.u32 %v1669, 7
      %v1671 = vsub.s32 1, %v1670
      %v1672 = vrot.slane %v1645, %v1671
      %v1675 = vmul.f32 %v1662, %v1668
      %v1676 = vmul.f32 %v1663, %v1672
      %v1678 = vlaneseq
      %v1679 = vshrl.u32 %v1678, 7
      %v1680 = vsub.s32 0, %v1679
      %v1681 = vrot.slane %v1646, %v1680
      %v1682 = vlaneseq
      %v1683 = vshrl.u32 %v1682, 7
      %v1684 = vsub.s32 1, %v1683
      %v1685 = vrot.slane %v1646, %v1684
      %v1688 = vadd.f32 %v1675, %v1681
      %v1689 = vadd.f32 %v1676, %v1685
      %v1690 = vlaneseq
      %v1691 = vshrl.u32 %v1690, 7
      %vm1692 = vcmp.lt.s32.totalorder %v1691, %v1189
      %v1693 = vsel %vm1692, 1, 0
      %v1694 = vcvt.s32.f32 %v1693
      %v1695 = vmul.f32 %v1688, %v1694
      %v1696 = vmul.f32 %v1689, %v1694
      %v1697 = vrot.slane %v1695, 7
      %v1698 = vrot.slane %v1696, 7
      %vm1699 = vcmp.ge.s32.totalorder %v1691, 1
      %v1700 = vsel %vm1699, 1, 0
      %vm1701 = vcmp.eq.s32.totalorder %v1700, 1
      %v1702 = vsel %vm1701, %v1697, 0.0
      %v1703 = vsel %vm1701, %v1698, 0.0
      %v1704 = vrot.slane %v1695, 1
      %v1705 = vrot.slane %v1696, 1
      %vm1706 = vcmp.lt.s32.totalorder %v1691, 7
      %v1707 = vsel %vm1706, 1, 0
      %vm1708 = vcmp.eq.s32.totalorder %v1707, 1
      %v1709 = vsel %vm1708, %v1704, 0.0
      %v1710 = vsel %vm1708, %v1705, 0.0
      %v1711 = vpack.c.bf16 %v1702, %v1702
      %v1712 = vpack.c.bf16 %v1703, %v1703
      %v1713 = vpack.c.bf16 %v1695, %v1695
      %v1714 = vpack.c.bf16 %v1696, %v1696
      %v1715 = vpack.c.bf16 %v1709, %v1709
      %v1716 = vpack.c.bf16 %v1710, %v1710
      %v1717 = vld [vmem:[%s8] sm:$0xff]
      %v1718 = vld [vmem:[%s8 + $0x8] sm:$0xff]
      %v1719 = vld [vmem:[%s8 + $0x10] sm:$0xff]
      %v1720 = vld [vmem:[%s8 + $0x18] sm:$0xff]
      %v1721 = vld [vmem:[%s8 + $0x20] sm:$0xff]
      %v1722 = vld [vmem:[%s8 + $0x28] sm:$0xff]
      %v1723 = vld [vmem:[%s8 + $0x30] sm:$0xff]
      %v1724 = vld [vmem:[%s8 + $0x38] sm:$0xff]
      %v1725 = vld [vmem:[%s8 + $0x40] sm:$0xff]
      %v1726 = vld [vmem:[%s8 + $0x48] sm:$0xff]
      %v1727 = vld [vmem:[%s8 + $0x50] sm:$0xff]
      %v1728 = vld [vmem:[%s8 + $0x58] sm:$0xff]
      %v1729 = vld [vmem:[%s8 + $0x60] sm:$0xff]
      %v1730 = vld [vmem:[%s8 + $0x68] sm:$0xff]
      %v1731 = vld [vmem:[%s8 + $0x70] sm:$0xff]
      %v1732 = vld [vmem:[%s8 + $0x78] sm:$0xff]
      %v1733 = vld [vmem:[%s8 + $0x80] sm:$0xff]
      %v1734 = vld [vmem:[%s8 + $0x88] sm:$0xff]
      %v1735 = vld [vmem:[%s8 + $0x90] sm:$0xff]
      %v1736 = vld [vmem:[%s8 + $0x98] sm:$0xff]
      %v1737 = vld [vmem:[%s8 + $0xa0] sm:$0xff]
      %v1738 = vld [vmem:[%s8 + $0xa8] sm:$0xff]
      %v1739 = vld [vmem:[%s8 + $0xb0] sm:$0xff]
      %v1740 = vld [vmem:[%s8 + $0xb8] sm:$0xff]
      %v1741 = vld [vmem:[%s8 + $0xc0] sm:$0xff]
      %v1742 = vld [vmem:[%s8 + $0xc8] sm:$0xff]
      %v1743 = vld [vmem:[%s8 + $0xd0] sm:$0xff]
      %v1744 = vld [vmem:[%s8 + $0xd8] sm:$0xff]
      %v1745 = vld [vmem:[%s8 + $0xe0] sm:$0xff]
      %v1746 = vld [vmem:[%s8 + $0xe8] sm:$0xff]
      %v1747 = vld [vmem:[%s8 + $0xf0] sm:$0xff]
      %v1748 = vld [vmem:[%s8 + $0xf8] sm:$0xff]
      %v1749 = vld [vmem:[%s8 + $0x100] sm:$0xff]
      %v1750 = vld [vmem:[%s8 + $0x108] sm:$0xff]
      %v1751 = vld [vmem:[%s8 + $0x110] sm:$0xff]
      %v1752 = vld [vmem:[%s8 + $0x118] sm:$0xff]
      %v1753 = vld [vmem:[%s8 + $0x120] sm:$0xff]
      %v1754 = vld [vmem:[%s8 + $0x128] sm:$0xff]
      %v1755 = vld [vmem:[%s8 + $0x130] sm:$0xff]
      %v1756 = vld [vmem:[%s8 + $0x138] sm:$0xff]
      %v1757 = vld [vmem:[%s8 + $0x140] sm:$0xff]
      %v1758 = vld [vmem:[%s8 + $0x148] sm:$0xff]
      %v1759 = vld [vmem:[%s8 + $0x150] sm:$0xff]
      %v1760 = vld [vmem:[%s8 + $0x158] sm:$0xff]
      %v1761 = vld [vmem:[%s8 + $0x160] sm:$0xff]
      %v1762 = vld [vmem:[%s8 + $0x168] sm:$0xff]
      %v1763 = vld [vmem:[%s8 + $0x170] sm:$0xff]
      %v1764 = vld [vmem:[%s8 + $0x178] sm:$0xff]
      %v1765 = vld [vmem:[%s8 + $0x180] sm:$0xff]
      %v1766 = vld [vmem:[%s8 + $0x188] sm:$0xff]
      %v1767 = vld [vmem:[%s8 + $0x190] sm:$0xff]
      %v1768 = vld [vmem:[%s8 + $0x198] sm:$0xff]
      %v1769 = vld [vmem:[%s8 + $0x1a0] sm:$0xff]
      %v1770 = vld [vmem:[%s8 + $0x1a8] sm:$0xff]
      %v1771 = vld [vmem:[%s8 + $0x1b0] sm:$0xff]
      %v1772 = vld [vmem:[%s8 + $0x1b8] sm:$0xff]
      %v1773 = vld [vmem:[%s8 + $0x1c0] sm:$0xff]
      %v1774 = vld [vmem:[%s8 + $0x1c8] sm:$0xff]
      %v1775 = vld [vmem:[%s8 + $0x1d0] sm:$0xff]
      %v1776 = vld [vmem:[%s8 + $0x1d8] sm:$0xff]
      %v1777 = vld [vmem:[%s8 + $0x1e0] sm:$0xff]
      %v1778 = vld [vmem:[%s8 + $0x1e8] sm:$0xff]
      %v1779 = vld [vmem:[%s8 + $0x1f0] sm:$0xff]
      %v1780 = vld [vmem:[%s8 + $0x1f8] sm:$0xff]
      %v1781 = vld [vmem:[%s8 + $0x200] sm:$0xff]
      %v1782 = vld [vmem:[%s8 + $0x208] sm:$0xff]
      %v1783 = vld [vmem:[%s8 + $0x210] sm:$0xff]
      %v1784 = vld [vmem:[%s8 + $0x218] sm:$0xff]
      %v1785 = vld [vmem:[%s8 + $0x220] sm:$0xff]
      %v1786 = vld [vmem:[%s8 + $0x228] sm:$0xff]
      %v1787 = vld [vmem:[%s8 + $0x230] sm:$0xff]
      %v1788 = vld [vmem:[%s8 + $0x238] sm:$0xff]
      %v1789 = vld [vmem:[%s8 + $0x240] sm:$0xff]
      %v1790 = vld [vmem:[%s8 + $0x248] sm:$0xff]
      %v1791 = vld [vmem:[%s8 + $0x250] sm:$0xff]
      %v1792 = vld [vmem:[%s8 + $0x258] sm:$0xff]
      %v1793 = vld [vmem:[%s8 + $0x260] sm:$0xff]
      %v1794 = vld [vmem:[%s8 + $0x268] sm:$0xff]
      %v1795 = vld [vmem:[%s8 + $0x270] sm:$0xff]
      %v1796 = vld [vmem:[%s8 + $0x278] sm:$0xff]
      %v1797 = vld [vmem:[%s8 + $0x280] sm:$0xff]
      %v1798 = vld [vmem:[%s8 + $0x288] sm:$0xff]
      %v1799 = vld [vmem:[%s8 + $0x290] sm:$0xff]
      %v1800 = vld [vmem:[%s8 + $0x298] sm:$0xff]
      %v1801 = vld [vmem:[%s8 + $0x2a0] sm:$0xff]
      %v1802 = vld [vmem:[%s8 + $0x2a8] sm:$0xff]
      %v1803 = vld [vmem:[%s8 + $0x2b0] sm:$0xff]
      %v1804 = vld [vmem:[%s8 + $0x2b8] sm:$0xff]
      %v1805 = vld [vmem:[%s8 + $0x2c0] sm:$0xff]
      %v1806 = vld [vmem:[%s8 + $0x2c8] sm:$0xff]
      %v1807 = vld [vmem:[%s8 + $0x2d0] sm:$0xff]
      %v1808 = vld [vmem:[%s8 + $0x2d8] sm:$0xff]
      %v1809 = vld [vmem:[%s8 + $0x2e0] sm:$0xff]
      %v1810 = vld [vmem:[%s8 + $0x2e8] sm:$0xff]
      %v1811 = vld [vmem:[%s8 + $0x2f0] sm:$0xff]
      %v1812 = vld [vmem:[%s8 + $0x2f8] sm:$0xff]
      %v1813 = vld [vmem:[%s9] sm:$0x3]
      %v1815 = vlaneseq
      %v1816 = vshrl.u32 %v1815, 7
      %v1817 = vsub.s32 0, %v1816
      %v1818 = vrot.slane %v1813, %v1817
      %v1819 = vlaneseq
      %v1820 = vshrl.u32 %v1819, 7
      %v1821 = vsub.s32 1, %v1820
      %v1822 = vrot.slane %v1813, %v1821
      %v1921 = vunpack.c.l.b16 %v1717
      %v1922 = vunpack.c.h.b16 %v1717
      %v1923 = vunpack.c.l.b16 %v1718
      %v1924 = vunpack.c.h.b16 %v1718
      %v1925 = vunpack.c.l.b16 %v1719
      %v1926 = vunpack.c.h.b16 %v1719
      %v1927 = vunpack.c.l.b16 %v1720
      %v1928 = vunpack.c.h.b16 %v1720
      %v1929 = vunpack.c.l.b16 %v1721
      %v1930 = vunpack.c.h.b16 %v1721
      %v1931 = vunpack.c.l.b16 %v1722
      %v1932 = vunpack.c.h.b16 %v1722
      %v1933 = vunpack.c.l.b16 %v1723
      %v1934 = vunpack.c.h.b16 %v1723
      %v1935 = vunpack.c.l.b16 %v1724
      %v1936 = vunpack.c.h.b16 %v1724
      %v1937 = vunpack.c.l.b16 %v1725
      %v1938 = vunpack.c.h.b16 %v1725
      %v1939 = vunpack.c.l.b16 %v1726
      %v1940 = vunpack.c.h.b16 %v1726
      %v1941 = vunpack.c.l.b16 %v1727
      %v1942 = vunpack.c.h.b16 %v1727
      %v1943 = vunpack.c.l.b16 %v1728
      %v1944 = vunpack.c.h.b16 %v1728
      %v1945 = vunpack.c.l.b16 %v1729
      %v1946 = vunpack.c.h.b16 %v1729
      %v1947 = vunpack.c.l.b16 %v1730
      %v1948 = vunpack.c.h.b16 %v1730
      %v1949 = vunpack.c.l.b16 %v1731
      %v1950 = vunpack.c.h.b16 %v1731
      %v1951 = vunpack.c.l.b16 %v1732
      %v1952 = vunpack.c.h.b16 %v1732
      %v1953 = vunpack.c.l.b16 %v1733
      %v1954 = vunpack.c.h.b16 %v1733
      %v1955 = vunpack.c.l.b16 %v1734
      %v1956 = vunpack.c.h.b16 %v1734
      %v1957 = vunpack.c.l.b16 %v1735
      %v1958 = vunpack.c.h.b16 %v1735
      %v1959 = vunpack.c.l.b16 %v1736
      %v1960 = vunpack.c.h.b16 %v1736
      %v1961 = vunpack.c.l.b16 %v1737
      %v1962 = vunpack.c.h.b16 %v1737
      %v1963 = vunpack.c.l.b16 %v1738
      %v1964 = vunpack.c.h.b16 %v1738
      %v1965 = vunpack.c.l.b16 %v1739
      %v1966 = vunpack.c.h.b16 %v1739
      %v1967 = vunpack.c.l.b16 %v1740
      %v1968 = vunpack.c.h.b16 %v1740
      %v1969 = vunpack.c.l.b16 %v1741
      %v1970 = vunpack.c.h.b16 %v1741
      %v1971 = vunpack.c.l.b16 %v1742
      %v1972 = vunpack.c.h.b16 %v1742
      %v1973 = vunpack.c.l.b16 %v1743
      %v1974 = vunpack.c.h.b16 %v1743
      %v1975 = vunpack.c.l.b16 %v1744
      %v1976 = vunpack.c.h.b16 %v1744
      %v1977 = vunpack.c.l.b16 %v1745
      %v1978 = vunpack.c.h.b16 %v1745
      %v1979 = vunpack.c.l.b16 %v1746
      %v1980 = vunpack.c.h.b16 %v1746
      %v1981 = vunpack.c.l.b16 %v1747
      %v1982 = vunpack.c.h.b16 %v1747
      %v1983 = vunpack.c.l.b16 %v1748
      %v1984 = vunpack.c.h.b16 %v1748
      %v1985 = vunpack.c.l.b16 %v1749
      %v1986 = vunpack.c.h.b16 %v1749
      %v1987 = vunpack.c.l.b16 %v1750
      %v1988 = vunpack.c.h.b16 %v1750
      %v1989 = vunpack.c.l.b16 %v1751
      %v1990 = vunpack.c.h.b16 %v1751
      %v1991 = vunpack.c.l.b16 %v1752
      %v1992 = vunpack.c.h.b16 %v1752
      %v1993 = vunpack.c.l.b16 %v1753
      %v1994 = vunpack.c.h.b16 %v1753
      %v1995 = vunpack.c.l.b16 %v1754
      %v1996 = vunpack.c.h.b16 %v1754
      %v1997 = vunpack.c.l.b16 %v1755
      %v1998 = vunpack.c.h.b16 %v1755
      %v1999 = vunpack.c.l.b16 %v1756
      %v2000 = vunpack.c.h.b16 %v1756
      %v2001 = vunpack.c.l.b16 %v1757
      %v2002 = vunpack.c.h.b16 %v1757
      %v2003 = vunpack.c.l.b16 %v1758
      %v2004 = vunpack.c.h.b16 %v1758
      %v2005 = vunpack.c.l.b16 %v1759
      %v2006 = vunpack.c.h.b16 %v1759
      %v2007 = vunpack.c.l.b16 %v1760
      %v2008 = vunpack.c.h.b16 %v1760
      %v2009 = vunpack.c.l.b16 %v1761
      %v2010 = vunpack.c.h.b16 %v1761
      %v2011 = vunpack.c.l.b16 %v1762
      %v2012 = vunpack.c.h.b16 %v1762
      %v2013 = vunpack.c.l.b16 %v1763
      %v2014 = vunpack.c.h.b16 %v1763
      %v2015 = vunpack.c.l.b16 %v1764
      %v2016 = vunpack.c.h.b16 %v1764
      %v2017 = vunpack.c.l.b16 %v1765
      %v2018 = vunpack.c.h.b16 %v1765
      %v2019 = vunpack.c.l.b16 %v1766
      %v2020 = vunpack.c.h.b16 %v1766
      %v2021 = vunpack.c.l.b16 %v1767
      %v2022 = vunpack.c.h.b16 %v1767
      %v2023 = vunpack.c.l.b16 %v1768
      %v2024 = vunpack.c.h.b16 %v1768
      %v2025 = vunpack.c.l.b16 %v1769
      %v2026 = vunpack.c.h.b16 %v1769
      %v2027 = vunpack.c.l.b16 %v1770
      %v2028 = vunpack.c.h.b16 %v1770
      %v2029 = vunpack.c.l.b16 %v1771
      %v2030 = vunpack.c.h.b16 %v1771
      %v2031 = vunpack.c.l.b16 %v1772
      %v2032 = vunpack.c.h.b16 %v1772
      %v2033 = vunpack.c.l.b16 %v1773
      %v2034 = vunpack.c.h.b16 %v1773
      %v2035 = vunpack.c.l.b16 %v1774
      %v2036 = vunpack.c.h.b16 %v1774
      %v2037 = vunpack.c.l.b16 %v1775
      %v2038 = vunpack.c.h.b16 %v1775
      %v2039 = vunpack.c.l.b16 %v1776
      %v2040 = vunpack.c.h.b16 %v1776
      %v2041 = vunpack.c.l.b16 %v1777
      %v2042 = vunpack.c.h.b16 %v1777
      %v2043 = vunpack.c.l.b16 %v1778
      %v2044 = vunpack.c.h.b16 %v1778
      %v2045 = vunpack.c.l.b16 %v1779
      %v2046 = vunpack.c.h.b16 %v1779
      %v2047 = vunpack.c.l.b16 %v1780
      %v2048 = vunpack.c.h.b16 %v1780
      %v2049 = vunpack.c.l.b16 %v1781
      %v2050 = vunpack.c.h.b16 %v1781
      %v2051 = vunpack.c.l.b16 %v1782
      %v2052 = vunpack.c.h.b16 %v1782
      %v2053 = vunpack.c.l.b16 %v1783
      %v2054 = vunpack.c.h.b16 %v1783
      %v2055 = vunpack.c.l.b16 %v1784
      %v2056 = vunpack.c.h.b16 %v1784
      %v2057 = vunpack.c.l.b16 %v1785
      %v2058 = vunpack.c.h.b16 %v1785
      %v2059 = vunpack.c.l.b16 %v1786
      %v2060 = vunpack.c.h.b16 %v1786
      %v2061 = vunpack.c.l.b16 %v1787
      %v2062 = vunpack.c.h.b16 %v1787
      %v2063 = vunpack.c.l.b16 %v1788
      %v2064 = vunpack.c.h.b16 %v1788
      %v2065 = vunpack.c.l.b16 %v1789
      %v2066 = vunpack.c.h.b16 %v1789
      %v2067 = vunpack.c.l.b16 %v1790
      %v2068 = vunpack.c.h.b16 %v1790
      %v2069 = vunpack.c.l.b16 %v1791
      %v2070 = vunpack.c.h.b16 %v1791
      %v2071 = vunpack.c.l.b16 %v1792
      %v2072 = vunpack.c.h.b16 %v1792
      %v2073 = vunpack.c.l.b16 %v1793
      %v2074 = vunpack.c.h.b16 %v1793
      %v2075 = vunpack.c.l.b16 %v1794
      %v2076 = vunpack.c.h.b16 %v1794
      %v2077 = vunpack.c.l.b16 %v1795
      %v2078 = vunpack.c.h.b16 %v1795
      %v2079 = vunpack.c.l.b16 %v1796
      %v2080 = vunpack.c.h.b16 %v1796
      %v2081 = vunpack.c.l.b16 %v1797
      %v2082 = vunpack.c.h.b16 %v1797
      %v2083 = vunpack.c.l.b16 %v1798
      %v2084 = vunpack.c.h.b16 %v1798
      %v2085 = vunpack.c.l.b16 %v1799
      %v2086 = vunpack.c.h.b16 %v1799
      %v2087 = vunpack.c.l.b16 %v1800
      %v2088 = vunpack.c.h.b16 %v1800
      %v2089 = vunpack.c.l.b16 %v1801
      %v2090 = vunpack.c.h.b16 %v1801
      %v2091 = vunpack.c.l.b16 %v1802
      %v2092 = vunpack.c.h.b16 %v1802
      %v2093 = vunpack.c.l.b16 %v1803
      %v2094 = vunpack.c.h.b16 %v1803
      %v2095 = vunpack.c.l.b16 %v1804
      %v2096 = vunpack.c.h.b16 %v1804
      %v2097 = vunpack.c.l.b16 %v1805
      %v2098 = vunpack.c.h.b16 %v1805
      %v2099 = vunpack.c.l.b16 %v1806
      %v2100 = vunpack.c.h.b16 %v1806
      %v2101 = vunpack.c.l.b16 %v1807
      %v2102 = vunpack.c.h.b16 %v1807
      %v2103 = vunpack.c.l.b16 %v1808
      %v2104 = vunpack.c.h.b16 %v1808
      %v2105 = vunpack.c.l.b16 %v1809
      %v2106 = vunpack.c.h.b16 %v1809
      %v2107 = vunpack.c.l.b16 %v1810
      %v2108 = vunpack.c.h.b16 %v1810
      %v2109 = vunpack.c.l.b16 %v1811
      %v2110 = vunpack.c.h.b16 %v1811
      %v2111 = vunpack.c.l.b16 %v1812
      %v2112 = vunpack.c.h.b16 %v1812
      %v2113 = vpack.c.b16 %v1923, %v1921
      %v2114 = vpack.c.b16 %v1924, %v1922
      %v2115 = vpack.c.b16 %v1927, %v1925
      %v2116 = vpack.c.b16 %v1928, %v1926
      %v2117 = vpack.c.b16 %v1931, %v1929
      %v2118 = vpack.c.b16 %v1932, %v1930
      %v2119 = vpack.c.b16 %v1935, %v1933
      %v2120 = vpack.c.b16 %v1936, %v1934
      %v2121 = vpack.c.b16 %v1939, %v1937
      %v2122 = vpack.c.b16 %v1940, %v1938
      %v2123 = vpack.c.b16 %v1943, %v1941
      %v2124 = vpack.c.b16 %v1944, %v1942
      %v2125 = vpack.c.b16 %v1947, %v1945
      %v2126 = vpack.c.b16 %v1948, %v1946
      %v2127 = vpack.c.b16 %v1951, %v1949
      %v2128 = vpack.c.b16 %v1952, %v1950
      %v2129 = vpack.c.b16 %v1955, %v1953
      %v2130 = vpack.c.b16 %v1956, %v1954
      %v2131 = vpack.c.b16 %v1959, %v1957
      %v2132 = vpack.c.b16 %v1960, %v1958
      %v2133 = vpack.c.b16 %v1963, %v1961
      %v2134 = vpack.c.b16 %v1964, %v1962
      %v2135 = vpack.c.b16 %v1967, %v1965
      %v2136 = vpack.c.b16 %v1968, %v1966
      %v2137 = vpack.c.b16 %v1971, %v1969
      %v2138 = vpack.c.b16 %v1972, %v1970
      %v2139 = vpack.c.b16 %v1975, %v1973
      %v2140 = vpack.c.b16 %v1976, %v1974
      %v2141 = vpack.c.b16 %v1979, %v1977
      %v2142 = vpack.c.b16 %v1980, %v1978
      %v2143 = vpack.c.b16 %v1983, %v1981
      %v2144 = vpack.c.b16 %v1984, %v1982
      %v2145 = vpack.c.b16 %v1987, %v1985
      %v2146 = vpack.c.b16 %v1988, %v1986
      %v2147 = vpack.c.b16 %v1991, %v1989
      %v2148 = vpack.c.b16 %v1992, %v1990
      %v2149 = vpack.c.b16 %v1995, %v1993
      %v2150 = vpack.c.b16 %v1996, %v1994
      %v2151 = vpack.c.b16 %v1999, %v1997
      %v2152 = vpack.c.b16 %v2000, %v1998
      %v2153 = vpack.c.b16 %v2003, %v2001
      %v2154 = vpack.c.b16 %v2004, %v2002
      %v2155 = vpack.c.b16 %v2007, %v2005
      %v2156 = vpack.c.b16 %v2008, %v2006
      %v2157 = vpack.c.b16 %v2011, %v2009
      %v2158 = vpack.c.b16 %v2012, %v2010
      %v2159 = vpack.c.b16 %v2015, %v2013
      %v2160 = vpack.c.b16 %v2016, %v2014
      %v2161 = vpack.c.b16 %v2019, %v2017
      %v2162 = vpack.c.b16 %v2020, %v2018
      %v2163 = vpack.c.b16 %v2023, %v2021
      %v2164 = vpack.c.b16 %v2024, %v2022
      %v2165 = vpack.c.b16 %v2027, %v2025
      %v2166 = vpack.c.b16 %v2028, %v2026
      %v2167 = vpack.c.b16 %v2031, %v2029
      %v2168 = vpack.c.b16 %v2032, %v2030
      %v2169 = vpack.c.b16 %v2035, %v2033
      %v2170 = vpack.c.b16 %v2036, %v2034
      %v2171 = vpack.c.b16 %v2039, %v2037
      %v2172 = vpack.c.b16 %v2040, %v2038
      %v2173 = vpack.c.b16 %v2043, %v2041
      %v2174 = vpack.c.b16 %v2044, %v2042
      %v2175 = vpack.c.b16 %v2047, %v2045
      %v2176 = vpack.c.b16 %v2048, %v2046
      %v2177 = vpack.c.b16 %v2051, %v2049
      %v2178 = vpack.c.b16 %v2052, %v2050
      %v2179 = vpack.c.b16 %v2055, %v2053
      %v2180 = vpack.c.b16 %v2056, %v2054
      %v2181 = vpack.c.b16 %v2059, %v2057
      %v2182 = vpack.c.b16 %v2060, %v2058
      %v2183 = vpack.c.b16 %v2063, %v2061
      %v2184 = vpack.c.b16 %v2064, %v2062
      %v2185 = vpack.c.b16 %v2067, %v2065
      %v2186 = vpack.c.b16 %v2068, %v2066
      %v2187 = vpack.c.b16 %v2071, %v2069
      %v2188 = vpack.c.b16 %v2072, %v2070
      %v2189 = vpack.c.b16 %v2075, %v2073
      %v2190 = vpack.c.b16 %v2076, %v2074
      %v2191 = vpack.c.b16 %v2079, %v2077
      %v2192 = vpack.c.b16 %v2080, %v2078
      %v2193 = vpack.c.b16 %v2083, %v2081
      %v2194 = vpack.c.b16 %v2084, %v2082
      %v2195 = vpack.c.b16 %v2087, %v2085
      %v2196 = vpack.c.b16 %v2088, %v2086
      %v2197 = vpack.c.b16 %v2091, %v2089
      %v2198 = vpack.c.b16 %v2092, %v2090
      %v2199 = vpack.c.b16 %v2095, %v2093
      %v2200 = vpack.c.b16 %v2096, %v2094
      %v2201 = vpack.c.b16 %v2099, %v2097
      %v2202 = vpack.c.b16 %v2100, %v2098
      %v2203 = vpack.c.b16 %v2103, %v2101
      %v2204 = vpack.c.b16 %v2104, %v2102
      %v2205 = vpack.c.b16 %v2107, %v2105
      %v2206 = vpack.c.b16 %v2108, %v2106
      %v2207 = vpack.c.b16 %v2111, %v2109
      %v2208 = vpack.c.b16 %v2112, %v2110
      %2305 = vmatprep.subr.bf16.mxu0 %v2128
      %2306 = vmatpush1.bf16.msra.mxu0 %v2127
      %2307 = vmatprep.subr.bf16.mxu0 %v2126
      %2308 = vmatpush1.bf16.msra.mxu0 %v2125
      %2309 = vmatprep.subr.bf16.mxu0 %v2124
      %2310 = vmatpush1.bf16.msra.mxu0 %v2123
      %2311 = vmatprep.subr.bf16.mxu0 %v2122
      %2312 = vmatpush1.bf16.msra.mxu0 %v2121
      %2313 = vmatprep.subr.bf16.mxu0 %v2120
      %2314 = vmatpush1.bf16.msra.mxu0 %v2119
      %2315 = vmatprep.subr.bf16.mxu0 %v2118
      %2316 = vmatpush1.bf16.msra.mxu0 %v2117
      %2317 = vmatprep.subr.bf16.mxu0 %v2116
      %2318 = vmatpush1.bf16.msra.mxu0 %v2115
      %2319 = vmatprep.subr.bf16.mxu0 %v2114
      %2320 = vmatpush1.bf16.msra.mxu0 %v2113
      %2321 = vmatprep.subr.bf16.mxu0 %v2144
      %2322 = vmatpush2.bf16.msra.mxu0 %v2143
      %2323 = vmatprep.subr.bf16.mxu0 %v2142
      %2324 = vmatpush2.bf16.msra.mxu0 %v2141
      %2325 = vmatprep.subr.bf16.mxu0 %v2140
      %2326 = vmatpush2.bf16.msra.mxu0 %v2139
      %2327 = vmatprep.subr.bf16.mxu0 %v2138
      %2328 = vmatpush2.bf16.msra.mxu0 %v2137
      %2329 = vmatprep.subr.bf16.mxu0 %v2136
      %2330 = vmatpush2.bf16.msra.mxu0 %v2135
      %2331 = vmatprep.subr.bf16.mxu0 %v2134
      %2332 = vmatpush2.bf16.msra.mxu0 %v2133
      %2333 = vmatprep.subr.bf16.mxu0 %v2132
      %2334 = vmatpush2.bf16.msra.mxu0 %v2131
      %2335 = vmatprep.subr.bf16.mxu0 %v2130
      %2336 = vmatpush2.bf16.msra.mxu0 %v2129
      %2337 = vmatprep.mubr.bf16.mxu0 %v1712
      %2338 = vmatmul.mubr.bf16.gmra.mxu0 %v1711
      %v2339 = vpop.f32.mrf.mxu0
      %v2340 = vadd.f32 %v1818, %v2339
      %v2341 = vpop.f32.mrf.mxu0
      %v2342 = vadd.f32 %v1822, %v2341
      %v2343 = vpop.f32.mrf.mxu0
      %v2344 = vpop.f32.mrf.mxu0
      %2345 = vdwg.mxu0
      %2346 = vmatprep.subr.bf16.mxu0 %v2160
      %2347 = vmatpush1.bf16.msra.mxu0 %v2159
      %2348 = vmatprep.subr.bf16.mxu0 %v2158
      %2349 = vmatpush1.bf16.msra.mxu0 %v2157
      %2350 = vmatprep.subr.bf16.mxu0 %v2156
      %2351 = vmatpush1.bf16.msra.mxu0 %v2155
      %2352 = vmatprep.subr.bf16.mxu0 %v2154
      %2353 = vmatpush1.bf16.msra.mxu0 %v2153
      %2354 = vmatprep.subr.bf16.mxu0 %v2152
      %2355 = vmatpush1.bf16.msra.mxu0 %v2151
      %2356 = vmatprep.subr.bf16.mxu0 %v2150
      %2357 = vmatpush1.bf16.msra.mxu0 %v2149
      %2358 = vmatprep.subr.bf16.mxu0 %v2148
      %2359 = vmatpush1.bf16.msra.mxu0 %v2147
      %2360 = vmatprep.subr.bf16.mxu0 %v2146
      %2361 = vmatpush1.bf16.msra.mxu0 %v2145
      %2362 = vmatprep.subr.bf16.mxu0 %v2176
      %2363 = vmatpush2.bf16.msra.mxu0 %v2175
      %2364 = vmatprep.subr.bf16.mxu0 %v2174
      %2365 = vmatpush2.bf16.msra.mxu0 %v2173
      %2366 = vmatprep.subr.bf16.mxu0 %v2172
      %2367 = vmatpush2.bf16.msra.mxu0 %v2171
      %2368 = vmatprep.subr.bf16.mxu0 %v2170
      %2369 = vmatpush2.bf16.msra.mxu0 %v2169
      %2370 = vmatprep.subr.bf16.mxu0 %v2168
      %2371 = vmatpush2.bf16.msra.mxu0 %v2167
      %2372 = vmatprep.subr.bf16.mxu0 %v2166
      %2373 = vmatpush2.bf16.msra.mxu0 %v2165
      %2374 = vmatprep.subr.bf16.mxu0 %v2164
      %2375 = vmatpush2.bf16.msra.mxu0 %v2163
      %2376 = vmatprep.subr.bf16.mxu0 %v2162
      %2377 = vmatpush2.bf16.msra.mxu0 %v2161
      %2378 = vmatprep.mubr.bf16.mxu0 %v1714
      %2379 = vmatmul.mubr.bf16.gmra.mxu0 %v1713
      %v2380 = vpop.f32.mrf.mxu0
      %v2381 = vadd.f32 %v2340, %v2380
      %v2382 = vpop.f32.mrf.mxu0
      %v2383 = vadd.f32 %v2342, %v2382
      %v2384 = vpop.f32.mrf.mxu0
      %v2385 = vpop.f32.mrf.mxu0
      %2386 = vdwg.mxu0
      %2387 = vmatprep.subr.bf16.mxu0 %v2192
      %2388 = vmatpush1.bf16.msra.mxu0 %v2191
      %2389 = vmatprep.subr.bf16.mxu0 %v2190
      %2390 = vmatpush1.bf16.msra.mxu0 %v2189
      %2391 = vmatprep.subr.bf16.mxu0 %v2188
      %2392 = vmatpush1.bf16.msra.mxu0 %v2187
      %2393 = vmatprep.subr.bf16.mxu0 %v2186
      %2394 = vmatpush1.bf16.msra.mxu0 %v2185
      %2395 = vmatprep.subr.bf16.mxu0 %v2184
      %2396 = vmatpush1.bf16.msra.mxu0 %v2183
      %2397 = vmatprep.subr.bf16.mxu0 %v2182
      %2398 = vmatpush1.bf16.msra.mxu0 %v2181
      %2399 = vmatprep.subr.bf16.mxu0 %v2180
      %2400 = vmatpush1.bf16.msra.mxu0 %v2179
      %2401 = vmatprep.subr.bf16.mxu0 %v2178
      %2402 = vmatpush1.bf16.msra.mxu0 %v2177
      %2403 = vmatprep.subr.bf16.mxu0 %v2208
      %2404 = vmatpush2.bf16.msra.mxu0 %v2207
      %2405 = vmatprep.subr.bf16.mxu0 %v2206
      %2406 = vmatpush2.bf16.msra.mxu0 %v2205
      %2407 = vmatprep.subr.bf16.mxu0 %v2204
      %2408 = vmatpush2.bf16.msra.mxu0 %v2203
      %2409 = vmatprep.subr.bf16.mxu0 %v2202
      %2410 = vmatpush2.bf16.msra.mxu0 %v2201
      %2411 = vmatprep.subr.bf16.mxu0 %v2200
      %2412 = vmatpush2.bf16.msra.mxu0 %v2199
      %2413 = vmatprep.subr.bf16.mxu0 %v2198
      %2414 = vmatpush2.bf16.msra.mxu0 %v2197
      %2415 = vmatprep.subr.bf16.mxu0 %v2196
      %2416 = vmatpush2.bf16.msra.mxu0 %v2195
      %2417 = vmatprep.subr.bf16.mxu0 %v2194
      %2418 = vmatpush2.bf16.msra.mxu0 %v2193
      %2419 = vmatprep.mubr.bf16.mxu0 %v1716
      %2420 = vmatmul.mubr.bf16.gmra.mxu0 %v1715
      %v2421 = vpop.f32.mrf.mxu0
      %v2422 = vadd.f32 %v2381, %v2421
      %v2423 = vpop.f32.mrf.mxu0
      %v2424 = vadd.f32 %v2383, %v2423
      %v2425 = vpop.f32.mrf.mxu0
      %v2426 = vpop.f32.mrf.mxu0
      %2427 = vdwg.mxu0
      %v2428 = vmax.f32 %v2422, 0.0
      %v2429 = vmax.f32 %v2424, 0.0
      %v2430 = vrot.slane %v2428, 7
      %v2431 = vrot.slane %v2429, 7
      %v2432 = vsel %vm1701, %v2430, 0.0
      %v2433 = vsel %vm1701, %v2431, 0.0
      %v2434 = vrot.slane %v2428, 1
      %v2435 = vrot.slane %v2429, 1
      %v2436 = vsel %vm1708, %v2434, 0.0
      %v2437 = vsel %vm1708, %v2435, 0.0
      %v2438 = vpack.c.bf16 %v2432, %v2432
      %v2439 = vpack.c.bf16 %v2433, %v2433
      %v2440 = vpack.c.bf16 %v2428, %v2428
      %v2441 = vpack.c.bf16 %v2429, %v2429
      %v2442 = vpack.c.bf16 %v2436, %v2436
      %v2443 = vpack.c.bf16 %v2437, %v2437
      %v2444 = vld [vmem:[%s10] sm:$0xff]
      %v2445 = vld [vmem:[%s10 + $0x8] sm:$0xff]
      %v2446 = vld [vmem:[%s10 + $0x10] sm:$0xff]
      %v2447 = vld [vmem:[%s10 + $0x18] sm:$0xff]
      %v2448 = vld [vmem:[%s10 + $0x20] sm:$0xff]
      %v2449 = vld [vmem:[%s10 + $0x28] sm:$0xff]
      %v2450 = vld [vmem:[%s10 + $0x30] sm:$0xff]
      %v2451 = vld [vmem:[%s10 + $0x38] sm:$0xff]
      %v2452 = vld [vmem:[%s10 + $0x40] sm:$0xff]
      %v2453 = vld [vmem:[%s10 + $0x48] sm:$0xff]
      %v2454 = vld [vmem:[%s10 + $0x50] sm:$0xff]
      %v2455 = vld [vmem:[%s10 + $0x58] sm:$0xff]
      %v2456 = vld [vmem:[%s10 + $0x60] sm:$0xff]
      %v2457 = vld [vmem:[%s10 + $0x68] sm:$0xff]
      %v2458 = vld [vmem:[%s10 + $0x70] sm:$0xff]
      %v2459 = vld [vmem:[%s10 + $0x78] sm:$0xff]
      %v2460 = vld [vmem:[%s10 + $0x80] sm:$0xff]
      %v2461 = vld [vmem:[%s10 + $0x88] sm:$0xff]
      %v2462 = vld [vmem:[%s10 + $0x90] sm:$0xff]
      %v2463 = vld [vmem:[%s10 + $0x98] sm:$0xff]
      %v2464 = vld [vmem:[%s10 + $0xa0] sm:$0xff]
      %v2465 = vld [vmem:[%s10 + $0xa8] sm:$0xff]
      %v2466 = vld [vmem:[%s10 + $0xb0] sm:$0xff]
      %v2467 = vld [vmem:[%s10 + $0xb8] sm:$0xff]
      %v2468 = vld [vmem:[%s10 + $0xc0] sm:$0xff]
      %v2469 = vld [vmem:[%s10 + $0xc8] sm:$0xff]
      %v2470 = vld [vmem:[%s10 + $0xd0] sm:$0xff]
      %v2471 = vld [vmem:[%s10 + $0xd8] sm:$0xff]
      %v2472 = vld [vmem:[%s10 + $0xe0] sm:$0xff]
      %v2473 = vld [vmem:[%s10 + $0xe8] sm:$0xff]
      %v2474 = vld [vmem:[%s10 + $0xf0] sm:$0xff]
      %v2475 = vld [vmem:[%s10 + $0xf8] sm:$0xff]
      %v2476 = vld [vmem:[%s10 + $0x100] sm:$0xff]
      %v2477 = vld [vmem:[%s10 + $0x108] sm:$0xff]
      %v2478 = vld [vmem:[%s10 + $0x110] sm:$0xff]
      %v2479 = vld [vmem:[%s10 + $0x118] sm:$0xff]
      %v2480 = vld [vmem:[%s10 + $0x120] sm:$0xff]
      %v2481 = vld [vmem:[%s10 + $0x128] sm:$0xff]
      %v2482 = vld [vmem:[%s10 + $0x130] sm:$0xff]
      %v2483 = vld [vmem:[%s10 + $0x138] sm:$0xff]
      %v2484 = vld [vmem:[%s10 + $0x140] sm:$0xff]
      %v2485 = vld [vmem:[%s10 + $0x148] sm:$0xff]
      %v2486 = vld [vmem:[%s10 + $0x150] sm:$0xff]
      %v2487 = vld [vmem:[%s10 + $0x158] sm:$0xff]
      %v2488 = vld [vmem:[%s10 + $0x160] sm:$0xff]
      %v2489 = vld [vmem:[%s10 + $0x168] sm:$0xff]
      %v2490 = vld [vmem:[%s10 + $0x170] sm:$0xff]
      %v2491 = vld [vmem:[%s10 + $0x178] sm:$0xff]
      %v2492 = vld [vmem:[%s10 + $0x180] sm:$0xff]
      %v2493 = vld [vmem:[%s10 + $0x188] sm:$0xff]
      %v2494 = vld [vmem:[%s10 + $0x190] sm:$0xff]
      %v2495 = vld [vmem:[%s10 + $0x198] sm:$0xff]
      %v2496 = vld [vmem:[%s10 + $0x1a0] sm:$0xff]
      %v2497 = vld [vmem:[%s10 + $0x1a8] sm:$0xff]
      %v2498 = vld [vmem:[%s10 + $0x1b0] sm:$0xff]
      %v2499 = vld [vmem:[%s10 + $0x1b8] sm:$0xff]
      %v2500 = vld [vmem:[%s10 + $0x1c0] sm:$0xff]
      %v2501 = vld [vmem:[%s10 + $0x1c8] sm:$0xff]
      %v2502 = vld [vmem:[%s10 + $0x1d0] sm:$0xff]
      %v2503 = vld [vmem:[%s10 + $0x1d8] sm:$0xff]
      %v2504 = vld [vmem:[%s10 + $0x1e0] sm:$0xff]
      %v2505 = vld [vmem:[%s10 + $0x1e8] sm:$0xff]
      %v2506 = vld [vmem:[%s10 + $0x1f0] sm:$0xff]
      %v2507 = vld [vmem:[%s10 + $0x1f8] sm:$0xff]
      %v2508 = vld [vmem:[%s10 + $0x200] sm:$0xff]
      %v2509 = vld [vmem:[%s10 + $0x208] sm:$0xff]
      %v2510 = vld [vmem:[%s10 + $0x210] sm:$0xff]
      %v2511 = vld [vmem:[%s10 + $0x218] sm:$0xff]
      %v2512 = vld [vmem:[%s10 + $0x220] sm:$0xff]
      %v2513 = vld [vmem:[%s10 + $0x228] sm:$0xff]
      %v2514 = vld [vmem:[%s10 + $0x230] sm:$0xff]
      %v2515 = vld [vmem:[%s10 + $0x238] sm:$0xff]
      %v2516 = vld [vmem:[%s10 + $0x240] sm:$0xff]
      %v2517 = vld [vmem:[%s10 + $0x248] sm:$0xff]
      %v2518 = vld [vmem:[%s10 + $0x250] sm:$0xff]
      %v2519 = vld [vmem:[%s10 + $0x258] sm:$0xff]
      %v2520 = vld [vmem:[%s10 + $0x260] sm:$0xff]
      %v2521 = vld [vmem:[%s10 + $0x268] sm:$0xff]
      %v2522 = vld [vmem:[%s10 + $0x270] sm:$0xff]
      %v2523 = vld [vmem:[%s10 + $0x278] sm:$0xff]
      %v2524 = vld [vmem:[%s10 + $0x280] sm:$0xff]
      %v2525 = vld [vmem:[%s10 + $0x288] sm:$0xff]
      %v2526 = vld [vmem:[%s10 + $0x290] sm:$0xff]
      %v2527 = vld [vmem:[%s10 + $0x298] sm:$0xff]
      %v2528 = vld [vmem:[%s10 + $0x2a0] sm:$0xff]
      %v2529 = vld [vmem:[%s10 + $0x2a8] sm:$0xff]
      %v2530 = vld [vmem:[%s10 + $0x2b0] sm:$0xff]
      %v2531 = vld [vmem:[%s10 + $0x2b8] sm:$0xff]
      %v2532 = vld [vmem:[%s10 + $0x2c0] sm:$0xff]
      %v2533 = vld [vmem:[%s10 + $0x2c8] sm:$0xff]
      %v2534 = vld [vmem:[%s10 + $0x2d0] sm:$0xff]
      %v2535 = vld [vmem:[%s10 + $0x2d8] sm:$0xff]
      %v2536 = vld [vmem:[%s10 + $0x2e0] sm:$0xff]
      %v2537 = vld [vmem:[%s10 + $0x2e8] sm:$0xff]
      %v2538 = vld [vmem:[%s10 + $0x2f0] sm:$0xff]
      %v2539 = vld [vmem:[%s10 + $0x2f8] sm:$0xff]
      %v2540 = vld [vmem:[%s11] sm:$0x3]
      %v2542 = vlaneseq
      %v2543 = vshrl.u32 %v2542, 7
      %v2544 = vsub.s32 0, %v2543
      %v2545 = vrot.slane %v2540, %v2544
      %v2546 = vlaneseq
      %v2547 = vshrl.u32 %v2546, 7
      %v2548 = vsub.s32 1, %v2547
      %v2549 = vrot.slane %v2540, %v2548
      %v2648 = vunpack.c.l.b16 %v2444
      %v2649 = vunpack.c.h.b16 %v2444
      %v2650 = vunpack.c.l.b16 %v2445
      %v2651 = vunpack.c.h.b16 %v2445
      %v2652 = vunpack.c.l.b16 %v2446
      %v2653 = vunpack.c.h.b16 %v2446
      %v2654 = vunpack.c.l.b16 %v2447
      %v2655 = vunpack.c.h.b16 %v2447
      %v2656 = vunpack.c.l.b16 %v2448
      %v2657 = vunpack.c.h.b16 %v2448
      %v2658 = vunpack.c.l.b16 %v2449
      %v2659 = vunpack.c.h.b16 %v2449
      %v2660 = vunpack.c.l.b16 %v2450
      %v2661 = vunpack.c.h.b16 %v2450
      %v2662 = vunpack.c.l.b16 %v2451
      %v2663 = vunpack.c.h.b16 %v2451
      %v2664 = vunpack.c.l.b16 %v2452
      %v2665 = vunpack.c.h.b16 %v2452
      %v2666 = vunpack.c.l.b16 %v2453
      %v2667 = vunpack.c.h.b16 %v2453
      %v2668 = vunpack.c.l.b16 %v2454
      %v2669 = vunpack.c.h.b16 %v2454
      %v2670 = vunpack.c.l.b16 %v2455
      %v2671 = vunpack.c.h.b16 %v2455
      %v2672 = vunpack.c.l.b16 %v2456
      %v2673 = vunpack.c.h.b16 %v2456
      %v2674 = vunpack.c.l.b16 %v2457
      %v2675 = vunpack.c.h.b16 %v2457
      %v2676 = vunpack.c.l.b16 %v2458
      %v2677 = vunpack.c.h.b16 %v2458
      %v2678 = vunpack.c.l.b16 %v2459
      %v2679 = vunpack.c.h.b16 %v2459
      %v2680 = vunpack.c.l.b16 %v2460
      %v2681 = vunpack.c.h.b16 %v2460
      %v2682 = vunpack.c.l.b16 %v2461
      %v2683 = vunpack.c.h.b16 %v2461
      %v2684 = vunpack.c.l.b16 %v2462
      %v2685 = vunpack.c.h.b16 %v2462
      %v2686 = vunpack.c.l.b16 %v2463
      %v2687 = vunpack.c.h.b16 %v2463
      %v2688 = vunpack.c.l.b16 %v2464
      %v2689 = vunpack.c.h.b16 %v2464
      %v2690 = vunpack.c.l.b16 %v2465
      %v2691 = vunpack.c.h.b16 %v2465
      %v2692 = vunpack.c.l.b16 %v2466
      %v2693 = vunpack.c.h.b16 %v2466
      %v2694 = vunpack.c.l.b16 %v2467
      %v2695 = vunpack.c.h.b16 %v2467
      %v2696 = vunpack.c.l.b16 %v2468
      %v2697 = vunpack.c.h.b16 %v2468
      %v2698 = vunpack.c.l.b16 %v2469
      %v2699 = vunpack.c.h.b16 %v2469
      %v2700 = vunpack.c.l.b16 %v2470
      %v2701 = vunpack.c.h.b16 %v2470
      %v2702 = vunpack.c.l.b16 %v2471
      %v2703 = vunpack.c.h.b16 %v2471
      %v2704 = vunpack.c.l.b16 %v2472
      %v2705 = vunpack.c.h.b16 %v2472
      %v2706 = vunpack.c.l.b16 %v2473
      %v2707 = vunpack.c.h.b16 %v2473
      %v2708 = vunpack.c.l.b16 %v2474
      %v2709 = vunpack.c.h.b16 %v2474
      %v2710 = vunpack.c.l.b16 %v2475
      %v2711 = vunpack.c.h.b16 %v2475
      %v2712 = vunpack.c.l.b16 %v2476
      %v2713 = vunpack.c.h.b16 %v2476
      %v2714 = vunpack.c.l.b16 %v2477
      %v2715 = vunpack.c.h.b16 %v2477
      %v2716 = vunpack.c.l.b16 %v2478
      %v2717 = vunpack.c.h.b16 %v2478
      %v2718 = vunpack.c.l.b16 %v2479
      %v2719 = vunpack.c.h.b16 %v2479
      %v2720 = vunpack.c.l.b16 %v2480
      %v2721 = vunpack.c.h.b16 %v2480
      %v2722 = vunpack.c.l.b16 %v2481
      %v2723 = vunpack.c.h.b16 %v2481
      %v2724 = vunpack.c.l.b16 %v2482
      %v2725 = vunpack.c.h.b16 %v2482
      %v2726 = vunpack.c.l.b16 %v2483
      %v2727 = vunpack.c.h.b16 %v2483
      %v2728 = vunpack.c.l.b16 %v2484
      %v2729 = vunpack.c.h.b16 %v2484
      %v2730 = vunpack.c.l.b16 %v2485
      %v2731 = vunpack.c.h.b16 %v2485
      %v2732 = vunpack.c.l.b16 %v2486
      %v2733 = vunpack.c.h.b16 %v2486
      %v2734 = vunpack.c.l.b16 %v2487
      %v2735 = vunpack.c.h.b16 %v2487
      %v2736 = vunpack.c.l.b16 %v2488
      %v2737 = vunpack.c.h.b16 %v2488
      %v2738 = vunpack.c.l.b16 %v2489
      %v2739 = vunpack.c.h.b16 %v2489
      %v2740 = vunpack.c.l.b16 %v2490
      %v2741 = vunpack.c.h.b16 %v2490
      %v2742 = vunpack.c.l.b16 %v2491
      %v2743 = vunpack.c.h.b16 %v2491
      %v2744 = vunpack.c.l.b16 %v2492
      %v2745 = vunpack.c.h.b16 %v2492
      %v2746 = vunpack.c.l.b16 %v2493
      %v2747 = vunpack.c.h.b16 %v2493
      %v2748 = vunpack.c.l.b16 %v2494
      %v2749 = vunpack.c.h.b16 %v2494
      %v2750 = vunpack.c.l.b16 %v2495
      %v2751 = vunpack.c.h.b16 %v2495
      %v2752 = vunpack.c.l.b16 %v2496
      %v2753 = vunpack.c.h.b16 %v2496
      %v2754 = vunpack.c.l.b16 %v2497
      %v2755 = vunpack.c.h.b16 %v2497
      %v2756 = vunpack.c.l.b16 %v2498
      %v2757 = vunpack.c.h.b16 %v2498
      %v2758 = vunpack.c.l.b16 %v2499
      %v2759 = vunpack.c.h.b16 %v2499
      %v2760 = vunpack.c.l.b16 %v2500
      %v2761 = vunpack.c.h.b16 %v2500
      %v2762 = vunpack.c.l.b16 %v2501
      %v2763 = vunpack.c.h.b16 %v2501
      %v2764 = vunpack.c.l.b16 %v2502
      %v2765 = vunpack.c.h.b16 %v2502
      %v2766 = vunpack.c.l.b16 %v2503
      %v2767 = vunpack.c.h.b16 %v2503
      %v2768 = vunpack.c.l.b16 %v2504
      %v2769 = vunpack.c.h.b16 %v2504
      %v2770 = vunpack.c.l.b16 %v2505
      %v2771 = vunpack.c.h.b16 %v2505
      %v2772 = vunpack.c.l.b16 %v2506
      %v2773 = vunpack.c.h.b16 %v2506
      %v2774 = vunpack.c.l.b16 %v2507
      %v2775 = vunpack.c.h.b16 %v2507
      %v2776 = vunpack.c.l.b16 %v2508
      %v2777 = vunpack.c.h.b16 %v2508
      %v2778 = vunpack.c.l.b16 %v2509
      %v2779 = vunpack.c.h.b16 %v2509
      %v2780 = vunpack.c.l.b16 %v2510
      %v2781 = vunpack.c.h.b16 %v2510
      %v2782 = vunpack.c.l.b16 %v2511
      %v2783 = vunpack.c.h.b16 %v2511
      %v2784 = vunpack.c.l.b16 %v2512
      %v2785 = vunpack.c.h.b16 %v2512
      %v2786 = vunpack.c.l.b16 %v2513
      %v2787 = vunpack.c.h.b16 %v2513
      %v2788 = vunpack.c.l.b16 %v2514
      %v2789 = vunpack.c.h.b16 %v2514
      %v2790 = vunpack.c.l.b16 %v2515
      %v2791 = vunpack.c.h.b16 %v2515
      %v2792 = vunpack.c.l.b16 %v2516
      %v2793 = vunpack.c.h.b16 %v2516
      %v2794 = vunpack.c.l.b16 %v2517
      %v2795 = vunpack.c.h.b16 %v2517
      %v2796 = vunpack.c.l.b16 %v2518
      %v2797 = vunpack.c.h.b16 %v2518
      %v2798 = vunpack.c.l.b16 %v2519
      %v2799 = vunpack.c.h.b16 %v2519
      %v2800 = vunpack.c.l.b16 %v2520
      %v2801 = vunpack.c.h.b16 %v2520
      %v2802 = vunpack.c.l.b16 %v2521
      %v2803 = vunpack.c.h.b16 %v2521
      %v2804 = vunpack.c.l.b16 %v2522
      %v2805 = vunpack.c.h.b16 %v2522
      %v2806 = vunpack.c.l.b16 %v2523
      %v2807 = vunpack.c.h.b16 %v2523
      %v2808 = vunpack.c.l.b16 %v2524
      %v2809 = vunpack.c.h.b16 %v2524
      %v2810 = vunpack.c.l.b16 %v2525
      %v2811 = vunpack.c.h.b16 %v2525
      %v2812 = vunpack.c.l.b16 %v2526
      %v2813 = vunpack.c.h.b16 %v2526
      %v2814 = vunpack.c.l.b16 %v2527
      %v2815 = vunpack.c.h.b16 %v2527
      %v2816 = vunpack.c.l.b16 %v2528
      %v2817 = vunpack.c.h.b16 %v2528
      %v2818 = vunpack.c.l.b16 %v2529
      %v2819 = vunpack.c.h.b16 %v2529
      %v2820 = vunpack.c.l.b16 %v2530
      %v2821 = vunpack.c.h.b16 %v2530
      %v2822 = vunpack.c.l.b16 %v2531
      %v2823 = vunpack.c.h.b16 %v2531
      %v2824 = vunpack.c.l.b16 %v2532
      %v2825 = vunpack.c.h.b16 %v2532
      %v2826 = vunpack.c.l.b16 %v2533
      %v2827 = vunpack.c.h.b16 %v2533
      %v2828 = vunpack.c.l.b16 %v2534
      %v2829 = vunpack.c.h.b16 %v2534
      %v2830 = vunpack.c.l.b16 %v2535
      %v2831 = vunpack.c.h.b16 %v2535
      %v2832 = vunpack.c.l.b16 %v2536
      %v2833 = vunpack.c.h.b16 %v2536
      %v2834 = vunpack.c.l.b16 %v2537
      %v2835 = vunpack.c.h.b16 %v2537
      %v2836 = vunpack.c.l.b16 %v2538
      %v2837 = vunpack.c.h.b16 %v2538
      %v2838 = vunpack.c.l.b16 %v2539
      %v2839 = vunpack.c.h.b16 %v2539
      %v2840 = vpack.c.b16 %v2650, %v2648
      %v2841 = vpack.c.b16 %v2651, %v2649
      %v2842 = vpack.c.b16 %v2654, %v2652
      %v2843 = vpack.c.b16 %v2655, %v2653
      %v2844 = vpack.c.b16 %v2658, %v2656
      %v2845 = vpack.c.b16 %v2659, %v2657
      %v2846 = vpack.c.b16 %v2662, %v2660
      %v2847 = vpack.c.b16 %v2663, %v2661
      %v2848 = vpack.c.b16 %v2666, %v2664
      %v2849 = vpack.c.b16 %v2667, %v2665
      %v2850 = vpack.c.b16 %v2670, %v2668
      %v2851 = vpack.c.b16 %v2671, %v2669
      %v2852 = vpack.c.b16 %v2674, %v2672
      %v2853 = vpack.c.b16 %v2675, %v2673
      %v2854 = vpack.c.b16 %v2678, %v2676
      %v2855 = vpack.c.b16 %v2679, %v2677
      %v2856 = vpack.c.b16 %v2682, %v2680
      %v2857 = vpack.c.b16 %v2683, %v2681
      %v2858 = vpack.c.b16 %v2686, %v2684
      %v2859 = vpack.c.b16 %v2687, %v2685
      %v2860 = vpack.c.b16 %v2690, %v2688
      %v2861 = vpack.c.b16 %v2691, %v2689
      %v2862 = vpack.c.b16 %v2694, %v2692
      %v2863 = vpack.c.b16 %v2695, %v2693
      %v2864 = vpack.c.b16 %v2698, %v2696
      %v2865 = vpack.c.b16 %v2699, %v2697
      %v2866 = vpack.c.b16 %v2702, %v2700
      %v2867 = vpack.c.b16 %v2703, %v2701
      %v2868 = vpack.c.b16 %v2706, %v2704
      %v2869 = vpack.c.b16 %v2707, %v2705
      %v2870 = vpack.c.b16 %v2710, %v2708
      %v2871 = vpack.c.b16 %v2711, %v2709
      %v2872 = vpack.c.b16 %v2714, %v2712
      %v2873 = vpack.c.b16 %v2715, %v2713
      %v2874 = vpack.c.b16 %v2718, %v2716
      %v2875 = vpack.c.b16 %v2719, %v2717
      %v2876 = vpack.c.b16 %v2722, %v2720
      %v2877 = vpack.c.b16 %v2723, %v2721
      %v2878 = vpack.c.b16 %v2726, %v2724
      %v2879 = vpack.c.b16 %v2727, %v2725
      %v2880 = vpack.c.b16 %v2730, %v2728
      %v2881 = vpack.c.b16 %v2731, %v2729
      %v2882 = vpack.c.b16 %v2734, %v2732
      %v2883 = vpack.c.b16 %v2735, %v2733
      %v2884 = vpack.c.b16 %v2738, %v2736
      %v2885 = vpack.c.b16 %v2739, %v2737
      %v2886 = vpack.c.b16 %v2742, %v2740
      %v2887 = vpack.c.b16 %v2743, %v2741
      %v2888 = vpack.c.b16 %v2746, %v2744
      %v2889 = vpack.c.b16 %v2747, %v2745
      %v2890 = vpack.c.b16 %v2750, %v2748
      %v2891 = vpack.c.b16 %v2751, %v2749
      %v2892 = vpack.c.b16 %v2754, %v2752
      %v2893 = vpack.c.b16 %v2755, %v2753
      %v2894 = vpack.c.b16 %v2758, %v2756
      %v2895 = vpack.c.b16 %v2759, %v2757
      %v2896 = vpack.c.b16 %v2762, %v2760
      %v2897 = vpack.c.b16 %v2763, %v2761
      %v2898 = vpack.c.b16 %v2766, %v2764
      %v2899 = vpack.c.b16 %v2767, %v2765
      %v2900 = vpack.c.b16 %v2770, %v2768
      %v2901 = vpack.c.b16 %v2771, %v2769
      %v2902 = vpack.c.b16 %v2774, %v2772
      %v2903 = vpack.c.b16 %v2775, %v2773
      %v2904 = vpack.c.b16 %v2778, %v2776
      %v2905 = vpack.c.b16 %v2779, %v2777
      %v2906 = vpack.c.b16 %v2782, %v2780
      %v2907 = vpack.c.b16 %v2783, %v2781
      %v2908 = vpack.c.b16 %v2786, %v2784
      %v2909 = vpack.c.b16 %v2787, %v2785
      %v2910 = vpack.c.b16 %v2790, %v2788
      %v2911 = vpack.c.b16 %v2791, %v2789
      %v2912 = vpack.c.b16 %v2794, %v2792
      %v2913 = vpack.c.b16 %v2795, %v2793
      %v2914 = vpack.c.b16 %v2798, %v2796
      %v2915 = vpack.c.b16 %v2799, %v2797
      %v2916 = vpack.c.b16 %v2802, %v2800
      %v2917 = vpack.c.b16 %v2803, %v2801
      %v2918 = vpack.c.b16 %v2806, %v2804
      %v2919 = vpack.c.b16 %v2807, %v2805
      %v2920 = vpack.c.b16 %v2810, %v2808
      %v2921 = vpack.c.b16 %v2811, %v2809
      %v2922 = vpack.c.b16 %v2814, %v2812
      %v2923 = vpack.c.b16 %v2815, %v2813
      %v2924 = vpack.c.b16 %v2818, %v2816
      %v2925 = vpack.c.b16 %v2819, %v2817
      %v2926 = vpack.c.b16 %v2822, %v2820
      %v2927 = vpack.c.b16 %v2823, %v2821
      %v2928 = vpack.c.b16 %v2826, %v2824
      %v2929 = vpack.c.b16 %v2827, %v2825
      %v2930 = vpack.c.b16 %v2830, %v2828
      %v2931 = vpack.c.b16 %v2831, %v2829
      %v2932 = vpack.c.b16 %v2834, %v2832
      %v2933 = vpack.c.b16 %v2835, %v2833
      %v2934 = vpack.c.b16 %v2838, %v2836
      %v2935 = vpack.c.b16 %v2839, %v2837
      %3032 = vmatprep.subr.bf16.mxu0 %v2855
      %3033 = vmatpush1.bf16.msra.mxu0 %v2854
      %3034 = vmatprep.subr.bf16.mxu0 %v2853
      %3035 = vmatpush1.bf16.msra.mxu0 %v2852
      %3036 = vmatprep.subr.bf16.mxu0 %v2851
      %3037 = vmatpush1.bf16.msra.mxu0 %v2850
      %3038 = vmatprep.subr.bf16.mxu0 %v2849
      %3039 = vmatpush1.bf16.msra.mxu0 %v2848
      %3040 = vmatprep.subr.bf16.mxu0 %v2847
      %3041 = vmatpush1.bf16.msra.mxu0 %v2846
      %3042 = vmatprep.subr.bf16.mxu0 %v2845
      %3043 = vmatpush1.bf16.msra.mxu0 %v2844
      %3044 = vmatprep.subr.bf16.mxu0 %v2843
      %3045 = vmatpush1.bf16.msra.mxu0 %v2842
      %3046 = vmatprep.subr.bf16.mxu0 %v2841
      %3047 = vmatpush1.bf16.msra.mxu0 %v2840
      %3048 = vmatprep.subr.bf16.mxu0 %v2871
      %3049 = vmatpush2.bf16.msra.mxu0 %v2870
      %3050 = vmatprep.subr.bf16.mxu0 %v2869
      %3051 = vmatpush2.bf16.msra.mxu0 %v2868
      %3052 = vmatprep.subr.bf16.mxu0 %v2867
      %3053 = vmatpush2.bf16.msra.mxu0 %v2866
      %3054 = vmatprep.subr.bf16.mxu0 %v2865
      %3055 = vmatpush2.bf16.msra.mxu0 %v2864
      %3056 = vmatprep.subr.bf16.mxu0 %v2863
      %3057 = vmatpush2.bf16.msra.mxu0 %v2862
      %3058 = vmatprep.subr.bf16.mxu0 %v2861
      %3059 = vmatpush2.bf16.msra.mxu0 %v2860
      %3060 = vmatprep.subr.bf16.mxu0 %v2859
      %3061 = vmatpush2.bf16.msra.mxu0 %v2858
      %3062 = vmatprep.subr.bf16.mxu0 %v2857
      %3063 = vmatpush2.bf16.msra.mxu0 %v2856
      %3064 = vmatprep.mubr.bf16.mxu0 %v2439
      %3065 = vmatmul.mubr.bf16.gmra.mxu0 %v2438
      %v3066 = vpop.f32.mrf.mxu0
      %v3067 = vadd.f32 %v2545, %v3066
      %v3068 = vpop.f32.mrf.mxu0
      %v3069 = vadd.f32 %v2549, %v3068
      %v3070 = vpop.f32.mrf.mxu0
      %v3071 = vpop.f32.mrf.mxu0
      %3072 = vdwg.mxu0
      %3073 = vmatprep.subr.bf16.mxu0 %v2887
      %3074 = vmatpush1.bf16.msra.mxu0 %v2886
      %3075 = vmatprep.subr.bf16.mxu0 %v2885
      %3076 = vmatpush1.bf16.msra.mxu0 %v2884
      %3077 = vmatprep.subr.bf16.mxu0 %v2883
      %3078 = vmatpush1.bf16.msra.mxu0 %v2882
      %3079 = vmatprep.subr.bf16.mxu0 %v2881
      %3080 = vmatpush1.bf16.msra.mxu0 %v2880
      %3081 = vmatprep.subr.bf16.mxu0 %v2879
      %3082 = vmatpush1.bf16.msra.mxu0 %v2878
      %3083 = vmatprep.subr.bf16.mxu0 %v2877
      %3084 = vmatpush1.bf16.msra.mxu0 %v2876
      %3085 = vmatprep.subr.bf16.mxu0 %v2875
      %3086 = vmatpush1.bf16.msra.mxu0 %v2874
      %3087 = vmatprep.subr.bf16.mxu0 %v2873
      %3088 = vmatpush1.bf16.msra.mxu0 %v2872
      %3089 = vmatprep.subr.bf16.mxu0 %v2903
      %3090 = vmatpush2.bf16.msra.mxu0 %v2902
      %3091 = vmatprep.subr.bf16.mxu0 %v2901
      %3092 = vmatpush2.bf16.msra.mxu0 %v2900
      %3093 = vmatprep.subr.bf16.mxu0 %v2899
      %3094 = vmatpush2.bf16.msra.mxu0 %v2898
      %3095 = vmatprep.subr.bf16.mxu0 %v2897
      %3096 = vmatpush2.bf16.msra.mxu0 %v2896
      %3097 = vmatprep.subr.bf16.mxu0 %v2895
      %3098 = vmatpush2.bf16.msra.mxu0 %v2894
      %3099 = vmatprep.subr.bf16.mxu0 %v2893
      %3100 = vmatpush2.bf16.msra.mxu0 %v2892
      %3101 = vmatprep.subr.bf16.mxu0 %v2891
      %3102 = vmatpush2.bf16.msra.mxu0 %v2890
      %3103 = vmatprep.subr.bf16.mxu0 %v2889
      %3104 = vmatpush2.bf16.msra.mxu0 %v2888
      %3105 = vmatprep.mubr.bf16.mxu0 %v2441
      %3106 = vmatmul.mubr.bf16.gmra.mxu0 %v2440
      %v3107 = vpop.f32.mrf.mxu0
      %v3108 = vadd.f32 %v3067, %v3107
      %v3109 = vpop.f32.mrf.mxu0
      %v3110 = vadd.f32 %v3069, %v3109
      %v3111 = vpop.f32.mrf.mxu0
      %v3112 = vpop.f32.mrf.mxu0
      %3113 = vdwg.mxu0
      %3114 = vmatprep.subr.bf16.mxu0 %v2919
      %3115 = vmatpush1.bf16.msra.mxu0 %v2918
      %3116 = vmatprep.subr.bf16.mxu0 %v2917
      %3117 = vmatpush1.bf16.msra.mxu0 %v2916
      %3118 = vmatprep.subr.bf16.mxu0 %v2915
      %3119 = vmatpush1.bf16.msra.mxu0 %v2914
      %3120 = vmatprep.subr.bf16.mxu0 %v2913
      %3121 = vmatpush1.bf16.msra.mxu0 %v2912
      %3122 = vmatprep.subr.bf16.mxu0 %v2911
      %3123 = vmatpush1.bf16.msra.mxu0 %v2910
      %3124 = vmatprep.subr.bf16.mxu0 %v2909
      %3125 = vmatpush1.bf16.msra.mxu0 %v2908
      %3126 = vmatprep.subr.bf16.mxu0 %v2907
      %3127 = vmatpush1.bf16.msra.mxu0 %v2906
      %3128 = vmatprep.subr.bf16.mxu0 %v2905
      %3129 = vmatpush1.bf16.msra.mxu0 %v2904
      %3130 = vmatprep.subr.bf16.mxu0 %v2935
      %3131 = vmatpush2.bf16.msra.mxu0 %v2934
      %3132 = vmatprep.subr.bf16.mxu0 %v2933
      %3133 = vmatpush2.bf16.msra.mxu0 %v2932
      %3134 = vmatprep.subr.bf16.mxu0 %v2931
      %3135 = vmatpush2.bf16.msra.mxu0 %v2930
      %3136 = vmatprep.subr.bf16.mxu0 %v2929
      %3137 = vmatpush2.bf16.msra.mxu0 %v2928
      %3138 = vmatprep.subr.bf16.mxu0 %v2927
      %3139 = vmatpush2.bf16.msra.mxu0 %v2926
      %3140 = vmatprep.subr.bf16.mxu0 %v2925
      %3141 = vmatpush2.bf16.msra.mxu0 %v2924
      %3142 = vmatprep.subr.bf16.mxu0 %v2923
      %3143 = vmatpush2.bf16.msra.mxu0 %v2922
      %3144 = vmatprep.subr.bf16.mxu0 %v2921
      %3145 = vmatpush2.bf16.msra.mxu0 %v2920
      %3146 = vmatprep.mubr.bf16.mxu0 %v2443
      %3147 = vmatmul.mubr.bf16.gmra.mxu0 %v2442
      %v3148 = vpop.f32.mrf.mxu0
      %v3149 = vadd.f32 %v3108, %v3148
      %v3150 = vpop.f32.mrf.mxu0
      %v3151 = vadd.f32 %v3110, %v3150
      %v3152 = vpop.f32.mrf.mxu0
      %v3153 = vpop.f32.mrf.mxu0
      %3154 = vdwg.mxu0
      %v3155 = vadd.f32 %v3149, %v1695
      %v3156 = vadd.f32 %v3151, %v1696
      %v3157 = vld [vmem:[%s12] sm:$0x3]
      %v3158 = vld [vmem:[%s13] sm:$0x3]
      %v3159 = vadd.f32 %v3155, %v3156
      %3160 = vadd.xlane.f32.xlu0 %v3159
      %v3161 = vpop.xlane.xlu0 %3160
      %v3162 = vmul.f32 %v3161, %v1650
      %v3163 = vsub.f32 %v3155, %v3162
      %v3164 = vsub.f32 %v3156, %v3162
      %v3165 = vmul.f32 %v3163, %v3163
      %v3166 = vmul.f32 %v3164, %v3164
      %v3167 = vadd.f32 %v3165, %v3166
      %3168 = vadd.xlane.f32.xlu0 %v3167
      %v3169 = vpop.xlane.xlu0 %3168
      %v3170 = vmul.f32 %v3169, %v1650
      %v3171 = vadd.f32 %v3170, 1e-05
      %v3172 = vrsqrt.pop %v3171
      %v3173 = vmul.f32 %v3163, %v3172
      %v3174 = vmul.f32 %v3164, %v3172
      %v3176 = vlaneseq
      %v3177 = vshrl.u32 %v3176, 7
      %v3178 = vsub.s32 0, %v3177
      %v3179 = vrot.slane %v3157, %v3178
      %v3180 = vlaneseq
      %v3181 = vshrl.u32 %v3180, 7
      %v3182 = vsub.s32 1, %v3181
      %v3183 = vrot.slane %v3157, %v3182
      %v3186 = vmul.f32 %v3173, %v3179
      %v3187 = vmul.f32 %v3174, %v3183
      %v3189 = vlaneseq
      %v3190 = vshrl.u32 %v3189, 7
      %v3191 = vsub.s32 0, %v3190
      %v3192 = vrot.slane %v3158, %v3191
      %v3193 = vlaneseq
      %v3194 = vshrl.u32 %v3193, 7
      %v3195 = vsub.s32 1, %v3194
      %v3196 = vrot.slane %v3158, %v3195
      %v3199 = vadd.f32 %v3186, %v3192
      %v3200 = vadd.f32 %v3187, %v3196
      %v3201 = vmul.f32 %v3199, %v1694
      %v3202 = vmul.f32 %v3200, %v1694
      %3203 = vst [vmem:[%s447] sm:$0xff] %v3201
      %3204 = vst [vmem:[%s447 + $0x8] sm:$0xff] %v3202
      %p3205 = scmp.lt.s32.totalorder %s31, 1
      %s3206 = scalar_select %p3205, %s31, 1
      %s3207 = smul.addr %s3206, 2
      %s3208 = smul.addr %s3207, 8
      %s3209 = scalar_lea.vmem %s14, %s3208
      // Predicated region
      $region73: #{stylespeech2_forward.7} parent=71 // pred_check
        %p3210 = pneg %p327
      $region74: #{stylespeech2_forward.7} parent=71 // pred_check_branch
        %3212 = sbr.rel (%p3210) target = $region76
      $region75: #{stylespeech2_forward.7} parent=71 // pred_region
        _
      $region76: #{stylespeech2_forward.7} parent=71 // pred_fallthru
        _
    $region72: #{stylespeech2_forward.7} parent=5 // pred_fallthru
      _
    %p3213 = scmp.le.s32.totalorder 2, %s26
    // Predicated region
    $region77: #{stylespeech2_forward.7} parent=5 // pred_check
      %p3214 = pneg %p3213
    $region78: #{stylespeech2_forward.7} parent=5 // pred_check_branch
      %3216 = sbr.rel (%p3214) target = $region80
    $region79: #{stylespeech2_forward.7} parent=5 // pred_region
      %s3217 = ssub.s32 %s26, 2
      // Predicated region
      $region81: #{stylespeech2_forward.7} parent=79 // pred_check
        %p3218 = pneg %p333
      $region82: #{stylespeech2_forward.7} parent=79 // pred_check_branch
        %3220 = sbr.rel (%p3218) target = $region84
      $region83: #{stylespeech2_forward.7} parent=79 // pred_region
        %p3221 = scmp.lt.s32.totalorder %s32, 1
        %s3222 = scalar_select %p3221, %s32, 1
        %s3223 = smul.addr %s3222, 2
        %s3224 = smul.addr %s3223, 8
        %s3225 = scalar_lea.vmem %s14, %s3224
      $region84: #{stylespeech2_forward.7} parent=79 // pred_fallthru
        _
    $region80: #{stylespeech2_forward.7} parent=5 // pred_fallthru
      _
  $region6: #{stylespeech2_forward.7} parent=0 // loop_footer
    %s30 = sadd.s32 1, %s26
  $region7: #{stylespeech2_forward.7} parent=0 // loop_footer_branch
    %25 = sbr.rel target = $region3
  $region8: #{stylespeech2_forward.7} parent=0 // loop_exit
    _

// kernel: stylespeech2_forward.11
$region0: #{stylespeech2_forward.11}
  #allocation0 [shape = 'u32[]', space=smem, size = 0x4, offset = 0x4, fixed_abs, tag = 'smem constant byte address 0x4 - core index']
  #allocation1 [shape = 'u32[144,128]{1,0:T(1,128)}', space=vmem, size = 0x12000, scoped, tag = 'internal scratch']
  %s0 = inlined_call_operand.vmem [shape: f32[2,12,8], index: 0, kind: input, shape index: {}]
  %s1 = inlined_call_operand.vmem [shape: f32[2,8,32], index: 1, kind: input, shape index: {}]
  %s2 = inlined_call_operand.vmem [shape: f32[2,12,32], index: 2, kind: output, shape index: {}]
  %s3 = sld [smem:[#allocation0]]
  $region41: #{stylespeech2_forward.11} parent=0
    _
  %s5 = ssub.s32 1, %s3
  %s6 = scalar_select 0, %s5, %s3
  loop: start=0, step=1, limit=4
  $region2: #{stylespeech2_forward.11} parent=0 // loop_pre_header
    _
  $region3: #{stylespeech2_forward.11} parent=0 // loop_header
    %s8 = sphi 0, %s12
    %p9 = scmp.ge.s32.totalorder %s8, 4
    %s18 = sphi 0, %s20
    %s21 = sphi 0, %s18
    %s22 = sphi 0, %s21
    %s38 = sphi 0, %s22
    %s44 = sphi 0, %s46
    %s47 = sphi 0, %s44
    %s48 = sphi 0, %s47
    %s64 = sphi 0, %s48
    %s70 = sphi 0, %s72
    %s73 = sphi 0, %s70
    %s74 = sphi 0, %s73
    %s90 = sphi 0, %s74
  $region4: #{stylespeech2_forward.11} parent=0 // loop_header_branch
    %11 = sbr.rel (%p9) target = $region8
  $region5: #{stylespeech2_forward.11} parent=0 // loop_body
    %s13 = ssub.s32 %s8, 1
    %s14 = ssub.s32 %s8, 2
    %s15 = sadd.s32 %s8, 1
    %s16 = ssub.s32 %s8, %s15
    %p17 = scmp.eq.s32.totalorder %s16, 0
    %s19 = sadd.s32 %s18, 1
    %s20 = scalar_select %p17, %s18, %s19
    %p23 = pneg %p17
    %p24 = scmp.eq.s32.totalorder %s8, 1
    %p25 = por %p23, %p24
    %p26 = scmp.ne.s32.totalorder %s18, %s21
    %p27 = scmp.eq.s32.totalorder %s8, 0
    %p28 = por %p26, %p27
    %p29 = scmp.ne.s32.totalorder %s18, %s21
    %p30 = scmp.eq.s32.totalorder %s13, 1
    %p31 = por %p29, %p30
    %p32 = scmp.ne.s32.totalorder %s21, %s22
    %p33 = scmp.eq.s32.totalorder %s13, 0
    %p34 = por %p32, %p33
    %p35 = scmp.ne.s32.totalorder %s21, %s22
    %p36 = scmp.eq.s32.totalorder %s14, 1
    %p37 = por %p35, %p36
    %p39 = scmp.ne.s32.totalorder %s22, %s38
    %p40 = scmp.eq.s32.totalorder %s14, 0
    %p41 = por %p39, %p40
    %s42 = ssub.s32 %s8, %s15
    %p43 = scmp.eq.s32.totalorder %s42, 0
    %s45 = sadd.s32 %s44, 1
    %s46 = scalar_select %p43, %s44, %s45
    %p49 = pneg %p43
    %p50 = scmp.eq.s32.totalorder %s8, 1
    %p51 = por %p49, %p50
    %p52 = scmp.ne.s32.totalorder %s44, %s47
    %p53 = scmp.eq.s32.totalorder %s8, 0
    %p54 = por %p52, %p53
    %p55 = scmp.ne.s32.totalorder %s44, %s47
    %p56 = scmp.eq.s32.totalorder %s13, 1
    %p57 = por %p55, %p56
    %p58 = scmp.ne.s32.totalorder %s47, %s48
    %p59 = scmp.eq.s32.totalorder %s13, 0
    %p60 = por %p58, %p59
    %p61 = scmp.ne.s32.totalorder %s47, %s48
    %p62 = scmp.eq.s32.totalorder %s14, 1
    %p63 = por %p61, %p62
    %p65 = scmp.ne.s32.totalorder %s48, %s64
    %p66 = scmp.eq.s32.totalorder %s14, 0
    %p67 = por %p65, %p66
    %s68 = ssub.s32 %s8, %s15
    %p69 = scmp.eq.s32.totalorder %s68, 0
    %s71 = sadd.s32 %s70, 1
    %s72 = scalar_select %p69, %s70, %s71
    %p75 = pneg %p69
    %p76 = scmp.eq.s32.totalorder %s8, 1
    %p77 = por %p75, %p76
    %p78 = scmp.ne.s32.totalorder %s70, %s73
    %p79 = scmp.eq.s32.totalorder %s8, 0
    %p80 = por %p78, %p79
    %p81 = scmp.ne.s32.totalorder %s70, %s73
    %p82 = scmp.eq.s32.totalorder %s13, 1
    %p83 = por %p81, %p82
    %p84 = scmp.ne.s32.totalorder %s73, %s74
    %p85 = scmp.eq.s32.totalorder %s13, 0
    %p86 = por %p84, %p85
    %p87 = scmp.ne.s32.totalorder %s73, %s74
    %p88 = scmp.eq.s32.totalorder %s14, 1
    %p89 = por %p87, %p88
    %p91 = scmp.ne.s32.totalorder %s74, %s90
    %p92 = scmp.eq.s32.totalorder %s14, 0
    %p93 = por %p91, %p92
    %p94 = scmp.le.s32.totalorder 1, %s8
    %p95 = scmp.lt.s32.totalorder %s8, 3
    %p96 = pnand %p94, %p95
    %p97 = pneg %p96
    // Predicated region
    $region9: #{stylespeech2_forward.11} parent=5 // pred_check
      _
    $region10: #{stylespeech2_forward.11} parent=5 // pred_check_branch
      %99 = sbr.rel (%p96) target = $region12
    $region11: #{stylespeech2_forward.11} parent=5 // pred_region
      %s100 = ssub.s32 %s8, 1
    $region12: #{stylespeech2_forward.11} parent=5 // pred_fallthru
      _
    %p101 = scmp.lt.s32.totalorder %s8, 2
    // Predicated region
    $region13: #{stylespeech2_forward.11} parent=5 // pred_check
      %p102 = pneg %p101
    $region14: #{stylespeech2_forward.11} parent=5 // pred_check_branch
      %104 = sbr.rel (%p102) target = $region16
    $region15: #{stylespeech2_forward.11} parent=5 // pred_region
      // Predicated region
      $region17: #{stylespeech2_forward.11} parent=15 // pred_check
        %p105 = pneg %p28
      $region18: #{stylespeech2_forward.11} parent=15 // pred_check_branch
        %107 = sbr.rel (%p105) target = $region20
      $region19: #{stylespeech2_forward.11} parent=15 // pred_region
        %p108 = scmp.lt.s32.totalorder %s8, 1
        %s109 = scalar_select %p108, %s8, 1
        %s110 = smul.addr %s109, 2
        %s111 = smul.addr %s110, 8
        %s112 = scalar_lea.vmem %s0, %s111
      $region20: #{stylespeech2_forward.11} parent=15 // pred_fallthru
        _
      // Predicated region
      $region21: #{stylespeech2_forward.11} parent=15 // pred_check
        %p113 = pneg %p54
      $region22: #{stylespeech2_forward.11} parent=15 // pred_check_branch
        %115 = sbr.rel (%p113) target = $region24
      $region23: #{stylespeech2_forward.11} parent=15 // pred_region
        %p116 = scmp.lt.s32.totalorder %s8, 1
        %s117 = scalar_select %p116, %s8, 1
        %s118 = smul.addr %s117, 8
        %s119 = scalar_lea.vmem %s1, %s118
      $region24: #{stylespeech2_forward.11} parent=15 // pred_fallthru
        _
    $region16: #{stylespeech2_forward.11} parent=5 // pred_fallthru
      _
    %p120 = scmp.le.s32.totalorder 1, %s8
    %p121 = scmp.lt.s32.totalorder %s8, 3
    %p122 = pnand %p120, %p121
    %p123 = pneg %p122
    // Predicated region
    $region25: #{stylespeech2_forward.11} parent=5 // pred_check
      _
    $region26: #{stylespeech2_forward.11} parent=5 // pred_check_branch
      %125 = sbr.rel (%p122) target = $region28
    $region27: #{stylespeech2_forward.11} parent=5 // pred_region
      %s126 = ssub.s32 %s8, 1
      %p127 = scmp.lt.s32.totalorder %s13, 1
      %s128 = scalar_select %p127, %s13, 1
      %s129 = smul.addr %s128, 2
      %s130 = smul.addr %s129, 8
      %s131 = scalar_lea.vmem %s0, %s130
      %p132 = pneg %p34
      %p133 = pneg %p31
      %p134 = scmp.lt.s32.totalorder %s13, 1
      %s135 = scalar_select %p134, %s13, 1
      %s136 = smul.addr %s135, 8
      %s137 = scalar_lea.vmem %s1, %s136
      %p138 = pneg %p60
      %p139 = pneg %p57
      %p140 = pneg %p86
      %p141 = pneg %p83
      %p142 = scmp.lt.s32.totalorder %s13, 1
      %s143 = scalar_select %p142, %s13, 1
      %s144 = smul.addr %s143, 2
      %s145 = smul.addr %s144, 8
      %s146 = scalar_lea.vmem %s2, %s145
      %p147 = scmp.lt.s32.totalorder %s13, 1
      %s148 = scalar_select %p147, %s13, 1
      %s149 = smul.addr %s148, 2
      %s150 = smul.addr %s149, 8
      %s151 = scalar_lea.vmem %s0, %s150
      %p152 = scmp.lt.s32.totalorder %s13, 1
      %s153 = scalar_select %p152, %s13, 1
      %s154 = smul.addr %s153, 8
      %s155 = scalar_lea.vmem %s1, %s154
      %p156 = scmp.lt.s32.totalorder %s13, 1
      %s157 = scalar_select %p156, %s13, 1
      %s158 = smul.addr %s157, 2
      %s159 = smul.addr %s158, 8
      %s160 = scalar_lea.vmem %s2, %s159
      %v162 = vld [vmem:[%s151] sm:$0xff]
      %v163 = vld [vmem:[%s151 + $0x8] sm:$0xf]
      %v164 = vpack.c.bf16 %v163, %v162
      %v165 = vld [vmem:[%s155] sm:$0xff]
      %v166 = vpack.c.bf16 %v165, %v165
      %vm167 = vcmask 64512
      %v169 = vsel %vm167, %v164, 0
      %vm171 = vcmask 1043456
      %v173 = vsel %vm171, %v166, 0
      %175 = vmatprep.subr.bf16.mxu0 0
      %176 = vmatpush1.bf16.msra.mxu0 0
      %177 = vmatprep.subr.bf16.mxu0 0
      %178 = vmatpush1.bf16.msra.mxu0 0
      %179 = vmatprep.subr.bf16.mxu0 0
      %180 = vmatpush1.bf16.msra.mxu0 0
      %181 = vmatprep.subr.bf16.mxu0 0
      %182 = vmatpush1.bf16.msra.mxu0 0
      %183 = vmatprep.subr.bf16.mxu0 0
      %184 = vmatpush1.bf16.msra.mxu0 0
      %185 = vmatprep.subr.bf16.mxu0 0
      %186 = vmatpush1.bf16.msra.mxu0 0
      %187 = vmatprep.subr.bf16.mxu0 0
      %188 = vmatpush1.bf16.msra.mxu0 0
      %189 = vmatprep.subr.bf16.mxu0 0
      %190 = vmatpush1.bf16.msra.mxu0 %v173
      %191 = vmatprep.subr.bf16.mxu0 0
      %192 = vmatpush2.bf16.msra.mxu0 0
      %193 = vmatprep.subr.bf16.mxu0 0
      %194 = vmatpush2.bf16.msra.mxu0 0
      %195 = vmatprep.subr.bf16.mxu0 0
      %196 = vmatpush2.bf16.msra.mxu0 0
      %197 = vmatprep.subr.bf16.mxu0 0
      %198 = vmatpush2.bf16.msra.mxu0 0
      %199 = vmatprep.subr.bf16.mxu0 0
      %200 = vmatpush2.bf16.msra.mxu0 0
      %201 = vmatprep.subr.bf16.mxu0 0
      %202 = vmatpush2.bf16.msra.mxu0 0
      %203 = vmatprep.subr.bf16.mxu0 0
      %204 = vmatpush2.bf16.msra.mxu0 0
      %205 = vmatprep.subr.bf16.mxu0 0
      %206 = vmatpush2.bf16.msra.mxu0 0
      %207 = vmatprep.mubr.bf16.mxu0 0
      %208 = vmatmul.mubr.bf16.gmra.mxu0 %v169
      %v209 = vpop.f32.mrf.mxu0
      %v210 = vadd.f32 0.0, %v209
      %v211 = vpop.f32.mrf.mxu0
      %v212 = vpop.f32.mrf.mxu0
      %v213 = vadd.f32 0.0, %v212
      %v214 = vpop.f32.mrf.mxu0
      %215 = vdwg.mxu0
      %vm216 = vcmask 261120
      %217 = vst.msk [vmem:[%s160] sm:$0xff] %vm216, %v210
      %vm218 = vcmask 257024
      %219 = vst.msk [vmem:[%s160 + $0x8] sm:$0xf] %vm218, %v213
      %p220 = scmp.lt.s32.totalorder %s13, 1
      %s221 = scalar_select %p220, %s13, 1
      %s222 = smul.addr %s221, 2
      %s223 = smul.addr %s222, 8
      %s224 = scalar_lea.vmem %s2, %s223
      // Predicated region
      $region29: #{stylespeech2_forward.11} parent=27 // pred_check
        %p225 = pneg %p83
      $region30: #{stylespeech2_forward.11} parent=27 // pred_check_branch
        %227 = sbr.rel (%p225) target = $region32
      $region31: #{stylespeech2_forward.11} parent=27 // pred_region
        _
      $region32: #{stylespeech2_forward.11} parent=27 // pred_fallthru
        _
    $region28: #{stylespeech2_forward.11} parent=5 // pred_fallthru
      _
    %p228 = scmp.le.s32.totalorder 2, %s8
    // Predicated region
    $region33: #{stylespeech2_forward.11} parent=5 // pred_check
      %p229 = pneg %p228
    $region34: #{stylespeech2_forward.11} parent=5 // pred_check_branch
      %231 = sbr.rel (%p229) target = $region36
    $region35: #{stylespeech2_forward.11} parent=5 // pred_region
      %s232 = ssub.s32 %s8, 2
      // Predicated region
      $region37: #{stylespeech2_forward.11} parent=35 // pred_check
        %p233 = pneg %p89
      $region38: #{stylespeech2_forward.11} parent=35 // pred_check_branch
        %235 = sbr.rel (%p233) target = $region40
      $region39: #{stylespeech2_forward.11} parent=35 // pred_region
        %p236 = scmp.lt.s32.totalorder %s14, 1
        %s237 = scalar_select %p236, %s14, 1
        %s238 = smul.addr %s237, 2
        %s239 = smul.addr %s238, 8
        %s240 = scalar_lea.vmem %s2, %s239
      $region40: #{stylespeech2_forward.11} parent=35 // pred_fallthru
        _
    $region36: #{stylespeech2_forward.11} parent=5 // pred_fallthru
      _
  $region6: #{stylespeech2_forward.11} parent=0 // loop_footer
    %s12 = sadd.s32 1, %s8
  $region7: #{stylespeech2_forward.11} parent=0 // loop_footer_branch
    %7 = sbr.rel target = $region3
  $region8: #{stylespeech2_forward.11} parent=0 // loop_exit
    _

</llo_original>
